<compile_context>
chip_gen: v7x
topology: tpu7x:2x2x1
jax: 0.10.0
libtpu: 0.0.40
codegen_flags: <defaults>
</compile_context>

<pallas_src>
import functools

import jax
import jax.numpy as jnp
from jax import lax
from jax.experimental import pallas as pl
from jax.experimental.pallas import tpu as pltpu


def _reid_head_kernel(x_ref, win_ref, bin_ref, watt_ref, batt_ref,
                      wlin_ref, blin_ref, out_ref, *, n_parts, hw, bt):
    """One grid step processes a tile of `bt` images.

    x_ref block : (bt, Cin, HW)    channel-major, straight from NCHW; the Cin
                                   contraction is a transposed matmul (MXU).
    out_ref block: (bt, n_parts*F) lane-dense (512-wide) store.
    """
    inv_hw = 1.0 / float(hw)
    w_in = win_ref[...]            # (Cin, D)  f32 or bf16
    b_in = bin_ref[...]            # (1, D)    f32
    w_att = watt_ref[...]          # (D, P)    f32 or bf16
    b_att = batt_ref[...]          # (1, P)    f32
    mm_dtype = w_in.dtype          # matmul-input dtype (bf16 on v6e/v7x path)

    pooled_list = []
    for b in range(bt):            # unrolled; bt is small (<= batch tile)
        x_b = x_ref[b]                                            # (Cin, HW)
        # 1x1 conv == transposed matmul: feat[s, d] = sum_c x[c, s] * w_in[c, d]
        feat = lax.dot_general(
            x_b, w_in, (((0,), (0,)), ((), ())),
            preferred_element_type=jnp.float32) + b_in            # (HW, D) f32
        # attention logits -> sigmoid (kept in f32)
        att = jax.nn.sigmoid(
            jnp.dot(feat.astype(mm_dtype), w_att,
                    preferred_element_type=jnp.float32) + b_att)  # (HW, P) f32
        # attention-masked average pooling for all parts at once:
        # pooled[p, c] = mean_s(att[s, p] * feat[s, c]) == (att^T @ feat) / HW
        pooled = lax.dot_general(
            att.astype(mm_dtype), feat.astype(mm_dtype),
            (((0,), (0,)), ((), ())),
            preferred_element_type=jnp.float32) * inv_hw          # (P, D) f32
        pooled_list.append(pooled)

    # Per-part Linear(512 -> 64), batched over the bt images of the tile:
    # one (bt, D) @ (D, F) matmul per part instead of bt*P tiny M=1 matmuls.
    lin_parts = []
    for p in range(n_parts):
        pooled_p = jnp.concatenate(
            [pooled_list[b][p:p + 1, :] for b in range(bt)], axis=0)  # (bt, D)
        lin_parts.append(
            jnp.dot(pooled_p, wlin_ref[p], preferred_element_type=jnp.float32)
            + blin_ref[p:p + 1, :])                                   # (bt, F)
    lin = jnp.concatenate(lin_parts, axis=1)                # (bt, P*F) f32

    # L2 normalize with clamp(norm, min=1e-6), in f32
    norm = jnp.maximum(
        jnp.sqrt(jnp.sum(lin * lin, axis=-1, keepdims=True)), 1e-6)
    out_ref[...] = lin / norm


def reid_head(x_nchw, params, *, n_parts=8, batch_tile=None, use_bf16=False):
    """x_nchw: backbone feature map (B, Cin, H, W), float32."""
    B, Cin, H, W = x_nchw.shape
    HW = H * W
    # NCHW -> (B, Cin, HW): a pure reshape (no extra HBM transpose pass);
    # the Cin contraction happens inside the kernel on the MXU.
    x = x_nchw.reshape(B, Cin, HW)

    w_in, b_in, w_att, b_att, w_lin, b_lin = params
    D = w_in.shape[1]          # 512
    F = w_lin.shape[2]         # 64
    out_dim = n_parts * F      # 512

    # Batch tile: amortizes per-step pipeline overhead; the output block's
    # second-to-last dim must be a multiple of 8 or equal the full batch.
    if batch_tile is None:
        batch_tile = 8 if B % 8 == 0 else B
    bt = batch_tile
    assert B % bt == 0, "batch must be divisible by batch_tile"
    assert bt % 8 == 0 or bt == B, "batch_tile must be a multiple of 8 or == B"

    if use_bf16:
        # bf16 MXU inputs (v6e/v7x): halves x DMA bytes; accumulation,
        # sigmoid, pooling scale, final linear and L2 norm stay in f32.
        x = x.astype(jnp.bfloat16)
        w_in = w_in.astype(jnp.bfloat16)
        w_att = w_att.astype(jnp.bfloat16)

    kernel = functools.partial(_reid_head_kernel,
                               n_parts=n_parts, hw=HW, bt=bt)

    in_itemsize = 2 if use_bf16 else 4
    flops = B * (2 * HW * Cin * D            # input 1x1 conv
                 + 2 * HW * D * n_parts      # attention logits
                 + 2 * n_parts * HW * D      # masked pooling
                 + 2 * n_parts * D * F)      # per-part linear
    bytes_accessed = (B * Cin * HW * in_itemsize
                      + (Cin * D + D * n_parts) * in_itemsize
                      + (D + n_parts + n_parts * D * F + n_parts * F) * 4
                      + B * out_dim * 4)
    cost = pl.CostEstimate(flops=flops,
                           transcendentals=B * HW * n_parts,
                           bytes_accessed=bytes_accessed)

    # NOTE: weight BlockSpecs have constant index maps, so Pallas fetches them
    # once and keeps them resident across the grid; the double-buffer VMEM
    # overhead is negligible at these weight sizes.
    return pl.pallas_call(
        kernel,
        out_shape=jax.ShapeDtypeStruct((B, out_dim), jnp.float32),
        grid_spec=pltpu.PrefetchScalarGridSpec(
            num_scalar_prefetch=0,
            grid=(B // bt,),
            in_specs=[
                pl.BlockSpec((bt, Cin, HW), lambda g: (g, 0, 0)),
                pl.BlockSpec((Cin, D), lambda g: (0, 0)),
                pl.BlockSpec((1, D), lambda g: (0, 0)),
                pl.BlockSpec((D, n_parts), lambda g: (0, 0)),
                pl.BlockSpec((1, n_parts), lambda g: (0, 0)),
                pl.BlockSpec((n_parts, D, F), lambda g: (0, 0, 0)),
                pl.BlockSpec((n_parts, F), lambda g: (0, 0)),
            ],
            out_specs=pl.BlockSpec((bt, out_dim), lambda g: (g, 0)),
        ),
        compiler_params=pltpu.CompilerParams(
            dimension_semantics=("parallel",)),   # v7x: megacore over batch
        cost_estimate=cost,
    )(x, w_in, b_in, w_att, b_att, w_lin, b_lin)


def reid_head_ref(x_nchw, params, *, n_parts=8):
    """Pure-JAX reference mirroring the PyTorch forward (post-backbone)."""
    w_in, b_in, w_att, b_att, w_lin, b_lin = params
    B, Cin, H, W = x_nchw.shape
    x = jnp.transpose(x_nchw, (0, 2, 3, 1)).reshape(B, H * W, Cin)
    feat = x @ w_in + b_in                                    # (B, HW, 512)
    att = jax.nn.sigmoid(feat @ w_att + b_att)                # (B, HW, P)
    pooled = jnp.einsum('bkp,bkc->bpc', att, feat) / (H * W)  # (B, P, 512)
    lin = jnp.einsum('bpc,pcf->bpf', pooled, w_lin) + b_lin   # (B, P, 64)
    flat = lin.reshape(B, -1)
    norm = jnp.maximum(jnp.linalg.norm(flat, axis=1, keepdims=True), 1e-6)
    return flat / norm


def init_params(key, cin, d=512, n_parts=8, f=64):
    ks = jax.random.split(key, 6)
    w_in = jax.random.normal(ks[0], (cin, d), jnp.float32) * 0.05
    b_in = jax.random.normal(ks[1], (1, d), jnp.float32) * 0.01
    w_att = jax.random.normal(ks[2], (d, n_parts), jnp.float32) * 0.05
    b_att = jax.random.normal(ks[3], (1, n_parts), jnp.float32) * 0.01
    w_lin = jax.random.normal(ks[4], (n_parts, d, f), jnp.float32) * 0.05
    b_lin = jax.random.normal(ks[5], (n_parts, f), jnp.float32) * 0.01
    return (w_in, b_in, w_att, b_att, w_lin, b_lin)


if __name__ == "__main__":
    key = jax.random.PRNGKey(0)
    k_x, k_p = jax.random.split(key)

    B, Cin, H, W = 16, 32, 8, 8          # small synthetic backbone feature map
    n_parts = 8

    x = jax.random.normal(k_x, (B, Cin, H, W), jnp.float32)
    params = init_params(k_p, Cin, d=512, n_parts=n_parts, f=64)

    ref = reid_head_ref(x, params, n_parts=n_parts)

    # f32 path (batch tile of 8 images per grid step, grid=(2,))
    out = jax.block_until_ready(reid_head(x, params, n_parts=n_parts))
    assert out.shape == (B, n_parts * 64)
    assert jnp.allclose(out, ref, atol=1e-4, rtol=1e-4), "f32 mismatch vs ref"

    # bf16 MXU-input path (v6e/v7x optimization), f32 accumulation
    out_bf16 = jax.block_until_ready(
        reid_head(x, params, n_parts=n_parts, use_bf16=True))
    assert out_bf16.shape == (B, n_parts * 64)
    assert jnp.allclose(out_bf16, ref, atol=3e-2, rtol=3e-2), "bf16 mismatch vs ref"

    print("KERNEL_OK")
</pallas_src>

<mosaic_0001>
module attributes {stable_mosaic.version = 11 : i64} {
  func.func @_reid_head_kernel(%arg0: i32, %arg1: memref<8x32x64xf32, #tpu.memory_space<vmem>>, %arg2: memref<32x512xf32, #tpu.memory_space<vmem>>, %arg3: memref<1x512xf32, #tpu.memory_space<vmem>>, %arg4: memref<512x8xf32, #tpu.memory_space<vmem>>, %arg5: memref<1x8xf32, #tpu.memory_space<vmem>>, %arg6: memref<8x512x64xf32, #tpu.memory_space<vmem>>, %arg7: memref<8x64xf32, #tpu.memory_space<vmem>>, %arg8: memref<8x512xf32, #tpu.memory_space<vmem>>) attributes {dimension_semantics = [#tpu.dimension_semantics<parallel>], iteration_bounds = array<i64: 2>, scalar_prefetch = 0 : i64, scratch_operands = 0 : i64, tpu.core_type = #tpu.core_type<tc>, window_params = [{transform_indices = @transform_0, window_bounds = array<i64: 8, 32, 64>}, {pipeline_mode = #tpu.pipeline_mode<synchronous>, transform_indices = @transform_1, window_bounds = array<i64: 32, 512>}, {pipeline_mode = #tpu.pipeline_mode<synchronous>, transform_indices = @transform_2, window_bounds = array<i64: 1, 512>}, {pipeline_mode = #tpu.pipeline_mode<synchronous>, transform_indices = @transform_3, window_bounds = array<i64: 512, 8>}, {pipeline_mode = #tpu.pipeline_mode<synchronous>, transform_indices = @transform_4, window_bounds = array<i64: 1, 8>}, {pipeline_mode = #tpu.pipeline_mode<synchronous>, transform_indices = @transform_5, window_bounds = array<i64: 8, 512, 64>}, {pipeline_mode = #tpu.pipeline_mode<synchronous>, transform_indices = @transform_6, window_bounds = array<i64: 8, 64>}, {transform_indices = @transform_7, window_bounds = array<i64: 8, 512>}]} {
    %c0 = arith.constant 0 : index
    %c0_0 = arith.constant 0 : index
    %0 = vector.load %arg2[%c0, %c0_0] : memref<32x512xf32, #tpu.memory_space<vmem>>, vector<32x512xf32>
    %c0_1 = arith.constant 0 : index
    %c0_2 = arith.constant 0 : index
    %1 = vector.load %arg3[%c0_1, %c0_2] : memref<1x512xf32, #tpu.memory_space<vmem>>, vector<1x512xf32>
    %c0_3 = arith.constant 0 : index
    %c0_4 = arith.constant 0 : index
    %2 = vector.load %arg4[%c0_3, %c0_4] : memref<512x8xf32, #tpu.memory_space<vmem>>, vector<512x8xf32>
    %c0_5 = arith.constant 0 : index
    %c0_6 = arith.constant 0 : index
    %3 = vector.load %arg5[%c0_5, %c0_6] : memref<1x8xf32, #tpu.memory_space<vmem>>, vector<1x8xf32>
    %c0_7 = arith.constant 0 : index
    %c0_8 = arith.constant 0 : index
    %c0_9 = arith.constant 0 : index
    %4 = vector.load %arg1[%c0_7, %c0_8, %c0_9] : memref<8x32x64xf32, #tpu.memory_space<vmem>>, vector<1x32x64xf32>
    %5 = vector.shape_cast %4 : vector<1x32x64xf32> to vector<32x64xf32>
    %cst = arith.constant dense<0.000000e+00> : vector<64x512xf32>
    %6 = tpu.matmul %5, %0, %cst {dimension_numbers = #tpu.dot_dimension_numbers<[0], [0], [1], [1], [0, 1, 1, 1], [], []>} : vector<32x64xf32>, vector<32x512xf32>, vector<64x512xf32> -> vector<64x512xf32>
    %7 = vector.broadcast %1 : vector<1x512xf32> to vector<64x512xf32>
    %8 = arith.addf %6, %7 : vector<64x512xf32>
    %cst_10 = arith.constant dense<0.000000e+00> : vector<64x8xf32>
    %9 = tpu.matmul %8, %2, %cst_10 {dimension_numbers = #tpu.dot_dimension_numbers<[1], [0], [0], [1], [0, 0, 1, 1], [], []>} : vector<64x512xf32>, vector<512x8xf32>, vector<64x8xf32> -> vector<64x8xf32>
    %10 = vector.broadcast %3 : vector<1x8xf32> to vector<64x8xf32>
    %11 = arith.addf %9, %10 : vector<64x8xf32>
    %12 = arith.negf %11 : vector<64x8xf32>
    %13 = math.exp %12 : vector<64x8xf32>
    %cst_11 = arith.constant 1.000000e+00 : f32
    %14 = vector.broadcast %cst_11 : f32 to vector<64x8xf32>
    %15 = arith.addf %14, %13 : vector<64x8xf32>
    %16 = arith.divf %14, %15 : vector<64x8xf32>
    %cst_12 = arith.constant dense<0.000000e+00> : vector<8x512xf32>
    %17 = tpu.matmul %16, %8, %cst_12 {dimension_numbers = #tpu.dot_dimension_numbers<[0], [0], [1], [1], [0, 1, 1, 1], [], []>} : vector<64x8xf32>, vector<64x512xf32>, vector<8x512xf32> -> vector<8x512xf32>
    %cst_13 = arith.constant 1.562500e-02 : f32
    %18 = vector.broadcast %cst_13 : f32 to vector<8x512xf32>
    %19 = arith.mulf %17, %18 : vector<8x512xf32>
    %c1 = arith.constant 1 : index
    %c0_14 = arith.constant 0 : index
    %c0_15 = arith.constant 0 : index
    %20 = vector.load %arg1[%c1, %c0_14, %c0_15] : memref<8x32x64xf32, #tpu.memory_space<vmem>>, vector<1x32x64xf32>
    %21 = vector.shape_cast %20 : vector<1x32x64xf32> to vector<32x64xf32>
    %cst_16 = arith.constant dense<0.000000e+00> : vector<64x512xf32>
    %22 = tpu.matmul %21, %0, %cst_16 {dimension_numbers = #tpu.dot_dimension_numbers<[0], [0], [1], [1], [0, 1, 1, 1], [], []>} : vector<32x64xf32>, vector<32x512xf32>, vector<64x512xf32> -> vector<64x512xf32>
    %23 = vector.broadcast %1 : vector<1x512xf32> to vector<64x512xf32>
    %24 = arith.addf %22, %23 : vector<64x512xf32>
    %cst_17 = arith.constant dense<0.000000e+00> : vector<64x8xf32>
    %25 = tpu.matmul %24, %2, %cst_17 {dimension_numbers = #tpu.dot_dimension_numbers<[1], [0], [0], [1], [0, 0, 1, 1], [], []>} : vector<64x512xf32>, vector<512x8xf32>, vector<64x8xf32> -> vector<64x8xf32>
    %26 = vector.broadcast %3 : vector<1x8xf32> to vector<64x8xf32>
    %27 = arith.addf %25, %26 : vector<64x8xf32>
    %28 = arith.negf %27 : vector<64x8xf32>
    %29 = math.exp %28 : vector<64x8xf32>
    %cst_18 = arith.constant 1.000000e+00 : f32
    %30 = vector.broadcast %cst_18 : f32 to vector<64x8xf32>
    %31 = arith.addf %30, %29 : vector<64x8xf32>
    %32 = arith.divf %30, %31 : vector<64x8xf32>
    %cst_19 = arith.constant dense<0.000000e+00> : vector<8x512xf32>
    %33 = tpu.matmul %32, %24, %cst_19 {dimension_numbers = #tpu.dot_dimension_numbers<[0], [0], [1], [1], [0, 1, 1, 1], [], []>} : vector<64x8xf32>, vector<64x512xf32>, vector<8x512xf32> -> vector<8x512xf32>
    %cst_20 = arith.constant 1.562500e-02 : f32
    %34 = vector.broadcast %cst_20 : f32 to vector<8x512xf32>
    %35 = arith.mulf %33, %34 : vector<8x512xf32>
    %c2 = arith.constant 2 : index
    %c0_21 = arith.constant 0 : index
    %c0_22 = arith.constant 0 : index
    %36 = vector.load %arg1[%c2, %c0_21, %c0_22] : memref<8x32x64xf32, #tpu.memory_space<vmem>>, vector<1x32x64xf32>
    %37 = vector.shape_cast %36 : vector<1x32x64xf32> to vector<32x64xf32>
    %cst_23 = arith.constant dense<0.000000e+00> : vector<64x512xf32>
    %38 = tpu.matmul %37, %0, %cst_23 {dimension_numbers = #tpu.dot_dimension_numbers<[0], [0], [1], [1], [0, 1, 1, 1], [], []>} : vector<32x64xf32>, vector<32x512xf32>, vector<64x512xf32> -> vector<64x512xf32>
    %39 = vector.broadcast %1 : vector<1x512xf32> to vector<64x512xf32>
    %40 = arith.addf %38, %39 : vector<64x512xf32>
    %cst_24 = arith.constant dense<0.000000e+00> : vector<64x8xf32>
    %41 = tpu.matmul %40, %2, %cst_24 {dimension_numbers = #tpu.dot_dimension_numbers<[1], [0], [0], [1], [0, 0, 1, 1], [], []>} : vector<64x512xf32>, vector<512x8xf32>, vector<64x8xf32> -> vector<64x8xf32>
    %42 = vector.broadcast %3 : vector<1x8xf32> to vector<64x8xf32>
    %43 = arith.addf %41, %42 : vector<64x8xf32>
    %44 = arith.negf %43 : vector<64x8xf32>
    %45 = math.exp %44 : vector<64x8xf32>
    %cst_25 = arith.constant 1.000000e+00 : f32
    %46 = vector.broadcast %cst_25 : f32 to vector<64x8xf32>
    %47 = arith.addf %46, %45 : vector<64x8xf32>
    %48 = arith.divf %46, %47 : vector<64x8xf32>
    %cst_26 = arith.constant dense<0.000000e+00> : vector<8x512xf32>
    %49 = tpu.matmul %48, %40, %cst_26 {dimension_numbers = #tpu.dot_dimension_numbers<[0], [0], [1], [1], [0, 1, 1, 1], [], []>} : vector<64x8xf32>, vector<64x512xf32>, vector<8x512xf32> -> vector<8x512xf32>
    %cst_27 = arith.constant 1.562500e-02 : f32
    %50 = vector.broadcast %cst_27 : f32 to vector<8x512xf32>
    %51 = arith.mulf %49, %50 : vector<8x512xf32>
    %c3 = arith.constant 3 : index
    %c0_28 = arith.constant 0 : index
    %c0_29 = arith.constant 0 : index
    %52 = vector.load %arg1[%c3, %c0_28, %c0_29] : memref<8x32x64xf32, #tpu.memory_space<vmem>>, vector<1x32x64xf32>
    %53 = vector.shape_cast %52 : vector<1x32x64xf32> to vector<32x64xf32>
    %cst_30 = arith.constant dense<0.000000e+00> : vector<64x512xf32>
    %54 = tpu.matmul %53, %0, %cst_30 {dimension_numbers = #tpu.dot_dimension_numbers<[0], [0], [1], [1], [0, 1, 1, 1], [], []>} : vector<32x64xf32>, vector<32x512xf32>, vector<64x512xf32> -> vector<64x512xf32>
    %55 = vector.broadcast %1 : vector<1x512xf32> to vector<64x512xf32>
    %56 = arith.addf %54, %55 : vector<64x512xf32>
    %cst_31 = arith.constant dense<0.000000e+00> : vector<64x8xf32>
    %57 = tpu.matmul %56, %2, %cst_31 {dimension_numbers = #tpu.dot_dimension_numbers<[1], [0], [0], [1], [0, 0, 1, 1], [], []>} : vector<64x512xf32>, vector<512x8xf32>, vector<64x8xf32> -> vector<64x8xf32>
    %58 = vector.broadcast %3 : vector<1x8xf32> to vector<64x8xf32>
    %59 = arith.addf %57, %58 : vector<64x8xf32>
    %60 = arith.negf %59 : vector<64x8xf32>
    %61 = math.exp %60 : vector<64x8xf32>
    %cst_32 = arith.constant 1.000000e+00 : f32
    %62 = vector.broadcast %cst_32 : f32 to vector<64x8xf32>
    %63 = arith.addf %62, %61 : vector<64x8xf32>
    %64 = arith.divf %62, %63 : vector<64x8xf32>
    %cst_33 = arith.constant dense<0.000000e+00> : vector<8x512xf32>
    %65 = tpu.matmul %64, %56, %cst_33 {dimension_numbers = #tpu.dot_dimension_numbers<[0], [0], [1], [1], [0, 1, 1, 1], [], []>} : vector<64x8xf32>, vector<64x512xf32>, vector<8x512xf32> -> vector<8x512xf32>
    %cst_34 = arith.constant 1.562500e-02 : f32
    %66 = vector.broadcast %cst_34 : f32 to vector<8x512xf32>
    %67 = arith.mulf %65, %66 : vector<8x512xf32>
    %c4 = arith.constant 4 : index
    %c0_35 = arith.constant 0 : index
    %c0_36 = arith.constant 0 : index
    %68 = vector.load %arg1[%c4, %c0_35, %c0_36] : memref<8x32x64xf32, #tpu.memory_space<vmem>>, vector<1x32x64xf32>
    %69 = vector.shape_cast %68 : vector<1x32x64xf32> to vector<32x64xf32>
    %cst_37 = arith.constant dense<0.000000e+00> : vector<64x512xf32>
    %70 = tpu.matmul %69, %0, %cst_37 {dimension_numbers = #tpu.dot_dimension_numbers<[0], [0], [1], [1], [0, 1, 1, 1], [], []>} : vector<32x64xf32>, vector<32x512xf32>, vector<64x512xf32> -> vector<64x512xf32>
    %71 = vector.broadcast %1 : vector<1x512xf32> to vector<64x512xf32>
    %72 = arith.addf %70, %71 : vector<64x512xf32>
    %cst_38 = arith.constant dense<0.000000e+00> : vector<64x8xf32>
    %73 = tpu.matmul %72, %2, %cst_38 {dimension_numbers = #tpu.dot_dimension_numbers<[1], [0], [0], [1], [0, 0, 1, 1], [], []>} : vector<64x512xf32>, vector<512x8xf32>, vector<64x8xf32> -> vector<64x8xf32>
    %74 = vector.broadcast %3 : vector<1x8xf32> to vector<64x8xf32>
    %75 = arith.addf %73, %74 : vector<64x8xf32>
    %76 = arith.negf %75 : vector<64x8xf32>
    %77 = math.exp %76 : vector<64x8xf32>
    %cst_39 = arith.constant 1.000000e+00 : f32
    %78 = vector.broadcast %cst_39 : f32 to vector<64x8xf32>
    %79 = arith.addf %78, %77 : vector<64x8xf32>
    %80 = arith.divf %78, %79 : vector<64x8xf32>
    %cst_40 = arith.constant dense<0.000000e+00> : vector<8x512xf32>
    %81 = tpu.matmul %80, %72, %cst_40 {dimension_numbers = #tpu.dot_dimension_numbers<[0], [0], [1], [1], [0, 1, 1, 1], [], []>} : vector<64x8xf32>, vector<64x512xf32>, vector<8x512xf32> -> vector<8x512xf32>
    %cst_41 = arith.constant 1.562500e-02 : f32
    %82 = vector.broadcast %cst_41 : f32 to vector<8x512xf32>
    %83 = arith.mulf %81, %82 : vector<8x512xf32>
    %c5 = arith.constant 5 : index
    %c0_42 = arith.constant 0 : index
    %c0_43 = arith.constant 0 : index
    %84 = vector.load %arg1[%c5, %c0_42, %c0_43] : memref<8x32x64xf32, #tpu.memory_space<vmem>>, vector<1x32x64xf32>
    %85 = vector.shape_cast %84 : vector<1x32x64xf32> to vector<32x64xf32>
    %cst_44 = arith.constant dense<0.000000e+00> : vector<64x512xf32>
    %86 = tpu.matmul %85, %0, %cst_44 {dimension_numbers = #tpu.dot_dimension_numbers<[0], [0], [1], [1], [0, 1, 1, 1], [], []>} : vector<32x64xf32>, vector<32x512xf32>, vector<64x512xf32> -> vector<64x512xf32>
    %87 = vector.broadcast %1 : vector<1x512xf32> to vector<64x512xf32>
    %88 = arith.addf %86, %87 : vector<64x512xf32>
    %cst_45 = arith.constant dense<0.000000e+00> : vector<64x8xf32>
    %89 = tpu.matmul %88, %2, %cst_45 {dimension_numbers = #tpu.dot_dimension_numbers<[1], [0], [0], [1], [0, 0, 1, 1], [], []>} : vector<64x512xf32>, vector<512x8xf32>, vector<64x8xf32> -> vector<64x8xf32>
    %90 = vector.broadcast %3 : vector<1x8xf32> to vector<64x8xf32>
    %91 = arith.addf %89, %90 : vector<64x8xf32>
    %92 = arith.negf %91 : vector<64x8xf32>
    %93 = math.exp %92 : vector<64x8xf32>
    %cst_46 = arith.constant 1.000000e+00 : f32
    %94 = vector.broadcast %cst_46 : f32 to vector<64x8xf32>
    %95 = arith.addf %94, %93 : vector<64x8xf32>
    %96 = arith.divf %94, %95 : vector<64x8xf32>
    %cst_47 = arith.constant dense<0.000000e+00> : vector<8x512xf32>
    %97 = tpu.matmul %96, %88, %cst_47 {dimension_numbers = #tpu.dot_dimension_numbers<[0], [0], [1], [1], [0, 1, 1, 1], [], []>} : vector<64x8xf32>, vector<64x512xf32>, vector<8x512xf32> -> vector<8x512xf32>
    %cst_48 = arith.constant 1.562500e-02 : f32
    %98 = vector.broadcast %cst_48 : f32 to vector<8x512xf32>
    %99 = arith.mulf %97, %98 : vector<8x512xf32>
    %c6 = arith.constant 6 : index
    %c0_49 = arith.constant 0 : index
    %c0_50 = arith.constant 0 : index
    %100 = vector.load %arg1[%c6, %c0_49, %c0_50] : memref<8x32x64xf32, #tpu.memory_space<vmem>>, vector<1x32x64xf32>
    %101 = vector.shape_cast %100 : vector<1x32x64xf32> to vector<32x64xf32>
    %cst_51 = arith.constant dense<0.000000e+00> : vector<64x512xf32>
    %102 = tpu.matmul %101, %0, %cst_51 {dimension_numbers = #tpu.dot_dimension_numbers<[0], [0], [1], [1], [0, 1, 1, 1], [], []>} : vector<32x64xf32>, vector<32x512xf32>, vector<64x512xf32> -> vector<64x512xf32>
    %103 = vector.broadcast %1 : vector<1x512xf32> to vector<64x512xf32>
    %104 = arith.addf %102, %103 : vector<64x512xf32>
    %cst_52 = arith.constant dense<0.000000e+00> : vector<64x8xf32>
    %105 = tpu.matmul %104, %2, %cst_52 {dimension_numbers = #tpu.dot_dimension_numbers<[1], [0], [0], [1], [0, 0, 1, 1], [], []>} : vector<64x512xf32>, vector<512x8xf32>, vector<64x8xf32> -> vector<64x8xf32>
    %106 = vector.broadcast %3 : vector<1x8xf32> to vector<64x8xf32>
    %107 = arith.addf %105, %106 : vector<64x8xf32>
    %108 = arith.negf %107 : vector<64x8xf32>
    %109 = math.exp %108 : vector<64x8xf32>
    %cst_53 = arith.constant 1.000000e+00 : f32
    %110 = vector.broadcast %cst_53 : f32 to vector<64x8xf32>
    %111 = arith.addf %110, %109 : vector<64x8xf32>
    %112 = arith.divf %110, %111 : vector<64x8xf32>
    %cst_54 = arith.constant dense<0.000000e+00> : vector<8x512xf32>
    %113 = tpu.matmul %112, %104, %cst_54 {dimension_numbers = #tpu.dot_dimension_numbers<[0], [0], [1], [1], [0, 1, 1, 1], [], []>} : vector<64x8xf32>, vector<64x512xf32>, vector<8x512xf32> -> vector<8x512xf32>
    %cst_55 = arith.constant 1.562500e-02 : f32
    %114 = vector.broadcast %cst_55 : f32 to vector<8x512xf32>
    %115 = arith.mulf %113, %114 : vector<8x512xf32>
    %c7 = arith.constant 7 : index
    %c0_56 = arith.constant 0 : index
    %c0_57 = arith.constant 0 : index
    %116 = vector.load %arg1[%c7, %c0_56, %c0_57] : memref<8x32x64xf32, #tpu.memory_space<vmem>>, vector<1x32x64xf32>
    %117 = vector.shape_cast %116 : vector<1x32x64xf32> to vector<32x64xf32>
    %cst_58 = arith.constant dense<0.000000e+00> : vector<64x512xf32>
    %118 = tpu.matmul %117, %0, %cst_58 {dimension_numbers = #tpu.dot_dimension_numbers<[0], [0], [1], [1], [0, 1, 1, 1], [], []>} : vector<32x64xf32>, vector<32x512xf32>, vector<64x512xf32> -> vector<64x512xf32>
    %119 = vector.broadcast %1 : vector<1x512xf32> to vector<64x512xf32>
    %120 = arith.addf %118, %119 : vector<64x512xf32>
    %cst_59 = arith.constant dense<0.000000e+00> : vector<64x8xf32>
    %121 = tpu.matmul %120, %2, %cst_59 {dimension_numbers = #tpu.dot_dimension_numbers<[1], [0], [0], [1], [0, 0, 1, 1], [], []>} : vector<64x512xf32>, vector<512x8xf32>, vector<64x8xf32> -> vector<64x8xf32>
    %122 = vector.broadcast %3 : vector<1x8xf32> to vector<64x8xf32>
    %123 = arith.addf %121, %122 : vector<64x8xf32>
    %124 = arith.negf %123 : vector<64x8xf32>
    %125 = math.exp %124 : vector<64x8xf32>
    %cst_60 = arith.constant 1.000000e+00 : f32
    %126 = vector.broadcast %cst_60 : f32 to vector<64x8xf32>
    %127 = arith.addf %126, %125 : vector<64x8xf32>
    %128 = arith.divf %126, %127 : vector<64x8xf32>
    %cst_61 = arith.constant dense<0.000000e+00> : vector<8x512xf32>
    %129 = tpu.matmul %128, %120, %cst_61 {dimension_numbers = #tpu.dot_dimension_numbers<[0], [0], [1], [1], [0, 1, 1, 1], [], []>} : vector<64x8xf32>, vector<64x512xf32>, vector<8x512xf32> -> vector<8x512xf32>
    %cst_62 = arith.constant 1.562500e-02 : f32
    %130 = vector.broadcast %cst_62 : f32 to vector<8x512xf32>
    %131 = arith.mulf %129, %130 : vector<8x512xf32>
    %132 = vector.extract_strided_slice %19 {offsets = [0, 0], sizes = [1, 512], strides = [1, 1]} : vector<8x512xf32> to vector<1x512xf32>
    %133 = vector.extract_strided_slice %35 {offsets = [0, 0], sizes = [1, 512], strides = [1, 1]} : vector<8x512xf32> to vector<1x512xf32>
    %134 = vector.extract_strided_slice %51 {offsets = [0, 0], sizes = [1, 512], strides = [1, 1]} : vector<8x512xf32> to vector<1x512xf32>
    %135 = vector.extract_strided_slice %67 {offsets = [0, 0], sizes = [1, 512], strides = [1, 1]} : vector<8x512xf32> to vector<1x512xf32>
    %136 = vector.extract_strided_slice %83 {offsets = [0, 0], sizes = [1, 512], strides = [1, 1]} : vector<8x512xf32> to vector<1x512xf32>
    %137 = vector.extract_strided_slice %99 {offsets = [0, 0], sizes = [1, 512], strides = [1, 1]} : vector<8x512xf32> to vector<1x512xf32>
    %138 = vector.extract_strided_slice %115 {offsets = [0, 0], sizes = [1, 512], strides = [1, 1]} : vector<8x512xf32> to vector<1x512xf32>
    %139 = vector.extract_strided_slice %131 {offsets = [0, 0], sizes = [1, 512], strides = [1, 1]} : vector<8x512xf32> to vector<1x512xf32>
    %140 = tpu.concatenate %132, %133, %134, %135, %136, %137, %138, %139 in 0 : vector<1x512xf32>, vector<1x512xf32>, vector<1x512xf32>, vector<1x512xf32>, vector<1x512xf32>, vector<1x512xf32>, vector<1x512xf32>, vector<1x512xf32> -> vector<8x512xf32>
    %c0_63 = arith.constant 0 : index
    %c0_64 = arith.constant 0 : index
    %c0_65 = arith.constant 0 : index
    %141 = vector.load %arg6[%c0_63, %c0_64, %c0_65] : memref<8x512x64xf32, #tpu.memory_space<vmem>>, vector<1x512x64xf32>
    %142 = vector.shape_cast %141 : vector<1x512x64xf32> to vector<512x64xf32>
    %cst_66 = arith.constant dense<0.000000e+00> : vector<8x64xf32>
    %143 = tpu.matmul %140, %142, %cst_66 {dimension_numbers = #tpu.dot_dimension_numbers<[1], [0], [0], [1], [0, 0, 1, 1], [], []>} : vector<8x512xf32>, vector<512x64xf32>, vector<8x64xf32> -> vector<8x64xf32>
    %c0_67 = arith.constant 0 : index
    %c0_68 = arith.constant 0 : index
    %144 = vector.load %arg7[%c0_67, %c0_68] : memref<8x64xf32, #tpu.memory_space<vmem>>, vector<1x64xf32>
    %145 = vector.broadcast %144 : vector<1x64xf32> to vector<8x64xf32>
    %146 = arith.addf %143, %145 : vector<8x64xf32>
    %147 = vector.extract_strided_slice %19 {offsets = [1, 0], sizes = [1, 512], strides = [1, 1]} : vector<8x512xf32> to vector<1x512xf32>
    %148 = vector.extract_strided_slice %35 {offsets = [1, 0], sizes = [1, 512], strides = [1, 1]} : vector<8x512xf32> to vector<1x512xf32>
    %149 = vector.extract_strided_slice %51 {offsets = [1, 0], sizes = [1, 512], strides = [1, 1]} : vector<8x512xf32> to vector<1x512xf32>
    %150 = vector.extract_strided_slice %67 {offsets = [1, 0], sizes = [1, 512], strides = [1, 1]} : vector<8x512xf32> to vector<1x512xf32>
    %151 = vector.extract_strided_slice %83 {offsets = [1, 0], sizes = [1, 512], strides = [1, 1]} : vector<8x512xf32> to vector<1x512xf32>
    %152 = vector.extract_strided_slice %99 {offsets = [1, 0], sizes = [1, 512], strides = [1, 1]} : vector<8x512xf32> to vector<1x512xf32>
    %153 = vector.extract_strided_slice %115 {offsets = [1, 0], sizes = [1, 512], strides = [1, 1]} : vector<8x512xf32> to vector<1x512xf32>
    %154 = vector.extract_strided_slice %131 {offsets = [1, 0], sizes = [1, 512], strides = [1, 1]} : vector<8x512xf32> to vector<1x512xf32>
    %155 = tpu.concatenate %147, %148, %149, %150, %151, %152, %153, %154 in 0 : vector<1x512xf32>, vector<1x512xf32>, vector<1x512xf32>, vector<1x512xf32>, vector<1x512xf32>, vector<1x512xf32>, vector<1x512xf32>, vector<1x512xf32> -> vector<8x512xf32>
    %c1_69 = arith.constant 1 : index
    %c0_70 = arith.constant 0 : index
    %c0_71 = arith.constant 0 : index
    %156 = vector.load %arg6[%c1_69, %c0_70, %c0_71] : memref<8x512x64xf32, #tpu.memory_space<vmem>>, vector<1x512x64xf32>
    %157 = vector.shape_cast %156 : vector<1x512x64xf32> to vector<512x64xf32>
    %cst_72 = arith.constant dense<0.000000e+00> : vector<8x64xf32>
    %158 = tpu.matmul %155, %157, %cst_72 {dimension_numbers = #tpu.dot_dimension_numbers<[1], [0], [0], [1], [0, 0, 1, 1], [], []>} : vector<8x512xf32>, vector<512x64xf32>, vector<8x64xf32> -> vector<8x64xf32>
    %c1_73 = arith.constant 1 : index
    %c0_74 = arith.constant 0 : index
    %159 = vector.load %arg7[%c1_73, %c0_74] : memref<8x64xf32, #tpu.memory_space<vmem>>, vector<1x64xf32>
    %160 = vector.broadcast %159 : vector<1x64xf32> to vector<8x64xf32>
    %161 = arith.addf %158, %160 : vector<8x64xf32>
    %162 = vector.extract_strided_slice %19 {offsets = [2, 0], sizes = [1, 512], strides = [1, 1]} : vector<8x512xf32> to vector<1x512xf32>
    %163 = vector.extract_strided_slice %35 {offsets = [2, 0], sizes = [1, 512], strides = [1, 1]} : vector<8x512xf32> to vector<1x512xf32>
    %164 = vector.extract_strided_slice %51 {offsets = [2, 0], sizes = [1, 512], strides = [1, 1]} : vector<8x512xf32> to vector<1x512xf32>
    %165 = vector.extract_strided_slice %67 {offsets = [2, 0], sizes = [1, 512], strides = [1, 1]} : vector<8x512xf32> to vector<1x512xf32>
    %166 = vector.extract_strided_slice %83 {offsets = [2, 0], sizes = [1, 512], strides = [1, 1]} : vector<8x512xf32> to vector<1x512xf32>
    %167 = vector.extract_strided_slice %99 {offsets = [2, 0], sizes = [1, 512], strides = [1, 1]} : vector<8x512xf32> to vector<1x512xf32>
    %168 = vector.extract_strided_slice %115 {offsets = [2, 0], sizes = [1, 512], strides = [1, 1]} : vector<8x512xf32> to vector<1x512xf32>
    %169 = vector.extract_strided_slice %131 {offsets = [2, 0], sizes = [1, 512], strides = [1, 1]} : vector<8x512xf32> to vector<1x512xf32>
    %170 = tpu.concatenate %162, %163, %164, %165, %166, %167, %168, %169 in 0 : vector<1x512xf32>, vector<1x512xf32>, vector<1x512xf32>, vector<1x512xf32>, vector<1x512xf32>, vector<1x512xf32>, vector<1x512xf32>, vector<1x512xf32> -> vector<8x512xf32>
    %c2_75 = arith.constant 2 : index
    %c0_76 = arith.constant 0 : index
    %c0_77 = arith.constant 0 : index
    %171 = vector.load %arg6[%c2_75, %c0_76, %c0_77] : memref<8x512x64xf32, #tpu.memory_space<vmem>>, vector<1x512x64xf32>
    %172 = vector.shape_cast %171 : vector<1x512x64xf32> to vector<512x64xf32>
    %cst_78 = arith.constant dense<0.000000e+00> : vector<8x64xf32>
    %173 = tpu.matmul %170, %172, %cst_78 {dimension_numbers = #tpu.dot_dimension_numbers<[1], [0], [0], [1], [0, 0, 1, 1], [], []>} : vector<8x512xf32>, vector<512x64xf32>, vector<8x64xf32> -> vector<8x64xf32>
    %c2_79 = arith.constant 2 : index
    %c0_80 = arith.constant 0 : index
    %174 = vector.load %arg7[%c2_79, %c0_80] : memref<8x64xf32, #tpu.memory_space<vmem>>, vector<1x64xf32>
    %175 = vector.broadcast %174 : vector<1x64xf32> to vector<8x64xf32>
    %176 = arith.addf %173, %175 : vector<8x64xf32>
    %177 = vector.extract_strided_slice %19 {offsets = [3, 0], sizes = [1, 512], strides = [1, 1]} : vector<8x512xf32> to vector<1x512xf32>
    %178 = vector.extract_strided_slice %35 {offsets = [3, 0], sizes = [1, 512], strides = [1, 1]} : vector<8x512xf32> to vector<1x512xf32>
    %179 = vector.extract_strided_slice %51 {offsets = [3, 0], sizes = [1, 512], strides = [1, 1]} : vector<8x512xf32> to vector<1x512xf32>
    %180 = vector.extract_strided_slice %67 {offsets = [3, 0], sizes = [1, 512], strides = [1, 1]} : vector<8x512xf32> to vector<1x512xf32>
    %181 = vector.extract_strided_slice %83 {offsets = [3, 0], sizes = [1, 512], strides = [1, 1]} : vector<8x512xf32> to vector<1x512xf32>
    %182 = vector.extract_strided_slice %99 {offsets = [3, 0], sizes = [1, 512], strides = [1, 1]} : vector<8x512xf32> to vector<1x512xf32>
    %183 = vector.extract_strided_slice %115 {offsets = [3, 0], sizes = [1, 512], strides = [1, 1]} : vector<8x512xf32> to vector<1x512xf32>
    %184 = vector.extract_strided_slice %131 {offsets = [3, 0], sizes = [1, 512], strides = [1, 1]} : vector<8x512xf32> to vector<1x512xf32>
    %185 = tpu.concatenate %177, %178, %179, %180, %181, %182, %183, %184 in 0 : vector<1x512xf32>, vector<1x512xf32>, vector<1x512xf32>, vector<1x512xf32>, vector<1x512xf32>, vector<1x512xf32>, vector<1x512xf32>, vector<1x512xf32> -> vector<8x512xf32>
    %c3_81 = arith.constant 3 : index
    %c0_82 = arith.constant 0 : index
    %c0_83 = arith.constant 0 : index
    %186 = vector.load %arg6[%c3_81, %c0_82, %c0_83] : memref<8x512x64xf32, #tpu.memory_space<vmem>>, vector<1x512x64xf32>
    %187 = vector.shape_cast %186 : vector<1x512x64xf32> to vector<512x64xf32>
    %cst_84 = arith.constant dense<0.000000e+00> : vector<8x64xf32>
    %188 = tpu.matmul %185, %187, %cst_84 {dimension_numbers = #tpu.dot_dimension_numbers<[1], [0], [0], [1], [0, 0, 1, 1], [], []>} : vector<8x512xf32>, vector<512x64xf32>, vector<8x64xf32> -> vector<8x64xf32>
    %c3_85 = arith.constant 3 : index
    %c0_86 = arith.constant 0 : index
    %189 = vector.load %arg7[%c3_85, %c0_86] : memref<8x64xf32, #tpu.memory_space<vmem>>, vector<1x64xf32>
    %190 = vector.broadcast %189 : vector<1x64xf32> to vector<8x64xf32>
    %191 = arith.addf %188, %190 : vector<8x64xf32>
    %192 = vector.extract_strided_slice %19 {offsets = [4, 0], sizes = [1, 512], strides = [1, 1]} : vector<8x512xf32> to vector<1x512xf32>
    %193 = vector.extract_strided_slice %35 {offsets = [4, 0], sizes = [1, 512], strides = [1, 1]} : vector<8x512xf32> to vector<1x512xf32>
    %194 = vector.extract_strided_slice %51 {offsets = [4, 0], sizes = [1, 512], strides = [1, 1]} : vector<8x512xf32> to vector<1x512xf32>
    %195 = vector.extract_strided_slice %67 {offsets = [4, 0], sizes = [1, 512], strides = [1, 1]} : vector<8x512xf32> to vector<1x512xf32>
    %196 = vector.extract_strided_slice %83 {offsets = [4, 0], sizes = [1, 512], strides = [1, 1]} : vector<8x512xf32> to vector<1x512xf32>
    %197 = vector.extract_strided_slice %99 {offsets = [4, 0], sizes = [1, 512], strides = [1, 1]} : vector<8x512xf32> to vector<1x512xf32>
    %198 = vector.extract_strided_slice %115 {offsets = [4, 0], sizes = [1, 512], strides = [1, 1]} : vector<8x512xf32> to vector<1x512xf32>
    %199 = vector.extract_strided_slice %131 {offsets = [4, 0], sizes = [1, 512], strides = [1, 1]} : vector<8x512xf32> to vector<1x512xf32>
    %200 = tpu.concatenate %192, %193, %194, %195, %196, %197, %198, %199 in 0 : vector<1x512xf32>, vector<1x512xf32>, vector<1x512xf32>, vector<1x512xf32>, vector<1x512xf32>, vector<1x512xf32>, vector<1x512xf32>, vector<1x512xf32> -> vector<8x512xf32>
    %c4_87 = arith.constant 4 : index
    %c0_88 = arith.constant 0 : index
    %c0_89 = arith.constant 0 : index
    %201 = vector.load %arg6[%c4_87, %c0_88, %c0_89] : memref<8x512x64xf32, #tpu.memory_space<vmem>>, vector<1x512x64xf32>
    %202 = vector.shape_cast %201 : vector<1x512x64xf32> to vector<512x64xf32>
    %cst_90 = arith.constant dense<0.000000e+00> : vector<8x64xf32>
    %203 = tpu.matmul %200, %202, %cst_90 {dimension_numbers = #tpu.dot_dimension_numbers<[1], [0], [0], [1], [0, 0, 1, 1], [], []>} : vector<8x512xf32>, vector<512x64xf32>, vector<8x64xf32> -> vector<8x64xf32>
    %c4_91 = arith.constant 4 : index
    %c0_92 = arith.constant 0 : index
    %204 = vector.load %arg7[%c4_91, %c0_92] : memref<8x64xf32, #tpu.memory_space<vmem>>, vector<1x64xf32>
    %205 = vector.broadcast %204 : vector<1x64xf32> to vector<8x64xf32>
    %206 = arith.addf %203, %205 : vector<8x64xf32>
    %207 = vector.extract_strided_slice %19 {offsets = [5, 0], sizes = [1, 512], strides = [1, 1]} : vector<8x512xf32> to vector<1x512xf32>
    %208 = vector.extract_strided_slice %35 {offsets = [5, 0], sizes = [1, 512], strides = [1, 1]} : vector<8x512xf32> to vector<1x512xf32>
    %209 = vector.extract_strided_slice %51 {offsets = [5, 0], sizes = [1, 512], strides = [1, 1]} : vector<8x512xf32> to vector<1x512xf32>
    %210 = vector.extract_strided_slice %67 {offsets = [5, 0], sizes = [1, 512], strides = [1, 1]} : vector<8x512xf32> to vector<1x512xf32>
    %211 = vector.extract_strided_slice %83 {offsets = [5, 0], sizes = [1, 512], strides = [1, 1]} : vector<8x512xf32> to vector<1x512xf32>
    %212 = vector.extract_strided_slice %99 {offsets = [5, 0], sizes = [1, 512], strides = [1, 1]} : vector<8x512xf32> to vector<1x512xf32>
    %213 = vector.extract_strided_slice %115 {offsets = [5, 0], sizes = [1, 512], strides = [1, 1]} : vector<8x512xf32> to vector<1x512xf32>
    %214 = vector.extract_strided_slice %131 {offsets = [5, 0], sizes = [1, 512], strides = [1, 1]} : vector<8x512xf32> to vector<1x512xf32>
    %215 = tpu.concatenate %207, %208, %209, %210, %211, %212, %213, %214 in 0 : vector<1x512xf32>, vector<1x512xf32>, vector<1x512xf32>, vector<1x512xf32>, vector<1x512xf32>, vector<1x512xf32>, vector<1x512xf32>, vector<1x512xf32> -> vector<8x512xf32>
    %c5_93 = arith.constant 5 : index
    %c0_94 = arith.constant 0 : index
    %c0_95 = arith.constant 0 : index
    %216 = vector.load %arg6[%c5_93, %c0_94, %c0_95] : memref<8x512x64xf32, #tpu.memory_space<vmem>>, vector<1x512x64xf32>
    %217 = vector.shape_cast %216 : vector<1x512x64xf32> to vector<512x64xf32>
    %cst_96 = arith.constant dense<0.000000e+00> : vector<8x64xf32>
    %218 = tpu.matmul %215, %217, %cst_96 {dimension_numbers = #tpu.dot_dimension_numbers<[1], [0], [0], [1], [0, 0, 1, 1], [], []>} : vector<8x512xf32>, vector<512x64xf32>, vector<8x64xf32> -> vector<8x64xf32>
    %c5_97 = arith.constant 5 : index
    %c0_98 = arith.constant 0 : index
    %219 = vector.load %arg7[%c5_97, %c0_98] : memref<8x64xf32, #tpu.memory_space<vmem>>, vector<1x64xf32>
    %220 = vector.broadcast %219 : vector<1x64xf32> to vector<8x64xf32>
    %221 = arith.addf %218, %220 : vector<8x64xf32>
    %222 = vector.extract_strided_slice %19 {offsets = [6, 0], sizes = [1, 512], strides = [1, 1]} : vector<8x512xf32> to vector<1x512xf32>
    %223 = vector.extract_strided_slice %35 {offsets = [6, 0], sizes = [1, 512], strides = [1, 1]} : vector<8x512xf32> to vector<1x512xf32>
    %224 = vector.extract_strided_slice %51 {offsets = [6, 0], sizes = [1, 512], strides = [1, 1]} : vector<8x512xf32> to vector<1x512xf32>
    %225 = vector.extract_strided_slice %67 {offsets = [6, 0], sizes = [1, 512], strides = [1, 1]} : vector<8x512xf32> to vector<1x512xf32>
    %226 = vector.extract_strided_slice %83 {offsets = [6, 0], sizes = [1, 512], strides = [1, 1]} : vector<8x512xf32> to vector<1x512xf32>
    %227 = vector.extract_strided_slice %99 {offsets = [6, 0], sizes = [1, 512], strides = [1, 1]} : vector<8x512xf32> to vector<1x512xf32>
    %228 = vector.extract_strided_slice %115 {offsets = [6, 0], sizes = [1, 512], strides = [1, 1]} : vector<8x512xf32> to vector<1x512xf32>
    %229 = vector.extract_strided_slice %131 {offsets = [6, 0], sizes = [1, 512], strides = [1, 1]} : vector<8x512xf32> to vector<1x512xf32>
    %230 = tpu.concatenate %222, %223, %224, %225, %226, %227, %228, %229 in 0 : vector<1x512xf32>, vector<1x512xf32>, vector<1x512xf32>, vector<1x512xf32>, vector<1x512xf32>, vector<1x512xf32>, vector<1x512xf32>, vector<1x512xf32> -> vector<8x512xf32>
    %c6_99 = arith.constant 6 : index
    %c0_100 = arith.constant 0 : index
    %c0_101 = arith.constant 0 : index
    %231 = vector.load %arg6[%c6_99, %c0_100, %c0_101] : memref<8x512x64xf32, #tpu.memory_space<vmem>>, vector<1x512x64xf32>
    %232 = vector.shape_cast %231 : vector<1x512x64xf32> to vector<512x64xf32>
    %cst_102 = arith.constant dense<0.000000e+00> : vector<8x64xf32>
    %233 = tpu.matmul %230, %232, %cst_102 {dimension_numbers = #tpu.dot_dimension_numbers<[1], [0], [0], [1], [0, 0, 1, 1], [], []>} : vector<8x512xf32>, vector<512x64xf32>, vector<8x64xf32> -> vector<8x64xf32>
    %c6_103 = arith.constant 6 : index
    %c0_104 = arith.constant 0 : index
    %234 = vector.load %arg7[%c6_103, %c0_104] : memref<8x64xf32, #tpu.memory_space<vmem>>, vector<1x64xf32>
    %235 = vector.broadcast %234 : vector<1x64xf32> to vector<8x64xf32>
    %236 = arith.addf %233, %235 : vector<8x64xf32>
    %237 = vector.extract_strided_slice %19 {offsets = [7, 0], sizes = [1, 512], strides = [1, 1]} : vector<8x512xf32> to vector<1x512xf32>
    %238 = vector.extract_strided_slice %35 {offsets = [7, 0], sizes = [1, 512], strides = [1, 1]} : vector<8x512xf32> to vector<1x512xf32>
    %239 = vector.extract_strided_slice %51 {offsets = [7, 0], sizes = [1, 512], strides = [1, 1]} : vector<8x512xf32> to vector<1x512xf32>
    %240 = vector.extract_strided_slice %67 {offsets = [7, 0], sizes = [1, 512], strides = [1, 1]} : vector<8x512xf32> to vector<1x512xf32>
    %241 = vector.extract_strided_slice %83 {offsets = [7, 0], sizes = [1, 512], strides = [1, 1]} : vector<8x512xf32> to vector<1x512xf32>
    %242 = vector.extract_strided_slice %99 {offsets = [7, 0], sizes = [1, 512], strides = [1, 1]} : vector<8x512xf32> to vector<1x512xf32>
    %243 = vector.extract_strided_slice %115 {offsets = [7, 0], sizes = [1, 512], strides = [1, 1]} : vector<8x512xf32> to vector<1x512xf32>
    %244 = vector.extract_strided_slice %131 {offsets = [7, 0], sizes = [1, 512], strides = [1, 1]} : vector<8x512xf32> to vector<1x512xf32>
    %245 = tpu.concatenate %237, %238, %239, %240, %241, %242, %243, %244 in 0 : vector<1x512xf32>, vector<1x512xf32>, vector<1x512xf32>, vector<1x512xf32>, vector<1x512xf32>, vector<1x512xf32>, vector<1x512xf32>, vector<1x512xf32> -> vector<8x512xf32>
    %c7_105 = arith.constant 7 : index
    %c0_106 = arith.constant 0 : index
    %c0_107 = arith.constant 0 : index
    %246 = vector.load %arg6[%c7_105, %c0_106, %c0_107] : memref<8x512x64xf32, #tpu.memory_space<vmem>>, vector<1x512x64xf32>
    %247 = vector.shape_cast %246 : vector<1x512x64xf32> to vector<512x64xf32>
    %cst_108 = arith.constant dense<0.000000e+00> : vector<8x64xf32>
    %248 = tpu.matmul %245, %247, %cst_108 {dimension_numbers = #tpu.dot_dimension_numbers<[1], [0], [0], [1], [0, 0, 1, 1], [], []>} : vector<8x512xf32>, vector<512x64xf32>, vector<8x64xf32> -> vector<8x64xf32>
    %c7_109 = arith.constant 7 : index
    %c0_110 = arith.constant 0 : index
    %249 = vector.load %arg7[%c7_109, %c0_110] : memref<8x64xf32, #tpu.memory_space<vmem>>, vector<1x64xf32>
    %250 = vector.broadcast %249 : vector<1x64xf32> to vector<8x64xf32>
    %251 = arith.addf %248, %250 : vector<8x64xf32>
    %252 = tpu.concatenate %146, %161, %176, %191, %206, %221, %236, %251 in 1 : vector<8x64xf32>, vector<8x64xf32>, vector<8x64xf32>, vector<8x64xf32>, vector<8x64xf32>, vector<8x64xf32>, vector<8x64xf32>, vector<8x64xf32> -> vector<8x512xf32>
    %253 = arith.mulf %252, %252 : vector<8x512xf32>
    %cst_111 = arith.constant dense<0.000000e+00> : vector<8xf32>
    %254 = vector.multi_reduction <add>, %253, %cst_111 [1] : vector<8x512xf32> to vector<8xf32>
    %255 = vector.shape_cast %254 : vector<8xf32> to vector<8x1xf32>
    %256 = math.sqrt %255 : vector<8x1xf32>
    %cst_112 = arith.constant 9.99999997E-7 : f32
    %257 = vector.broadcast %cst_112 : f32 to vector<8x1xf32>
    %258 = arith.maximumf %256, %257 : vector<8x1xf32>
    %259 = vector.broadcast %258 : vector<8x1xf32> to vector<8x512xf32>
    %260 = arith.divf %252, %259 : vector<8x512xf32>
    %c0_113 = arith.constant 0 : index
    %c0_114 = arith.constant 0 : index
    %261 = vector.load %arg8[%c0_113, %c0_114] : memref<8x512xf32, #tpu.memory_space<vmem>>, vector<8x512xf32>
    tpu.vector_store %arg8[%c0_113, %c0_114], %260 {strides = array<i32>} : memref<8x512xf32, #tpu.memory_space<vmem>>, vector<8x512xf32>,
    return
  }
  func.func @transform_0(%arg0: i32) -> (i32, i32, i32) {
    %c0_i32 = arith.constant 0 : i32
    %c0_i32_0 = arith.constant 0 : i32
    %c0_i32_1 = arith.constant 0 : i32
    return %arg0, %c0_i32, %c0_i32_0 : i32, i32, i32
  }
  func.func @transform_1(%arg0: i32) -> (i32, i32) {
    %c0_i32 = arith.constant 0 : i32
    %c0_i32_0 = arith.constant 0 : i32
    %c0_i32_1 = arith.constant 0 : i32
    return %c0_i32, %c0_i32_0 : i32, i32
  }
  func.func @transform_2(%arg0: i32) -> (i32, i32) {
    %c0_i32 = arith.constant 0 : i32
    %c0_i32_0 = arith.constant 0 : i32
    %c0_i32_1 = arith.constant 0 : i32
    return %c0_i32, %c0_i32_0 : i32, i32
  }
  func.func @transform_3(%arg0: i32) -> (i32, i32) {
    %c0_i32 = arith.constant 0 : i32
    %c0_i32_0 = arith.constant 0 : i32
    %c0_i32_1 = arith.constant 0 : i32
    return %c0_i32, %c0_i32_0 : i32, i32
  }
  func.func @transform_4(%arg0: i32) -> (i32, i32) {
    %c0_i32 = arith.constant 0 : i32
    %c0_i32_0 = arith.constant 0 : i32
    %c0_i32_1 = arith.constant 0 : i32
    return %c0_i32, %c0_i32_0 : i32, i32
  }
  func.func @transform_5(%arg0: i32) -> (i32, i32, i32) {
    %c0_i32 = arith.constant 0 : i32
    %c0_i32_0 = arith.constant 0 : i32
    %c0_i32_1 = arith.constant 0 : i32
    %c0_i32_2 = arith.constant 0 : i32
    return %c0_i32, %c0_i32_0, %c0_i32_1 : i32, i32, i32
  }
  func.func @transform_6(%arg0: i32) -> (i32, i32) {
    %c0_i32 = arith.constant 0 : i32
    %c0_i32_0 = arith.constant 0 : i32
    %c0_i32_1 = arith.constant 0 : i32
    return %c0_i32, %c0_i32_0 : i32, i32
  }
  func.func @transform_7(%arg0: i32) -> (i32, i32) {
    %c0_i32 = arith.constant 0 : i32
    %c0_i32_0 = arith.constant 0 : i32
    return %arg0, %c0_i32 : i32, i32
  }
}

</mosaic_0001>

<llo_original>
// kernel: tpu_custom_call.1
$region0: #{tpu_custom_call.1}
  #allocation0 [shape = 'u32[]', space=smem, size = 0x4, offset = 0x4, fixed_abs, tag = 'smem constant byte address 0x4 - core index']
  #allocation1 [shape = 'u32[144,128]{1,0:T(1,128)}', space=vmem, size = 0x12000, scoped, tag = 'internal scratch']
  %s0 = inlined_call_operand.vmem [shape: f32[16,32,64], index: 0, kind: input, shape index: {}]
  %s1 = inlined_call_operand.vmem [shape: f32[32,512], index: 1, kind: input, shape index: {}]
  %s2 = inlined_call_operand.vmem [shape: f32[1,512], index: 2, kind: input, shape index: {}]
  %s3 = inlined_call_operand.vmem [shape: f32[512,8], index: 3, kind: input, shape index: {}]
  %s4 = inlined_call_operand.vmem [shape: f32[1,8], index: 4, kind: input, shape index: {}]
  %s5 = inlined_call_operand.vmem [shape: f32[8,512,64], index: 5, kind: input, shape index: {}]
  %s6 = inlined_call_operand.vmem [shape: f32[8,64], index: 6, kind: input, shape index: {}]
  %s7 = inlined_call_operand.hbm [shape: f32[16,512], index: 7, kind: output, shape index: {}]
  %s8 = sld [smem:[#allocation0]]
  $region61: #{tpu_custom_call.1} parent=0
    _
  %s10 = ssub.s32 1, %s8
  %s11 = scalar_select 0, %s10, %s8
  $region1: #{tpu_custom_call.1} parent=0
    #allocation2 [shape = 'u8[32768]{0}', space=vmem, size = 0x8000, scoped, tag = 'output window, operand 0']
    #allocation3 [shape = 's32[2]{0}', space=sflag, size = 0x8, scoped, tag = 'scoped memory for tpu_custom_call.1']
    %12 = vsyncpa [#allocation3], 0
    %s13 = scalar_lea.sflag [#allocation3], 1
    %14 = vsyncpa %s13, 0
    loop: start=0, step=1, limit=4
    $region2: #{tpu_custom_call.1} parent=1 // loop_pre_header
      _
    $region3: #{tpu_custom_call.1} parent=1 // loop_header
      %s16 = sphi 0, %s20
      %p17 = scmp.ge.s32.totalorder %s16, 4
      %s26 = sphi 0, %s28
      %s29 = sphi 0, %s26
      %s30 = sphi 0, %s29
      %s46 = sphi 0, %s30
      %s50 = sphi 0, %s50
      %s52 = sphi 0, %s50
      %s53 = sphi 0, %s52
      %s67 = sphi 0, %s53
      %s71 = sphi 0, %s71
      %s73 = sphi 0, %s71
      %s74 = sphi 0, %s73
      %s88 = sphi 0, %s74
      %s92 = sphi 0, %s92
      %s94 = sphi 0, %s92
      %s95 = sphi 0, %s94
      %s109 = sphi 0, %s95
      %s113 = sphi 0, %s113
      %s115 = sphi 0, %s113
      %s116 = sphi 0, %s115
      %s130 = sphi 0, %s116
      %s134 = sphi 0, %s134
      %s136 = sphi 0, %s134
      %s137 = sphi 0, %s136
      %s151 = sphi 0, %s137
      %s155 = sphi 0, %s155
      %s157 = sphi 0, %s155
      %s158 = sphi 0, %s157
      %s172 = sphi 0, %s158
      %s178 = sphi 0, %s180
      %s181 = sphi 0, %s178
      %s182 = sphi 0, %s181
      %s198 = sphi 0, %s182
    $region4: #{tpu_custom_call.1} parent=1 // loop_header_branch
      %19 = sbr.rel (%p17) target = $region8
    $region5: #{tpu_custom_call.1} parent=1 // loop_body
      %s21 = ssub.s32 %s16, 1
      %s22 = ssub.s32 %s16, 2
      %s23 = sadd.s32 %s16, 1
      %s24 = ssub.s32 %s16, %s23
      %p25 = scmp.eq.s32.totalorder %s24, 0
      %s27 = sadd.s32 %s26, 1
      %s28 = scalar_select %p25, %s26, %s27
      %p31 = pneg %p25
      %p32 = scmp.eq.s32.totalorder %s16, 1
      %p33 = por %p31, %p32
      %p34 = scmp.ne.s32.totalorder %s26, %s29
      %p35 = scmp.eq.s32.totalorder %s16, 0
      %p36 = por %p34, %p35
      %p37 = scmp.ne.s32.totalorder %s26, %s29
      %p38 = scmp.eq.s32.totalorder %s21, 1
      %p39 = por %p37, %p38
      %p40 = scmp.ne.s32.totalorder %s29, %s30
      %p41 = scmp.eq.s32.totalorder %s21, 0
      %p42 = por %p40, %p41
      %p43 = scmp.ne.s32.totalorder %s29, %s30
      %p44 = scmp.eq.s32.totalorder %s22, 1
      %p45 = por %p43, %p44
      %p47 = scmp.ne.s32.totalorder %s30, %s46
      %p48 = scmp.eq.s32.totalorder %s22, 0
      %p49 = por %p47, %p48
      %s51 = sadd.s32 %s50, 1
      %p54 = scmp.eq.s32.totalorder %s16, 1
      %p55 = scmp.ne.s32.totalorder %s50, %s52
      %p56 = scmp.eq.s32.totalorder %s16, 0
      %p57 = por %p55, %p56
      %p58 = scmp.ne.s32.totalorder %s50, %s52
      %p59 = scmp.eq.s32.totalorder %s21, 1
      %p60 = por %p58, %p59
      %p61 = scmp.ne.s32.totalorder %s52, %s53
      %p62 = scmp.eq.s32.totalorder %s21, 0
      %p63 = por %p61, %p62
      %p64 = scmp.ne.s32.totalorder %s52, %s53
      %p65 = scmp.eq.s32.totalorder %s22, 1
      %p66 = por %p64, %p65
      %p68 = scmp.ne.s32.totalorder %s53, %s67
      %p69 = scmp.eq.s32.totalorder %s22, 0
      %p70 = por %p68, %p69
      %s72 = sadd.s32 %s71, 1
      %p75 = scmp.eq.s32.totalorder %s16, 1
      %p76 = scmp.ne.s32.totalorder %s71, %s73
      %p77 = scmp.eq.s32.totalorder %s16, 0
      %p78 = por %p76, %p77
      %p79 = scmp.ne.s32.totalorder %s71, %s73
      %p80 = scmp.eq.s32.totalorder %s21, 1
      %p81 = por %p79, %p80
      %p82 = scmp.ne.s32.totalorder %s73, %s74
      %p83 = scmp.eq.s32.totalorder %s21, 0
      %p84 = por %p82, %p83
      %p85 = scmp.ne.s32.totalorder %s73, %s74
      %p86 = scmp.eq.s32.totalorder %s22, 1
      %p87 = por %p85, %p86
      %p89 = scmp.ne.s32.totalorder %s74, %s88
      %p90 = scmp.eq.s32.totalorder %s22, 0
      %p91 = por %p89, %p90
      %s93 = sadd.s32 %s92, 1
      %p96 = scmp.eq.s32.totalorder %s16, 1
      %p97 = scmp.ne.s32.totalorder %s92, %s94
      %p98 = scmp.eq.s32.totalorder %s16, 0
      %p99 = por %p97, %p98
      %p100 = scmp.ne.s32.totalorder %s92, %s94
      %p101 = scmp.eq.s32.totalorder %s21, 1
      %p102 = por %p100, %p101
      %p103 = scmp.ne.s32.totalorder %s94, %s95
      %p104 = scmp.eq.s32.totalorder %s21, 0
      %p105 = por %p103, %p104
      %p106 = scmp.ne.s32.totalorder %s94, %s95
      %p107 = scmp.eq.s32.totalorder %s22, 1
      %p108 = por %p106, %p107
      %p110 = scmp.ne.s32.totalorder %s95, %s109
      %p111 = scmp.eq.s32.totalorder %s22, 0
      %p112 = por %p110, %p111
      %s114 = sadd.s32 %s113, 1
      %p117 = scmp.eq.s32.totalorder %s16, 1
      %p118 = scmp.ne.s32.totalorder %s113, %s115
      %p119 = scmp.eq.s32.totalorder %s16, 0
      %p120 = por %p118, %p119
      %p121 = scmp.ne.s32.totalorder %s113, %s115
      %p122 = scmp.eq.s32.totalorder %s21, 1
      %p123 = por %p121, %p122
      %p124 = scmp.ne.s32.totalorder %s115, %s116
      %p125 = scmp.eq.s32.totalorder %s21, 0
      %p126 = por %p124, %p125
      %p127 = scmp.ne.s32.totalorder %s115, %s116
      %p128 = scmp.eq.s32.totalorder %s22, 1
      %p129 = por %p127, %p128
      %p131 = scmp.ne.s32.totalorder %s116, %s130
      %p132 = scmp.eq.s32.totalorder %s22, 0
      %p133 = por %p131, %p132
      %s135 = sadd.s32 %s134, 1
      %p138 = scmp.eq.s32.totalorder %s16, 1
      %p139 = scmp.ne.s32.totalorder %s134, %s136
      %p140 = scmp.eq.s32.totalorder %s16, 0
      %p141 = por %p139, %p140
      %p142 = scmp.ne.s32.totalorder %s134, %s136
      %p143 = scmp.eq.s32.totalorder %s21, 1
      %p144 = por %p142, %p143
      %p145 = scmp.ne.s32.totalorder %s136, %s137
      %p146 = scmp.eq.s32.totalorder %s21, 0
      %p147 = por %p145, %p146
      %p148 = scmp.ne.s32.totalorder %s136, %s137
      %p149 = scmp.eq.s32.totalorder %s22, 1
      %p150 = por %p148, %p149
      %p152 = scmp.ne.s32.totalorder %s137, %s151
      %p153 = scmp.eq.s32.totalorder %s22, 0
      %p154 = por %p152, %p153
      %s156 = sadd.s32 %s155, 1
      %p159 = scmp.eq.s32.totalorder %s16, 1
      %p160 = scmp.ne.s32.totalorder %s155, %s157
      %p161 = scmp.eq.s32.totalorder %s16, 0
      %p162 = por %p160, %p161
      %p163 = scmp.ne.s32.totalorder %s155, %s157
      %p164 = scmp.eq.s32.totalorder %s21, 1
      %p165 = por %p163, %p164
      %p166 = scmp.ne.s32.totalorder %s157, %s158
      %p167 = scmp.eq.s32.totalorder %s21, 0
      %p168 = por %p166, %p167
      %p169 = scmp.ne.s32.totalorder %s157, %s158
      %p170 = scmp.eq.s32.totalorder %s22, 1
      %p171 = por %p169, %p170
      %p173 = scmp.ne.s32.totalorder %s158, %s172
      %p174 = scmp.eq.s32.totalorder %s22, 0
      %p175 = por %p173, %p174
      %s176 = ssub.s32 %s16, %s23
      %p177 = scmp.eq.s32.totalorder %s176, 0
      %s179 = sadd.s32 %s178, 1
      %s180 = scalar_select %p177, %s178, %s179
      %p183 = pneg %p177
      %p184 = scmp.eq.s32.totalorder %s16, 1
      %p185 = por %p183, %p184
      %p186 = scmp.ne.s32.totalorder %s178, %s181
      %p187 = scmp.eq.s32.totalorder %s16, 0
      %p188 = por %p186, %p187
      %p189 = scmp.ne.s32.totalorder %s178, %s181
      %p190 = scmp.eq.s32.totalorder %s21, 1
      %p191 = por %p189, %p190
      %p192 = scmp.ne.s32.totalorder %s181, %s182
      %p193 = scmp.eq.s32.totalorder %s21, 0
      %p194 = por %p192, %p193
      %p195 = scmp.ne.s32.totalorder %s181, %s182
      %p196 = scmp.eq.s32.totalorder %s22, 1
      %p197 = por %p195, %p196
      %p199 = scmp.ne.s32.totalorder %s182, %s198
      %p200 = scmp.eq.s32.totalorder %s22, 0
      %p201 = por %p199, %p200
      %p202 = scmp.le.s32.totalorder 1, %s16
      %p203 = scmp.lt.s32.totalorder %s16, 3
      %p204 = pnand %p202, %p203
      %p205 = pneg %p204
      // Predicated region
      $region9: #{tpu_custom_call.1} parent=5 // pred_check
        _
      $region10: #{tpu_custom_call.1} parent=5 // pred_check_branch
        %207 = sbr.rel (%p204) target = $region12
      $region11: #{tpu_custom_call.1} parent=5 // pred_region
        %s208 = ssub.s32 %s16, 1
        // Predicated region
        $region13: #{tpu_custom_call.1} parent=11 // pred_check
          %p209 = pneg %p63
        $region14: #{tpu_custom_call.1} parent=11 // pred_check_branch
          %211 = sbr.rel (%p209) target = $region16
        $region15: #{tpu_custom_call.1} parent=11 // pred_region
          _
        $region16: #{tpu_custom_call.1} parent=11 // pred_fallthru
          _
        // Predicated region
        $region17: #{tpu_custom_call.1} parent=11 // pred_check
          %p212 = pneg %p84
        $region18: #{tpu_custom_call.1} parent=11 // pred_check_branch
          %214 = sbr.rel (%p212) target = $region20
        $region19: #{tpu_custom_call.1} parent=11 // pred_region
          _
        $region20: #{tpu_custom_call.1} parent=11 // pred_fallthru
          _
        // Predicated region
        $region21: #{tpu_custom_call.1} parent=11 // pred_check
          %p215 = pneg %p105
        $region22: #{tpu_custom_call.1} parent=11 // pred_check_branch
          %217 = sbr.rel (%p215) target = $region24
        $region23: #{tpu_custom_call.1} parent=11 // pred_region
          _
        $region24: #{tpu_custom_call.1} parent=11 // pred_fallthru
          _
        // Predicated region
        $region25: #{tpu_custom_call.1} parent=11 // pred_check
          %p218 = pneg %p126
        $region26: #{tpu_custom_call.1} parent=11 // pred_check_branch
          %220 = sbr.rel (%p218) target = $region28
        $region27: #{tpu_custom_call.1} parent=11 // pred_region
          _
        $region28: #{tpu_custom_call.1} parent=11 // pred_fallthru
          _
        // Predicated region
        $region29: #{tpu_custom_call.1} parent=11 // pred_check
          %p221 = pneg %p147
        $region30: #{tpu_custom_call.1} parent=11 // pred_check_branch
          %223 = sbr.rel (%p221) target = $region32
        $region31: #{tpu_custom_call.1} parent=11 // pred_region
          _
        $region32: #{tpu_custom_call.1} parent=11 // pred_fallthru
          _
        // Predicated region
        $region33: #{tpu_custom_call.1} parent=11 // pred_check
          %p224 = pneg %p168
        $region34: #{tpu_custom_call.1} parent=11 // pred_check_branch
          %226 = sbr.rel (%p224) target = $region36
        $region35: #{tpu_custom_call.1} parent=11 // pred_region
          _
        $region36: #{tpu_custom_call.1} parent=11 // pred_fallthru
          _
      $region12: #{tpu_custom_call.1} parent=5 // pred_fallthru
        _
      %p227 = scmp.lt.s32.totalorder %s16, 2
      // Predicated region
      $region37: #{tpu_custom_call.1} parent=5 // pred_check
        %p228 = pneg %p227
      $region38: #{tpu_custom_call.1} parent=5 // pred_check_branch
        %230 = sbr.rel (%p228) target = $region40
      $region39: #{tpu_custom_call.1} parent=5 // pred_region
        // Predicated region
        $region41: #{tpu_custom_call.1} parent=39 // pred_check
          %p231 = pneg %p36
        $region42: #{tpu_custom_call.1} parent=39 // pred_check_branch
          %233 = sbr.rel (%p231) target = $region44
        $region43: #{tpu_custom_call.1} parent=39 // pred_region
          %s234 = smul.u32 8, %s16
          %p235 = scmp.lt.s32.totalorder %s234, 15
          %s236 = scalar_select %p235, %s234, 15
          %s237 = smul.addr %s236, 4
          %s238 = smul.addr %s237, 8
          %s239 = scalar_lea.vmem %s0, %s238
          %s240 = smul.u32 8, %s16
        $region44: #{tpu_custom_call.1} parent=39 // pred_fallthru
          _
      $region40: #{tpu_custom_call.1} parent=5 // pred_fallthru
        _
      %p241 = scmp.le.s32.totalorder 1, %s16
      %p242 = scmp.lt.s32.totalorder %s16, 3
      %p243 = pnand %p241, %p242
      %p244 = pneg %p243
      // Predicated region
      $region45: #{tpu_custom_call.1} parent=5 // pred_check
        _
      $region46: #{tpu_custom_call.1} parent=5 // pred_check_branch
        %246 = sbr.rel (%p243) target = $region48
      $region47: #{tpu_custom_call.1} parent=5 // pred_region
        %s247 = ssub.s32 %s16, 1
        %s248 = smul.u32 8, %s21
        %p249 = scmp.lt.s32.totalorder %s248, 15
        %s250 = scalar_select %p249, %s248, 15
        %s251 = smul.addr %s250, 4
        %s252 = smul.addr %s251, 8
        %s253 = scalar_lea.vmem %s0, %s252
        %p254 = pneg %p42
        %p255 = pneg %p39
        %p256 = pneg %p63
        %p257 = pneg %p60
        %p258 = pneg %p84
        %p259 = pneg %p81
        %p260 = pneg %p105
        %p261 = pneg %p102
        %p262 = pneg %p126
        %p263 = pneg %p123
        %p264 = pneg %p147
        %p265 = pneg %p144
        %p266 = pneg %p168
        %p267 = pneg %p165
        %p268 = pneg %p194
        %p269 = pneg %p191
        %s270 = sand.u32 %s181, 1
        %s271 = scalar_lea.sflag [#allocation3], %s270
        %s272 = sand.u32 %s181, 1
        %s273 = smul.addr %s272, 32
        %s274 = scalar_lea.vmem [#allocation2], %s273
        %s275 = smul.u32 8, %s21
        %p276 = scmp.lt.s32.totalorder %s275, 15
        %s277 = scalar_select %p276, %s275, 15
        %s278 = smul.addr %s277, 4
        %s279 = smul.addr %s278, 8
        %s280 = scalar_lea.vmem %s0, %s279
        %s281 = smul.u32 8, %s21
        %v282 = vld [vmem:[%s1] sm:$0xff]
        %v283 = vld [vmem:[%s1 + $0x8] sm:$0xff]
        %v284 = vld [vmem:[%s1 + $0x10] sm:$0xff]
        %v285 = vld [vmem:[%s1 + $0x18] sm:$0xff]
        %v286 = vld [vmem:[%s1 + $0x20] sm:$0xff]
        %v287 = vld [vmem:[%s1 + $0x28] sm:$0xff]
        %v288 = vld [vmem:[%s1 + $0x30] sm:$0xff]
        %v289 = vld [vmem:[%s1 + $0x38] sm:$0xff]
        %v290 = vld [vmem:[%s1 + $0x40] sm:$0xff]
        %v291 = vld [vmem:[%s1 + $0x48] sm:$0xff]
        %v292 = vld [vmem:[%s1 + $0x50] sm:$0xff]
        %v293 = vld [vmem:[%s1 + $0x58] sm:$0xff]
        %v294 = vld [vmem:[%s1 + $0x60] sm:$0xff]
        %v295 = vld [vmem:[%s1 + $0x68] sm:$0xff]
        %v296 = vld [vmem:[%s1 + $0x70] sm:$0xff]
        %v297 = vld [vmem:[%s1 + $0x78] sm:$0xff]
        %v298 = vld [vmem:[%s2] sm:$0xf]
        %v299 = vld [vmem:[%s3] sm:$0xff]
        %v300 = vld [vmem:[%s3 + $0x8] sm:$0xff]
        %v301 = vld [vmem:[%s3 + $0x10] sm:$0xff]
        %v302 = vld [vmem:[%s3 + $0x18] sm:$0xff]
        %v303 = vld [vmem:[%s3 + $0x20] sm:$0xff]
        %v304 = vld [vmem:[%s3 + $0x28] sm:$0xff]
        %v305 = vld [vmem:[%s3 + $0x30] sm:$0xff]
        %v306 = vld [vmem:[%s3 + $0x38] sm:$0xff]
        %v307 = vld [vmem:[%s3 + $0x40] sm:$0xff]
        %v308 = vld [vmem:[%s3 + $0x48] sm:$0xff]
        %v309 = vld [vmem:[%s3 + $0x50] sm:$0xff]
        %v310 = vld [vmem:[%s3 + $0x58] sm:$0xff]
        %v311 = vld [vmem:[%s3 + $0x60] sm:$0xff]
        %v312 = vld [vmem:[%s3 + $0x68] sm:$0xff]
        %v313 = vld [vmem:[%s3 + $0x70] sm:$0xff]
        %v314 = vld [vmem:[%s3 + $0x78] sm:$0xff]
        %v315 = vld [vmem:[%s3 + $0x80] sm:$0xff]
        %v316 = vld [vmem:[%s3 + $0x88] sm:$0xff]
        %v317 = vld [vmem:[%s3 + $0x90] sm:$0xff]
        %v318 = vld [vmem:[%s3 + $0x98] sm:$0xff]
        %v319 = vld [vmem:[%s3 + $0xa0] sm:$0xff]
        %v320 = vld [vmem:[%s3 + $0xa8] sm:$0xff]
        %v321 = vld [vmem:[%s3 + $0xb0] sm:$0xff]
        %v322 = vld [vmem:[%s3 + $0xb8] sm:$0xff]
        %v323 = vld [vmem:[%s3 + $0xc0] sm:$0xff]
        %v324 = vld [vmem:[%s3 + $0xc8] sm:$0xff]
        %v325 = vld [vmem:[%s3 + $0xd0] sm:$0xff]
        %v326 = vld [vmem:[%s3 + $0xd8] sm:$0xff]
        %v327 = vld [vmem:[%s3 + $0xe0] sm:$0xff]
        %v328 = vld [vmem:[%s3 + $0xe8] sm:$0xff]
        %v329 = vld [vmem:[%s3 + $0xf0] sm:$0xff]
        %v330 = vld [vmem:[%s3 + $0xf8] sm:$0xff]
        %v331 = vld [vmem:[%s3 + $0x100] sm:$0xff]
        %v332 = vld [vmem:[%s3 + $0x108] sm:$0xff]
        %v333 = vld [vmem:[%s3 + $0x110] sm:$0xff]
        %v334 = vld [vmem:[%s3 + $0x118] sm:$0xff]
        %v335 = vld [vmem:[%s3 + $0x120] sm:$0xff]
        %v336 = vld [vmem:[%s3 + $0x128] sm:$0xff]
        %v337 = vld [vmem:[%s3 + $0x130] sm:$0xff]
        %v338 = vld [vmem:[%s3 + $0x138] sm:$0xff]
        %v339 = vld [vmem:[%s3 + $0x140] sm:$0xff]
        %v340 = vld [vmem:[%s3 + $0x148] sm:$0xff]
        %v341 = vld [vmem:[%s3 + $0x150] sm:$0xff]
        %v342 = vld [vmem:[%s3 + $0x158] sm:$0xff]
        %v343 = vld [vmem:[%s3 + $0x160] sm:$0xff]
        %v344 = vld [vmem:[%s3 + $0x168] sm:$0xff]
        %v345 = vld [vmem:[%s3 + $0x170] sm:$0xff]
        %v346 = vld [vmem:[%s3 + $0x178] sm:$0xff]
        %v347 = vld [vmem:[%s3 + $0x180] sm:$0xff]
        %v348 = vld [vmem:[%s3 + $0x188] sm:$0xff]
        %v349 = vld [vmem:[%s3 + $0x190] sm:$0xff]
        %v350 = vld [vmem:[%s3 + $0x198] sm:$0xff]
        %v351 = vld [vmem:[%s3 + $0x1a0] sm:$0xff]
        %v352 = vld [vmem:[%s3 + $0x1a8] sm:$0xff]
        %v353 = vld [vmem:[%s3 + $0x1b0] sm:$0xff]
        %v354 = vld [vmem:[%s3 + $0x1b8] sm:$0xff]
        %v355 = vld [vmem:[%s3 + $0x1c0] sm:$0xff]
        %v356 = vld [vmem:[%s3 + $0x1c8] sm:$0xff]
        %v357 = vld [vmem:[%s3 + $0x1d0] sm:$0xff]
        %v358 = vld [vmem:[%s3 + $0x1d8] sm:$0xff]
        %v359 = vld [vmem:[%s3 + $0x1e0] sm:$0xff]
        %v360 = vld [vmem:[%s3 + $0x1e8] sm:$0xff]
        %v361 = vld [vmem:[%s3 + $0x1f0] sm:$0xff]
        %v362 = vld [vmem:[%s3 + $0x1f8] sm:$0xff]
        %v363 = vld [vmem:[%s4] sm:$0x1]
        %v364 = vld [vmem:[%s280] sm:$0xff]
        %v365 = vld [vmem:[%s280 + $0x8] sm:$0xff]
        %v366 = vld [vmem:[%s280 + $0x10] sm:$0xff]
        %v367 = vld [vmem:[%s280 + $0x18] sm:$0xff]
        %v369 = vlaneseq
        %v370 = vshrl.u32 %v369, 7
        %v371 = vsub.s32 0, %v370
        %v372 = vrot.slane %v298, %v371
        %v373 = vlaneseq
        %v374 = vshrl.u32 %v373, 7
        %v375 = vsub.s32 1, %v374
        %v376 = vrot.slane %v298, %v375
        %v377 = vlaneseq
        %v378 = vshrl.u32 %v377, 7
        %v379 = vsub.s32 2, %v378
        %v380 = vrot.slane %v298, %v379
        %v381 = vlaneseq
        %v382 = vshrl.u32 %v381, 7
        %v383 = vsub.s32 3, %v382
        %v384 = vrot.slane %v298, %v383
        %389 = vxpose.xlu0.b32.start [1/16] %v364, 128
        %390 = vxpose.xlu0.b32.cont [2/16] %v365, 128
        %391 = vxpose.xlu0.b32.cont [3/16] %v366, 128
        %392 = vxpose.xlu0.b32.cont [4/16] %v367, 128
        %393 = vxpose.xlu0.b32.cont [5/16] 0.0, 128
        %394 = vxpose.xlu0.b32.cont [6/16] 0.0, 128
        %395 = vxpose.xlu0.b32.cont [7/16] 0.0, 128
        %396 = vxpose.xlu0.b32.cont [8/16] 0.0, 128
        %397 = vxpose.xlu0.b32.cont [9/16] 0.0, 128
        %398 = vxpose.xlu0.b32.cont [10/16] 0.0, 128
        %399 = vxpose.xlu0.b32.cont [11/16] 0.0, 128
        %400 = vxpose.xlu0.b32.cont [12/16] 0.0, 128
        %401 = vxpose.xlu0.b32.cont [13/16] 0.0, 128
        %402 = vxpose.xlu0.b32.cont [14/16] 0.0, 128
        %403 = vxpose.xlu0.b32.cont [15/16] 0.0, 128
        %404 = vxpose.xlu0.b32.end [16/16] 0.0, 128
        %v405 = vpop.trf.xlu0
        %v406 = vpop.trf.xlu0
        %v407 = vpop.trf.xlu0
        %v408 = vpop.trf.xlu0
        %v409 = vpop.trf.xlu0
        %v410 = vpop.trf.xlu0
        %v411 = vpop.trf.xlu0
        %v412 = vpop.trf.xlu0
        %v413 = vpop.trf.xlu0
        %v414 = vpop.trf.xlu0
        %v415 = vpop.trf.xlu0
        %v416 = vpop.trf.xlu0
        %v417 = vpop.trf.xlu0
        %v418 = vpop.trf.xlu0
        %v419 = vpop.trf.xlu0
        %v420 = vpop.trf.xlu0
        %vm421 = vcmask 261120
        %v423 = vsel %vm421, %v405, 0
        %v426 = vsel %vm421, %v406, 0
        %v429 = vsel %vm421, %v407, 0
        %v432 = vsel %vm421, %v408, 0
        %v435 = vsel %vm421, %v409, 0
        %v438 = vsel %vm421, %v410, 0
        %v441 = vsel %vm421, %v411, 0
        %v444 = vsel %vm421, %v412, 0
        %446 = vmatprep.subr.mxu0 %v283
        %447 = vmatpush1.msra.mxu0 %v282
        %448 = vmatprep.subr.mxu0 %v287
        %449 = vmatpush1.msra.mxu0 %v286
        %450 = vmatprep.subr.mxu0 %v291
        %451 = vmatpush1.msra.mxu0 %v290
        %452 = vmatprep.subr.mxu0 %v295
        %453 = vmatpush1.msra.mxu0 %v294
        %454 = vmatprep.subr.mxu0 0.0
        %455 = vmatpush1.msra.mxu0 0.0
        %456 = vmatprep.subr.mxu0 0.0
        %457 = vmatpush1.msra.mxu0 0.0
        %458 = vmatprep.subr.mxu0 0.0
        %459 = vmatpush1.msra.mxu0 0.0
        %460 = vmatprep.subr.mxu0 0.0
        %461 = vmatpush1.msra.mxu0 0.0
        %462 = vmatprep.subr.mxu0 0.0
        %463 = vmatpush1.msra.mxu0 0.0
        %464 = vmatprep.subr.mxu0 0.0
        %465 = vmatpush1.msra.mxu0 0.0
        %466 = vmatprep.subr.mxu0 0.0
        %467 = vmatpush1.msra.mxu0 0.0
        %468 = vmatprep.subr.mxu0 0.0
        %469 = vmatpush1.msra.mxu0 0.0
        %470 = vmatprep.subr.mxu0 0.0
        %471 = vmatpush1.msra.mxu0 0.0
        %472 = vmatprep.subr.mxu0 0.0
        %473 = vmatpush1.msra.mxu0 0.0
        %474 = vmatprep.subr.mxu0 0.0
        %475 = vmatpush1.msra.mxu0 0.0
        %476 = vmatprep.subr.mxu0 0.0
        %477 = vmatpush1.msra.mxu0 0.0
        %478 = vmatprep.subr.mxu0 0.0
        %479 = vmatpush1.msra.mxu0 0.0
        %480 = vmatprep.subr.mxu0 0.0
        %481 = vmatpush1.msra.mxu0 0.0
        %482 = vmatprep.subr.mxu0 0.0
        %483 = vmatpush1.msra.mxu0 0.0
        %484 = vmatprep.subr.mxu0 0.0
        %485 = vmatpush1.msra.mxu0 0.0
        %486 = vmatprep.subr.mxu0 0.0
        %487 = vmatpush1.msra.mxu0 0.0
        %488 = vmatprep.subr.mxu0 0.0
        %489 = vmatpush1.msra.mxu0 0.0
        %490 = vmatprep.subr.mxu0 0.0
        %491 = vmatpush1.msra.mxu0 0.0
        %492 = vmatprep.subr.mxu0 0.0
        %493 = vmatpush1.msra.mxu0 0.0
        %494 = vmatprep.subr.mxu0 0.0
        %495 = vmatpush1.msra.mxu0 0.0
        %496 = vmatprep.subr.mxu0 0.0
        %497 = vmatpush1.msra.mxu0 0.0
        %498 = vmatprep.subr.mxu0 0.0
        %499 = vmatpush1.msra.mxu0 0.0
        %500 = vmatprep.subr.mxu0 0.0
        %501 = vmatpush1.msra.mxu0 0.0
        %502 = vmatprep.subr.mxu0 0.0
        %503 = vmatpush1.msra.mxu0 0.0
        %504 = vmatprep.subr.mxu0 0.0
        %505 = vmatpush1.msra.mxu0 0.0
        %506 = vmatprep.subr.mxu0 0.0
        %507 = vmatpush1.msra.mxu0 0.0
        %508 = vmatprep.subr.mxu0 0.0
        %509 = vmatpush1.msra.mxu0 0.0
        %510 = vmatprep.mubr.f32.mxu0 0.0
        %511 = vmatmul.mubr.f32.gmra.mrb[0].mxu0 %v423
        %v512 = vpop.f32.mrb[0].mxu0
        %v513 = vadd.f32 %v372, %v512
        %v514 = vpop.f32.mrb[0].mxu0
        %v515 = vadd.f32 %v376, %v514
        %516 = vmatprep.mubr.f32.mxu0 0.0
        %517 = vmatmul.mubr.f32.gmra.mrb[0].mxu0 %v426
        %v518 = vpop.f32.mrb[0].mxu0
        %v519 = vadd.f32 %v372, %v518
        %v520 = vpop.f32.mrb[0].mxu0
        %v521 = vadd.f32 %v376, %v520
        %522 = vmatprep.mubr.f32.mxu0 0.0
        %523 = vmatmul.mubr.f32.gmra.mrb[0].mxu0 %v429
        %v524 = vpop.f32.mrb[0].mxu0
        %v525 = vadd.f32 %v372, %v524
        %v526 = vpop.f32.mrb[0].mxu0
        %v527 = vadd.f32 %v376, %v526
        %528 = vmatprep.mubr.f32.mxu0 0.0
        %529 = vmatmul.mubr.f32.gmra.mrb[0].mxu0 %v432
        %v530 = vpop.f32.mrb[0].mxu0
        %v531 = vadd.f32 %v372, %v530
        %v532 = vpop.f32.mrb[0].mxu0
        %v533 = vadd.f32 %v376, %v532
        %534 = vmatprep.mubr.f32.mxu0 0.0
        %535 = vmatmul.mubr.f32.gmra.mrb[0].mxu0 %v435
        %v536 = vpop.f32.mrb[0].mxu0
        %v537 = vadd.f32 %v372, %v536
        %v538 = vpop.f32.mrb[0].mxu0
        %v539 = vadd.f32 %v376, %v538
        %540 = vmatprep.mubr.f32.mxu0 0.0
        %541 = vmatmul.mubr.f32.gmra.mrb[0].mxu0 %v438
        %v542 = vpop.f32.mrb[0].mxu0
        %v543 = vadd.f32 %v372, %v542
        %v544 = vpop.f32.mrb[0].mxu0
        %v545 = vadd.f32 %v376, %v544
        %546 = vmatprep.mubr.f32.mxu0 0.0
        %547 = vmatmul.mubr.f32.gmra.mrb[0].mxu0 %v441
        %v548 = vpop.f32.mrb[0].mxu0
        %v549 = vadd.f32 %v372, %v548
        %v550 = vpop.f32.mrb[0].mxu0
        %v551 = vadd.f32 %v376, %v550
        %552 = vmatprep.mubr.f32.mxu0 0.0
        %553 = vmatmul.mubr.f32.gmra.mrb[0].mxu0 %v444
        %v554 = vpop.f32.mrb[0].mxu0
        %v555 = vadd.f32 %v372, %v554
        %v556 = vpop.f32.mrb[0].mxu0
        %v557 = vadd.f32 %v376, %v556
        %558 = vdwg.mxu0
        %559 = vmatprep.subr.mxu0 %v285
        %560 = vmatpush1.msra.mxu0 %v284
        %561 = vmatprep.subr.mxu0 %v289
        %562 = vmatpush1.msra.mxu0 %v288
        %563 = vmatprep.subr.mxu0 %v293
        %564 = vmatpush1.msra.mxu0 %v292
        %565 = vmatprep.subr.mxu0 %v297
        %566 = vmatpush1.msra.mxu0 %v296
        %567 = vmatprep.subr.mxu0 0.0
        %568 = vmatpush1.msra.mxu0 0.0
        %569 = vmatprep.subr.mxu0 0.0
        %570 = vmatpush1.msra.mxu0 0.0
        %571 = vmatprep.subr.mxu0 0.0
        %572 = vmatpush1.msra.mxu0 0.0
        %573 = vmatprep.subr.mxu0 0.0
        %574 = vmatpush1.msra.mxu0 0.0
        %575 = vmatprep.subr.mxu0 0.0
        %576 = vmatpush1.msra.mxu0 0.0
        %577 = vmatprep.subr.mxu0 0.0
        %578 = vmatpush1.msra.mxu0 0.0
        %579 = vmatprep.subr.mxu0 0.0
        %580 = vmatpush1.msra.mxu0 0.0
        %581 = vmatprep.subr.mxu0 0.0
        %582 = vmatpush1.msra.mxu0 0.0
        %583 = vmatprep.subr.mxu0 0.0
        %584 = vmatpush1.msra.mxu0 0.0
        %585 = vmatprep.subr.mxu0 0.0
        %586 = vmatpush1.msra.mxu0 0.0
        %587 = vmatprep.subr.mxu0 0.0
        %588 = vmatpush1.msra.mxu0 0.0
        %589 = vmatprep.subr.mxu0 0.0
        %590 = vmatpush1.msra.mxu0 0.0
        %591 = vmatprep.subr.mxu0 0.0
        %592 = vmatpush1.msra.mxu0 0.0
        %593 = vmatprep.subr.mxu0 0.0
        %594 = vmatpush1.msra.mxu0 0.0
        %595 = vmatprep.subr.mxu0 0.0
        %596 = vmatpush1.msra.mxu0 0.0
        %597 = vmatprep.subr.mxu0 0.0
        %598 = vmatpush1.msra.mxu0 0.0
        %599 = vmatprep.subr.mxu0 0.0
        %600 = vmatpush1.msra.mxu0 0.0
        %601 = vmatprep.subr.mxu0 0.0
        %602 = vmatpush1.msra.mxu0 0.0
        %603 = vmatprep.subr.mxu0 0.0
        %604 = vmatpush1.msra.mxu0 0.0
        %605 = vmatprep.subr.mxu0 0.0
        %606 = vmatpush1.msra.mxu0 0.0
        %607 = vmatprep.subr.mxu0 0.0
        %608 = vmatpush1.msra.mxu0 0.0
        %609 = vmatprep.subr.mxu0 0.0
        %610 = vmatpush1.msra.mxu0 0.0
        %611 = vmatprep.subr.mxu0 0.0
        %612 = vmatpush1.msra.mxu0 0.0
        %613 = vmatprep.subr.mxu0 0.0
        %614 = vmatpush1.msra.mxu0 0.0
        %615 = vmatprep.subr.mxu0 0.0
        %616 = vmatpush1.msra.mxu0 0.0
        %617 = vmatprep.subr.mxu0 0.0
        %618 = vmatpush1.msra.mxu0 0.0
        %619 = vmatprep.subr.mxu0 0.0
        %620 = vmatpush1.msra.mxu0 0.0
        %621 = vmatprep.subr.mxu0 0.0
        %622 = vmatpush1.msra.mxu0 0.0
        %623 = vmatprep.mubr.f32.mxu0 0.0
        %624 = vmatmul.mubr.f32.gmra.mrb[0].mxu0 %v423
        %v625 = vpop.f32.mrb[0].mxu0
        %v626 = vadd.f32 %v380, %v625
        %v627 = vpop.f32.mrb[0].mxu0
        %v628 = vadd.f32 %v384, %v627
        %629 = vmatprep.mubr.f32.mxu0 0.0
        %630 = vmatmul.mubr.f32.gmra.mrb[0].mxu0 %v426
        %v631 = vpop.f32.mrb[0].mxu0
        %v632 = vadd.f32 %v380, %v631
        %v633 = vpop.f32.mrb[0].mxu0
        %v634 = vadd.f32 %v384, %v633
        %635 = vmatprep.mubr.f32.mxu0 0.0
        %636 = vmatmul.mubr.f32.gmra.mrb[0].mxu0 %v429
        %v637 = vpop.f32.mrb[0].mxu0
        %v638 = vadd.f32 %v380, %v637
        %v639 = vpop.f32.mrb[0].mxu0
        %v640 = vadd.f32 %v384, %v639
        %641 = vmatprep.mubr.f32.mxu0 0.0
        %642 = vmatmul.mubr.f32.gmra.mrb[0].mxu0 %v432
        %v643 = vpop.f32.mrb[0].mxu0
        %v644 = vadd.f32 %v380, %v643
        %v645 = vpop.f32.mrb[0].mxu0
        %v646 = vadd.f32 %v384, %v645
        %647 = vmatprep.mubr.f32.mxu0 0.0
        %648 = vmatmul.mubr.f32.gmra.mrb[0].mxu0 %v435
        %v649 = vpop.f32.mrb[0].mxu0
        %v650 = vadd.f32 %v380, %v649
        %v651 = vpop.f32.mrb[0].mxu0
        %v652 = vadd.f32 %v384, %v651
        %653 = vmatprep.mubr.f32.mxu0 0.0
        %654 = vmatmul.mubr.f32.gmra.mrb[0].mxu0 %v438
        %v655 = vpop.f32.mrb[0].mxu0
        %v656 = vadd.f32 %v380, %v655
        %v657 = vpop.f32.mrb[0].mxu0
        %v658 = vadd.f32 %v384, %v657
        %659 = vmatprep.mubr.f32.mxu0 0.0
        %660 = vmatmul.mubr.f32.gmra.mrb[0].mxu0 %v441
        %v661 = vpop.f32.mrb[0].mxu0
        %v662 = vadd.f32 %v380, %v661
        %v663 = vpop.f32.mrb[0].mxu0
        %v664 = vadd.f32 %v384, %v663
        %665 = vmatprep.mubr.f32.mxu0 0.0
        %666 = vmatmul.mubr.f32.gmra.mrb[0].mxu0 %v444
        %v667 = vpop.f32.mrb[0].mxu0
        %v668 = vadd.f32 %v380, %v667
        %v669 = vpop.f32.mrb[0].mxu0
        %v670 = vadd.f32 %v384, %v669
        %671 = vdwg.mxu0
        %v673 = vlaneseq
        %v674 = vshrl.u32 %v673, 7
        %v675 = vsub.s32 0, %v674
        %v676 = vrot.slane %v363, %v675
        %678 = vmatprep.subr.mxu0 0.0
        %679 = vmatpush1.msra.mxu0 %v299
        %680 = vmatprep.subr.mxu0 0.0
        %681 = vmatpush1.msra.mxu0 %v300
        %682 = vmatprep.subr.mxu0 0.0
        %683 = vmatpush1.msra.mxu0 %v301
        %684 = vmatprep.subr.mxu0 0.0
        %685 = vmatpush1.msra.mxu0 %v302
        %686 = vmatprep.subr.mxu0 0.0
        %687 = vmatpush1.msra.mxu0 %v303
        %688 = vmatprep.subr.mxu0 0.0
        %689 = vmatpush1.msra.mxu0 %v304
        %690 = vmatprep.subr.mxu0 0.0
        %691 = vmatpush1.msra.mxu0 %v305
        %692 = vmatprep.subr.mxu0 0.0
        %693 = vmatpush1.msra.mxu0 %v306
        %694 = vmatprep.subr.mxu0 0.0
        %695 = vmatpush1.msra.mxu0 %v307
        %696 = vmatprep.subr.mxu0 0.0
        %697 = vmatpush1.msra.mxu0 %v308
        %698 = vmatprep.subr.mxu0 0.0
        %699 = vmatpush1.msra.mxu0 %v309
        %700 = vmatprep.subr.mxu0 0.0
        %701 = vmatpush1.msra.mxu0 %v310
        %702 = vmatprep.subr.mxu0 0.0
        %703 = vmatpush1.msra.mxu0 %v311
        %704 = vmatprep.subr.mxu0 0.0
        %705 = vmatpush1.msra.mxu0 %v312
        %706 = vmatprep.subr.mxu0 0.0
        %707 = vmatpush1.msra.mxu0 %v313
        %708 = vmatprep.subr.mxu0 0.0
        %709 = vmatpush1.msra.mxu0 %v314
        %710 = vmatprep.subr.mxu0 0.0
        %711 = vmatpush1.msra.mxu0 %v315
        %712 = vmatprep.subr.mxu0 0.0
        %713 = vmatpush1.msra.mxu0 %v316
        %714 = vmatprep.subr.mxu0 0.0
        %715 = vmatpush1.msra.mxu0 %v317
        %716 = vmatprep.subr.mxu0 0.0
        %717 = vmatpush1.msra.mxu0 %v318
        %718 = vmatprep.subr.mxu0 0.0
        %719 = vmatpush1.msra.mxu0 %v319
        %720 = vmatprep.subr.mxu0 0.0
        %721 = vmatpush1.msra.mxu0 %v320
        %722 = vmatprep.subr.mxu0 0.0
        %723 = vmatpush1.msra.mxu0 %v321
        %724 = vmatprep.subr.mxu0 0.0
        %725 = vmatpush1.msra.mxu0 %v322
        %726 = vmatprep.subr.mxu0 0.0
        %727 = vmatpush1.msra.mxu0 %v323
        %728 = vmatprep.subr.mxu0 0.0
        %729 = vmatpush1.msra.mxu0 %v324
        %730 = vmatprep.subr.mxu0 0.0
        %731 = vmatpush1.msra.mxu0 %v325
        %732 = vmatprep.subr.mxu0 0.0
        %733 = vmatpush1.msra.mxu0 %v326
        %734 = vmatprep.subr.mxu0 0.0
        %735 = vmatpush1.msra.mxu0 %v327
        %736 = vmatprep.subr.mxu0 0.0
        %737 = vmatpush1.msra.mxu0 %v328
        %738 = vmatprep.subr.mxu0 0.0
        %739 = vmatpush1.msra.mxu0 %v329
        %740 = vmatprep.subr.mxu0 0.0
        %741 = vmatpush1.msra.mxu0 %v330
        %742 = vmatprep.mubr.f32.mxu0 %v515
        %743 = vmatmul.mubr.f32.gmra.mrb[0].mxu0 %v513
        %v744 = vpop.f32.mrb[0].mxu0
        %v745 = vadd.f32 %v676, %v744
        %v746 = vpop.f32.mrb[0].mxu0
        %747 = vmatprep.mubr.f32.mxu0 %v521
        %748 = vmatmul.mubr.f32.gmra.mrb[0].mxu0 %v519
        %v749 = vpop.f32.mrb[0].mxu0
        %v750 = vadd.f32 %v676, %v749
        %v751 = vpop.f32.mrb[0].mxu0
        %752 = vmatprep.mubr.f32.mxu0 %v527
        %753 = vmatmul.mubr.f32.gmra.mrb[0].mxu0 %v525
        %v754 = vpop.f32.mrb[0].mxu0
        %v755 = vadd.f32 %v676, %v754
        %v756 = vpop.f32.mrb[0].mxu0
        %757 = vmatprep.mubr.f32.mxu0 %v533
        %758 = vmatmul.mubr.f32.gmra.mrb[0].mxu0 %v531
        %v759 = vpop.f32.mrb[0].mxu0
        %v760 = vadd.f32 %v676, %v759
        %v761 = vpop.f32.mrb[0].mxu0
        %762 = vmatprep.mubr.f32.mxu0 %v539
        %763 = vmatmul.mubr.f32.gmra.mrb[0].mxu0 %v537
        %v764 = vpop.f32.mrb[0].mxu0
        %v765 = vadd.f32 %v676, %v764
        %v766 = vpop.f32.mrb[0].mxu0
        %767 = vmatprep.mubr.f32.mxu0 %v545
        %768 = vmatmul.mubr.f32.gmra.mrb[0].mxu0 %v543
        %v769 = vpop.f32.mrb[0].mxu0
        %v770 = vadd.f32 %v676, %v769
        %v771 = vpop.f32.mrb[0].mxu0
        %772 = vmatprep.mubr.f32.mxu0 %v551
        %773 = vmatmul.mubr.f32.gmra.mrb[0].mxu0 %v549
        %v774 = vpop.f32.mrb[0].mxu0
        %v775 = vadd.f32 %v676, %v774
        %v776 = vpop.f32.mrb[0].mxu0
        %777 = vmatprep.mubr.f32.mxu0 %v557
        %778 = vmatmul.mubr.f32.gmra.mrb[0].mxu0 %v555
        %v779 = vpop.f32.mrb[0].mxu0
        %v780 = vadd.f32 %v676, %v779
        %v781 = vpop.f32.mrb[0].mxu0
        %782 = vdwg.mxu0
        %783 = vmatprep.subr.mxu0 0.0
        %784 = vmatpush1.msra.mxu0 %v331
        %785 = vmatprep.subr.mxu0 0.0
        %786 = vmatpush1.msra.mxu0 %v332
        %787 = vmatprep.subr.mxu0 0.0
        %788 = vmatpush1.msra.mxu0 %v333
        %789 = vmatprep.subr.mxu0 0.0
        %790 = vmatpush1.msra.mxu0 %v334
        %791 = vmatprep.subr.mxu0 0.0
        %792 = vmatpush1.msra.mxu0 %v335
        %793 = vmatprep.subr.mxu0 0.0
        %794 = vmatpush1.msra.mxu0 %v336
        %795 = vmatprep.subr.mxu0 0.0
        %796 = vmatpush1.msra.mxu0 %v337
        %797 = vmatprep.subr.mxu0 0.0
        %798 = vmatpush1.msra.mxu0 %v338
        %799 = vmatprep.subr.mxu0 0.0
        %800 = vmatpush1.msra.mxu0 %v339
        %801 = vmatprep.subr.mxu0 0.0
        %802 = vmatpush1.msra.mxu0 %v340
        %803 = vmatprep.subr.mxu0 0.0
        %804 = vmatpush1.msra.mxu0 %v341
        %805 = vmatprep.subr.mxu0 0.0
        %806 = vmatpush1.msra.mxu0 %v342
        %807 = vmatprep.subr.mxu0 0.0
        %808 = vmatpush1.msra.mxu0 %v343
        %809 = vmatprep.subr.mxu0 0.0
        %810 = vmatpush1.msra.mxu0 %v344
        %811 = vmatprep.subr.mxu0 0.0
        %812 = vmatpush1.msra.mxu0 %v345
        %813 = vmatprep.subr.mxu0 0.0
        %814 = vmatpush1.msra.mxu0 %v346
        %815 = vmatprep.subr.mxu0 0.0
        %816 = vmatpush1.msra.mxu0 %v347
        %817 = vmatprep.subr.mxu0 0.0
        %818 = vmatpush1.msra.mxu0 %v348
        %819 = vmatprep.subr.mxu0 0.0
        %820 = vmatpush1.msra.mxu0 %v349
        %821 = vmatprep.subr.mxu0 0.0
        %822 = vmatpush1.msra.mxu0 %v350
        %823 = vmatprep.subr.mxu0 0.0
        %824 = vmatpush1.msra.mxu0 %v351
        %825 = vmatprep.subr.mxu0 0.0
        %826 = vmatpush1.msra.mxu0 %v352
        %827 = vmatprep.subr.mxu0 0.0
        %828 = vmatpush1.msra.mxu0 %v353
        %829 = vmatprep.subr.mxu0 0.0
        %830 = vmatpush1.msra.mxu0 %v354
        %831 = vmatprep.subr.mxu0 0.0
        %832 = vmatpush1.msra.mxu0 %v355
        %833 = vmatprep.subr.mxu0 0.0
        %834 = vmatpush1.msra.mxu0 %v356
        %835 = vmatprep.subr.mxu0 0.0
        %836 = vmatpush1.msra.mxu0 %v357
        %837 = vmatprep.subr.mxu0 0.0
        %838 = vmatpush1.msra.mxu0 %v358
        %839 = vmatprep.subr.mxu0 0.0
        %840 = vmatpush1.msra.mxu0 %v359
        %841 = vmatprep.subr.mxu0 0.0
        %842 = vmatpush1.msra.mxu0 %v360
        %843 = vmatprep.subr.mxu0 0.0
        %844 = vmatpush1.msra.mxu0 %v361
        %845 = vmatprep.subr.mxu0 0.0
        %846 = vmatpush1.msra.mxu0 %v362
        %847 = vmatprep.mubr.f32.mxu0 %v628
        %848 = vmatmul.mubr.f32.gmra.mrb[0].mxu0 %v626
        %v849 = vpop.f32.mrb[0].mxu0
        %v850 = vadd.f32 %v745, %v849
        %v851 = vpop.f32.mrb[0].mxu0
        %852 = vmatprep.mubr.f32.mxu0 %v634
        %853 = vmatmul.mubr.f32.gmra.mrb[0].mxu0 %v632
        %v854 = vpop.f32.mrb[0].mxu0
        %v855 = vadd.f32 %v750, %v854
        %v856 = vpop.f32.mrb[0].mxu0
        %857 = vmatprep.mubr.f32.mxu0 %v640
        %858 = vmatmul.mubr.f32.gmra.mrb[0].mxu0 %v638
        %v859 = vpop.f32.mrb[0].mxu0
        %v860 = vadd.f32 %v755, %v859
        %v861 = vpop.f32.mrb[0].mxu0
        %862 = vmatprep.mubr.f32.mxu0 %v646
        %863 = vmatmul.mubr.f32.gmra.mrb[0].mxu0 %v644
        %v864 = vpop.f32.mrb[0].mxu0
        %v865 = vadd.f32 %v760, %v864
        %v866 = vpop.f32.mrb[0].mxu0
        %867 = vmatprep.mubr.f32.mxu0 %v652
        %868 = vmatmul.mubr.f32.gmra.mrb[0].mxu0 %v650
        %v869 = vpop.f32.mrb[0].mxu0
        %v870 = vadd.f32 %v765, %v869
        %v871 = vpop.f32.mrb[0].mxu0
        %872 = vmatprep.mubr.f32.mxu0 %v658
        %873 = vmatmul.mubr.f32.gmra.mrb[0].mxu0 %v656
        %v874 = vpop.f32.mrb[0].mxu0
        %v875 = vadd.f32 %v770, %v874
        %v876 = vpop.f32.mrb[0].mxu0
        %877 = vmatprep.mubr.f32.mxu0 %v664
        %878 = vmatmul.mubr.f32.gmra.mrb[0].mxu0 %v662
        %v879 = vpop.f32.mrb[0].mxu0
        %v880 = vadd.f32 %v775, %v879
        %v881 = vpop.f32.mrb[0].mxu0
        %882 = vmatprep.mubr.f32.mxu0 %v670
        %883 = vmatmul.mubr.f32.gmra.mrb[0].mxu0 %v668
        %v884 = vpop.f32.mrb[0].mxu0
        %v885 = vadd.f32 %v780, %v884
        %v886 = vpop.f32.mrb[0].mxu0
        %887 = vdwg.mxu0
        %v888 = vxor.u32 %v850, 2147483648
        %v889 = vxor.u32 %v855, 2147483648
        %v890 = vxor.u32 %v860, 2147483648
        %v891 = vxor.u32 %v865, 2147483648
        %v892 = vxor.u32 %v870, 2147483648
        %v893 = vxor.u32 %v875, 2147483648
        %v894 = vxor.u32 %v880, 2147483648
        %v895 = vxor.u32 %v885, 2147483648
        %v896 = vmul.f32 %v888, 1.442695
        %v897 = vpow.pop %v896
        %v898 = vmul.f32 %v889, 1.442695
        %v899 = vpow.pop %v898
        %v900 = vmul.f32 %v890, 1.442695
        %v901 = vpow.pop %v900
        %v902 = vmul.f32 %v891, 1.442695
        %v903 = vpow.pop %v902
        %v904 = vmul.f32 %v892, 1.442695
        %v905 = vpow.pop %v904
        %v906 = vmul.f32 %v893, 1.442695
        %v907 = vpow.pop %v906
        %v908 = vmul.f32 %v894, 1.442695
        %v909 = vpow.pop %v908
        %v910 = vmul.f32 %v895, 1.442695
        %v911 = vpow.pop %v910
        %v912 = vadd.f32 %v897, 1.0
        %v913 = vadd.f32 %v899, 1.0
        %v914 = vadd.f32 %v901, 1.0
        %v915 = vadd.f32 %v903, 1.0
        %v916 = vadd.f32 %v905, 1.0
        %v917 = vadd.f32 %v907, 1.0
        %v918 = vadd.f32 %v909, 1.0
        %v919 = vadd.f32 %v911, 1.0
        %v920 = vrcp.pop %v912
        %v921 = vmul.f32 1.0, %v920
        %v922 = vrcp.pop %v913
        %v923 = vmul.f32 1.0, %v922
        %v924 = vrcp.pop %v914
        %v925 = vmul.f32 1.0, %v924
        %v926 = vrcp.pop %v915
        %v927 = vmul.f32 1.0, %v926
        %v928 = vrcp.pop %v916
        %v929 = vmul.f32 1.0, %v928
        %v930 = vrcp.pop %v917
        %v931 = vmul.f32 1.0, %v930
        %v932 = vrcp.pop %v918
        %v933 = vmul.f32 1.0, %v932
        %v934 = vrcp.pop %v919
        %v935 = vmul.f32 1.0, %v934
        %936 = vxpose.xlu0.b32.start [1/16] %v921, 128
        %937 = vxpose.xlu0.b32.cont [2/16] %v923, 128
        %938 = vxpose.xlu0.b32.cont [3/16] %v925, 128
        %939 = vxpose.xlu0.b32.cont [4/16] %v927, 128
        %940 = vxpose.xlu0.b32.cont [5/16] %v929, 128
        %941 = vxpose.xlu0.b32.cont [6/16] %v931, 128
        %942 = vxpose.xlu0.b32.cont [7/16] %v933, 128
        %943 = vxpose.xlu0.b32.cont [8/16] %v935, 128
        %944 = vxpose.xlu0.b32.cont [9/16] 0.0, 128
        %945 = vxpose.xlu0.b32.cont [10/16] 0.0, 128
        %946 = vxpose.xlu0.b32.cont [11/16] 0.0, 128
        %947 = vxpose.xlu0.b32.cont [12/16] 0.0, 128
        %948 = vxpose.xlu0.b32.cont [13/16] 0.0, 128
        %949 = vxpose.xlu0.b32.cont [14/16] 0.0, 128
        %950 = vxpose.xlu0.b32.cont [15/16] 0.0, 128
        %951 = vxpose.xlu0.b32.end [16/16] 0.0, 128
        %v952 = vpop.trf.xlu0
        %v953 = vpop.trf.xlu0
        %v954 = vpop.trf.xlu0
        %v955 = vpop.trf.xlu0
        %v956 = vpop.trf.xlu0
        %v957 = vpop.trf.xlu0
        %v958 = vpop.trf.xlu0
        %v959 = vpop.trf.xlu0
        %v960 = vpop.trf.xlu0
        %v961 = vpop.trf.xlu0
        %v962 = vpop.trf.xlu0
        %v963 = vpop.trf.xlu0
        %v964 = vpop.trf.xlu0
        %v965 = vpop.trf.xlu0
        %v966 = vpop.trf.xlu0
        %v967 = vpop.trf.xlu0
        %vm968 = vcmask 523264
        %v970 = vsel %vm968, %v952, 0
        %972 = vmatprep.subr.mxu0 %v515
        %973 = vmatpush1.msra.mxu0 %v513
        %974 = vmatprep.subr.mxu0 %v521
        %975 = vmatpush1.msra.mxu0 %v519
        %976 = vmatprep.subr.mxu0 %v527
        %977 = vmatpush1.msra.mxu0 %v525
        %978 = vmatprep.subr.mxu0 %v533
        %979 = vmatpush1.msra.mxu0 %v531
        %980 = vmatprep.subr.mxu0 %v539
        %981 = vmatpush1.msra.mxu0 %v537
        %982 = vmatprep.subr.mxu0 %v545
        %983 = vmatpush1.msra.mxu0 %v543
        %984 = vmatprep.subr.mxu0 %v551
        %985 = vmatpush1.msra.mxu0 %v549
        %986 = vmatprep.subr.mxu0 %v557
        %987 = vmatpush1.msra.mxu0 %v555
        %988 = vmatprep.subr.mxu0 0.0
        %989 = vmatpush1.msra.mxu0 0.0
        %990 = vmatprep.subr.mxu0 0.0
        %991 = vmatpush1.msra.mxu0 0.0
        %992 = vmatprep.subr.mxu0 0.0
        %993 = vmatpush1.msra.mxu0 0.0
        %994 = vmatprep.subr.mxu0 0.0
        %995 = vmatpush1.msra.mxu0 0.0
        %996 = vmatprep.subr.mxu0 0.0
        %997 = vmatpush1.msra.mxu0 0.0
        %998 = vmatprep.subr.mxu0 0.0
        %999 = vmatpush1.msra.mxu0 0.0
        %1000 = vmatprep.subr.mxu0 0.0
        %1001 = vmatpush1.msra.mxu0 0.0
        %1002 = vmatprep.subr.mxu0 0.0
        %1003 = vmatpush1.msra.mxu0 0.0
        %1004 = vmatprep.subr.mxu0 0.0
        %1005 = vmatpush1.msra.mxu0 0.0
        %1006 = vmatprep.subr.mxu0 0.0
        %1007 = vmatpush1.msra.mxu0 0.0
        %1008 = vmatprep.subr.mxu0 0.0
        %1009 = vmatpush1.msra.mxu0 0.0
        %1010 = vmatprep.subr.mxu0 0.0
        %1011 = vmatpush1.msra.mxu0 0.0
        %1012 = vmatprep.subr.mxu0 0.0
        %1013 = vmatpush1.msra.mxu0 0.0
        %1014 = vmatprep.subr.mxu0 0.0
        %1015 = vmatpush1.msra.mxu0 0.0
        %1016 = vmatprep.subr.mxu0 0.0
        %1017 = vmatpush1.msra.mxu0 0.0
        %1018 = vmatprep.subr.mxu0 0.0
        %1019 = vmatpush1.msra.mxu0 0.0
        %1020 = vmatprep.subr.mxu0 0.0
        %1021 = vmatpush1.msra.mxu0 0.0
        %1022 = vmatprep.subr.mxu0 0.0
        %1023 = vmatpush1.msra.mxu0 0.0
        %1024 = vmatprep.subr.mxu0 0.0
        %1025 = vmatpush1.msra.mxu0 0.0
        %1026 = vmatprep.subr.mxu0 0.0
        %1027 = vmatpush1.msra.mxu0 0.0
        %1028 = vmatprep.subr.mxu0 0.0
        %1029 = vmatpush1.msra.mxu0 0.0
        %1030 = vmatprep.subr.mxu0 0.0
        %1031 = vmatpush1.msra.mxu0 0.0
        %1032 = vmatprep.subr.mxu0 0.0
        %1033 = vmatpush1.msra.mxu0 0.0
        %1034 = vmatprep.subr.mxu0 0.0
        %1035 = vmatpush1.msra.mxu0 0.0
        %1036 = vmatprep.mubr.f32.mxu0 0.0
        %1037 = vmatmul.mubr.f32.gmra.mrb[0].mxu0 %v970
        %v1038 = vpop.f32.mrb[0].mxu0
        %v1039 = vadd.f32 0.0, %v1038
        %v1040 = vpop.f32.mrb[0].mxu0
        %v1041 = vadd.f32 0.0, %v1040
        %1042 = vdwg.mxu0
        %1043 = vmatprep.subr.mxu0 %v628
        %1044 = vmatpush1.msra.mxu0 %v626
        %1045 = vmatprep.subr.mxu0 %v634
        %1046 = vmatpush1.msra.mxu0 %v632
        %1047 = vmatprep.subr.mxu0 %v640
        %1048 = vmatpush1.msra.mxu0 %v638
        %1049 = vmatprep.subr.mxu0 %v646
        %1050 = vmatpush1.msra.mxu0 %v644
        %1051 = vmatprep.subr.mxu0 %v652
        %1052 = vmatpush1.msra.mxu0 %v650
        %1053 = vmatprep.subr.mxu0 %v658
        %1054 = vmatpush1.msra.mxu0 %v656
        %1055 = vmatprep.subr.mxu0 %v664
        %1056 = vmatpush1.msra.mxu0 %v662
        %1057 = vmatprep.subr.mxu0 %v670
        %1058 = vmatpush1.msra.mxu0 %v668
        %1059 = vmatprep.subr.mxu0 0.0
        %1060 = vmatpush1.msra.mxu0 0.0
        %1061 = vmatprep.subr.mxu0 0.0
        %1062 = vmatpush1.msra.mxu0 0.0
        %1063 = vmatprep.subr.mxu0 0.0
        %1064 = vmatpush1.msra.mxu0 0.0
        %1065 = vmatprep.subr.mxu0 0.0
        %1066 = vmatpush1.msra.mxu0 0.0
        %1067 = vmatprep.subr.mxu0 0.0
        %1068 = vmatpush1.msra.mxu0 0.0
        %1069 = vmatprep.subr.mxu0 0.0
        %1070 = vmatpush1.msra.mxu0 0.0
        %1071 = vmatprep.subr.mxu0 0.0
        %1072 = vmatpush1.msra.mxu0 0.0
        %1073 = vmatprep.subr.mxu0 0.0
        %1074 = vmatpush1.msra.mxu0 0.0
        %1075 = vmatprep.subr.mxu0 0.0
        %1076 = vmatpush1.msra.mxu0 0.0
        %1077 = vmatprep.subr.mxu0 0.0
        %1078 = vmatpush1.msra.mxu0 0.0
        %1079 = vmatprep.subr.mxu0 0.0
        %1080 = vmatpush1.msra.mxu0 0.0
        %1081 = vmatprep.subr.mxu0 0.0
        %1082 = vmatpush1.msra.mxu0 0.0
        %1083 = vmatprep.subr.mxu0 0.0
        %1084 = vmatpush1.msra.mxu0 0.0
        %1085 = vmatprep.subr.mxu0 0.0
        %1086 = vmatpush1.msra.mxu0 0.0
        %1087 = vmatprep.subr.mxu0 0.0
        %1088 = vmatpush1.msra.mxu0 0.0
        %1089 = vmatprep.subr.mxu0 0.0
        %1090 = vmatpush1.msra.mxu0 0.0
        %1091 = vmatprep.subr.mxu0 0.0
        %1092 = vmatpush1.msra.mxu0 0.0
        %1093 = vmatprep.subr.mxu0 0.0
        %1094 = vmatpush1.msra.mxu0 0.0
        %1095 = vmatprep.subr.mxu0 0.0
        %1096 = vmatpush1.msra.mxu0 0.0
        %1097 = vmatprep.subr.mxu0 0.0
        %1098 = vmatpush1.msra.mxu0 0.0
        %1099 = vmatprep.subr.mxu0 0.0
        %1100 = vmatpush1.msra.mxu0 0.0
        %1101 = vmatprep.subr.mxu0 0.0
        %1102 = vmatpush1.msra.mxu0 0.0
        %1103 = vmatprep.subr.mxu0 0.0
        %1104 = vmatpush1.msra.mxu0 0.0
        %1105 = vmatprep.subr.mxu0 0.0
        %1106 = vmatpush1.msra.mxu0 0.0
        %1107 = vmatprep.mubr.f32.mxu0 0.0
        %1108 = vmatmul.mubr.f32.gmra.mrb[0].mxu0 %v970
        %v1109 = vpop.f32.mrb[0].mxu0
        %v1110 = vadd.f32 0.0, %v1109
        %v1111 = vpop.f32.mrb[0].mxu0
        %v1112 = vadd.f32 0.0, %v1111
        %1113 = vdwg.mxu0
        %v1114 = vmul.f32 %v1039, 0.015625
        %v1115 = vmul.f32 %v1041, 0.015625
        %v1116 = vmul.f32 %v1110, 0.015625
        %v1117 = vmul.f32 %v1112, 0.015625
        %s1118 = scalar_lea.vmem %s280, 32
        %v1119 = vld [vmem:[%s1118] sm:$0xff]
        %v1120 = vld [vmem:[%s1118 + $0x8] sm:$0xff]
        %v1121 = vld [vmem:[%s1118 + $0x10] sm:$0xff]
        %v1122 = vld [vmem:[%s1118 + $0x18] sm:$0xff]
        %1123 = vxpose.xlu0.b32.start [1/16] %v1119, 128
        %1124 = vxpose.xlu0.b32.cont [2/16] %v1120, 128
        %1125 = vxpose.xlu0.b32.cont [3/16] %v1121, 128
        %1126 = vxpose.xlu0.b32.cont [4/16] %v1122, 128
        %1127 = vxpose.xlu0.b32.cont [5/16] 0.0, 128
        %1128 = vxpose.xlu0.b32.cont [6/16] 0.0, 128
        %1129 = vxpose.xlu0.b32.cont [7/16] 0.0, 128
        %1130 = vxpose.xlu0.b32.cont [8/16] 0.0, 128
        %1131 = vxpose.xlu0.b32.cont [9/16] 0.0, 128
        %1132 = vxpose.xlu0.b32.cont [10/16] 0.0, 128
        %1133 = vxpose.xlu0.b32.cont [11/16] 0.0, 128
        %1134 = vxpose.xlu0.b32.cont [12/16] 0.0, 128
        %1135 = vxpose.xlu0.b32.cont [13/16] 0.0, 128
        %1136 = vxpose.xlu0.b32.cont [14/16] 0.0, 128
        %1137 = vxpose.xlu0.b32.cont [15/16] 0.0, 128
        %1138 = vxpose.xlu0.b32.end [16/16] 0.0, 128
        %v1139 = vpop.trf.xlu0
        %v1140 = vpop.trf.xlu0
        %v1141 = vpop.trf.xlu0
        %v1142 = vpop.trf.xlu0
        %v1143 = vpop.trf.xlu0
        %v1144 = vpop.trf.xlu0
        %v1145 = vpop.trf.xlu0
        %v1146 = vpop.trf.xlu0
        %v1147 = vpop.trf.xlu0
        %v1148 = vpop.trf.xlu0
        %v1149 = vpop.trf.xlu0
        %v1150 = vpop.trf.xlu0
        %v1151 = vpop.trf.xlu0
        %v1152 = vpop.trf.xlu0
        %v1153 = vpop.trf.xlu0
        %v1154 = vpop.trf.xlu0
        %v1156 = vsel %vm421, %v1139, 0
        %v1159 = vsel %vm421, %v1140, 0
        %v1162 = vsel %vm421, %v1141, 0
        %v1165 = vsel %vm421, %v1142, 0
        %v1168 = vsel %vm421, %v1143, 0
        %v1171 = vsel %vm421, %v1144, 0
        %v1174 = vsel %vm421, %v1145, 0
        %v1177 = vsel %vm421, %v1146, 0
        %1179 = vmatprep.subr.mxu0 %v283
        %1180 = vmatpush1.msra.mxu0 %v282
        %1181 = vmatprep.subr.mxu0 %v287
        %1182 = vmatpush1.msra.mxu0 %v286
        %1183 = vmatprep.subr.mxu0 %v291
        %1184 = vmatpush1.msra.mxu0 %v290
        %1185 = vmatprep.subr.mxu0 %v295
        %1186 = vmatpush1.msra.mxu0 %v294
        %1187 = vmatprep.subr.mxu0 0.0
        %1188 = vmatpush1.msra.mxu0 0.0
        %1189 = vmatprep.subr.mxu0 0.0
        %1190 = vmatpush1.msra.mxu0 0.0
        %1191 = vmatprep.subr.mxu0 0.0
        %1192 = vmatpush1.msra.mxu0 0.0
        %1193 = vmatprep.subr.mxu0 0.0
        %1194 = vmatpush1.msra.mxu0 0.0
        %1195 = vmatprep.subr.mxu0 0.0
        %1196 = vmatpush1.msra.mxu0 0.0
        %1197 = vmatprep.subr.mxu0 0.0
        %1198 = vmatpush1.msra.mxu0 0.0
        %1199 = vmatprep.subr.mxu0 0.0
        %1200 = vmatpush1.msra.mxu0 0.0
        %1201 = vmatprep.subr.mxu0 0.0
        %1202 = vmatpush1.msra.mxu0 0.0
        %1203 = vmatprep.subr.mxu0 0.0
        %1204 = vmatpush1.msra.mxu0 0.0
        %1205 = vmatprep.subr.mxu0 0.0
        %1206 = vmatpush1.msra.mxu0 0.0
        %1207 = vmatprep.subr.mxu0 0.0
        %1208 = vmatpush1.msra.mxu0 0.0
        %1209 = vmatprep.subr.mxu0 0.0
        %1210 = vmatpush1.msra.mxu0 0.0
        %1211 = vmatprep.subr.mxu0 0.0
        %1212 = vmatpush1.msra.mxu0 0.0
        %1213 = vmatprep.subr.mxu0 0.0
        %1214 = vmatpush1.msra.mxu0 0.0
        %1215 = vmatprep.subr.mxu0 0.0
        %1216 = vmatpush1.msra.mxu0 0.0
        %1217 = vmatprep.subr.mxu0 0.0
        %1218 = vmatpush1.msra.mxu0 0.0
        %1219 = vmatprep.subr.mxu0 0.0
        %1220 = vmatpush1.msra.mxu0 0.0
        %1221 = vmatprep.subr.mxu0 0.0
        %1222 = vmatpush1.msra.mxu0 0.0
        %1223 = vmatprep.subr.mxu0 0.0
        %1224 = vmatpush1.msra.mxu0 0.0
        %1225 = vmatprep.subr.mxu0 0.0
        %1226 = vmatpush1.msra.mxu0 0.0
        %1227 = vmatprep.subr.mxu0 0.0
        %1228 = vmatpush1.msra.mxu0 0.0
        %1229 = vmatprep.subr.mxu0 0.0
        %1230 = vmatpush1.msra.mxu0 0.0
        %1231 = vmatprep.subr.mxu0 0.0
        %1232 = vmatpush1.msra.mxu0 0.0
        %1233 = vmatprep.subr.mxu0 0.0
        %1234 = vmatpush1.msra.mxu0 0.0
        %1235 = vmatprep.subr.mxu0 0.0
        %1236 = vmatpush1.msra.mxu0 0.0
        %1237 = vmatprep.subr.mxu0 0.0
        %1238 = vmatpush1.msra.mxu0 0.0
        %1239 = vmatprep.subr.mxu0 0.0
        %1240 = vmatpush1.msra.mxu0 0.0
        %1241 = vmatprep.subr.mxu0 0.0
        %1242 = vmatpush1.msra.mxu0 0.0
        %1243 = vmatprep.mubr.f32.mxu0 0.0
        %1244 = vmatmul.mubr.f32.gmra.mrb[0].mxu0 %v1156
        %v1245 = vpop.f32.mrb[0].mxu0
        %v1246 = vadd.f32 %v372, %v1245
        %v1247 = vpop.f32.mrb[0].mxu0
        %v1248 = vadd.f32 %v376, %v1247
        %1249 = vmatprep.mubr.f32.mxu0 0.0
        %1250 = vmatmul.mubr.f32.gmra.mrb[0].mxu0 %v1159
        %v1251 = vpop.f32.mrb[0].mxu0
        %v1252 = vadd.f32 %v372, %v1251
        %v1253 = vpop.f32.mrb[0].mxu0
        %v1254 = vadd.f32 %v376, %v1253
        %1255 = vmatprep.mubr.f32.mxu0 0.0
        %1256 = vmatmul.mubr.f32.gmra.mrb[0].mxu0 %v1162
        %v1257 = vpop.f32.mrb[0].mxu0
        %v1258 = vadd.f32 %v372, %v1257
        %v1259 = vpop.f32.mrb[0].mxu0
        %v1260 = vadd.f32 %v376, %v1259
        %1261 = vmatprep.mubr.f32.mxu0 0.0
        %1262 = vmatmul.mubr.f32.gmra.mrb[0].mxu0 %v1165
        %v1263 = vpop.f32.mrb[0].mxu0
        %v1264 = vadd.f32 %v372, %v1263
        %v1265 = vpop.f32.mrb[0].mxu0
        %v1266 = vadd.f32 %v376, %v1265
        %1267 = vmatprep.mubr.f32.mxu0 0.0
        %1268 = vmatmul.mubr.f32.gmra.mrb[0].mxu0 %v1168
        %v1269 = vpop.f32.mrb[0].mxu0
        %v1270 = vadd.f32 %v372, %v1269
        %v1271 = vpop.f32.mrb[0].mxu0
        %v1272 = vadd.f32 %v376, %v1271
        %1273 = vmatprep.mubr.f32.mxu0 0.0
        %1274 = vmatmul.mubr.f32.gmra.mrb[0].mxu0 %v1171
        %v1275 = vpop.f32.mrb[0].mxu0
        %v1276 = vadd.f32 %v372, %v1275
        %v1277 = vpop.f32.mrb[0].mxu0
        %v1278 = vadd.f32 %v376, %v1277
        %1279 = vmatprep.mubr.f32.mxu0 0.0
        %1280 = vmatmul.mubr.f32.gmra.mrb[0].mxu0 %v1174
        %v1281 = vpop.f32.mrb[0].mxu0
        %v1282 = vadd.f32 %v372, %v1281
        %v1283 = vpop.f32.mrb[0].mxu0
        %v1284 = vadd.f32 %v376, %v1283
        %1285 = vmatprep.mubr.f32.mxu0 0.0
        %1286 = vmatmul.mubr.f32.gmra.mrb[0].mxu0 %v1177
        %v1287 = vpop.f32.mrb[0].mxu0
        %v1288 = vadd.f32 %v372, %v1287
        %v1289 = vpop.f32.mrb[0].mxu0
        %v1290 = vadd.f32 %v376, %v1289
        %1291 = vdwg.mxu0
        %1292 = vmatprep.subr.mxu0 %v285
        %1293 = vmatpush1.msra.mxu0 %v284
        %1294 = vmatprep.subr.mxu0 %v289
        %1295 = vmatpush1.msra.mxu0 %v288
        %1296 = vmatprep.subr.mxu0 %v293
        %1297 = vmatpush1.msra.mxu0 %v292
        %1298 = vmatprep.subr.mxu0 %v297
        %1299 = vmatpush1.msra.mxu0 %v296
        %1300 = vmatprep.subr.mxu0 0.0
        %1301 = vmatpush1.msra.mxu0 0.0
        %1302 = vmatprep.subr.mxu0 0.0
        %1303 = vmatpush1.msra.mxu0 0.0
        %1304 = vmatprep.subr.mxu0 0.0
        %1305 = vmatpush1.msra.mxu0 0.0
        %1306 = vmatprep.subr.mxu0 0.0
        %1307 = vmatpush1.msra.mxu0 0.0
        %1308 = vmatprep.subr.mxu0 0.0
        %1309 = vmatpush1.msra.mxu0 0.0
        %1310 = vmatprep.subr.mxu0 0.0
        %1311 = vmatpush1.msra.mxu0 0.0
        %1312 = vmatprep.subr.mxu0 0.0
        %1313 = vmatpush1.msra.mxu0 0.0
        %1314 = vmatprep.subr.mxu0 0.0
        %1315 = vmatpush1.msra.mxu0 0.0
        %1316 = vmatprep.subr.mxu0 0.0
        %1317 = vmatpush1.msra.mxu0 0.0
        %1318 = vmatprep.subr.mxu0 0.0
        %1319 = vmatpush1.msra.mxu0 0.0
        %1320 = vmatprep.subr.mxu0 0.0
        %1321 = vmatpush1.msra.mxu0 0.0
        %1322 = vmatprep.subr.mxu0 0.0
        %1323 = vmatpush1.msra.mxu0 0.0
        %1324 = vmatprep.subr.mxu0 0.0
        %1325 = vmatpush1.msra.mxu0 0.0
        %1326 = vmatprep.subr.mxu0 0.0
        %1327 = vmatpush1.msra.mxu0 0.0
        %1328 = vmatprep.subr.mxu0 0.0
        %1329 = vmatpush1.msra.mxu0 0.0
        %1330 = vmatprep.subr.mxu0 0.0
        %1331 = vmatpush1.msra.mxu0 0.0
        %1332 = vmatprep.subr.mxu0 0.0
        %1333 = vmatpush1.msra.mxu0 0.0
        %1334 = vmatprep.subr.mxu0 0.0
        %1335 = vmatpush1.msra.mxu0 0.0
        %1336 = vmatprep.subr.mxu0 0.0
        %1337 = vmatpush1.msra.mxu0 0.0
        %1338 = vmatprep.subr.mxu0 0.0
        %1339 = vmatpush1.msra.mxu0 0.0
        %1340 = vmatprep.subr.mxu0 0.0
        %1341 = vmatpush1.msra.mxu0 0.0
        %1342 = vmatprep.subr.mxu0 0.0
        %1343 = vmatpush1.msra.mxu0 0.0
        %1344 = vmatprep.subr.mxu0 0.0
        %1345 = vmatpush1.msra.mxu0 0.0
        %1346 = vmatprep.subr.mxu0 0.0
        %1347 = vmatpush1.msra.mxu0 0.0
        %1348 = vmatprep.subr.mxu0 0.0
        %1349 = vmatpush1.msra.mxu0 0.0
        %1350 = vmatprep.subr.mxu0 0.0
        %1351 = vmatpush1.msra.mxu0 0.0
        %1352 = vmatprep.subr.mxu0 0.0
        %1353 = vmatpush1.msra.mxu0 0.0
        %1354 = vmatprep.subr.mxu0 0.0
        %1355 = vmatpush1.msra.mxu0 0.0
        %1356 = vmatprep.mubr.f32.mxu0 0.0
        %1357 = vmatmul.mubr.f32.gmra.mrb[0].mxu0 %v1156
        %v1358 = vpop.f32.mrb[0].mxu0
        %v1359 = vadd.f32 %v380, %v1358
        %v1360 = vpop.f32.mrb[0].mxu0
        %v1361 = vadd.f32 %v384, %v1360
        %1362 = vmatprep.mubr.f32.mxu0 0.0
        %1363 = vmatmul.mubr.f32.gmra.mrb[0].mxu0 %v1159
        %v1364 = vpop.f32.mrb[0].mxu0
        %v1365 = vadd.f32 %v380, %v1364
        %v1366 = vpop.f32.mrb[0].mxu0
        %v1367 = vadd.f32 %v384, %v1366
        %1368 = vmatprep.mubr.f32.mxu0 0.0
        %1369 = vmatmul.mubr.f32.gmra.mrb[0].mxu0 %v1162
        %v1370 = vpop.f32.mrb[0].mxu0
        %v1371 = vadd.f32 %v380, %v1370
        %v1372 = vpop.f32.mrb[0].mxu0
        %v1373 = vadd.f32 %v384, %v1372
        %1374 = vmatprep.mubr.f32.mxu0 0.0
        %1375 = vmatmul.mubr.f32.gmra.mrb[0].mxu0 %v1165
        %v1376 = vpop.f32.mrb[0].mxu0
        %v1377 = vadd.f32 %v380, %v1376
        %v1378 = vpop.f32.mrb[0].mxu0
        %v1379 = vadd.f32 %v384, %v1378
        %1380 = vmatprep.mubr.f32.mxu0 0.0
        %1381 = vmatmul.mubr.f32.gmra.mrb[0].mxu0 %v1168
        %v1382 = vpop.f32.mrb[0].mxu0
        %v1383 = vadd.f32 %v380, %v1382
        %v1384 = vpop.f32.mrb[0].mxu0
        %v1385 = vadd.f32 %v384, %v1384
        %1386 = vmatprep.mubr.f32.mxu0 0.0
        %1387 = vmatmul.mubr.f32.gmra.mrb[0].mxu0 %v1171
        %v1388 = vpop.f32.mrb[0].mxu0
        %v1389 = vadd.f32 %v380, %v1388
        %v1390 = vpop.f32.mrb[0].mxu0
        %v1391 = vadd.f32 %v384, %v1390
        %1392 = vmatprep.mubr.f32.mxu0 0.0
        %1393 = vmatmul.mubr.f32.gmra.mrb[0].mxu0 %v1174
        %v1394 = vpop.f32.mrb[0].mxu0
        %v1395 = vadd.f32 %v380, %v1394
        %v1396 = vpop.f32.mrb[0].mxu0
        %v1397 = vadd.f32 %v384, %v1396
        %1398 = vmatprep.mubr.f32.mxu0 0.0
        %1399 = vmatmul.mubr.f32.gmra.mrb[0].mxu0 %v1177
        %v1400 = vpop.f32.mrb[0].mxu0
        %v1401 = vadd.f32 %v380, %v1400
        %v1402 = vpop.f32.mrb[0].mxu0
        %v1403 = vadd.f32 %v384, %v1402
        %1404 = vdwg.mxu0
        %1405 = vmatprep.subr.mxu0 0.0
        %1406 = vmatpush1.msra.mxu0 %v299
        %1407 = vmatprep.subr.mxu0 0.0
        %1408 = vmatpush1.msra.mxu0 %v300
        %1409 = vmatprep.subr.mxu0 0.0
        %1410 = vmatpush1.msra.mxu0 %v301
        %1411 = vmatprep.subr.mxu0 0.0
        %1412 = vmatpush1.msra.mxu0 %v302
        %1413 = vmatprep.subr.mxu0 0.0
        %1414 = vmatpush1.msra.mxu0 %v303
        %1415 = vmatprep.subr.mxu0 0.0
        %1416 = vmatpush1.msra.mxu0 %v304
        %1417 = vmatprep.subr.mxu0 0.0
        %1418 = vmatpush1.msra.mxu0 %v305
        %1419 = vmatprep.subr.mxu0 0.0
        %1420 = vmatpush1.msra.mxu0 %v306
        %1421 = vmatprep.subr.mxu0 0.0
        %1422 = vmatpush1.msra.mxu0 %v307
        %1423 = vmatprep.subr.mxu0 0.0
        %1424 = vmatpush1.msra.mxu0 %v308
        %1425 = vmatprep.subr.mxu0 0.0
        %1426 = vmatpush1.msra.mxu0 %v309
        %1427 = vmatprep.subr.mxu0 0.0
        %1428 = vmatpush1.msra.mxu0 %v310
        %1429 = vmatprep.subr.mxu0 0.0
        %1430 = vmatpush1.msra.mxu0 %v311
        %1431 = vmatprep.subr.mxu0 0.0
        %1432 = vmatpush1.msra.mxu0 %v312
        %1433 = vmatprep.subr.mxu0 0.0
        %1434 = vmatpush1.msra.mxu0 %v313
        %1435 = vmatprep.subr.mxu0 0.0
        %1436 = vmatpush1.msra.mxu0 %v314
        %1437 = vmatprep.subr.mxu0 0.0
        %1438 = vmatpush1.msra.mxu0 %v315
        %1439 = vmatprep.subr.mxu0 0.0
        %1440 = vmatpush1.msra.mxu0 %v316
        %1441 = vmatprep.subr.mxu0 0.0
        %1442 = vmatpush1.msra.mxu0 %v317
        %1443 = vmatprep.subr.mxu0 0.0
        %1444 = vmatpush1.msra.mxu0 %v318
        %1445 = vmatprep.subr.mxu0 0.0
        %1446 = vmatpush1.msra.mxu0 %v319
        %1447 = vmatprep.subr.mxu0 0.0
        %1448 = vmatpush1.msra.mxu0 %v320
        %1449 = vmatprep.subr.mxu0 0.0
        %1450 = vmatpush1.msra.mxu0 %v321
        %1451 = vmatprep.subr.mxu0 0.0
        %1452 = vmatpush1.msra.mxu0 %v322
        %1453 = vmatprep.subr.mxu0 0.0
        %1454 = vmatpush1.msra.mxu0 %v323
        %1455 = vmatprep.subr.mxu0 0.0
        %1456 = vmatpush1.msra.mxu0 %v324
        %1457 = vmatprep.subr.mxu0 0.0
        %1458 = vmatpush1.msra.mxu0 %v325
        %1459 = vmatprep.subr.mxu0 0.0
        %1460 = vmatpush1.msra.mxu0 %v326
        %1461 = vmatprep.subr.mxu0 0.0
        %1462 = vmatpush1.msra.mxu0 %v327
        %1463 = vmatprep.subr.mxu0 0.0
        %1464 = vmatpush1.msra.mxu0 %v328
        %1465 = vmatprep.subr.mxu0 0.0
        %1466 = vmatpush1.msra.mxu0 %v329
        %1467 = vmatprep.subr.mxu0 0.0
        %1468 = vmatpush1.msra.mxu0 %v330
        %1469 = vmatprep.mubr.f32.mxu0 %v1248
        %1470 = vmatmul.mubr.f32.gmra.mrb[0].mxu0 %v1246
        %v1471 = vpop.f32.mrb[0].mxu0
        %v1472 = vadd.f32 %v676, %v1471
        %v1473 = vpop.f32.mrb[0].mxu0
        %1474 = vmatprep.mubr.f32.mxu0 %v1254
        %1475 = vmatmul.mubr.f32.gmra.mrb[0].mxu0 %v1252
        %v1476 = vpop.f32.mrb[0].mxu0
        %v1477 = vadd.f32 %v676, %v1476
        %v1478 = vpop.f32.mrb[0].mxu0
        %1479 = vmatprep.mubr.f32.mxu0 %v1260
        %1480 = vmatmul.mubr.f32.gmra.mrb[0].mxu0 %v1258
        %v1481 = vpop.f32.mrb[0].mxu0
        %v1482 = vadd.f32 %v676, %v1481
        %v1483 = vpop.f32.mrb[0].mxu0
        %1484 = vmatprep.mubr.f32.mxu0 %v1266
        %1485 = vmatmul.mubr.f32.gmra.mrb[0].mxu0 %v1264
        %v1486 = vpop.f32.mrb[0].mxu0
        %v1487 = vadd.f32 %v676, %v1486
        %v1488 = vpop.f32.mrb[0].mxu0
        %1489 = vmatprep.mubr.f32.mxu0 %v1272
        %1490 = vmatmul.mubr.f32.gmra.mrb[0].mxu0 %v1270
        %v1491 = vpop.f32.mrb[0].mxu0
        %v1492 = vadd.f32 %v676, %v1491
        %v1493 = vpop.f32.mrb[0].mxu0
        %1494 = vmatprep.mubr.f32.mxu0 %v1278
        %1495 = vmatmul.mubr.f32.gmra.mrb[0].mxu0 %v1276
        %v1496 = vpop.f32.mrb[0].mxu0
        %v1497 = vadd.f32 %v676, %v1496
        %v1498 = vpop.f32.mrb[0].mxu0
        %1499 = vmatprep.mubr.f32.mxu0 %v1284
        %1500 = vmatmul.mubr.f32.gmra.mrb[0].mxu0 %v1282
        %v1501 = vpop.f32.mrb[0].mxu0
        %v1502 = vadd.f32 %v676, %v1501
        %v1503 = vpop.f32.mrb[0].mxu0
        %1504 = vmatprep.mubr.f32.mxu0 %v1290
        %1505 = vmatmul.mubr.f32.gmra.mrb[0].mxu0 %v1288
        %v1506 = vpop.f32.mrb[0].mxu0
        %v1507 = vadd.f32 %v676, %v1506
        %v1508 = vpop.f32.mrb[0].mxu0
        %1509 = vdwg.mxu0
        %1510 = vmatprep.subr.mxu0 0.0
        %1511 = vmatpush1.msra.mxu0 %v331
        %1512 = vmatprep.subr.mxu0 0.0
        %1513 = vmatpush1.msra.mxu0 %v332
        %1514 = vmatprep.subr.mxu0 0.0
        %1515 = vmatpush1.msra.mxu0 %v333
        %1516 = vmatprep.subr.mxu0 0.0
        %1517 = vmatpush1.msra.mxu0 %v334
        %1518 = vmatprep.subr.mxu0 0.0
        %1519 = vmatpush1.msra.mxu0 %v335
        %1520 = vmatprep.subr.mxu0 0.0
        %1521 = vmatpush1.msra.mxu0 %v336
        %1522 = vmatprep.subr.mxu0 0.0
        %1523 = vmatpush1.msra.mxu0 %v337
        %1524 = vmatprep.subr.mxu0 0.0
        %1525 = vmatpush1.msra.mxu0 %v338
        %1526 = vmatprep.subr.mxu0 0.0
        %1527 = vmatpush1.msra.mxu0 %v339
        %1528 = vmatprep.subr.mxu0 0.0
        %1529 = vmatpush1.msra.mxu0 %v340
        %1530 = vmatprep.subr.mxu0 0.0
        %1531 = vmatpush1.msra.mxu0 %v341
        %1532 = vmatprep.subr.mxu0 0.0
        %1533 = vmatpush1.msra.mxu0 %v342
        %1534 = vmatprep.subr.mxu0 0.0
        %1535 = vmatpush1.msra.mxu0 %v343
        %1536 = vmatprep.subr.mxu0 0.0
        %1537 = vmatpush1.msra.mxu0 %v344
        %1538 = vmatprep.subr.mxu0 0.0
        %1539 = vmatpush1.msra.mxu0 %v345
        %1540 = vmatprep.subr.mxu0 0.0
        %1541 = vmatpush1.msra.mxu0 %v346
        %1542 = vmatprep.subr.mxu0 0.0
        %1543 = vmatpush1.msra.mxu0 %v347
        %1544 = vmatprep.subr.mxu0 0.0
        %1545 = vmatpush1.msra.mxu0 %v348
        %1546 = vmatprep.subr.mxu0 0.0
        %1547 = vmatpush1.msra.mxu0 %v349
        %1548 = vmatprep.subr.mxu0 0.0
        %1549 = vmatpush1.msra.mxu0 %v350
        %1550 = vmatprep.subr.mxu0 0.0
        %1551 = vmatpush1.msra.mxu0 %v351
        %1552 = vmatprep.subr.mxu0 0.0
        %1553 = vmatpush1.msra.mxu0 %v352
        %1554 = vmatprep.subr.mxu0 0.0
        %1555 = vmatpush1.msra.mxu0 %v353
        %1556 = vmatprep.subr.mxu0 0.0
        %1557 = vmatpush1.msra.mxu0 %v354
        %1558 = vmatprep.subr.mxu0 0.0
        %1559 = vmatpush1.msra.mxu0 %v355
        %1560 = vmatprep.subr.mxu0 0.0
        %1561 = vmatpush1.msra.mxu0 %v356
        %1562 = vmatprep.subr.mxu0 0.0
        %1563 = vmatpush1.msra.mxu0 %v357
        %1564 = vmatprep.subr.mxu0 0.0
        %1565 = vmatpush1.msra.mxu0 %v358
        %1566 = vmatprep.subr.mxu0 0.0
        %1567 = vmatpush1.msra.mxu0 %v359
        %1568 = vmatprep.subr.mxu0 0.0
        %1569 = vmatpush1.msra.mxu0 %v360
        %1570 = vmatprep.subr.mxu0 0.0
        %1571 = vmatpush1.msra.mxu0 %v361
        %1572 = vmatprep.subr.mxu0 0.0
        %1573 = vmatpush1.msra.mxu0 %v362
        %1574 = vmatprep.mubr.f32.mxu0 %v1361
        %1575 = vmatmul.mubr.f32.gmra.mrb[0].mxu0 %v1359
        %v1576 = vpop.f32.mrb[0].mxu0
        %v1577 = vadd.f32 %v1472, %v1576
        %v1578 = vpop.f32.mrb[0].mxu0
        %1579 = vmatprep.mubr.f32.mxu0 %v1367
        %1580 = vmatmul.mubr.f32.gmra.mrb[0].mxu0 %v1365
        %v1581 = vpop.f32.mrb[0].mxu0
        %v1582 = vadd.f32 %v1477, %v1581
        %v1583 = vpop.f32.mrb[0].mxu0
        %1584 = vmatprep.mubr.f32.mxu0 %v1373
        %1585 = vmatmul.mubr.f32.gmra.mrb[0].mxu0 %v1371
        %v1586 = vpop.f32.mrb[0].mxu0
        %v1587 = vadd.f32 %v1482, %v1586
        %v1588 = vpop.f32.mrb[0].mxu0
        %1589 = vmatprep.mubr.f32.mxu0 %v1379
        %1590 = vmatmul.mubr.f32.gmra.mrb[0].mxu0 %v1377
        %v1591 = vpop.f32.mrb[0].mxu0
        %v1592 = vadd.f32 %v1487, %v1591
        %v1593 = vpop.f32.mrb[0].mxu0
        %1594 = vmatprep.mubr.f32.mxu0 %v1385
        %1595 = vmatmul.mubr.f32.gmra.mrb[0].mxu0 %v1383
        %v1596 = vpop.f32.mrb[0].mxu0
        %v1597 = vadd.f32 %v1492, %v1596
        %v1598 = vpop.f32.mrb[0].mxu0
        %1599 = vmatprep.mubr.f32.mxu0 %v1391
        %1600 = vmatmul.mubr.f32.gmra.mrb[0].mxu0 %v1389
        %v1601 = vpop.f32.mrb[0].mxu0
        %v1602 = vadd.f32 %v1497, %v1601
        %v1603 = vpop.f32.mrb[0].mxu0
        %1604 = vmatprep.mubr.f32.mxu0 %v1397
        %1605 = vmatmul.mubr.f32.gmra.mrb[0].mxu0 %v1395
        %v1606 = vpop.f32.mrb[0].mxu0
        %v1607 = vadd.f32 %v1502, %v1606
        %v1608 = vpop.f32.mrb[0].mxu0
        %1609 = vmatprep.mubr.f32.mxu0 %v1403
        %1610 = vmatmul.mubr.f32.gmra.mrb[0].mxu0 %v1401
        %v1611 = vpop.f32.mrb[0].mxu0
        %v1612 = vadd.f32 %v1507, %v1611
        %v1613 = vpop.f32.mrb[0].mxu0
        %1614 = vdwg.mxu0
        %v1615 = vxor.u32 %v1577, 2147483648
        %v1616 = vxor.u32 %v1582, 2147483648
        %v1617 = vxor.u32 %v1587, 2147483648
        %v1618 = vxor.u32 %v1592, 2147483648
        %v1619 = vxor.u32 %v1597, 2147483648
        %v1620 = vxor.u32 %v1602, 2147483648
        %v1621 = vxor.u32 %v1607, 2147483648
        %v1622 = vxor.u32 %v1612, 2147483648
        %v1623 = vmul.f32 %v1615, 1.442695
        %v1624 = vpow.pop %v1623
        %v1625 = vmul.f32 %v1616, 1.442695
        %v1626 = vpow.pop %v1625
        %v1627 = vmul.f32 %v1617, 1.442695
        %v1628 = vpow.pop %v1627
        %v1629 = vmul.f32 %v1618, 1.442695
        %v1630 = vpow.pop %v1629
        %v1631 = vmul.f32 %v1619, 1.442695
        %v1632 = vpow.pop %v1631
        %v1633 = vmul.f32 %v1620, 1.442695
        %v1634 = vpow.pop %v1633
        %v1635 = vmul.f32 %v1621, 1.442695
        %v1636 = vpow.pop %v1635
        %v1637 = vmul.f32 %v1622, 1.442695
        %v1638 = vpow.pop %v1637
        %v1639 = vadd.f32 %v1624, 1.0
        %v1640 = vadd.f32 %v1626, 1.0
        %v1641 = vadd.f32 %v1628, 1.0
        %v1642 = vadd.f32 %v1630, 1.0
        %v1643 = vadd.f32 %v1632, 1.0
        %v1644 = vadd.f32 %v1634, 1.0
        %v1645 = vadd.f32 %v1636, 1.0
        %v1646 = vadd.f32 %v1638, 1.0
        %v1647 = vrcp.pop %v1639
        %v1648 = vmul.f32 1.0, %v1647
        %v1649 = vrcp.pop %v1640
        %v1650 = vmul.f32 1.0, %v1649
        %v1651 = vrcp.pop %v1641
        %v1652 = vmul.f32 1.0, %v1651
        %v1653 = vrcp.pop %v1642
        %v1654 = vmul.f32 1.0, %v1653
        %v1655 = vrcp.pop %v1643
        %v1656 = vmul.f32 1.0, %v1655
        %v1657 = vrcp.pop %v1644
        %v1658 = vmul.f32 1.0, %v1657
        %v1659 = vrcp.pop %v1645
        %v1660 = vmul.f32 1.0, %v1659
        %v1661 = vrcp.pop %v1646
        %v1662 = vmul.f32 1.0, %v1661
        %1663 = vxpose.xlu0.b32.start [1/16] %v1648, 128
        %1664 = vxpose.xlu0.b32.cont [2/16] %v1650, 128
        %1665 = vxpose.xlu0.b32.cont [3/16] %v1652, 128
        %1666 = vxpose.xlu0.b32.cont [4/16] %v1654, 128
        %1667 = vxpose.xlu0.b32.cont [5/16] %v1656, 128
        %1668 = vxpose.xlu0.b32.cont [6/16] %v1658, 128
        %1669 = vxpose.xlu0.b32.cont [7/16] %v1660, 128
        %1670 = vxpose.xlu0.b32.cont [8/16] %v1662, 128
        %1671 = vxpose.xlu0.b32.cont [9/16] 0.0, 128
        %1672 = vxpose.xlu0.b32.cont [10/16] 0.0, 128
        %1673 = vxpose.xlu0.b32.cont [11/16] 0.0, 128
        %1674 = vxpose.xlu0.b32.cont [12/16] 0.0, 128
        %1675 = vxpose.xlu0.b32.cont [13/16] 0.0, 128
        %1676 = vxpose.xlu0.b32.cont [14/16] 0.0, 128
        %1677 = vxpose.xlu0.b32.cont [15/16] 0.0, 128
        %1678 = vxpose.xlu0.b32.end [16/16] 0.0, 128
        %v1679 = vpop.trf.xlu0
        %v1680 = vpop.trf.xlu0
        %v1681 = vpop.trf.xlu0
        %v1682 = vpop.trf.xlu0
        %v1683 = vpop.trf.xlu0
        %v1684 = vpop.trf.xlu0
        %v1685 = vpop.trf.xlu0
        %v1686 = vpop.trf.xlu0
        %v1687 = vpop.trf.xlu0
        %v1688 = vpop.trf.xlu0
        %v1689 = vpop.trf.xlu0
        %v1690 = vpop.trf.xlu0
        %v1691 = vpop.trf.xlu0
        %v1692 = vpop.trf.xlu0
        %v1693 = vpop.trf.xlu0
        %v1694 = vpop.trf.xlu0
        %v1696 = vsel %vm968, %v1679, 0
        %1698 = vmatprep.subr.mxu0 %v1248
        %1699 = vmatpush1.msra.mxu0 %v1246
        %1700 = vmatprep.subr.mxu0 %v1254
        %1701 = vmatpush1.msra.mxu0 %v1252
        %1702 = vmatprep.subr.mxu0 %v1260
        %1703 = vmatpush1.msra.mxu0 %v1258
        %1704 = vmatprep.subr.mxu0 %v1266
        %1705 = vmatpush1.msra.mxu0 %v1264
        %1706 = vmatprep.subr.mxu0 %v1272
        %1707 = vmatpush1.msra.mxu0 %v1270
        %1708 = vmatprep.subr.mxu0 %v1278
        %1709 = vmatpush1.msra.mxu0 %v1276
        %1710 = vmatprep.subr.mxu0 %v1284
        %1711 = vmatpush1.msra.mxu0 %v1282
        %1712 = vmatprep.subr.mxu0 %v1290
        %1713 = vmatpush1.msra.mxu0 %v1288
        %1714 = vmatprep.subr.mxu0 0.0
        %1715 = vmatpush1.msra.mxu0 0.0
        %1716 = vmatprep.subr.mxu0 0.0
        %1717 = vmatpush1.msra.mxu0 0.0
        %1718 = vmatprep.subr.mxu0 0.0
        %1719 = vmatpush1.msra.mxu0 0.0
        %1720 = vmatprep.subr.mxu0 0.0
        %1721 = vmatpush1.msra.mxu0 0.0
        %1722 = vmatprep.subr.mxu0 0.0
        %1723 = vmatpush1.msra.mxu0 0.0
        %1724 = vmatprep.subr.mxu0 0.0
        %1725 = vmatpush1.msra.mxu0 0.0
        %1726 = vmatprep.subr.mxu0 0.0
        %1727 = vmatpush1.msra.mxu0 0.0
        %1728 = vmatprep.subr.mxu0 0.0
        %1729 = vmatpush1.msra.mxu0 0.0
        %1730 = vmatprep.subr.mxu0 0.0
        %1731 = vmatpush1.msra.mxu0 0.0
        %1732 = vmatprep.subr.mxu0 0.0
        %1733 = vmatpush1.msra.mxu0 0.0
        %1734 = vmatprep.subr.mxu0 0.0
        %1735 = vmatpush1.msra.mxu0 0.0
        %1736 = vmatprep.subr.mxu0 0.0
        %1737 = vmatpush1.msra.mxu0 0.0
        %1738 = vmatprep.subr.mxu0 0.0
        %1739 = vmatpush1.msra.mxu0 0.0
        %1740 = vmatprep.subr.mxu0 0.0
        %1741 = vmatpush1.msra.mxu0 0.0
        %1742 = vmatprep.subr.mxu0 0.0
        %1743 = vmatpush1.msra.mxu0 0.0
        %1744 = vmatprep.subr.mxu0 0.0
        %1745 = vmatpush1.msra.mxu0 0.0
        %1746 = vmatprep.subr.mxu0 0.0
        %1747 = vmatpush1.msra.mxu0 0.0
        %1748 = vmatprep.subr.mxu0 0.0
        %1749 = vmatpush1.msra.mxu0 0.0
        %1750 = vmatprep.subr.mxu0 0.0
        %1751 = vmatpush1.msra.mxu0 0.0
        %1752 = vmatprep.subr.mxu0 0.0
        %1753 = vmatpush1.msra.mxu0 0.0
        %1754 = vmatprep.subr.mxu0 0.0
        %1755 = vmatpush1.msra.mxu0 0.0
        %1756 = vmatprep.subr.mxu0 0.0
        %1757 = vmatpush1.msra.mxu0 0.0
        %1758 = vmatprep.subr.mxu0 0.0
        %1759 = vmatpush1.msra.mxu0 0.0
        %1760 = vmatprep.subr.mxu0 0.0
        %1761 = vmatpush1.msra.mxu0 0.0
        %1762 = vmatprep.mubr.f32.mxu0 0.0
        %1763 = vmatmul.mubr.f32.gmra.mrb[0].mxu0 %v1696
        %v1764 = vpop.f32.mrb[0].mxu0
        %v1765 = vadd.f32 0.0, %v1764
        %v1766 = vpop.f32.mrb[0].mxu0
        %v1767 = vadd.f32 0.0, %v1766
        %1768 = vdwg.mxu0
        %1769 = vmatprep.subr.mxu0 %v1361
        %1770 = vmatpush1.msra.mxu0 %v1359
        %1771 = vmatprep.subr.mxu0 %v1367
        %1772 = vmatpush1.msra.mxu0 %v1365
        %1773 = vmatprep.subr.mxu0 %v1373
        %1774 = vmatpush1.msra.mxu0 %v1371
        %1775 = vmatprep.subr.mxu0 %v1379
        %1776 = vmatpush1.msra.mxu0 %v1377
        %1777 = vmatprep.subr.mxu0 %v1385
        %1778 = vmatpush1.msra.mxu0 %v1383
        %1779 = vmatprep.subr.mxu0 %v1391
        %1780 = vmatpush1.msra.mxu0 %v1389
        %1781 = vmatprep.subr.mxu0 %v1397
        %1782 = vmatpush1.msra.mxu0 %v1395
        %1783 = vmatprep.subr.mxu0 %v1403
        %1784 = vmatpush1.msra.mxu0 %v1401
        %1785 = vmatprep.subr.mxu0 0.0
        %1786 = vmatpush1.msra.mxu0 0.0
        %1787 = vmatprep.subr.mxu0 0.0
        %1788 = vmatpush1.msra.mxu0 0.0
        %1789 = vmatprep.subr.mxu0 0.0
        %1790 = vmatpush1.msra.mxu0 0.0
        %1791 = vmatprep.subr.mxu0 0.0
        %1792 = vmatpush1.msra.mxu0 0.0
        %1793 = vmatprep.subr.mxu0 0.0
        %1794 = vmatpush1.msra.mxu0 0.0
        %1795 = vmatprep.subr.mxu0 0.0
        %1796 = vmatpush1.msra.mxu0 0.0
        %1797 = vmatprep.subr.mxu0 0.0
        %1798 = vmatpush1.msra.mxu0 0.0
        %1799 = vmatprep.subr.mxu0 0.0
        %1800 = vmatpush1.msra.mxu0 0.0
        %1801 = vmatprep.subr.mxu0 0.0
        %1802 = vmatpush1.msra.mxu0 0.0
        %1803 = vmatprep.subr.mxu0 0.0
        %1804 = vmatpush1.msra.mxu0 0.0
        %1805 = vmatprep.subr.mxu0 0.0
        %1806 = vmatpush1.msra.mxu0 0.0
        %1807 = vmatprep.subr.mxu0 0.0
        %1808 = vmatpush1.msra.mxu0 0.0
        %1809 = vmatprep.subr.mxu0 0.0
        %1810 = vmatpush1.msra.mxu0 0.0
        %1811 = vmatprep.subr.mxu0 0.0
        %1812 = vmatpush1.msra.mxu0 0.0
        %1813 = vmatprep.subr.mxu0 0.0
        %1814 = vmatpush1.msra.mxu0 0.0
        %1815 = vmatprep.subr.mxu0 0.0
        %1816 = vmatpush1.msra.mxu0 0.0
        %1817 = vmatprep.subr.mxu0 0.0
        %1818 = vmatpush1.msra.mxu0 0.0
        %1819 = vmatprep.subr.mxu0 0.0
        %1820 = vmatpush1.msra.mxu0 0.0
        %1821 = vmatprep.subr.mxu0 0.0
        %1822 = vmatpush1.msra.mxu0 0.0
        %1823 = vmatprep.subr.mxu0 0.0
        %1824 = vmatpush1.msra.mxu0 0.0
        %1825 = vmatprep.subr.mxu0 0.0
        %1826 = vmatpush1.msra.mxu0 0.0
        %1827 = vmatprep.subr.mxu0 0.0
        %1828 = vmatpush1.msra.mxu0 0.0
        %1829 = vmatprep.subr.mxu0 0.0
        %1830 = vmatpush1.msra.mxu0 0.0
        %1831 = vmatprep.subr.mxu0 0.0
        %1832 = vmatpush1.msra.mxu0 0.0
        %1833 = vmatprep.mubr.f32.mxu0 0.0
        %1834 = vmatmul.mubr.f32.gmra.mrb[0].mxu0 %v1696
        %v1835 = vpop.f32.mrb[0].mxu0
        %v1836 = vadd.f32 0.0, %v1835
        %v1837 = vpop.f32.mrb[0].mxu0
        %v1838 = vadd.f32 0.0, %v1837
        %1839 = vdwg.mxu0
        %v1840 = vmul.f32 %v1765, 0.015625
        %v1841 = vmul.f32 %v1767, 0.015625
        %v1842 = vmul.f32 %v1836, 0.015625
        %v1843 = vmul.f32 %v1838, 0.015625
        %s1844 = scalar_lea.vmem %s280, 64
        %v1845 = vld [vmem:[%s1844] sm:$0xff]
        %v1846 = vld [vmem:[%s1844 + $0x8] sm:$0xff]
        %v1847 = vld [vmem:[%s1844 + $0x10] sm:$0xff]
        %v1848 = vld [vmem:[%s1844 + $0x18] sm:$0xff]
        %1849 = vxpose.xlu0.b32.start [1/16] %v1845, 128
        %1850 = vxpose.xlu0.b32.cont [2/16] %v1846, 128
        %1851 = vxpose.xlu0.b32.cont [3/16] %v1847, 128
        %1852 = vxpose.xlu0.b32.cont [4/16] %v1848, 128
        %1853 = vxpose.xlu0.b32.cont [5/16] 0.0, 128
        %1854 = vxpose.xlu0.b32.cont [6/16] 0.0, 128
        %1855 = vxpose.xlu0.b32.cont [7/16] 0.0, 128
        %1856 = vxpose.xlu0.b32.cont [8/16] 0.0, 128
        %1857 = vxpose.xlu0.b32.cont [9/16] 0.0, 128
        %1858 = vxpose.xlu0.b32.cont [10/16] 0.0, 128
        %1859 = vxpose.xlu0.b32.cont [11/16] 0.0, 128
        %1860 = vxpose.xlu0.b32.cont [12/16] 0.0, 128
        %1861 = vxpose.xlu0.b32.cont [13/16] 0.0, 128
        %1862 = vxpose.xlu0.b32.cont [14/16] 0.0, 128
        %1863 = vxpose.xlu0.b32.cont [15/16] 0.0, 128
        %1864 = vxpose.xlu0.b32.end [16/16] 0.0, 128
        %v1865 = vpop.trf.xlu0
        %v1866 = vpop.trf.xlu0
        %v1867 = vpop.trf.xlu0
        %v1868 = vpop.trf.xlu0
        %v1869 = vpop.trf.xlu0
        %v1870 = vpop.trf.xlu0
        %v1871 = vpop.trf.xlu0
        %v1872 = vpop.trf.xlu0
        %v1873 = vpop.trf.xlu0
        %v1874 = vpop.trf.xlu0
        %v1875 = vpop.trf.xlu0
        %v1876 = vpop.trf.xlu0
        %v1877 = vpop.trf.xlu0
        %v1878 = vpop.trf.xlu0
        %v1879 = vpop.trf.xlu0
        %v1880 = vpop.trf.xlu0
        %v1882 = vsel %vm421, %v1865, 0
        %v1885 = vsel %vm421, %v1866, 0
        %v1888 = vsel %vm421, %v1867, 0
        %v1891 = vsel %vm421, %v1868, 0
        %v1894 = vsel %vm421, %v1869, 0
        %v1897 = vsel %vm421, %v1870, 0
        %v1900 = vsel %vm421, %v1871, 0
        %v1903 = vsel %vm421, %v1872, 0
        %1905 = vmatprep.subr.mxu0 %v283
        %1906 = vmatpush1.msra.mxu0 %v282
        %1907 = vmatprep.subr.mxu0 %v287
        %1908 = vmatpush1.msra.mxu0 %v286
        %1909 = vmatprep.subr.mxu0 %v291
        %1910 = vmatpush1.msra.mxu0 %v290
        %1911 = vmatprep.subr.mxu0 %v295
        %1912 = vmatpush1.msra.mxu0 %v294
        %1913 = vmatprep.subr.mxu0 0.0
        %1914 = vmatpush1.msra.mxu0 0.0
        %1915 = vmatprep.subr.mxu0 0.0
        %1916 = vmatpush1.msra.mxu0 0.0
        %1917 = vmatprep.subr.mxu0 0.0
        %1918 = vmatpush1.msra.mxu0 0.0
        %1919 = vmatprep.subr.mxu0 0.0
        %1920 = vmatpush1.msra.mxu0 0.0
        %1921 = vmatprep.subr.mxu0 0.0
        %1922 = vmatpush1.msra.mxu0 0.0
        %1923 = vmatprep.subr.mxu0 0.0
        %1924 = vmatpush1.msra.mxu0 0.0
        %1925 = vmatprep.subr.mxu0 0.0
        %1926 = vmatpush1.msra.mxu0 0.0
        %1927 = vmatprep.subr.mxu0 0.0
        %1928 = vmatpush1.msra.mxu0 0.0
        %1929 = vmatprep.subr.mxu0 0.0
        %1930 = vmatpush1.msra.mxu0 0.0
        %1931 = vmatprep.subr.mxu0 0.0
        %1932 = vmatpush1.msra.mxu0 0.0
        %1933 = vmatprep.subr.mxu0 0.0
        %1934 = vmatpush1.msra.mxu0 0.0
        %1935 = vmatprep.subr.mxu0 0.0
        %1936 = vmatpush1.msra.mxu0 0.0
        %1937 = vmatprep.subr.mxu0 0.0
        %1938 = vmatpush1.msra.mxu0 0.0
        %1939 = vmatprep.subr.mxu0 0.0
        %1940 = vmatpush1.msra.mxu0 0.0
        %1941 = vmatprep.subr.mxu0 0.0
        %1942 = vmatpush1.msra.mxu0 0.0
        %1943 = vmatprep.subr.mxu0 0.0
        %1944 = vmatpush1.msra.mxu0 0.0
        %1945 = vmatprep.subr.mxu0 0.0
        %1946 = vmatpush1.msra.mxu0 0.0
        %1947 = vmatprep.subr.mxu0 0.0
        %1948 = vmatpush1.msra.mxu0 0.0
        %1949 = vmatprep.subr.mxu0 0.0
        %1950 = vmatpush1.msra.mxu0 0.0
        %1951 = vmatprep.subr.mxu0 0.0
        %1952 = vmatpush1.msra.mxu0 0.0
        %1953 = vmatprep.subr.mxu0 0.0
        %1954 = vmatpush1.msra.mxu0 0.0
        %1955 = vmatprep.subr.mxu0 0.0
        %1956 = vmatpush1.msra.mxu0 0.0
        %1957 = vmatprep.subr.mxu0 0.0
        %1958 = vmatpush1.msra.mxu0 0.0
        %1959 = vmatprep.subr.mxu0 0.0
        %1960 = vmatpush1.msra.mxu0 0.0
        %1961 = vmatprep.subr.mxu0 0.0
        %1962 = vmatpush1.msra.mxu0 0.0
        %1963 = vmatprep.subr.mxu0 0.0
        %1964 = vmatpush1.msra.mxu0 0.0
        %1965 = vmatprep.subr.mxu0 0.0
        %1966 = vmatpush1.msra.mxu0 0.0
        %1967 = vmatprep.subr.mxu0 0.0
        %1968 = vmatpush1.msra.mxu0 0.0
        %1969 = vmatprep.mubr.f32.mxu0 0.0
        %1970 = vmatmul.mubr.f32.gmra.mrb[0].mxu0 %v1882
        %v1971 = vpop.f32.mrb[0].mxu0
        %v1972 = vadd.f32 %v372, %v1971
        %v1973 = vpop.f32.mrb[0].mxu0
        %v1974 = vadd.f32 %v376, %v1973
        %1975 = vmatprep.mubr.f32.mxu0 0.0
        %1976 = vmatmul.mubr.f32.gmra.mrb[0].mxu0 %v1885
        %v1977 = vpop.f32.mrb[0].mxu0
        %v1978 = vadd.f32 %v372, %v1977
        %v1979 = vpop.f32.mrb[0].mxu0
        %v1980 = vadd.f32 %v376, %v1979
        %1981 = vmatprep.mubr.f32.mxu0 0.0
        %1982 = vmatmul.mubr.f32.gmra.mrb[0].mxu0 %v1888
        %v1983 = vpop.f32.mrb[0].mxu0
        %v1984 = vadd.f32 %v372, %v1983
        %v1985 = vpop.f32.mrb[0].mxu0
        %v1986 = vadd.f32 %v376, %v1985
        %1987 = vmatprep.mubr.f32.mxu0 0.0
        %1988 = vmatmul.mubr.f32.gmra.mrb[0].mxu0 %v1891
        %v1989 = vpop.f32.mrb[0].mxu0
        %v1990 = vadd.f32 %v372, %v1989
        %v1991 = vpop.f32.mrb[0].mxu0
        %v1992 = vadd.f32 %v376, %v1991
        %1993 = vmatprep.mubr.f32.mxu0 0.0
        %1994 = vmatmul.mubr.f32.gmra.mrb[0].mxu0 %v1894
        %v1995 = vpop.f32.mrb[0].mxu0
        %v1996 = vadd.f32 %v372, %v1995
        %v1997 = vpop.f32.mrb[0].mxu0
        %v1998 = vadd.f32 %v376, %v1997
        %1999 = vmatprep.mubr.f32.mxu0 0.0
        %2000 = vmatmul.mubr.f32.gmra.mrb[0].mxu0 %v1897
        %v2001 = vpop.f32.mrb[0].mxu0
        %v2002 = vadd.f32 %v372, %v2001
        %v2003 = vpop.f32.mrb[0].mxu0
        %v2004 = vadd.f32 %v376, %v2003
        %2005 = vmatprep.mubr.f32.mxu0 0.0
        %2006 = vmatmul.mubr.f32.gmra.mrb[0].mxu0 %v1900
        %v2007 = vpop.f32.mrb[0].mxu0
        %v2008 = vadd.f32 %v372, %v2007
        %v2009 = vpop.f32.mrb[0].mxu0
        %v2010 = vadd.f32 %v376, %v2009
        %2011 = vmatprep.mubr.f32.mxu0 0.0
        %2012 = vmatmul.mubr.f32.gmra.mrb[0].mxu0 %v1903
        %v2013 = vpop.f32.mrb[0].mxu0
        %v2014 = vadd.f32 %v372, %v2013
        %v2015 = vpop.f32.mrb[0].mxu0
        %v2016 = vadd.f32 %v376, %v2015
        %2017 = vdwg.mxu0
        %2018 = vmatprep.subr.mxu0 %v285
        %2019 = vmatpush1.msra.mxu0 %v284
        %2020 = vmatprep.subr.mxu0 %v289
        %2021 = vmatpush1.msra.mxu0 %v288
        %2022 = vmatprep.subr.mxu0 %v293
        %2023 = vmatpush1.msra.mxu0 %v292
        %2024 = vmatprep.subr.mxu0 %v297
        %2025 = vmatpush1.msra.mxu0 %v296
        %2026 = vmatprep.subr.mxu0 0.0
        %2027 = vmatpush1.msra.mxu0 0.0
        %2028 = vmatprep.subr.mxu0 0.0
        %2029 = vmatpush1.msra.mxu0 0.0
        %2030 = vmatprep.subr.mxu0 0.0
        %2031 = vmatpush1.msra.mxu0 0.0
        %2032 = vmatprep.subr.mxu0 0.0
        %2033 = vmatpush1.msra.mxu0 0.0
        %2034 = vmatprep.subr.mxu0 0.0
        %2035 = vmatpush1.msra.mxu0 0.0
        %2036 = vmatprep.subr.mxu0 0.0
        %2037 = vmatpush1.msra.mxu0 0.0
        %2038 = vmatprep.subr.mxu0 0.0
        %2039 = vmatpush1.msra.mxu0 0.0
        %2040 = vmatprep.subr.mxu0 0.0
        %2041 = vmatpush1.msra.mxu0 0.0
        %2042 = vmatprep.subr.mxu0 0.0
        %2043 = vmatpush1.msra.mxu0 0.0
        %2044 = vmatprep.subr.mxu0 0.0
        %2045 = vmatpush1.msra.mxu0 0.0
        %2046 = vmatprep.subr.mxu0 0.0
        %2047 = vmatpush1.msra.mxu0 0.0
        %2048 = vmatprep.subr.mxu0 0.0
        %2049 = vmatpush1.msra.mxu0 0.0
        %2050 = vmatprep.subr.mxu0 0.0
        %2051 = vmatpush1.msra.mxu0 0.0
        %2052 = vmatprep.subr.mxu0 0.0
        %2053 = vmatpush1.msra.mxu0 0.0
        %2054 = vmatprep.subr.mxu0 0.0
        %2055 = vmatpush1.msra.mxu0 0.0
        %2056 = vmatprep.subr.mxu0 0.0
        %2057 = vmatpush1.msra.mxu0 0.0
        %2058 = vmatprep.subr.mxu0 0.0
        %2059 = vmatpush1.msra.mxu0 0.0
        %2060 = vmatprep.subr.mxu0 0.0
        %2061 = vmatpush1.msra.mxu0 0.0
        %2062 = vmatprep.subr.mxu0 0.0
        %2063 = vmatpush1.msra.mxu0 0.0
        %2064 = vmatprep.subr.mxu0 0.0
        %2065 = vmatpush1.msra.mxu0 0.0
        %2066 = vmatprep.subr.mxu0 0.0
        %2067 = vmatpush1.msra.mxu0 0.0
        %2068 = vmatprep.subr.mxu0 0.0
        %2069 = vmatpush1.msra.mxu0 0.0
        %2070 = vmatprep.subr.mxu0 0.0
        %2071 = vmatpush1.msra.mxu0 0.0
        %2072 = vmatprep.subr.mxu0 0.0
        %2073 = vmatpush1.msra.mxu0 0.0
        %2074 = vmatprep.subr.mxu0 0.0
        %2075 = vmatpush1.msra.mxu0 0.0
        %2076 = vmatprep.subr.mxu0 0.0
        %2077 = vmatpush1.msra.mxu0 0.0
        %2078 = vmatprep.subr.mxu0 0.0
        %2079 = vmatpush1.msra.mxu0 0.0
        %2080 = vmatprep.subr.mxu0 0.0
        %2081 = vmatpush1.msra.mxu0 0.0
        %2082 = vmatprep.mubr.f32.mxu0 0.0
        %2083 = vmatmul.mubr.f32.gmra.mrb[0].mxu0 %v1882
        %v2084 = vpop.f32.mrb[0].mxu0
        %v2085 = vadd.f32 %v380, %v2084
        %v2086 = vpop.f32.mrb[0].mxu0
        %v2087 = vadd.f32 %v384, %v2086
        %2088 = vmatprep.mubr.f32.mxu0 0.0
        %2089 = vmatmul.mubr.f32.gmra.mrb[0].mxu0 %v1885
        %v2090 = vpop.f32.mrb[0].mxu0
        %v2091 = vadd.f32 %v380, %v2090
        %v2092 = vpop.f32.mrb[0].mxu0
        %v2093 = vadd.f32 %v384, %v2092
        %2094 = vmatprep.mubr.f32.mxu0 0.0
        %2095 = vmatmul.mubr.f32.gmra.mrb[0].mxu0 %v1888
        %v2096 = vpop.f32.mrb[0].mxu0
        %v2097 = vadd.f32 %v380, %v2096
        %v2098 = vpop.f32.mrb[0].mxu0
        %v2099 = vadd.f32 %v384, %v2098
        %2100 = vmatprep.mubr.f32.mxu0 0.0
        %2101 = vmatmul.mubr.f32.gmra.mrb[0].mxu0 %v1891
        %v2102 = vpop.f32.mrb[0].mxu0
        %v2103 = vadd.f32 %v380, %v2102
        %v2104 = vpop.f32.mrb[0].mxu0
        %v2105 = vadd.f32 %v384, %v2104
        %2106 = vmatprep.mubr.f32.mxu0 0.0
        %2107 = vmatmul.mubr.f32.gmra.mrb[0].mxu0 %v1894
        %v2108 = vpop.f32.mrb[0].mxu0
        %v2109 = vadd.f32 %v380, %v2108
        %v2110 = vpop.f32.mrb[0].mxu0
        %v2111 = vadd.f32 %v384, %v2110
        %2112 = vmatprep.mubr.f32.mxu0 0.0
        %2113 = vmatmul.mubr.f32.gmra.mrb[0].mxu0 %v1897
        %v2114 = vpop.f32.mrb[0].mxu0
        %v2115 = vadd.f32 %v380, %v2114
        %v2116 = vpop.f32.mrb[0].mxu0
        %v2117 = vadd.f32 %v384, %v2116
        %2118 = vmatprep.mubr.f32.mxu0 0.0
        %2119 = vmatmul.mubr.f32.gmra.mrb[0].mxu0 %v1900
        %v2120 = vpop.f32.mrb[0].mxu0
        %v2121 = vadd.f32 %v380, %v2120
        %v2122 = vpop.f32.mrb[0].mxu0
        %v2123 = vadd.f32 %v384, %v2122
        %2124 = vmatprep.mubr.f32.mxu0 0.0
        %2125 = vmatmul.mubr.f32.gmra.mrb[0].mxu0 %v1903
        %v2126 = vpop.f32.mrb[0].mxu0
        %v2127 = vadd.f32 %v380, %v2126
        %v2128 = vpop.f32.mrb[0].mxu0
        %v2129 = vadd.f32 %v384, %v2128
        %2130 = vdwg.mxu0
        %2131 = vmatprep.subr.mxu0 0.0
        %2132 = vmatpush1.msra.mxu0 %v299
        %2133 = vmatprep.subr.mxu0 0.0
        %2134 = vmatpush1.msra.mxu0 %v300
        %2135 = vmatprep.subr.mxu0 0.0
        %2136 = vmatpush1.msra.mxu0 %v301
        %2137 = vmatprep.subr.mxu0 0.0
        %2138 = vmatpush1.msra.mxu0 %v302
        %2139 = vmatprep.subr.mxu0 0.0
        %2140 = vmatpush1.msra.mxu0 %v303
        %2141 = vmatprep.subr.mxu0 0.0
        %2142 = vmatpush1.msra.mxu0 %v304
        %2143 = vmatprep.subr.mxu0 0.0
        %2144 = vmatpush1.msra.mxu0 %v305
        %2145 = vmatprep.subr.mxu0 0.0
        %2146 = vmatpush1.msra.mxu0 %v306
        %2147 = vmatprep.subr.mxu0 0.0
        %2148 = vmatpush1.msra.mxu0 %v307
        %2149 = vmatprep.subr.mxu0 0.0
        %2150 = vmatpush1.msra.mxu0 %v308
        %2151 = vmatprep.subr.mxu0 0.0
        %2152 = vmatpush1.msra.mxu0 %v309
        %2153 = vmatprep.subr.mxu0 0.0
        %2154 = vmatpush1.msra.mxu0 %v310
        %2155 = vmatprep.subr.mxu0 0.0
        %2156 = vmatpush1.msra.mxu0 %v311
        %2157 = vmatprep.subr.mxu0 0.0
        %2158 = vmatpush1.msra.mxu0 %v312
        %2159 = vmatprep.subr.mxu0 0.0
        %2160 = vmatpush1.msra.mxu0 %v313
        %2161 = vmatprep.subr.mxu0 0.0
        %2162 = vmatpush1.msra.mxu0 %v314
        %2163 = vmatprep.subr.mxu0 0.0
        %2164 = vmatpush1.msra.mxu0 %v315
        %2165 = vmatprep.subr.mxu0 0.0
        %2166 = vmatpush1.msra.mxu0 %v316
        %2167 = vmatprep.subr.mxu0 0.0
        %2168 = vmatpush1.msra.mxu0 %v317
        %2169 = vmatprep.subr.mxu0 0.0
        %2170 = vmatpush1.msra.mxu0 %v318
        %2171 = vmatprep.subr.mxu0 0.0
        %2172 = vmatpush1.msra.mxu0 %v319
        %2173 = vmatprep.subr.mxu0 0.0
        %2174 = vmatpush1.msra.mxu0 %v320
        %2175 = vmatprep.subr.mxu0 0.0
        %2176 = vmatpush1.msra.mxu0 %v321
        %2177 = vmatprep.subr.mxu0 0.0
        %2178 = vmatpush1.msra.mxu0 %v322
        %2179 = vmatprep.subr.mxu0 0.0
        %2180 = vmatpush1.msra.mxu0 %v323
        %2181 = vmatprep.subr.mxu0 0.0
        %2182 = vmatpush1.msra.mxu0 %v324
        %2183 = vmatprep.subr.mxu0 0.0
        %2184 = vmatpush1.msra.mxu0 %v325
        %2185 = vmatprep.subr.mxu0 0.0
        %2186 = vmatpush1.msra.mxu0 %v326
        %2187 = vmatprep.subr.mxu0 0.0
        %2188 = vmatpush1.msra.mxu0 %v327
        %2189 = vmatprep.subr.mxu0 0.0
        %2190 = vmatpush1.msra.mxu0 %v328
        %2191 = vmatprep.subr.mxu0 0.0
        %2192 = vmatpush1.msra.mxu0 %v329
        %2193 = vmatprep.subr.mxu0 0.0
        %2194 = vmatpush1.msra.mxu0 %v330
        %2195 = vmatprep.mubr.f32.mxu0 %v1974
        %2196 = vmatmul.mubr.f32.gmra.mrb[0].mxu0 %v1972
        %v2197 = vpop.f32.mrb[0].mxu0
        %v2198 = vadd.f32 %v676, %v2197
        %v2199 = vpop.f32.mrb[0].mxu0
        %2200 = vmatprep.mubr.f32.mxu0 %v1980
        %2201 = vmatmul.mubr.f32.gmra.mrb[0].mxu0 %v1978
        %v2202 = vpop.f32.mrb[0].mxu0
        %v2203 = vadd.f32 %v676, %v2202
        %v2204 = vpop.f32.mrb[0].mxu0
        %2205 = vmatprep.mubr.f32.mxu0 %v1986
        %2206 = vmatmul.mubr.f32.gmra.mrb[0].mxu0 %v1984
        %v2207 = vpop.f32.mrb[0].mxu0
        %v2208 = vadd.f32 %v676, %v2207
        %v2209 = vpop.f32.mrb[0].mxu0
        %2210 = vmatprep.mubr.f32.mxu0 %v1992
        %2211 = vmatmul.mubr.f32.gmra.mrb[0].mxu0 %v1990
        %v2212 = vpop.f32.mrb[0].mxu0
        %v2213 = vadd.f32 %v676, %v2212
        %v2214 = vpop.f32.mrb[0].mxu0
        %2215 = vmatprep.mubr.f32.mxu0 %v1998
        %2216 = vmatmul.mubr.f32.gmra.mrb[0].mxu0 %v1996
        %v2217 = vpop.f32.mrb[0].mxu0
        %v2218 = vadd.f32 %v676, %v2217
        %v2219 = vpop.f32.mrb[0].mxu0
        %2220 = vmatprep.mubr.f32.mxu0 %v2004
        %2221 = vmatmul.mubr.f32.gmra.mrb[0].mxu0 %v2002
        %v2222 = vpop.f32.mrb[0].mxu0
        %v2223 = vadd.f32 %v676, %v2222
        %v2224 = vpop.f32.mrb[0].mxu0
        %2225 = vmatprep.mubr.f32.mxu0 %v2010
        %2226 = vmatmul.mubr.f32.gmra.mrb[0].mxu0 %v2008
        %v2227 = vpop.f32.mrb[0].mxu0
        %v2228 = vadd.f32 %v676, %v2227
        %v2229 = vpop.f32.mrb[0].mxu0
        %2230 = vmatprep.mubr.f32.mxu0 %v2016
        %2231 = vmatmul.mubr.f32.gmra.mrb[0].mxu0 %v2014
        %v2232 = vpop.f32.mrb[0].mxu0
        %v2233 = vadd.f32 %v676, %v2232
        %v2234 = vpop.f32.mrb[0].mxu0
        %2235 = vdwg.mxu0
        %2236 = vmatprep.subr.mxu0 0.0
        %2237 = vmatpush1.msra.mxu0 %v331
        %2238 = vmatprep.subr.mxu0 0.0
        %2239 = vmatpush1.msra.mxu0 %v332
        %2240 = vmatprep.subr.mxu0 0.0
        %2241 = vmatpush1.msra.mxu0 %v333
        %2242 = vmatprep.subr.mxu0 0.0
        %2243 = vmatpush1.msra.mxu0 %v334
        %2244 = vmatprep.subr.mxu0 0.0
        %2245 = vmatpush1.msra.mxu0 %v335
        %2246 = vmatprep.subr.mxu0 0.0
        %2247 = vmatpush1.msra.mxu0 %v336
        %2248 = vmatprep.subr.mxu0 0.0
        %2249 = vmatpush1.msra.mxu0 %v337
        %2250 = vmatprep.subr.mxu0 0.0
        %2251 = vmatpush1.msra.mxu0 %v338
        %2252 = vmatprep.subr.mxu0 0.0
        %2253 = vmatpush1.msra.mxu0 %v339
        %2254 = vmatprep.subr.mxu0 0.0
        %2255 = vmatpush1.msra.mxu0 %v340
        %2256 = vmatprep.subr.mxu0 0.0
        %2257 = vmatpush1.msra.mxu0 %v341
        %2258 = vmatprep.subr.mxu0 0.0
        %2259 = vmatpush1.msra.mxu0 %v342
        %2260 = vmatprep.subr.mxu0 0.0
        %2261 = vmatpush1.msra.mxu0 %v343
        %2262 = vmatprep.subr.mxu0 0.0
        %2263 = vmatpush1.msra.mxu0 %v344
        %2264 = vmatprep.subr.mxu0 0.0
        %2265 = vmatpush1.msra.mxu0 %v345
        %2266 = vmatprep.subr.mxu0 0.0
        %2267 = vmatpush1.msra.mxu0 %v346
        %2268 = vmatprep.subr.mxu0 0.0
        %2269 = vmatpush1.msra.mxu0 %v347
        %2270 = vmatprep.subr.mxu0 0.0
        %2271 = vmatpush1.msra.mxu0 %v348
        %2272 = vmatprep.subr.mxu0 0.0
        %2273 = vmatpush1.msra.mxu0 %v349
        %2274 = vmatprep.subr.mxu0 0.0
        %2275 = vmatpush1.msra.mxu0 %v350
        %2276 = vmatprep.subr.mxu0 0.0
        %2277 = vmatpush1.msra.mxu0 %v351
        %2278 = vmatprep.subr.mxu0 0.0
        %2279 = vmatpush1.msra.mxu0 %v352
        %2280 = vmatprep.subr.mxu0 0.0
        %2281 = vmatpush1.msra.mxu0 %v353
        %2282 = vmatprep.subr.mxu0 0.0
        %2283 = vmatpush1.msra.mxu0 %v354
        %2284 = vmatprep.subr.mxu0 0.0
        %2285 = vmatpush1.msra.mxu0 %v355
        %2286 = vmatprep.subr.mxu0 0.0
        %2287 = vmatpush1.msra.mxu0 %v356
        %2288 = vmatprep.subr.mxu0 0.0
        %2289 = vmatpush1.msra.mxu0 %v357
        %2290 = vmatprep.subr.mxu0 0.0
        %2291 = vmatpush1.msra.mxu0 %v358
        %2292 = vmatprep.subr.mxu0 0.0
        %2293 = vmatpush1.msra.mxu0 %v359
        %2294 = vmatprep.subr.mxu0 0.0
        %2295 = vmatpush1.msra.mxu0 %v360
        %2296 = vmatprep.subr.mxu0 0.0
        %2297 = vmatpush1.msra.mxu0 %v361
        %2298 = vmatprep.subr.mxu0 0.0
        %2299 = vmatpush1.msra.mxu0 %v362
        %2300 = vmatprep.mubr.f32.mxu0 %v2087
        %2301 = vmatmul.mubr.f32.gmra.mrb[0].mxu0 %v2085
        %v2302 = vpop.f32.mrb[0].mxu0
        %v2303 = vadd.f32 %v2198, %v2302
        %v2304 = vpop.f32.mrb[0].mxu0
        %2305 = vmatprep.mubr.f32.mxu0 %v2093
        %2306 = vmatmul.mubr.f32.gmra.mrb[0].mxu0 %v2091
        %v2307 = vpop.f32.mrb[0].mxu0
        %v2308 = vadd.f32 %v2203, %v2307
        %v2309 = vpop.f32.mrb[0].mxu0
        %2310 = vmatprep.mubr.f32.mxu0 %v2099
        %2311 = vmatmul.mubr.f32.gmra.mrb[0].mxu0 %v2097
        %v2312 = vpop.f32.mrb[0].mxu0
        %v2313 = vadd.f32 %v2208, %v2312
        %v2314 = vpop.f32.mrb[0].mxu0
        %2315 = vmatprep.mubr.f32.mxu0 %v2105
        %2316 = vmatmul.mubr.f32.gmra.mrb[0].mxu0 %v2103
        %v2317 = vpop.f32.mrb[0].mxu0
        %v2318 = vadd.f32 %v2213, %v2317
        %v2319 = vpop.f32.mrb[0].mxu0
        %2320 = vmatprep.mubr.f32.mxu0 %v2111
        %2321 = vmatmul.mubr.f32.gmra.mrb[0].mxu0 %v2109
        %v2322 = vpop.f32.mrb[0].mxu0
        %v2323 = vadd.f32 %v2218, %v2322
        %v2324 = vpop.f32.mrb[0].mxu0
        %2325 = vmatprep.mubr.f32.mxu0 %v2117
        %2326 = vmatmul.mubr.f32.gmra.mrb[0].mxu0 %v2115
        %v2327 = vpop.f32.mrb[0].mxu0
        %v2328 = vadd.f32 %v2223, %v2327
        %v2329 = vpop.f32.mrb[0].mxu0
        %2330 = vmatprep.mubr.f32.mxu0 %v2123
        %2331 = vmatmul.mubr.f32.gmra.mrb[0].mxu0 %v2121
        %v2332 = vpop.f32.mrb[0].mxu0
        %v2333 = vadd.f32 %v2228, %v2332
        %v2334 = vpop.f32.mrb[0].mxu0
        %2335 = vmatprep.mubr.f32.mxu0 %v2129
        %2336 = vmatmul.mubr.f32.gmra.mrb[0].mxu0 %v2127
        %v2337 = vpop.f32.mrb[0].mxu0
        %v2338 = vadd.f32 %v2233, %v2337
        %v2339 = vpop.f32.mrb[0].mxu0
        %2340 = vdwg.mxu0
        %v2341 = vxor.u32 %v2303, 2147483648
        %v2342 = vxor.u32 %v2308, 2147483648
        %v2343 = vxor.u32 %v2313, 2147483648
        %v2344 = vxor.u32 %v2318, 2147483648
        %v2345 = vxor.u32 %v2323, 2147483648
        %v2346 = vxor.u32 %v2328, 2147483648
        %v2347 = vxor.u32 %v2333, 2147483648
        %v2348 = vxor.u32 %v2338, 2147483648
        %v2349 = vmul.f32 %v2341, 1.442695
        %v2350 = vpow.pop %v2349
        %v2351 = vmul.f32 %v2342, 1.442695
        %v2352 = vpow.pop %v2351
        %v2353 = vmul.f32 %v2343, 1.442695
        %v2354 = vpow.pop %v2353
        %v2355 = vmul.f32 %v2344, 1.442695
        %v2356 = vpow.pop %v2355
        %v2357 = vmul.f32 %v2345, 1.442695
        %v2358 = vpow.pop %v2357
        %v2359 = vmul.f32 %v2346, 1.442695
        %v2360 = vpow.pop %v2359
        %v2361 = vmul.f32 %v2347, 1.442695
        %v2362 = vpow.pop %v2361
        %v2363 = vmul.f32 %v2348, 1.442695
        %v2364 = vpow.pop %v2363
        %v2365 = vadd.f32 %v2350, 1.0
        %v2366 = vadd.f32 %v2352, 1.0
        %v2367 = vadd.f32 %v2354, 1.0
        %v2368 = vadd.f32 %v2356, 1.0
        %v2369 = vadd.f32 %v2358, 1.0
        %v2370 = vadd.f32 %v2360, 1.0
        %v2371 = vadd.f32 %v2362, 1.0
        %v2372 = vadd.f32 %v2364, 1.0
        %v2373 = vrcp.pop %v2365
        %v2374 = vmul.f32 1.0, %v2373
        %v2375 = vrcp.pop %v2366
        %v2376 = vmul.f32 1.0, %v2375
        %v2377 = vrcp.pop %v2367
        %v2378 = vmul.f32 1.0, %v2377
        %v2379 = vrcp.pop %v2368
        %v2380 = vmul.f32 1.0, %v2379
        %v2381 = vrcp.pop %v2369
        %v2382 = vmul.f32 1.0, %v2381
        %v2383 = vrcp.pop %v2370
        %v2384 = vmul.f32 1.0, %v2383
        %v2385 = vrcp.pop %v2371
        %v2386 = vmul.f32 1.0, %v2385
        %v2387 = vrcp.pop %v2372
        %v2388 = vmul.f32 1.0, %v2387
        %2389 = vxpose.xlu0.b32.start [1/16] %v2374, 128
        %2390 = vxpose.xlu0.b32.cont [2/16] %v2376, 128
        %2391 = vxpose.xlu0.b32.cont [3/16] %v2378, 128
        %2392 = vxpose.xlu0.b32.cont [4/16] %v2380, 128
        %2393 = vxpose.xlu0.b32.cont [5/16] %v2382, 128
        %2394 = vxpose.xlu0.b32.cont [6/16] %v2384, 128
        %2395 = vxpose.xlu0.b32.cont [7/16] %v2386, 128
        %2396 = vxpose.xlu0.b32.cont [8/16] %v2388, 128
        %2397 = vxpose.xlu0.b32.cont [9/16] 0.0, 128
        %2398 = vxpose.xlu0.b32.cont [10/16] 0.0, 128
        %2399 = vxpose.xlu0.b32.cont [11/16] 0.0, 128
        %2400 = vxpose.xlu0.b32.cont [12/16] 0.0, 128
        %2401 = vxpose.xlu0.b32.cont [13/16] 0.0, 128
        %2402 = vxpose.xlu0.b32.cont [14/16] 0.0, 128
        %2403 = vxpose.xlu0.b32.cont [15/16] 0.0, 128
        %2404 = vxpose.xlu0.b32.end [16/16] 0.0, 128
        %v2405 = vpop.trf.xlu0
        %v2406 = vpop.trf.xlu0
        %v2407 = vpop.trf.xlu0
        %v2408 = vpop.trf.xlu0
        %v2409 = vpop.trf.xlu0
        %v2410 = vpop.trf.xlu0
        %v2411 = vpop.trf.xlu0
        %v2412 = vpop.trf.xlu0
        %v2413 = vpop.trf.xlu0
        %v2414 = vpop.trf.xlu0
        %v2415 = vpop.trf.xlu0
        %v2416 = vpop.trf.xlu0
        %v2417 = vpop.trf.xlu0
        %v2418 = vpop.trf.xlu0
        %v2419 = vpop.trf.xlu0
        %v2420 = vpop.trf.xlu0
        %v2422 = vsel %vm968, %v2405, 0
        %2424 = vmatprep.subr.mxu0 %v1974
        %2425 = vmatpush1.msra.mxu0 %v1972
        %2426 = vmatprep.subr.mxu0 %v1980
        %2427 = vmatpush1.msra.mxu0 %v1978
        %2428 = vmatprep.subr.mxu0 %v1986
        %2429 = vmatpush1.msra.mxu0 %v1984
        %2430 = vmatprep.subr.mxu0 %v1992
        %2431 = vmatpush1.msra.mxu0 %v1990
        %2432 = vmatprep.subr.mxu0 %v1998
        %2433 = vmatpush1.msra.mxu0 %v1996
        %2434 = vmatprep.subr.mxu0 %v2004
        %2435 = vmatpush1.msra.mxu0 %v2002
        %2436 = vmatprep.subr.mxu0 %v2010
        %2437 = vmatpush1.msra.mxu0 %v2008
        %2438 = vmatprep.subr.mxu0 %v2016
        %2439 = vmatpush1.msra.mxu0 %v2014
        %2440 = vmatprep.subr.mxu0 0.0
        %2441 = vmatpush1.msra.mxu0 0.0
        %2442 = vmatprep.subr.mxu0 0.0
        %2443 = vmatpush1.msra.mxu0 0.0
        %2444 = vmatprep.subr.mxu0 0.0
        %2445 = vmatpush1.msra.mxu0 0.0
        %2446 = vmatprep.subr.mxu0 0.0
        %2447 = vmatpush1.msra.mxu0 0.0
        %2448 = vmatprep.subr.mxu0 0.0
        %2449 = vmatpush1.msra.mxu0 0.0
        %2450 = vmatprep.subr.mxu0 0.0
        %2451 = vmatpush1.msra.mxu0 0.0
        %2452 = vmatprep.subr.mxu0 0.0
        %2453 = vmatpush1.msra.mxu0 0.0
        %2454 = vmatprep.subr.mxu0 0.0
        %2455 = vmatpush1.msra.mxu0 0.0
        %2456 = vmatprep.subr.mxu0 0.0
        %2457 = vmatpush1.msra.mxu0 0.0
        %2458 = vmatprep.subr.mxu0 0.0
        %2459 = vmatpush1.msra.mxu0 0.0
        %2460 = vmatprep.subr.mxu0 0.0
        %2461 = vmatpush1.msra.mxu0 0.0
        %2462 = vmatprep.subr.mxu0 0.0
        %2463 = vmatpush1.msra.mxu0 0.0
        %2464 = vmatprep.subr.mxu0 0.0
        %2465 = vmatpush1.msra.mxu0 0.0
        %2466 = vmatprep.subr.mxu0 0.0
        %2467 = vmatpush1.msra.mxu0 0.0
        %2468 = vmatprep.subr.mxu0 0.0
        %2469 = vmatpush1.msra.mxu0 0.0
        %2470 = vmatprep.subr.mxu0 0.0
        %2471 = vmatpush1.msra.mxu0 0.0
        %2472 = vmatprep.subr.mxu0 0.0
        %2473 = vmatpush1.msra.mxu0 0.0
        %2474 = vmatprep.subr.mxu0 0.0
        %2475 = vmatpush1.msra.mxu0 0.0
        %2476 = vmatprep.subr.mxu0 0.0
        %2477 = vmatpush1.msra.mxu0 0.0
        %2478 = vmatprep.subr.mxu0 0.0
        %2479 = vmatpush1.msra.mxu0 0.0
        %2480 = vmatprep.subr.mxu0 0.0
        %2481 = vmatpush1.msra.mxu0 0.0
        %2482 = vmatprep.subr.mxu0 0.0
        %2483 = vmatpush1.msra.mxu0 0.0
        %2484 = vmatprep.subr.mxu0 0.0
        %2485 = vmatpush1.msra.mxu0 0.0
        %2486 = vmatprep.subr.mxu0 0.0
        %2487 = vmatpush1.msra.mxu0 0.0
        %2488 = vmatprep.mubr.f32.mxu0 0.0
        %2489 = vmatmul.mubr.f32.gmra.mrb[0].mxu0 %v2422
        %v2490 = vpop.f32.mrb[0].mxu0
        %v2491 = vadd.f32 0.0, %v2490
        %v2492 = vpop.f32.mrb[0].mxu0
        %v2493 = vadd.f32 0.0, %v2492
        %2494 = vdwg.mxu0
        %2495 = vmatprep.subr.mxu0 %v2087
        %2496 = vmatpush1.msra.mxu0 %v2085
        %2497 = vmatprep.subr.mxu0 %v2093
        %2498 = vmatpush1.msra.mxu0 %v2091
        %2499 = vmatprep.subr.mxu0 %v2099
        %2500 = vmatpush1.msra.mxu0 %v2097
        %2501 = vmatprep.subr.mxu0 %v2105
        %2502 = vmatpush1.msra.mxu0 %v2103
        %2503 = vmatprep.subr.mxu0 %v2111
        %2504 = vmatpush1.msra.mxu0 %v2109
        %2505 = vmatprep.subr.mxu0 %v2117
        %2506 = vmatpush1.msra.mxu0 %v2115
        %2507 = vmatprep.subr.mxu0 %v2123
        %2508 = vmatpush1.msra.mxu0 %v2121
        %2509 = vmatprep.subr.mxu0 %v2129
        %2510 = vmatpush1.msra.mxu0 %v2127
        %2511 = vmatprep.subr.mxu0 0.0
        %2512 = vmatpush1.msra.mxu0 0.0
        %2513 = vmatprep.subr.mxu0 0.0
        %2514 = vmatpush1.msra.mxu0 0.0
        %2515 = vmatprep.subr.mxu0 0.0
        %2516 = vmatpush1.msra.mxu0 0.0
        %2517 = vmatprep.subr.mxu0 0.0
        %2518 = vmatpush1.msra.mxu0 0.0
        %2519 = vmatprep.subr.mxu0 0.0
        %2520 = vmatpush1.msra.mxu0 0.0
        %2521 = vmatprep.subr.mxu0 0.0
        %2522 = vmatpush1.msra.mxu0 0.0
        %2523 = vmatprep.subr.mxu0 0.0
        %2524 = vmatpush1.msra.mxu0 0.0
        %2525 = vmatprep.subr.mxu0 0.0
        %2526 = vmatpush1.msra.mxu0 0.0
        %2527 = vmatprep.subr.mxu0 0.0
        %2528 = vmatpush1.msra.mxu0 0.0
        %2529 = vmatprep.subr.mxu0 0.0
        %2530 = vmatpush1.msra.mxu0 0.0
        %2531 = vmatprep.subr.mxu0 0.0
        %2532 = vmatpush1.msra.mxu0 0.0
        %2533 = vmatprep.subr.mxu0 0.0
        %2534 = vmatpush1.msra.mxu0 0.0
        %2535 = vmatprep.subr.mxu0 0.0
        %2536 = vmatpush1.msra.mxu0 0.0
        %2537 = vmatprep.subr.mxu0 0.0
        %2538 = vmatpush1.msra.mxu0 0.0
        %2539 = vmatprep.subr.mxu0 0.0
        %2540 = vmatpush1.msra.mxu0 0.0
        %2541 = vmatprep.subr.mxu0 0.0
        %2542 = vmatpush1.msra.mxu0 0.0
        %2543 = vmatprep.subr.mxu0 0.0
        %2544 = vmatpush1.msra.mxu0 0.0
        %2545 = vmatprep.subr.mxu0 0.0
        %2546 = vmatpush1.msra.mxu0 0.0
        %2547 = vmatprep.subr.mxu0 0.0
        %2548 = vmatpush1.msra.mxu0 0.0
        %2549 = vmatprep.subr.mxu0 0.0
        %2550 = vmatpush1.msra.mxu0 0.0
        %2551 = vmatprep.subr.mxu0 0.0
        %2552 = vmatpush1.msra.mxu0 0.0
        %2553 = vmatprep.subr.mxu0 0.0
        %2554 = vmatpush1.msra.mxu0 0.0
        %2555 = vmatprep.subr.mxu0 0.0
        %2556 = vmatpush1.msra.mxu0 0.0
        %2557 = vmatprep.subr.mxu0 0.0
        %2558 = vmatpush1.msra.mxu0 0.0
        %2559 = vmatprep.mubr.f32.mxu0 0.0
        %2560 = vmatmul.mubr.f32.gmra.mrb[0].mxu0 %v2422
        %v2561 = vpop.f32.mrb[0].mxu0
        %v2562 = vadd.f32 0.0, %v2561
        %v2563 = vpop.f32.mrb[0].mxu0
        %v2564 = vadd.f32 0.0, %v2563
        %2565 = vdwg.mxu0
        %v2566 = vmul.f32 %v2491, 0.015625
        %v2567 = vmul.f32 %v2493, 0.015625
        %v2568 = vmul.f32 %v2562, 0.015625
        %v2569 = vmul.f32 %v2564, 0.015625
        %s2570 = scalar_lea.vmem %s280, 96
        %v2571 = vld [vmem:[%s2570] sm:$0xff]
        %v2572 = vld [vmem:[%s2570 + $0x8] sm:$0xff]
        %v2573 = vld [vmem:[%s2570 + $0x10] sm:$0xff]
        %v2574 = vld [vmem:[%s2570 + $0x18] sm:$0xff]
        %2575 = vxpose.xlu0.b32.start [1/16] %v2571, 128
        %2576 = vxpose.xlu0.b32.cont [2/16] %v2572, 128
        %2577 = vxpose.xlu0.b32.cont [3/16] %v2573, 128
        %2578 = vxpose.xlu0.b32.cont [4/16] %v2574, 128
        %2579 = vxpose.xlu0.b32.cont [5/16] 0.0, 128
        %2580 = vxpose.xlu0.b32.cont [6/16] 0.0, 128
        %2581 = vxpose.xlu0.b32.cont [7/16] 0.0, 128
        %2582 = vxpose.xlu0.b32.cont [8/16] 0.0, 128
        %2583 = vxpose.xlu0.b32.cont [9/16] 0.0, 128
        %2584 = vxpose.xlu0.b32.cont [10/16] 0.0, 128
        %2585 = vxpose.xlu0.b32.cont [11/16] 0.0, 128
        %2586 = vxpose.xlu0.b32.cont [12/16] 0.0, 128
        %2587 = vxpose.xlu0.b32.cont [13/16] 0.0, 128
        %2588 = vxpose.xlu0.b32.cont [14/16] 0.0, 128
        %2589 = vxpose.xlu0.b32.cont [15/16] 0.0, 128
        %2590 = vxpose.xlu0.b32.end [16/16] 0.0, 128
        %v2591 = vpop.trf.xlu0
        %v2592 = vpop.trf.xlu0
        %v2593 = vpop.trf.xlu0
        %v2594 = vpop.trf.xlu0
        %v2595 = vpop.trf.xlu0
        %v2596 = vpop.trf.xlu0
        %v2597 = vpop.trf.xlu0
        %v2598 = vpop.trf.xlu0
        %v2599 = vpop.trf.xlu0
        %v2600 = vpop.trf.xlu0
        %v2601 = vpop.trf.xlu0
        %v2602 = vpop.trf.xlu0
        %v2603 = vpop.trf.xlu0
        %v2604 = vpop.trf.xlu0
        %v2605 = vpop.trf.xlu0
        %v2606 = vpop.trf.xlu0
        %v2608 = vsel %vm421, %v2591, 0
        %v2611 = vsel %vm421, %v2592, 0
        %v2614 = vsel %vm421, %v2593, 0
        %v2617 = vsel %vm421, %v2594, 0
        %v2620 = vsel %vm421, %v2595, 0
        %v2623 = vsel %vm421, %v2596, 0
        %v2626 = vsel %vm421, %v2597, 0
        %v2629 = vsel %vm421, %v2598, 0
        %2631 = vmatprep.subr.mxu0 %v283
        %2632 = vmatpush1.msra.mxu0 %v282
        %2633 = vmatprep.subr.mxu0 %v287
        %2634 = vmatpush1.msra.mxu0 %v286
        %2635 = vmatprep.subr.mxu0 %v291
        %2636 = vmatpush1.msra.mxu0 %v290
        %2637 = vmatprep.subr.mxu0 %v295
        %2638 = vmatpush1.msra.mxu0 %v294
        %2639 = vmatprep.subr.mxu0 0.0
        %2640 = vmatpush1.msra.mxu0 0.0
        %2641 = vmatprep.subr.mxu0 0.0
        %2642 = vmatpush1.msra.mxu0 0.0
        %2643 = vmatprep.subr.mxu0 0.0
        %2644 = vmatpush1.msra.mxu0 0.0
        %2645 = vmatprep.subr.mxu0 0.0
        %2646 = vmatpush1.msra.mxu0 0.0
        %2647 = vmatprep.subr.mxu0 0.0
        %2648 = vmatpush1.msra.mxu0 0.0
        %2649 = vmatprep.subr.mxu0 0.0
        %2650 = vmatpush1.msra.mxu0 0.0
        %2651 = vmatprep.subr.mxu0 0.0
        %2652 = vmatpush1.msra.mxu0 0.0
        %2653 = vmatprep.subr.mxu0 0.0
        %2654 = vmatpush1.msra.mxu0 0.0
        %2655 = vmatprep.subr.mxu0 0.0
        %2656 = vmatpush1.msra.mxu0 0.0
        %2657 = vmatprep.subr.mxu0 0.0
        %2658 = vmatpush1.msra.mxu0 0.0
        %2659 = vmatprep.subr.mxu0 0.0
        %2660 = vmatpush1.msra.mxu0 0.0
        %2661 = vmatprep.subr.mxu0 0.0
        %2662 = vmatpush1.msra.mxu0 0.0
        %2663 = vmatprep.subr.mxu0 0.0
        %2664 = vmatpush1.msra.mxu0 0.0
        %2665 = vmatprep.subr.mxu0 0.0
        %2666 = vmatpush1.msra.mxu0 0.0
        %2667 = vmatprep.subr.mxu0 0.0
        %2668 = vmatpush1.msra.mxu0 0.0
        %2669 = vmatprep.subr.mxu0 0.0
        %2670 = vmatpush1.msra.mxu0 0.0
        %2671 = vmatprep.subr.mxu0 0.0
        %2672 = vmatpush1.msra.mxu0 0.0
        %2673 = vmatprep.subr.mxu0 0.0
        %2674 = vmatpush1.msra.mxu0 0.0
        %2675 = vmatprep.subr.mxu0 0.0
        %2676 = vmatpush1.msra.mxu0 0.0
        %2677 = vmatprep.subr.mxu0 0.0
        %2678 = vmatpush1.msra.mxu0 0.0
        %2679 = vmatprep.subr.mxu0 0.0
        %2680 = vmatpush1.msra.mxu0 0.0
        %2681 = vmatprep.subr.mxu0 0.0
        %2682 = vmatpush1.msra.mxu0 0.0
        %2683 = vmatprep.subr.mxu0 0.0
        %2684 = vmatpush1.msra.mxu0 0.0
        %2685 = vmatprep.subr.mxu0 0.0
        %2686 = vmatpush1.msra.mxu0 0.0
        %2687 = vmatprep.subr.mxu0 0.0
        %2688 = vmatpush1.msra.mxu0 0.0
        %2689 = vmatprep.subr.mxu0 0.0
        %2690 = vmatpush1.msra.mxu0 0.0
        %2691 = vmatprep.subr.mxu0 0.0
        %2692 = vmatpush1.msra.mxu0 0.0
        %2693 = vmatprep.subr.mxu0 0.0
        %2694 = vmatpush1.msra.mxu0 0.0
        %2695 = vmatprep.mubr.f32.mxu0 0.0
        %2696 = vmatmul.mubr.f32.gmra.mrb[0].mxu0 %v2608
        %v2697 = vpop.f32.mrb[0].mxu0
        %v2698 = vadd.f32 %v372, %v2697
        %v2699 = vpop.f32.mrb[0].mxu0
        %v2700 = vadd.f32 %v376, %v2699
        %2701 = vmatprep.mubr.f32.mxu0 0.0
        %2702 = vmatmul.mubr.f32.gmra.mrb[0].mxu0 %v2611
        %v2703 = vpop.f32.mrb[0].mxu0
        %v2704 = vadd.f32 %v372, %v2703
        %v2705 = vpop.f32.mrb[0].mxu0
        %v2706 = vadd.f32 %v376, %v2705
        %2707 = vmatprep.mubr.f32.mxu0 0.0
        %2708 = vmatmul.mubr.f32.gmra.mrb[0].mxu0 %v2614
        %v2709 = vpop.f32.mrb[0].mxu0
        %v2710 = vadd.f32 %v372, %v2709
        %v2711 = vpop.f32.mrb[0].mxu0
        %v2712 = vadd.f32 %v376, %v2711
        %2713 = vmatprep.mubr.f32.mxu0 0.0
        %2714 = vmatmul.mubr.f32.gmra.mrb[0].mxu0 %v2617
        %v2715 = vpop.f32.mrb[0].mxu0
        %v2716 = vadd.f32 %v372, %v2715
        %v2717 = vpop.f32.mrb[0].mxu0
        %v2718 = vadd.f32 %v376, %v2717
        %2719 = vmatprep.mubr.f32.mxu0 0.0
        %2720 = vmatmul.mubr.f32.gmra.mrb[0].mxu0 %v2620
        %v2721 = vpop.f32.mrb[0].mxu0
        %v2722 = vadd.f32 %v372, %v2721
        %v2723 = vpop.f32.mrb[0].mxu0
        %v2724 = vadd.f32 %v376, %v2723
        %2725 = vmatprep.mubr.f32.mxu0 0.0
        %2726 = vmatmul.mubr.f32.gmra.mrb[0].mxu0 %v2623
        %v2727 = vpop.f32.mrb[0].mxu0
        %v2728 = vadd.f32 %v372, %v2727
        %v2729 = vpop.f32.mrb[0].mxu0
        %v2730 = vadd.f32 %v376, %v2729
        %2731 = vmatprep.mubr.f32.mxu0 0.0
        %2732 = vmatmul.mubr.f32.gmra.mrb[0].mxu0 %v2626
        %v2733 = vpop.f32.mrb[0].mxu0
        %v2734 = vadd.f32 %v372, %v2733
        %v2735 = vpop.f32.mrb[0].mxu0
        %v2736 = vadd.f32 %v376, %v2735
        %2737 = vmatprep.mubr.f32.mxu0 0.0
        %2738 = vmatmul.mubr.f32.gmra.mrb[0].mxu0 %v2629
        %v2739 = vpop.f32.mrb[0].mxu0
        %v2740 = vadd.f32 %v372, %v2739
        %v2741 = vpop.f32.mrb[0].mxu0
        %v2742 = vadd.f32 %v376, %v2741
        %2743 = vdwg.mxu0
        %2744 = vmatprep.subr.mxu0 %v285
        %2745 = vmatpush1.msra.mxu0 %v284
        %2746 = vmatprep.subr.mxu0 %v289
        %2747 = vmatpush1.msra.mxu0 %v288
        %2748 = vmatprep.subr.mxu0 %v293
        %2749 = vmatpush1.msra.mxu0 %v292
        %2750 = vmatprep.subr.mxu0 %v297
        %2751 = vmatpush1.msra.mxu0 %v296
        %2752 = vmatprep.subr.mxu0 0.0
        %2753 = vmatpush1.msra.mxu0 0.0
        %2754 = vmatprep.subr.mxu0 0.0
        %2755 = vmatpush1.msra.mxu0 0.0
        %2756 = vmatprep.subr.mxu0 0.0
        %2757 = vmatpush1.msra.mxu0 0.0
        %2758 = vmatprep.subr.mxu0 0.0
        %2759 = vmatpush1.msra.mxu0 0.0
        %2760 = vmatprep.subr.mxu0 0.0
        %2761 = vmatpush1.msra.mxu0 0.0
        %2762 = vmatprep.subr.mxu0 0.0
        %2763 = vmatpush1.msra.mxu0 0.0
        %2764 = vmatprep.subr.mxu0 0.0
        %2765 = vmatpush1.msra.mxu0 0.0
        %2766 = vmatprep.subr.mxu0 0.0
        %2767 = vmatpush1.msra.mxu0 0.0
        %2768 = vmatprep.subr.mxu0 0.0
        %2769 = vmatpush1.msra.mxu0 0.0
        %2770 = vmatprep.subr.mxu0 0.0
        %2771 = vmatpush1.msra.mxu0 0.0
        %2772 = vmatprep.subr.mxu0 0.0
        %2773 = vmatpush1.msra.mxu0 0.0
        %2774 = vmatprep.subr.mxu0 0.0
        %2775 = vmatpush1.msra.mxu0 0.0
        %2776 = vmatprep.subr.mxu0 0.0
        %2777 = vmatpush1.msra.mxu0 0.0
        %2778 = vmatprep.subr.mxu0 0.0
        %2779 = vmatpush1.msra.mxu0 0.0
        %2780 = vmatprep.subr.mxu0 0.0
        %2781 = vmatpush1.msra.mxu0 0.0
        %2782 = vmatprep.subr.mxu0 0.0
        %2783 = vmatpush1.msra.mxu0 0.0
        %2784 = vmatprep.subr.mxu0 0.0
        %2785 = vmatpush1.msra.mxu0 0.0
        %2786 = vmatprep.subr.mxu0 0.0
        %2787 = vmatpush1.msra.mxu0 0.0
        %2788 = vmatprep.subr.mxu0 0.0
        %2789 = vmatpush1.msra.mxu0 0.0
        %2790 = vmatprep.subr.mxu0 0.0
        %2791 = vmatpush1.msra.mxu0 0.0
        %2792 = vmatprep.subr.mxu0 0.0
        %2793 = vmatpush1.msra.mxu0 0.0
        %2794 = vmatprep.subr.mxu0 0.0
        %2795 = vmatpush1.msra.mxu0 0.0
        %2796 = vmatprep.subr.mxu0 0.0
        %2797 = vmatpush1.msra.mxu0 0.0
        %2798 = vmatprep.subr.mxu0 0.0
        %2799 = vmatpush1.msra.mxu0 0.0
        %2800 = vmatprep.subr.mxu0 0.0
        %2801 = vmatpush1.msra.mxu0 0.0
        %2802 = vmatprep.subr.mxu0 0.0
        %2803 = vmatpush1.msra.mxu0 0.0
        %2804 = vmatprep.subr.mxu0 0.0
        %2805 = vmatpush1.msra.mxu0 0.0
        %2806 = vmatprep.subr.mxu0 0.0
        %2807 = vmatpush1.msra.mxu0 0.0
        %2808 = vmatprep.mubr.f32.mxu0 0.0
        %2809 = vmatmul.mubr.f32.gmra.mrb[0].mxu0 %v2608
        %v2810 = vpop.f32.mrb[0].mxu0
        %v2811 = vadd.f32 %v380, %v2810
        %v2812 = vpop.f32.mrb[0].mxu0
        %v2813 = vadd.f32 %v384, %v2812
        %2814 = vmatprep.mubr.f32.mxu0 0.0
        %2815 = vmatmul.mubr.f32.gmra.mrb[0].mxu0 %v2611
        %v2816 = vpop.f32.mrb[0].mxu0
        %v2817 = vadd.f32 %v380, %v2816
        %v2818 = vpop.f32.mrb[0].mxu0
        %v2819 = vadd.f32 %v384, %v2818
        %2820 = vmatprep.mubr.f32.mxu0 0.0
        %2821 = vmatmul.mubr.f32.gmra.mrb[0].mxu0 %v2614
        %v2822 = vpop.f32.mrb[0].mxu0
        %v2823 = vadd.f32 %v380, %v2822
        %v2824 = vpop.f32.mrb[0].mxu0
        %v2825 = vadd.f32 %v384, %v2824
        %2826 = vmatprep.mubr.f32.mxu0 0.0
        %2827 = vmatmul.mubr.f32.gmra.mrb[0].mxu0 %v2617
        %v2828 = vpop.f32.mrb[0].mxu0
        %v2829 = vadd.f32 %v380, %v2828
        %v2830 = vpop.f32.mrb[0].mxu0
        %v2831 = vadd.f32 %v384, %v2830
        %2832 = vmatprep.mubr.f32.mxu0 0.0
        %2833 = vmatmul.mubr.f32.gmra.mrb[0].mxu0 %v2620
        %v2834 = vpop.f32.mrb[0].mxu0
        %v2835 = vadd.f32 %v380, %v2834
        %v2836 = vpop.f32.mrb[0].mxu0
        %v2837 = vadd.f32 %v384, %v2836
        %2838 = vmatprep.mubr.f32.mxu0 0.0
        %2839 = vmatmul.mubr.f32.gmra.mrb[0].mxu0 %v2623
        %v2840 = vpop.f32.mrb[0].mxu0
        %v2841 = vadd.f32 %v380, %v2840
        %v2842 = vpop.f32.mrb[0].mxu0
        %v2843 = vadd.f32 %v384, %v2842
        %2844 = vmatprep.mubr.f32.mxu0 0.0
        %2845 = vmatmul.mubr.f32.gmra.mrb[0].mxu0 %v2626
        %v2846 = vpop.f32.mrb[0].mxu0
        %v2847 = vadd.f32 %v380, %v2846
        %v2848 = vpop.f32.mrb[0].mxu0
        %v2849 = vadd.f32 %v384, %v2848
        %2850 = vmatprep.mubr.f32.mxu0 0.0
        %2851 = vmatmul.mubr.f32.gmra.mrb[0].mxu0 %v2629
        %v2852 = vpop.f32.mrb[0].mxu0
        %v2853 = vadd.f32 %v380, %v2852
        %v2854 = vpop.f32.mrb[0].mxu0
        %v2855 = vadd.f32 %v384, %v2854
        %2856 = vdwg.mxu0
        %2857 = vmatprep.subr.mxu0 0.0
        %2858 = vmatpush1.msra.mxu0 %v299
        %2859 = vmatprep.subr.mxu0 0.0
        %2860 = vmatpush1.msra.mxu0 %v300
        %2861 = vmatprep.subr.mxu0 0.0
        %2862 = vmatpush1.msra.mxu0 %v301
        %2863 = vmatprep.subr.mxu0 0.0
        %2864 = vmatpush1.msra.mxu0 %v302
        %2865 = vmatprep.subr.mxu0 0.0
        %2866 = vmatpush1.msra.mxu0 %v303
        %2867 = vmatprep.subr.mxu0 0.0
        %2868 = vmatpush1.msra.mxu0 %v304
        %2869 = vmatprep.subr.mxu0 0.0
        %2870 = vmatpush1.msra.mxu0 %v305
        %2871 = vmatprep.subr.mxu0 0.0
        %2872 = vmatpush1.msra.mxu0 %v306
        %2873 = vmatprep.subr.mxu0 0.0
        %2874 = vmatpush1.msra.mxu0 %v307
        %2875 = vmatprep.subr.mxu0 0.0
        %2876 = vmatpush1.msra.mxu0 %v308
        %2877 = vmatprep.subr.mxu0 0.0
        %2878 = vmatpush1.msra.mxu0 %v309
        %2879 = vmatprep.subr.mxu0 0.0
        %2880 = vmatpush1.msra.mxu0 %v310
        %2881 = vmatprep.subr.mxu0 0.0
        %2882 = vmatpush1.msra.mxu0 %v311
        %2883 = vmatprep.subr.mxu0 0.0
        %2884 = vmatpush1.msra.mxu0 %v312
        %2885 = vmatprep.subr.mxu0 0.0
        %2886 = vmatpush1.msra.mxu0 %v313
        %2887 = vmatprep.subr.mxu0 0.0
        %2888 = vmatpush1.msra.mxu0 %v314
        %2889 = vmatprep.subr.mxu0 0.0
        %2890 = vmatpush1.msra.mxu0 %v315
        %2891 = vmatprep.subr.mxu0 0.0
        %2892 = vmatpush1.msra.mxu0 %v316
        %2893 = vmatprep.subr.mxu0 0.0
        %2894 = vmatpush1.msra.mxu0 %v317
        %2895 = vmatprep.subr.mxu0 0.0
        %2896 = vmatpush1.msra.mxu0 %v318
        %2897 = vmatprep.subr.mxu0 0.0
        %2898 = vmatpush1.msra.mxu0 %v319
        %2899 = vmatprep.subr.mxu0 0.0
        %2900 = vmatpush1.msra.mxu0 %v320
        %2901 = vmatprep.subr.mxu0 0.0
        %2902 = vmatpush1.msra.mxu0 %v321
        %2903 = vmatprep.subr.mxu0 0.0
        %2904 = vmatpush1.msra.mxu0 %v322
        %2905 = vmatprep.subr.mxu0 0.0
        %2906 = vmatpush1.msra.mxu0 %v323
        %2907 = vmatprep.subr.mxu0 0.0
        %2908 = vmatpush1.msra.mxu0 %v324
        %2909 = vmatprep.subr.mxu0 0.0
        %2910 = vmatpush1.msra.mxu0 %v325
        %2911 = vmatprep.subr.mxu0 0.0
        %2912 = vmatpush1.msra.mxu0 %v326
        %2913 = vmatprep.subr.mxu0 0.0
        %2914 = vmatpush1.msra.mxu0 %v327
        %2915 = vmatprep.subr.mxu0 0.0
        %2916 = vmatpush1.msra.mxu0 %v328
        %2917 = vmatprep.subr.mxu0 0.0
        %2918 = vmatpush1.msra.mxu0 %v329
        %2919 = vmatprep.subr.mxu0 0.0
        %2920 = vmatpush1.msra.mxu0 %v330
        %2921 = vmatprep.mubr.f32.mxu0 %v2700
        %2922 = vmatmul.mubr.f32.gmra.mrb[0].mxu0 %v2698
        %v2923 = vpop.f32.mrb[0].mxu0
        %v2924 = vadd.f32 %v676, %v2923
        %v2925 = vpop.f32.mrb[0].mxu0
        %2926 = vmatprep.mubr.f32.mxu0 %v2706
        %2927 = vmatmul.mubr.f32.gmra.mrb[0].mxu0 %v2704
        %v2928 = vpop.f32.mrb[0].mxu0
        %v2929 = vadd.f32 %v676, %v2928
        %v2930 = vpop.f32.mrb[0].mxu0
        %2931 = vmatprep.mubr.f32.mxu0 %v2712
        %2932 = vmatmul.mubr.f32.gmra.mrb[0].mxu0 %v2710
        %v2933 = vpop.f32.mrb[0].mxu0
        %v2934 = vadd.f32 %v676, %v2933
        %v2935 = vpop.f32.mrb[0].mxu0
        %2936 = vmatprep.mubr.f32.mxu0 %v2718
        %2937 = vmatmul.mubr.f32.gmra.mrb[0].mxu0 %v2716
        %v2938 = vpop.f32.mrb[0].mxu0
        %v2939 = vadd.f32 %v676, %v2938
        %v2940 = vpop.f32.mrb[0].mxu0
        %2941 = vmatprep.mubr.f32.mxu0 %v2724
        %2942 = vmatmul.mubr.f32.gmra.mrb[0].mxu0 %v2722
        %v2943 = vpop.f32.mrb[0].mxu0
        %v2944 = vadd.f32 %v676, %v2943
        %v2945 = vpop.f32.mrb[0].mxu0
        %2946 = vmatprep.mubr.f32.mxu0 %v2730
        %2947 = vmatmul.mubr.f32.gmra.mrb[0].mxu0 %v2728
        %v2948 = vpop.f32.mrb[0].mxu0
        %v2949 = vadd.f32 %v676, %v2948
        %v2950 = vpop.f32.mrb[0].mxu0
        %2951 = vmatprep.mubr.f32.mxu0 %v2736
        %2952 = vmatmul.mubr.f32.gmra.mrb[0].mxu0 %v2734
        %v2953 = vpop.f32.mrb[0].mxu0
        %v2954 = vadd.f32 %v676, %v2953
        %v2955 = vpop.f32.mrb[0].mxu0
        %2956 = vmatprep.mubr.f32.mxu0 %v2742
        %2957 = vmatmul.mubr.f32.gmra.mrb[0].mxu0 %v2740
        %v2958 = vpop.f32.mrb[0].mxu0
        %v2959 = vadd.f32 %v676, %v2958
        %v2960 = vpop.f32.mrb[0].mxu0
        %2961 = vdwg.mxu0
        %2962 = vmatprep.subr.mxu0 0.0
        %2963 = vmatpush1.msra.mxu0 %v331
        %2964 = vmatprep.subr.mxu0 0.0
        %2965 = vmatpush1.msra.mxu0 %v332
        %2966 = vmatprep.subr.mxu0 0.0
        %2967 = vmatpush1.msra.mxu0 %v333
        %2968 = vmatprep.subr.mxu0 0.0
        %2969 = vmatpush1.msra.mxu0 %v334
        %2970 = vmatprep.subr.mxu0 0.0
        %2971 = vmatpush1.msra.mxu0 %v335
        %2972 = vmatprep.subr.mxu0 0.0
        %2973 = vmatpush1.msra.mxu0 %v336
        %2974 = vmatprep.subr.mxu0 0.0
        %2975 = vmatpush1.msra.mxu0 %v337
        %2976 = vmatprep.subr.mxu0 0.0
        %2977 = vmatpush1.msra.mxu0 %v338
        %2978 = vmatprep.subr.mxu0 0.0
        %2979 = vmatpush1.msra.mxu0 %v339
        %2980 = vmatprep.subr.mxu0 0.0
        %2981 = vmatpush1.msra.mxu0 %v340
        %2982 = vmatprep.subr.mxu0 0.0
        %2983 = vmatpush1.msra.mxu0 %v341
        %2984 = vmatprep.subr.mxu0 0.0
        %2985 = vmatpush1.msra.mxu0 %v342
        %2986 = vmatprep.subr.mxu0 0.0
        %2987 = vmatpush1.msra.mxu0 %v343
        %2988 = vmatprep.subr.mxu0 0.0
        %2989 = vmatpush1.msra.mxu0 %v344
        %2990 = vmatprep.subr.mxu0 0.0
        %2991 = vmatpush1.msra.mxu0 %v345
        %2992 = vmatprep.subr.mxu0 0.0
        %2993 = vmatpush1.msra.mxu0 %v346
        %2994 = vmatprep.subr.mxu0 0.0
        %2995 = vmatpush1.msra.mxu0 %v347
        %2996 = vmatprep.subr.mxu0 0.0
        %2997 = vmatpush1.msra.mxu0 %v348
        %2998 = vmatprep.subr.mxu0 0.0
        %2999 = vmatpush1.msra.mxu0 %v349
        %3000 = vmatprep.subr.mxu0 0.0
        %3001 = vmatpush1.msra.mxu0 %v350
        %3002 = vmatprep.subr.mxu0 0.0
        %3003 = vmatpush1.msra.mxu0 %v351
        %3004 = vmatprep.subr.mxu0 0.0
        %3005 = vmatpush1.msra.mxu0 %v352
        %3006 = vmatprep.subr.mxu0 0.0
        %3007 = vmatpush1.msra.mxu0 %v353
        %3008 = vmatprep.subr.mxu0 0.0
        %3009 = vmatpush1.msra.mxu0 %v354
        %3010 = vmatprep.subr.mxu0 0.0
        %3011 = vmatpush1.msra.mxu0 %v355
        %3012 = vmatprep.subr.mxu0 0.0
        %3013 = vmatpush1.msra.mxu0 %v356
        %3014 = vmatprep.subr.mxu0 0.0
        %3015 = vmatpush1.msra.mxu0 %v357
        %3016 = vmatprep.subr.mxu0 0.0
        %3017 = vmatpush1.msra.mxu0 %v358
        %3018 = vmatprep.subr.mxu0 0.0
        %3019 = vmatpush1.msra.mxu0 %v359
        %3020 = vmatprep.subr.mxu0 0.0
        %3021 = vmatpush1.msra.mxu0 %v360
        %3022 = vmatprep.subr.mxu0 0.0
        %3023 = vmatpush1.msra.mxu0 %v361
        %3024 = vmatprep.subr.mxu0 0.0
        %3025 = vmatpush1.msra.mxu0 %v362
        %3026 = vmatprep.mubr.f32.mxu0 %v2813
        %3027 = vmatmul.mubr.f32.gmra.mrb[0].mxu0 %v2811
        %v3028 = vpop.f32.mrb[0].mxu0
        %v3029 = vadd.f32 %v2924, %v3028
        %v3030 = vpop.f32.mrb[0].mxu0
        %3031 = vmatprep.mubr.f32.mxu0 %v2819
        %3032 = vmatmul.mubr.f32.gmra.mrb[0].mxu0 %v2817
        %v3033 = vpop.f32.mrb[0].mxu0
        %v3034 = vadd.f32 %v2929, %v3033
        %v3035 = vpop.f32.mrb[0].mxu0
        %3036 = vmatprep.mubr.f32.mxu0 %v2825
        %3037 = vmatmul.mubr.f32.gmra.mrb[0].mxu0 %v2823
        %v3038 = vpop.f32.mrb[0].mxu0
        %v3039 = vadd.f32 %v2934, %v3038
        %v3040 = vpop.f32.mrb[0].mxu0
        %3041 = vmatprep.mubr.f32.mxu0 %v2831
        %3042 = vmatmul.mubr.f32.gmra.mrb[0].mxu0 %v2829
        %v3043 = vpop.f32.mrb[0].mxu0
        %v3044 = vadd.f32 %v2939, %v3043
        %v3045 = vpop.f32.mrb[0].mxu0
        %3046 = vmatprep.mubr.f32.mxu0 %v2837
        %3047 = vmatmul.mubr.f32.gmra.mrb[0].mxu0 %v2835
        %v3048 = vpop.f32.mrb[0].mxu0
        %v3049 = vadd.f32 %v2944, %v3048
        %v3050 = vpop.f32.mrb[0].mxu0
        %3051 = vmatprep.mubr.f32.mxu0 %v2843
        %3052 = vmatmul.mubr.f32.gmra.mrb[0].mxu0 %v2841
        %v3053 = vpop.f32.mrb[0].mxu0
        %v3054 = vadd.f32 %v2949, %v3053
        %v3055 = vpop.f32.mrb[0].mxu0
        %3056 = vmatprep.mubr.f32.mxu0 %v2849
        %3057 = vmatmul.mubr.f32.gmra.mrb[0].mxu0 %v2847
        %v3058 = vpop.f32.mrb[0].mxu0
        %v3059 = vadd.f32 %v2954, %v3058
        %v3060 = vpop.f32.mrb[0].mxu0
        %3061 = vmatprep.mubr.f32.mxu0 %v2855
        %3062 = vmatmul.mubr.f32.gmra.mrb[0].mxu0 %v2853
        %v3063 = vpop.f32.mrb[0].mxu0
        %v3064 = vadd.f32 %v2959, %v3063
        %v3065 = vpop.f32.mrb[0].mxu0
        %3066 = vdwg.mxu0
        %v3067 = vxor.u32 %v3029, 2147483648
        %v3068 = vxor.u32 %v3034, 2147483648
        %v3069 = vxor.u32 %v3039, 2147483648
        %v3070 = vxor.u32 %v3044, 2147483648
        %v3071 = vxor.u32 %v3049, 2147483648
        %v3072 = vxor.u32 %v3054, 2147483648
        %v3073 = vxor.u32 %v3059, 2147483648
        %v3074 = vxor.u32 %v3064, 2147483648
        %v3075 = vmul.f32 %v3067, 1.442695
        %v3076 = vpow.pop %v3075
        %v3077 = vmul.f32 %v3068, 1.442695
        %v3078 = vpow.pop %v3077
        %v3079 = vmul.f32 %v3069, 1.442695
        %v3080 = vpow.pop %v3079
        %v3081 = vmul.f32 %v3070, 1.442695
        %v3082 = vpow.pop %v3081
        %v3083 = vmul.f32 %v3071, 1.442695
        %v3084 = vpow.pop %v3083
        %v3085 = vmul.f32 %v3072, 1.442695
        %v3086 = vpow.pop %v3085
        %v3087 = vmul.f32 %v3073, 1.442695
        %v3088 = vpow.pop %v3087
        %v3089 = vmul.f32 %v3074, 1.442695
        %v3090 = vpow.pop %v3089
        %v3091 = vadd.f32 %v3076, 1.0
        %v3092 = vadd.f32 %v3078, 1.0
        %v3093 = vadd.f32 %v3080, 1.0
        %v3094 = vadd.f32 %v3082, 1.0
        %v3095 = vadd.f32 %v3084, 1.0
        %v3096 = vadd.f32 %v3086, 1.0
        %v3097 = vadd.f32 %v3088, 1.0
        %v3098 = vadd.f32 %v3090, 1.0
        %v3099 = vrcp.pop %v3091
        %v3100 = vmul.f32 1.0, %v3099
        %v3101 = vrcp.pop %v3092
        %v3102 = vmul.f32 1.0, %v3101
        %v3103 = vrcp.pop %v3093
        %v3104 = vmul.f32 1.0, %v3103
        %v3105 = vrcp.pop %v3094
        %v3106 = vmul.f32 1.0, %v3105
        %v3107 = vrcp.pop %v3095
        %v3108 = vmul.f32 1.0, %v3107
        %v3109 = vrcp.pop %v3096
        %v3110 = vmul.f32 1.0, %v3109
        %v3111 = vrcp.pop %v3097
        %v3112 = vmul.f32 1.0, %v3111
        %v3113 = vrcp.pop %v3098
        %v3114 = vmul.f32 1.0, %v3113
        %3115 = vxpose.xlu0.b32.start [1/16] %v3100, 128
        %3116 = vxpose.xlu0.b32.cont [2/16] %v3102, 128
        %3117 = vxpose.xlu0.b32.cont [3/16] %v3104, 128
        %3118 = vxpose.xlu0.b32.cont [4/16] %v3106, 128
        %3119 = vxpose.xlu0.b32.cont [5/16] %v3108, 128
        %3120 = vxpose.xlu0.b32.cont [6/16] %v3110, 128
        %3121 = vxpose.xlu0.b32.cont [7/16] %v3112, 128
        %3122 = vxpose.xlu0.b32.cont [8/16] %v3114, 128
        %3123 = vxpose.xlu0.b32.cont [9/16] 0.0, 128
        %3124 = vxpose.xlu0.b32.cont [10/16] 0.0, 128
        %3125 = vxpose.xlu0.b32.cont [11/16] 0.0, 128
        %3126 = vxpose.xlu0.b32.cont [12/16] 0.0, 128
        %3127 = vxpose.xlu0.b32.cont [13/16] 0.0, 128
        %3128 = vxpose.xlu0.b32.cont [14/16] 0.0, 128
        %3129 = vxpose.xlu0.b32.cont [15/16] 0.0, 128
        %3130 = vxpose.xlu0.b32.end [16/16] 0.0, 128
        %v3131 = vpop.trf.xlu0
        %v3132 = vpop.trf.xlu0
        %v3133 = vpop.trf.xlu0
        %v3134 = vpop.trf.xlu0
        %v3135 = vpop.trf.xlu0
        %v3136 = vpop.trf.xlu0
        %v3137 = vpop.trf.xlu0
        %v3138 = vpop.trf.xlu0
        %v3139 = vpop.trf.xlu0
        %v3140 = vpop.trf.xlu0
        %v3141 = vpop.trf.xlu0
        %v3142 = vpop.trf.xlu0
        %v3143 = vpop.trf.xlu0
        %v3144 = vpop.trf.xlu0
        %v3145 = vpop.trf.xlu0
        %v3146 = vpop.trf.xlu0
        %v3148 = vsel %vm968, %v3131, 0
        %3150 = vmatprep.subr.mxu0 %v2700
        %3151 = vmatpush1.msra.mxu0 %v2698
        %3152 = vmatprep.subr.mxu0 %v2706
        %3153 = vmatpush1.msra.mxu0 %v2704
        %3154 = vmatprep.subr.mxu0 %v2712
        %3155 = vmatpush1.msra.mxu0 %v2710
        %3156 = vmatprep.subr.mxu0 %v2718
        %3157 = vmatpush1.msra.mxu0 %v2716
        %3158 = vmatprep.subr.mxu0 %v2724
        %3159 = vmatpush1.msra.mxu0 %v2722
        %3160 = vmatprep.subr.mxu0 %v2730
        %3161 = vmatpush1.msra.mxu0 %v2728
        %3162 = vmatprep.subr.mxu0 %v2736
        %3163 = vmatpush1.msra.mxu0 %v2734
        %3164 = vmatprep.subr.mxu0 %v2742
        %3165 = vmatpush1.msra.mxu0 %v2740
        %3166 = vmatprep.subr.mxu0 0.0
        %3167 = vmatpush1.msra.mxu0 0.0
        %3168 = vmatprep.subr.mxu0 0.0
        %3169 = vmatpush1.msra.mxu0 0.0
        %3170 = vmatprep.subr.mxu0 0.0
        %3171 = vmatpush1.msra.mxu0 0.0
        %3172 = vmatprep.subr.mxu0 0.0
        %3173 = vmatpush1.msra.mxu0 0.0
        %3174 = vmatprep.subr.mxu0 0.0
        %3175 = vmatpush1.msra.mxu0 0.0
        %3176 = vmatprep.subr.mxu0 0.0
        %3177 = vmatpush1.msra.mxu0 0.0
        %3178 = vmatprep.subr.mxu0 0.0
        %3179 = vmatpush1.msra.mxu0 0.0
        %3180 = vmatprep.subr.mxu0 0.0
        %3181 = vmatpush1.msra.mxu0 0.0
        %3182 = vmatprep.subr.mxu0 0.0
        %3183 = vmatpush1.msra.mxu0 0.0
        %3184 = vmatprep.subr.mxu0 0.0
        %3185 = vmatpush1.msra.mxu0 0.0
        %3186 = vmatprep.subr.mxu0 0.0
        %3187 = vmatpush1.msra.mxu0 0.0
        %3188 = vmatprep.subr.mxu0 0.0
        %3189 = vmatpush1.msra.mxu0 0.0
        %3190 = vmatprep.subr.mxu0 0.0
        %3191 = vmatpush1.msra.mxu0 0.0
        %3192 = vmatprep.subr.mxu0 0.0
        %3193 = vmatpush1.msra.mxu0 0.0
        %3194 = vmatprep.subr.mxu0 0.0
        %3195 = vmatpush1.msra.mxu0 0.0
        %3196 = vmatprep.subr.mxu0 0.0
        %3197 = vmatpush1.msra.mxu0 0.0
        %3198 = vmatprep.subr.mxu0 0.0
        %3199 = vmatpush1.msra.mxu0 0.0
        %3200 = vmatprep.subr.mxu0 0.0
        %3201 = vmatpush1.msra.mxu0 0.0
        %3202 = vmatprep.subr.mxu0 0.0
        %3203 = vmatpush1.msra.mxu0 0.0
        %3204 = vmatprep.subr.mxu0 0.0
        %3205 = vmatpush1.msra.mxu0 0.0
        %3206 = vmatprep.subr.mxu0 0.0
        %3207 = vmatpush1.msra.mxu0 0.0
        %3208 = vmatprep.subr.mxu0 0.0
        %3209 = vmatpush1.msra.mxu0 0.0
        %3210 = vmatprep.subr.mxu0 0.0
        %3211 = vmatpush1.msra.mxu0 0.0
        %3212 = vmatprep.subr.mxu0 0.0
        %3213 = vmatpush1.msra.mxu0 0.0
        %3214 = vmatprep.mubr.f32.mxu0 0.0
        %3215 = vmatmul.mubr.f32.gmra.mrb[0].mxu0 %v3148
        %v3216 = vpop.f32.mrb[0].mxu0
        %v3217 = vadd.f32 0.0, %v3216
        %v3218 = vpop.f32.mrb[0].mxu0
        %v3219 = vadd.f32 0.0, %v3218
        %3220 = vdwg.mxu0
        %3221 = vmatprep.subr.mxu0 %v2813
        %3222 = vmatpush1.msra.mxu0 %v2811
        %3223 = vmatprep.subr.mxu0 %v2819
        %3224 = vmatpush1.msra.mxu0 %v2817
        %3225 = vmatprep.subr.mxu0 %v2825
        %3226 = vmatpush1.msra.mxu0 %v2823
        %3227 = vmatprep.subr.mxu0 %v2831
        %3228 = vmatpush1.msra.mxu0 %v2829
        %3229 = vmatprep.subr.mxu0 %v2837
        %3230 = vmatpush1.msra.mxu0 %v2835
        %3231 = vmatprep.subr.mxu0 %v2843
        %3232 = vmatpush1.msra.mxu0 %v2841
        %3233 = vmatprep.subr.mxu0 %v2849
        %3234 = vmatpush1.msra.mxu0 %v2847
        %3235 = vmatprep.subr.mxu0 %v2855
        %3236 = vmatpush1.msra.mxu0 %v2853
        %3237 = vmatprep.subr.mxu0 0.0
        %3238 = vmatpush1.msra.mxu0 0.0
        %3239 = vmatprep.subr.mxu0 0.0
        %3240 = vmatpush1.msra.mxu0 0.0
        %3241 = vmatprep.subr.mxu0 0.0
        %3242 = vmatpush1.msra.mxu0 0.0
        %3243 = vmatprep.subr.mxu0 0.0
        %3244 = vmatpush1.msra.mxu0 0.0
        %3245 = vmatprep.subr.mxu0 0.0
        %3246 = vmatpush1.msra.mxu0 0.0
        %3247 = vmatprep.subr.mxu0 0.0
        %3248 = vmatpush1.msra.mxu0 0.0
        %3249 = vmatprep.subr.mxu0 0.0
        %3250 = vmatpush1.msra.mxu0 0.0
        %3251 = vmatprep.subr.mxu0 0.0
        %3252 = vmatpush1.msra.mxu0 0.0
        %3253 = vmatprep.subr.mxu0 0.0
        %3254 = vmatpush1.msra.mxu0 0.0
        %3255 = vmatprep.subr.mxu0 0.0
        %3256 = vmatpush1.msra.mxu0 0.0
        %3257 = vmatprep.subr.mxu0 0.0
        %3258 = vmatpush1.msra.mxu0 0.0
        %3259 = vmatprep.subr.mxu0 0.0
        %3260 = vmatpush1.msra.mxu0 0.0
        %3261 = vmatprep.subr.mxu0 0.0
        %3262 = vmatpush1.msra.mxu0 0.0
        %3263 = vmatprep.subr.mxu0 0.0
        %3264 = vmatpush1.msra.mxu0 0.0
        %3265 = vmatprep.subr.mxu0 0.0
        %3266 = vmatpush1.msra.mxu0 0.0
        %3267 = vmatprep.subr.mxu0 0.0
        %3268 = vmatpush1.msra.mxu0 0.0
        %3269 = vmatprep.subr.mxu0 0.0
        %3270 = vmatpush1.msra.mxu0 0.0
        %3271 = vmatprep.subr.mxu0 0.0
        %3272 = vmatpush1.msra.mxu0 0.0
        %3273 = vmatprep.subr.mxu0 0.0
        %3274 = vmatpush1.msra.mxu0 0.0
        %3275 = vmatprep.subr.mxu0 0.0
        %3276 = vmatpush1.msra.mxu0 0.0
        %3277 = vmatprep.subr.mxu0 0.0
        %3278 = vmatpush1.msra.mxu0 0.0
        %3279 = vmatprep.subr.mxu0 0.0
        %3280 = vmatpush1.msra.mxu0 0.0
        %3281 = vmatprep.subr.mxu0 0.0
        %3282 = vmatpush1.msra.mxu0 0.0
        %3283 = vmatprep.subr.mxu0 0.0
        %3284 = vmatpush1.msra.mxu0 0.0
        %3285 = vmatprep.mubr.f32.mxu0 0.0
        %3286 = vmatmul.mubr.f32.gmra.mrb[0].mxu0 %v3148
        %v3287 = vpop.f32.mrb[0].mxu0
        %v3288 = vadd.f32 0.0, %v3287
        %v3289 = vpop.f32.mrb[0].mxu0
        %v3290 = vadd.f32 0.0, %v3289
        %3291 = vdwg.mxu0
        %v3292 = vmul.f32 %v3217, 0.015625
        %v3293 = vmul.f32 %v3219, 0.015625
        %v3294 = vmul.f32 %v3288, 0.015625
        %v3295 = vmul.f32 %v3290, 0.015625
        %s3296 = scalar_lea.vmem %s280, 128
        %v3297 = vld [vmem:[%s3296] sm:$0xff]
        %v3298 = vld [vmem:[%s3296 + $0x8] sm:$0xff]
        %v3299 = vld [vmem:[%s3296 + $0x10] sm:$0xff]
        %v3300 = vld [vmem:[%s3296 + $0x18] sm:$0xff]
        %3301 = vxpose.xlu0.b32.start [1/16] %v3297, 128
        %3302 = vxpose.xlu0.b32.cont [2/16] %v3298, 128
        %3303 = vxpose.xlu0.b32.cont [3/16] %v3299, 128
        %3304 = vxpose.xlu0.b32.cont [4/16] %v3300, 128
        %3305 = vxpose.xlu0.b32.cont [5/16] 0.0, 128
        %3306 = vxpose.xlu0.b32.cont [6/16] 0.0, 128
        %3307 = vxpose.xlu0.b32.cont [7/16] 0.0, 128
        %3308 = vxpose.xlu0.b32.cont [8/16] 0.0, 128
        %3309 = vxpose.xlu0.b32.cont [9/16] 0.0, 128
        %3310 = vxpose.xlu0.b32.cont [10/16] 0.0, 128
        %3311 = vxpose.xlu0.b32.cont [11/16] 0.0, 128
        %3312 = vxpose.xlu0.b32.cont [12/16] 0.0, 128
        %3313 = vxpose.xlu0.b32.cont [13/16] 0.0, 128
        %3314 = vxpose.xlu0.b32.cont [14/16] 0.0, 128
        %3315 = vxpose.xlu0.b32.cont [15/16] 0.0, 128
        %3316 = vxpose.xlu0.b32.end [16/16] 0.0, 128
        %v3317 = vpop.trf.xlu0
        %v3318 = vpop.trf.xlu0
        %v3319 = vpop.trf.xlu0
        %v3320 = vpop.trf.xlu0
        %v3321 = vpop.trf.xlu0
        %v3322 = vpop.trf.xlu0
        %v3323 = vpop.trf.xlu0
        %v3324 = vpop.trf.xlu0
        %v3325 = vpop.trf.xlu0
        %v3326 = vpop.trf.xlu0
        %v3327 = vpop.trf.xlu0
        %v3328 = vpop.trf.xlu0
        %v3329 = vpop.trf.xlu0
        %v3330 = vpop.trf.xlu0
        %v3331 = vpop.trf.xlu0
        %v3332 = vpop.trf.xlu0
        %v3334 = vsel %vm421, %v3317, 0
        %v3337 = vsel %vm421, %v3318, 0
        %v3340 = vsel %vm421, %v3319, 0
        %v3343 = vsel %vm421, %v3320, 0
        %v3346 = vsel %vm421, %v3321, 0
        %v3349 = vsel %vm421, %v3322, 0
        %v3352 = vsel %vm421, %v3323, 0
        %v3355 = vsel %vm421, %v3324, 0
        %3357 = vmatprep.subr.mxu0 %v283
        %3358 = vmatpush1.msra.mxu0 %v282
        %3359 = vmatprep.subr.mxu0 %v287
        %3360 = vmatpush1.msra.mxu0 %v286
        %3361 = vmatprep.subr.mxu0 %v291
        %3362 = vmatpush1.msra.mxu0 %v290
        %3363 = vmatprep.subr.mxu0 %v295
        %3364 = vmatpush1.msra.mxu0 %v294
        %3365 = vmatprep.subr.mxu0 0.0
        %3366 = vmatpush1.msra.mxu0 0.0
        %3367 = vmatprep.subr.mxu0 0.0
        %3368 = vmatpush1.msra.mxu0 0.0
        %3369 = vmatprep.subr.mxu0 0.0
        %3370 = vmatpush1.msra.mxu0 0.0
        %3371 = vmatprep.subr.mxu0 0.0
        %3372 = vmatpush1.msra.mxu0 0.0
        %3373 = vmatprep.subr.mxu0 0.0
        %3374 = vmatpush1.msra.mxu0 0.0
        %3375 = vmatprep.subr.mxu0 0.0
        %3376 = vmatpush1.msra.mxu0 0.0
        %3377 = vmatprep.subr.mxu0 0.0
        %3378 = vmatpush1.msra.mxu0 0.0
        %3379 = vmatprep.subr.mxu0 0.0
        %3380 = vmatpush1.msra.mxu0 0.0
        %3381 = vmatprep.subr.mxu0 0.0
        %3382 = vmatpush1.msra.mxu0 0.0
        %3383 = vmatprep.subr.mxu0 0.0
        %3384 = vmatpush1.msra.mxu0 0.0
        %3385 = vmatprep.subr.mxu0 0.0
        %3386 = vmatpush1.msra.mxu0 0.0
        %3387 = vmatprep.subr.mxu0 0.0
        %3388 = vmatpush1.msra.mxu0 0.0
        %3389 = vmatprep.subr.mxu0 0.0
        %3390 = vmatpush1.msra.mxu0 0.0
        %3391 = vmatprep.subr.mxu0 0.0
        %3392 = vmatpush1.msra.mxu0 0.0
        %3393 = vmatprep.subr.mxu0 0.0
        %3394 = vmatpush1.msra.mxu0 0.0
        %3395 = vmatprep.subr.mxu0 0.0
        %3396 = vmatpush1.msra.mxu0 0.0
        %3397 = vmatprep.subr.mxu0 0.0
        %3398 = vmatpush1.msra.mxu0 0.0
        %3399 = vmatprep.subr.mxu0 0.0
        %3400 = vmatpush1.msra.mxu0 0.0
        %3401 = vmatprep.subr.mxu0 0.0
        %3402 = vmatpush1.msra.mxu0 0.0
        %3403 = vmatprep.subr.mxu0 0.0
        %3404 = vmatpush1.msra.mxu0 0.0
        %3405 = vmatprep.subr.mxu0 0.0
        %3406 = vmatpush1.msra.mxu0 0.0
        %3407 = vmatprep.subr.mxu0 0.0
        %3408 = vmatpush1.msra.mxu0 0.0
        %3409 = vmatprep.subr.mxu0 0.0
        %3410 = vmatpush1.msra.mxu0 0.0
        %3411 = vmatprep.subr.mxu0 0.0
        %3412 = vmatpush1.msra.mxu0 0.0
        %3413 = vmatprep.subr.mxu0 0.0
        %3414 = vmatpush1.msra.mxu0 0.0
        %3415 = vmatprep.subr.mxu0 0.0
        %3416 = vmatpush1.msra.mxu0 0.0
        %3417 = vmatprep.subr.mxu0 0.0
        %3418 = vmatpush1.msra.mxu0 0.0
        %3419 = vmatprep.subr.mxu0 0.0
        %3420 = vmatpush1.msra.mxu0 0.0
        %3421 = vmatprep.mubr.f32.mxu0 0.0
        %3422 = vmatmul.mubr.f32.gmra.mrb[0].mxu0 %v3334
        %v3423 = vpop.f32.mrb[0].mxu0
        %v3424 = vadd.f32 %v372, %v3423
        %v3425 = vpop.f32.mrb[0].mxu0
        %v3426 = vadd.f32 %v376, %v3425
        %3427 = vmatprep.mubr.f32.mxu0 0.0
        %3428 = vmatmul.mubr.f32.gmra.mrb[0].mxu0 %v3337
        %v3429 = vpop.f32.mrb[0].mxu0
        %v3430 = vadd.f32 %v372, %v3429
        %v3431 = vpop.f32.mrb[0].mxu0
        %v3432 = vadd.f32 %v376, %v3431
        %3433 = vmatprep.mubr.f32.mxu0 0.0
        %3434 = vmatmul.mubr.f32.gmra.mrb[0].mxu0 %v3340
        %v3435 = vpop.f32.mrb[0].mxu0
        %v3436 = vadd.f32 %v372, %v3435
        %v3437 = vpop.f32.mrb[0].mxu0
        %v3438 = vadd.f32 %v376, %v3437
        %3439 = vmatprep.mubr.f32.mxu0 0.0
        %3440 = vmatmul.mubr.f32.gmra.mrb[0].mxu0 %v3343
        %v3441 = vpop.f32.mrb[0].mxu0
        %v3442 = vadd.f32 %v372, %v3441
        %v3443 = vpop.f32.mrb[0].mxu0
        %v3444 = vadd.f32 %v376, %v3443
        %3445 = vmatprep.mubr.f32.mxu0 0.0
        %3446 = vmatmul.mubr.f32.gmra.mrb[0].mxu0 %v3346
        %v3447 = vpop.f32.mrb[0].mxu0
        %v3448 = vadd.f32 %v372, %v3447
        %v3449 = vpop.f32.mrb[0].mxu0
        %v3450 = vadd.f32 %v376, %v3449
        %3451 = vmatprep.mubr.f32.mxu0 0.0
        %3452 = vmatmul.mubr.f32.gmra.mrb[0].mxu0 %v3349
        %v3453 = vpop.f32.mrb[0].mxu0
        %v3454 = vadd.f32 %v372, %v3453
        %v3455 = vpop.f32.mrb[0].mxu0
        %v3456 = vadd.f32 %v376, %v3455
        %3457 = vmatprep.mubr.f32.mxu0 0.0
        %3458 = vmatmul.mubr.f32.gmra.mrb[0].mxu0 %v3352
        %v3459 = vpop.f32.mrb[0].mxu0
        %v3460 = vadd.f32 %v372, %v3459
        %v3461 = vpop.f32.mrb[0].mxu0
        %v3462 = vadd.f32 %v376, %v3461
        %3463 = vmatprep.mubr.f32.mxu0 0.0
        %3464 = vmatmul.mubr.f32.gmra.mrb[0].mxu0 %v3355
        %v3465 = vpop.f32.mrb[0].mxu0
        %v3466 = vadd.f32 %v372, %v3465
        %v3467 = vpop.f32.mrb[0].mxu0
        %v3468 = vadd.f32 %v376, %v3467
        %3469 = vdwg.mxu0
        %3470 = vmatprep.subr.mxu0 %v285
        %3471 = vmatpush1.msra.mxu0 %v284
        %3472 = vmatprep.subr.mxu0 %v289
        %3473 = vmatpush1.msra.mxu0 %v288
        %3474 = vmatprep.subr.mxu0 %v293
        %3475 = vmatpush1.msra.mxu0 %v292
        %3476 = vmatprep.subr.mxu0 %v297
        %3477 = vmatpush1.msra.mxu0 %v296
        %3478 = vmatprep.subr.mxu0 0.0
        %3479 = vmatpush1.msra.mxu0 0.0
        %3480 = vmatprep.subr.mxu0 0.0
        %3481 = vmatpush1.msra.mxu0 0.0
        %3482 = vmatprep.subr.mxu0 0.0
        %3483 = vmatpush1.msra.mxu0 0.0
        %3484 = vmatprep.subr.mxu0 0.0
        %3485 = vmatpush1.msra.mxu0 0.0
        %3486 = vmatprep.subr.mxu0 0.0
        %3487 = vmatpush1.msra.mxu0 0.0
        %3488 = vmatprep.subr.mxu0 0.0
        %3489 = vmatpush1.msra.mxu0 0.0
        %3490 = vmatprep.subr.mxu0 0.0
        %3491 = vmatpush1.msra.mxu0 0.0
        %3492 = vmatprep.subr.mxu0 0.0
        %3493 = vmatpush1.msra.mxu0 0.0
        %3494 = vmatprep.subr.mxu0 0.0
        %3495 = vmatpush1.msra.mxu0 0.0
        %3496 = vmatprep.subr.mxu0 0.0
        %3497 = vmatpush1.msra.mxu0 0.0
        %3498 = vmatprep.subr.mxu0 0.0
        %3499 = vmatpush1.msra.mxu0 0.0
        %3500 = vmatprep.subr.mxu0 0.0
        %3501 = vmatpush1.msra.mxu0 0.0
        %3502 = vmatprep.subr.mxu0 0.0
        %3503 = vmatpush1.msra.mxu0 0.0
        %3504 = vmatprep.subr.mxu0 0.0
        %3505 = vmatpush1.msra.mxu0 0.0
        %3506 = vmatprep.subr.mxu0 0.0
        %3507 = vmatpush1.msra.mxu0 0.0
        %3508 = vmatprep.subr.mxu0 0.0
        %3509 = vmatpush1.msra.mxu0 0.0
        %3510 = vmatprep.subr.mxu0 0.0
        %3511 = vmatpush1.msra.mxu0 0.0
        %3512 = vmatprep.subr.mxu0 0.0
        %3513 = vmatpush1.msra.mxu0 0.0
        %3514 = vmatprep.subr.mxu0 0.0
        %3515 = vmatpush1.msra.mxu0 0.0
        %3516 = vmatprep.subr.mxu0 0.0
        %3517 = vmatpush1.msra.mxu0 0.0
        %3518 = vmatprep.subr.mxu0 0.0
        %3519 = vmatpush1.msra.mxu0 0.0
        %3520 = vmatprep.subr.mxu0 0.0
        %3521 = vmatpush1.msra.mxu0 0.0
        %3522 = vmatprep.subr.mxu0 0.0
        %3523 = vmatpush1.msra.mxu0 0.0
        %3524 = vmatprep.subr.mxu0 0.0
        %3525 = vmatpush1.msra.mxu0 0.0
        %3526 = vmatprep.subr.mxu0 0.0
        %3527 = vmatpush1.msra.mxu0 0.0
        %3528 = vmatprep.subr.mxu0 0.0
        %3529 = vmatpush1.msra.mxu0 0.0
        %3530 = vmatprep.subr.mxu0 0.0
        %3531 = vmatpush1.msra.mxu0 0.0
        %3532 = vmatprep.subr.mxu0 0.0
        %3533 = vmatpush1.msra.mxu0 0.0
        %3534 = vmatprep.mubr.f32.mxu0 0.0
        %3535 = vmatmul.mubr.f32.gmra.mrb[0].mxu0 %v3334
        %v3536 = vpop.f32.mrb[0].mxu0
        %v3537 = vadd.f32 %v380, %v3536
        %v3538 = vpop.f32.mrb[0].mxu0
        %v3539 = vadd.f32 %v384, %v3538
        %3540 = vmatprep.mubr.f32.mxu0 0.0
        %3541 = vmatmul.mubr.f32.gmra.mrb[0].mxu0 %v3337
        %v3542 = vpop.f32.mrb[0].mxu0
        %v3543 = vadd.f32 %v380, %v3542
        %v3544 = vpop.f32.mrb[0].mxu0
        %v3545 = vadd.f32 %v384, %v3544
        %3546 = vmatprep.mubr.f32.mxu0 0.0
        %3547 = vmatmul.mubr.f32.gmra.mrb[0].mxu0 %v3340
        %v3548 = vpop.f32.mrb[0].mxu0
        %v3549 = vadd.f32 %v380, %v3548
        %v3550 = vpop.f32.mrb[0].mxu0
        %v3551 = vadd.f32 %v384, %v3550
        %3552 = vmatprep.mubr.f32.mxu0 0.0
        %3553 = vmatmul.mubr.f32.gmra.mrb[0].mxu0 %v3343
        %v3554 = vpop.f32.mrb[0].mxu0
        %v3555 = vadd.f32 %v380, %v3554
        %v3556 = vpop.f32.mrb[0].mxu0
        %v3557 = vadd.f32 %v384, %v3556
        %3558 = vmatprep.mubr.f32.mxu0 0.0
        %3559 = vmatmul.mubr.f32.gmra.mrb[0].mxu0 %v3346
        %v3560 = vpop.f32.mrb[0].mxu0
        %v3561 = vadd.f32 %v380, %v3560
        %v3562 = vpop.f32.mrb[0].mxu0
        %v3563 = vadd.f32 %v384, %v3562
        %3564 = vmatprep.mubr.f32.mxu0 0.0
        %3565 = vmatmul.mubr.f32.gmra.mrb[0].mxu0 %v3349
        %v3566 = vpop.f32.mrb[0].mxu0
        %v3567 = vadd.f32 %v380, %v3566
        %v3568 = vpop.f32.mrb[0].mxu0
        %v3569 = vadd.f32 %v384, %v3568
        %3570 = vmatprep.mubr.f32.mxu0 0.0
        %3571 = vmatmul.mubr.f32.gmra.mrb[0].mxu0 %v3352
        %v3572 = vpop.f32.mrb[0].mxu0
        %v3573 = vadd.f32 %v380, %v3572
        %v3574 = vpop.f32.mrb[0].mxu0
        %v3575 = vadd.f32 %v384, %v3574
        %3576 = vmatprep.mubr.f32.mxu0 0.0
        %3577 = vmatmul.mubr.f32.gmra.mrb[0].mxu0 %v3355
        %v3578 = vpop.f32.mrb[0].mxu0
        %v3579 = vadd.f32 %v380, %v3578
        %v3580 = vpop.f32.mrb[0].mxu0
        %v3581 = vadd.f32 %v384, %v3580
        %3582 = vdwg.mxu0
        %3583 = vmatprep.subr.mxu0 0.0
        %3584 = vmatpush1.msra.mxu0 %v299
        %3585 = vmatprep.subr.mxu0 0.0
        %3586 = vmatpush1.msra.mxu0 %v300
        %3587 = vmatprep.subr.mxu0 0.0
        %3588 = vmatpush1.msra.mxu0 %v301
        %3589 = vmatprep.subr.mxu0 0.0
        %3590 = vmatpush1.msra.mxu0 %v302
        %3591 = vmatprep.subr.mxu0 0.0
        %3592 = vmatpush1.msra.mxu0 %v303
        %3593 = vmatprep.subr.mxu0 0.0
        %3594 = vmatpush1.msra.mxu0 %v304
        %3595 = vmatprep.subr.mxu0 0.0
        %3596 = vmatpush1.msra.mxu0 %v305
        %3597 = vmatprep.subr.mxu0 0.0
        %3598 = vmatpush1.msra.mxu0 %v306
        %3599 = vmatprep.subr.mxu0 0.0
        %3600 = vmatpush1.msra.mxu0 %v307
        %3601 = vmatprep.subr.mxu0 0.0
        %3602 = vmatpush1.msra.mxu0 %v308
        %3603 = vmatprep.subr.mxu0 0.0
        %3604 = vmatpush1.msra.mxu0 %v309
        %3605 = vmatprep.subr.mxu0 0.0
        %3606 = vmatpush1.msra.mxu0 %v310
        %3607 = vmatprep.subr.mxu0 0.0
        %3608 = vmatpush1.msra.mxu0 %v311
        %3609 = vmatprep.subr.mxu0 0.0
        %3610 = vmatpush1.msra.mxu0 %v312
        %3611 = vmatprep.subr.mxu0 0.0
        %3612 = vmatpush1.msra.mxu0 %v313
        %3613 = vmatprep.subr.mxu0 0.0
        %3614 = vmatpush1.msra.mxu0 %v314
        %3615 = vmatprep.subr.mxu0 0.0
        %3616 = vmatpush1.msra.mxu0 %v315
        %3617 = vmatprep.subr.mxu0 0.0
        %3618 = vmatpush1.msra.mxu0 %v316
        %3619 = vmatprep.subr.mxu0 0.0
        %3620 = vmatpush1.msra.mxu0 %v317
        %3621 = vmatprep.subr.mxu0 0.0
        %3622 = vmatpush1.msra.mxu0 %v318
        %3623 = vmatprep.subr.mxu0 0.0
        %3624 = vmatpush1.msra.mxu0 %v319
        %3625 = vmatprep.subr.mxu0 0.0
        %3626 = vmatpush1.msra.mxu0 %v320
        %3627 = vmatprep.subr.mxu0 0.0
        %3628 = vmatpush1.msra.mxu0 %v321
        %3629 = vmatprep.subr.mxu0 0.0
        %3630 = vmatpush1.msra.mxu0 %v322
        %3631 = vmatprep.subr.mxu0 0.0
        %3632 = vmatpush1.msra.mxu0 %v323
        %3633 = vmatprep.subr.mxu0 0.0
        %3634 = vmatpush1.msra.mxu0 %v324
        %3635 = vmatprep.subr.mxu0 0.0
        %3636 = vmatpush1.msra.mxu0 %v325
        %3637 = vmatprep.subr.mxu0 0.0
        %3638 = vmatpush1.msra.mxu0 %v326
        %3639 = vmatprep.subr.mxu0 0.0
        %3640 = vmatpush1.msra.mxu0 %v327
        %3641 = vmatprep.subr.mxu0 0.0
        %3642 = vmatpush1.msra.mxu0 %v328
        %3643 = vmatprep.subr.mxu0 0.0
        %3644 = vmatpush1.msra.mxu0 %v329
        %3645 = vmatprep.subr.mxu0 0.0
        %3646 = vmatpush1.msra.mxu0 %v330
        %3647 = vmatprep.mubr.f32.mxu0 %v3426
        %3648 = vmatmul.mubr.f32.gmra.mrb[0].mxu0 %v3424
        %v3649 = vpop.f32.mrb[0].mxu0
        %v3650 = vadd.f32 %v676, %v3649
        %v3651 = vpop.f32.mrb[0].mxu0
        %3652 = vmatprep.mubr.f32.mxu0 %v3432
        %3653 = vmatmul.mubr.f32.gmra.mrb[0].mxu0 %v3430
        %v3654 = vpop.f32.mrb[0].mxu0
        %v3655 = vadd.f32 %v676, %v3654
        %v3656 = vpop.f32.mrb[0].mxu0
        %3657 = vmatprep.mubr.f32.mxu0 %v3438
        %3658 = vmatmul.mubr.f32.gmra.mrb[0].mxu0 %v3436
        %v3659 = vpop.f32.mrb[0].mxu0
        %v3660 = vadd.f32 %v676, %v3659
        %v3661 = vpop.f32.mrb[0].mxu0
        %3662 = vmatprep.mubr.f32.mxu0 %v3444
        %3663 = vmatmul.mubr.f32.gmra.mrb[0].mxu0 %v3442
        %v3664 = vpop.f32.mrb[0].mxu0
        %v3665 = vadd.f32 %v676, %v3664
        %v3666 = vpop.f32.mrb[0].mxu0
        %3667 = vmatprep.mubr.f32.mxu0 %v3450
        %3668 = vmatmul.mubr.f32.gmra.mrb[0].mxu0 %v3448
        %v3669 = vpop.f32.mrb[0].mxu0
        %v3670 = vadd.f32 %v676, %v3669
        %v3671 = vpop.f32.mrb[0].mxu0
        %3672 = vmatprep.mubr.f32.mxu0 %v3456
        %3673 = vmatmul.mubr.f32.gmra.mrb[0].mxu0 %v3454
        %v3674 = vpop.f32.mrb[0].mxu0
        %v3675 = vadd.f32 %v676, %v3674
        %v3676 = vpop.f32.mrb[0].mxu0
        %3677 = vmatprep.mubr.f32.mxu0 %v3462
        %3678 = vmatmul.mubr.f32.gmra.mrb[0].mxu0 %v3460
        %v3679 = vpop.f32.mrb[0].mxu0
        %v3680 = vadd.f32 %v676, %v3679
        %v3681 = vpop.f32.mrb[0].mxu0
        %3682 = vmatprep.mubr.f32.mxu0 %v3468
        %3683 = vmatmul.mubr.f32.gmra.mrb[0].mxu0 %v3466
        %v3684 = vpop.f32.mrb[0].mxu0
        %v3685 = vadd.f32 %v676, %v3684
        %v3686 = vpop.f32.mrb[0].mxu0
        %3687 = vdwg.mxu0
        %3688 = vmatprep.subr.mxu0 0.0
        %3689 = vmatpush1.msra.mxu0 %v331
        %3690 = vmatprep.subr.mxu0 0.0
        %3691 = vmatpush1.msra.mxu0 %v332
        %3692 = vmatprep.subr.mxu0 0.0
        %3693 = vmatpush1.msra.mxu0 %v333
        %3694 = vmatprep.subr.mxu0 0.0
        %3695 = vmatpush1.msra.mxu0 %v334
        %3696 = vmatprep.subr.mxu0 0.0
        %3697 = vmatpush1.msra.mxu0 %v335
        %3698 = vmatprep.subr.mxu0 0.0
        %3699 = vmatpush1.msra.mxu0 %v336
        %3700 = vmatprep.subr.mxu0 0.0
        %3701 = vmatpush1.msra.mxu0 %v337
        %3702 = vmatprep.subr.mxu0 0.0
        %3703 = vmatpush1.msra.mxu0 %v338
        %3704 = vmatprep.subr.mxu0 0.0
        %3705 = vmatpush1.msra.mxu0 %v339
        %3706 = vmatprep.subr.mxu0 0.0
        %3707 = vmatpush1.msra.mxu0 %v340
        %3708 = vmatprep.subr.mxu0 0.0
        %3709 = vmatpush1.msra.mxu0 %v341
        %3710 = vmatprep.subr.mxu0 0.0
        %3711 = vmatpush1.msra.mxu0 %v342
        %3712 = vmatprep.subr.mxu0 0.0
        %3713 = vmatpush1.msra.mxu0 %v343
        %3714 = vmatprep.subr.mxu0 0.0
        %3715 = vmatpush1.msra.mxu0 %v344
        %3716 = vmatprep.subr.mxu0 0.0
        %3717 = vmatpush1.msra.mxu0 %v345
        %3718 = vmatprep.subr.mxu0 0.0
        %3719 = vmatpush1.msra.mxu0 %v346
        %3720 = vmatprep.subr.mxu0 0.0
        %3721 = vmatpush1.msra.mxu0 %v347
        %3722 = vmatprep.subr.mxu0 0.0
        %3723 = vmatpush1.msra.mxu0 %v348
        %3724 = vmatprep.subr.mxu0 0.0
        %3725 = vmatpush1.msra.mxu0 %v349
        %3726 = vmatprep.subr.mxu0 0.0
        %3727 = vmatpush1.msra.mxu0 %v350
        %3728 = vmatprep.subr.mxu0 0.0
        %3729 = vmatpush1.msra.mxu0 %v351
        %3730 = vmatprep.subr.mxu0 0.0
        %3731 = vmatpush1.msra.mxu0 %v352
        %3732 = vmatprep.subr.mxu0 0.0
        %3733 = vmatpush1.msra.mxu0 %v353
        %3734 = vmatprep.subr.mxu0 0.0
        %3735 = vmatpush1.msra.mxu0 %v354
        %3736 = vmatprep.subr.mxu0 0.0
        %3737 = vmatpush1.msra.mxu0 %v355
        %3738 = vmatprep.subr.mxu0 0.0
        %3739 = vmatpush1.msra.mxu0 %v356
        %3740 = vmatprep.subr.mxu0 0.0
        %3741 = vmatpush1.msra.mxu0 %v357
        %3742 = vmatprep.subr.mxu0 0.0
        %3743 = vmatpush1.msra.mxu0 %v358
        %3744 = vmatprep.subr.mxu0 0.0
        %3745 = vmatpush1.msra.mxu0 %v359
        %3746 = vmatprep.subr.mxu0 0.0
        %3747 = vmatpush1.msra.mxu0 %v360
        %3748 = vmatprep.subr.mxu0 0.0
        %3749 = vmatpush1.msra.mxu0 %v361
        %3750 = vmatprep.subr.mxu0 0.0
        %3751 = vmatpush1.msra.mxu0 %v362
        %3752 = vmatprep.mubr.f32.mxu0 %v3539
        %3753 = vmatmul.mubr.f32.gmra.mrb[0].mxu0 %v3537
        %v3754 = vpop.f32.mrb[0].mxu0
        %v3755 = vadd.f32 %v3650, %v3754
        %v3756 = vpop.f32.mrb[0].mxu0
        %3757 = vmatprep.mubr.f32.mxu0 %v3545
        %3758 = vmatmul.mubr.f32.gmra.mrb[0].mxu0 %v3543
        %v3759 = vpop.f32.mrb[0].mxu0
        %v3760 = vadd.f32 %v3655, %v3759
        %v3761 = vpop.f32.mrb[0].mxu0
        %3762 = vmatprep.mubr.f32.mxu0 %v3551
        %3763 = vmatmul.mubr.f32.gmra.mrb[0].mxu0 %v3549
        %v3764 = vpop.f32.mrb[0].mxu0
        %v3765 = vadd.f32 %v3660, %v3764
        %v3766 = vpop.f32.mrb[0].mxu0
        %3767 = vmatprep.mubr.f32.mxu0 %v3557
        %3768 = vmatmul.mubr.f32.gmra.mrb[0].mxu0 %v3555
        %v3769 = vpop.f32.mrb[0].mxu0
        %v3770 = vadd.f32 %v3665, %v3769
        %v3771 = vpop.f32.mrb[0].mxu0
        %3772 = vmatprep.mubr.f32.mxu0 %v3563
        %3773 = vmatmul.mubr.f32.gmra.mrb[0].mxu0 %v3561
        %v3774 = vpop.f32.mrb[0].mxu0
        %v3775 = vadd.f32 %v3670, %v3774
        %v3776 = vpop.f32.mrb[0].mxu0
        %3777 = vmatprep.mubr.f32.mxu0 %v3569
        %3778 = vmatmul.mubr.f32.gmra.mrb[0].mxu0 %v3567
        %v3779 = vpop.f32.mrb[0].mxu0
        %v3780 = vadd.f32 %v3675, %v3779
        %v3781 = vpop.f32.mrb[0].mxu0
        %3782 = vmatprep.mubr.f32.mxu0 %v3575
        %3783 = vmatmul.mubr.f32.gmra.mrb[0].mxu0 %v3573
        %v3784 = vpop.f32.mrb[0].mxu0
        %v3785 = vadd.f32 %v3680, %v3784
        %v3786 = vpop.f32.mrb[0].mxu0
        %3787 = vmatprep.mubr.f32.mxu0 %v3581
        %3788 = vmatmul.mubr.f32.gmra.mrb[0].mxu0 %v3579
        %v3789 = vpop.f32.mrb[0].mxu0
        %v3790 = vadd.f32 %v3685, %v3789
        %v3791 = vpop.f32.mrb[0].mxu0
        %3792 = vdwg.mxu0
        %v3793 = vxor.u32 %v3755, 2147483648
        %v3794 = vxor.u32 %v3760, 2147483648
        %v3795 = vxor.u32 %v3765, 2147483648
        %v3796 = vxor.u32 %v3770, 2147483648
        %v3797 = vxor.u32 %v3775, 2147483648
        %v3798 = vxor.u32 %v3780, 2147483648
        %v3799 = vxor.u32 %v3785, 2147483648
        %v3800 = vxor.u32 %v3790, 2147483648
        %v3801 = vmul.f32 %v3793, 1.442695
        %v3802 = vpow.pop %v3801
        %v3803 = vmul.f32 %v3794, 1.442695
        %v3804 = vpow.pop %v3803
        %v3805 = vmul.f32 %v3795, 1.442695
        %v3806 = vpow.pop %v3805
        %v3807 = vmul.f32 %v3796, 1.442695
        %v3808 = vpow.pop %v3807
        %v3809 = vmul.f32 %v3797, 1.442695
        %v3810 = vpow.pop %v3809
        %v3811 = vmul.f32 %v3798, 1.442695
        %v3812 = vpow.pop %v3811
        %v3813 = vmul.f32 %v3799, 1.442695
        %v3814 = vpow.pop %v3813
        %v3815 = vmul.f32 %v3800, 1.442695
        %v3816 = vpow.pop %v3815
        %v3817 = vadd.f32 %v3802, 1.0
        %v3818 = vadd.f32 %v3804, 1.0
        %v3819 = vadd.f32 %v3806, 1.0
        %v3820 = vadd.f32 %v3808, 1.0
        %v3821 = vadd.f32 %v3810, 1.0
        %v3822 = vadd.f32 %v3812, 1.0
        %v3823 = vadd.f32 %v3814, 1.0
        %v3824 = vadd.f32 %v3816, 1.0
        %v3825 = vrcp.pop %v3817
        %v3826 = vmul.f32 1.0, %v3825
        %v3827 = vrcp.pop %v3818
        %v3828 = vmul.f32 1.0, %v3827
        %v3829 = vrcp.pop %v3819
        %v3830 = vmul.f32 1.0, %v3829
        %v3831 = vrcp.pop %v3820
        %v3832 = vmul.f32 1.0, %v3831
        %v3833 = vrcp.pop %v3821
        %v3834 = vmul.f32 1.0, %v3833
        %v3835 = vrcp.pop %v3822
        %v3836 = vmul.f32 1.0, %v3835
        %v3837 = vrcp.pop %v3823
        %v3838 = vmul.f32 1.0, %v3837
        %v3839 = vrcp.pop %v3824
        %v3840 = vmul.f32 1.0, %v3839
        %3841 = vxpose.xlu0.b32.start [1/16] %v3826, 128
        %3842 = vxpose.xlu0.b32.cont [2/16] %v3828, 128
        %3843 = vxpose.xlu0.b32.cont [3/16] %v3830, 128
        %3844 = vxpose.xlu0.b32.cont [4/16] %v3832, 128
        %3845 = vxpose.xlu0.b32.cont [5/16] %v3834, 128
        %3846 = vxpose.xlu0.b32.cont [6/16] %v3836, 128
        %3847 = vxpose.xlu0.b32.cont [7/16] %v3838, 128
        %3848 = vxpose.xlu0.b32.cont [8/16] %v3840, 128
        %3849 = vxpose.xlu0.b32.cont [9/16] 0.0, 128
        %3850 = vxpose.xlu0.b32.cont [10/16] 0.0, 128
        %3851 = vxpose.xlu0.b32.cont [11/16] 0.0, 128
        %3852 = vxpose.xlu0.b32.cont [12/16] 0.0, 128
        %3853 = vxpose.xlu0.b32.cont [13/16] 0.0, 128
        %3854 = vxpose.xlu0.b32.cont [14/16] 0.0, 128
        %3855 = vxpose.xlu0.b32.cont [15/16] 0.0, 128
        %3856 = vxpose.xlu0.b32.end [16/16] 0.0, 128
        %v3857 = vpop.trf.xlu0
        %v3858 = vpop.trf.xlu0
        %v3859 = vpop.trf.xlu0
        %v3860 = vpop.trf.xlu0
        %v3861 = vpop.trf.xlu0
        %v3862 = vpop.trf.xlu0
        %v3863 = vpop.trf.xlu0
        %v3864 = vpop.trf.xlu0
        %v3865 = vpop.trf.xlu0
        %v3866 = vpop.trf.xlu0
        %v3867 = vpop.trf.xlu0
        %v3868 = vpop.trf.xlu0
        %v3869 = vpop.trf.xlu0
        %v3870 = vpop.trf.xlu0
        %v3871 = vpop.trf.xlu0
        %v3872 = vpop.trf.xlu0
        %v3874 = vsel %vm968, %v3857, 0
        %3876 = vmatprep.subr.mxu0 %v3426
        %3877 = vmatpush1.msra.mxu0 %v3424
        %3878 = vmatprep.subr.mxu0 %v3432
        %3879 = vmatpush1.msra.mxu0 %v3430
        %3880 = vmatprep.subr.mxu0 %v3438
        %3881 = vmatpush1.msra.mxu0 %v3436
        %3882 = vmatprep.subr.mxu0 %v3444
        %3883 = vmatpush1.msra.mxu0 %v3442
        %3884 = vmatprep.subr.mxu0 %v3450
        %3885 = vmatpush1.msra.mxu0 %v3448
        %3886 = vmatprep.subr.mxu0 %v3456
        %3887 = vmatpush1.msra.mxu0 %v3454
        %3888 = vmatprep.subr.mxu0 %v3462
        %3889 = vmatpush1.msra.mxu0 %v3460
        %3890 = vmatprep.subr.mxu0 %v3468
        %3891 = vmatpush1.msra.mxu0 %v3466
        %3892 = vmatprep.subr.mxu0 0.0
        %3893 = vmatpush1.msra.mxu0 0.0
        %3894 = vmatprep.subr.mxu0 0.0
        %3895 = vmatpush1.msra.mxu0 0.0
        %3896 = vmatprep.subr.mxu0 0.0
        %3897 = vmatpush1.msra.mxu0 0.0
        %3898 = vmatprep.subr.mxu0 0.0
        %3899 = vmatpush1.msra.mxu0 0.0
        %3900 = vmatprep.subr.mxu0 0.0
        %3901 = vmatpush1.msra.mxu0 0.0
        %3902 = vmatprep.subr.mxu0 0.0
        %3903 = vmatpush1.msra.mxu0 0.0
        %3904 = vmatprep.subr.mxu0 0.0
        %3905 = vmatpush1.msra.mxu0 0.0
        %3906 = vmatprep.subr.mxu0 0.0
        %3907 = vmatpush1.msra.mxu0 0.0
        %3908 = vmatprep.subr.mxu0 0.0
        %3909 = vmatpush1.msra.mxu0 0.0
        %3910 = vmatprep.subr.mxu0 0.0
        %3911 = vmatpush1.msra.mxu0 0.0
        %3912 = vmatprep.subr.mxu0 0.0
        %3913 = vmatpush1.msra.mxu0 0.0
        %3914 = vmatprep.subr.mxu0 0.0
        %3915 = vmatpush1.msra.mxu0 0.0
        %3916 = vmatprep.subr.mxu0 0.0
        %3917 = vmatpush1.msra.mxu0 0.0
        %3918 = vmatprep.subr.mxu0 0.0
        %3919 = vmatpush1.msra.mxu0 0.0
        %3920 = vmatprep.subr.mxu0 0.0
        %3921 = vmatpush1.msra.mxu0 0.0
        %3922 = vmatprep.subr.mxu0 0.0
        %3923 = vmatpush1.msra.mxu0 0.0
        %3924 = vmatprep.subr.mxu0 0.0
        %3925 = vmatpush1.msra.mxu0 0.0
        %3926 = vmatprep.subr.mxu0 0.0
        %3927 = vmatpush1.msra.mxu0 0.0
        %3928 = vmatprep.subr.mxu0 0.0
        %3929 = vmatpush1.msra.mxu0 0.0
        %3930 = vmatprep.subr.mxu0 0.0
        %3931 = vmatpush1.msra.mxu0 0.0
        %3932 = vmatprep.subr.mxu0 0.0
        %3933 = vmatpush1.msra.mxu0 0.0
        %3934 = vmatprep.subr.mxu0 0.0
        %3935 = vmatpush1.msra.mxu0 0.0
        %3936 = vmatprep.subr.mxu0 0.0
        %3937 = vmatpush1.msra.mxu0 0.0
        %3938 = vmatprep.subr.mxu0 0.0
        %3939 = vmatpush1.msra.mxu0 0.0
        %3940 = vmatprep.mubr.f32.mxu0 0.0
        %3941 = vmatmul.mubr.f32.gmra.mrb[0].mxu0 %v3874
        %v3942 = vpop.f32.mrb[0].mxu0
        %v3943 = vadd.f32 0.0, %v3942
        %v3944 = vpop.f32.mrb[0].mxu0
        %v3945 = vadd.f32 0.0, %v3944
        %3946 = vdwg.mxu0
        %3947 = vmatprep.subr.mxu0 %v3539
        %3948 = vmatpush1.msra.mxu0 %v3537
        %3949 = vmatprep.subr.mxu0 %v3545
        %3950 = vmatpush1.msra.mxu0 %v3543
        %3951 = vmatprep.subr.mxu0 %v3551
        %3952 = vmatpush1.msra.mxu0 %v3549
        %3953 = vmatprep.subr.mxu0 %v3557
        %3954 = vmatpush1.msra.mxu0 %v3555
        %3955 = vmatprep.subr.mxu0 %v3563
        %3956 = vmatpush1.msra.mxu0 %v3561
        %3957 = vmatprep.subr.mxu0 %v3569
        %3958 = vmatpush1.msra.mxu0 %v3567
        %3959 = vmatprep.subr.mxu0 %v3575
        %3960 = vmatpush1.msra.mxu0 %v3573
        %3961 = vmatprep.subr.mxu0 %v3581
        %3962 = vmatpush1.msra.mxu0 %v3579
        %3963 = vmatprep.subr.mxu0 0.0
        %3964 = vmatpush1.msra.mxu0 0.0
        %3965 = vmatprep.subr.mxu0 0.0
        %3966 = vmatpush1.msra.mxu0 0.0
        %3967 = vmatprep.subr.mxu0 0.0
        %3968 = vmatpush1.msra.mxu0 0.0
        %3969 = vmatprep.subr.mxu0 0.0
        %3970 = vmatpush1.msra.mxu0 0.0
        %3971 = vmatprep.subr.mxu0 0.0
        %3972 = vmatpush1.msra.mxu0 0.0
        %3973 = vmatprep.subr.mxu0 0.0
        %3974 = vmatpush1.msra.mxu0 0.0
        %3975 = vmatprep.subr.mxu0 0.0
        %3976 = vmatpush1.msra.mxu0 0.0
        %3977 = vmatprep.subr.mxu0 0.0
        %3978 = vmatpush1.msra.mxu0 0.0
        %3979 = vmatprep.subr.mxu0 0.0
        %3980 = vmatpush1.msra.mxu0 0.0
        %3981 = vmatprep.subr.mxu0 0.0
        %3982 = vmatpush1.msra.mxu0 0.0
        %3983 = vmatprep.subr.mxu0 0.0
        %3984 = vmatpush1.msra.mxu0 0.0
        %3985 = vmatprep.subr.mxu0 0.0
        %3986 = vmatpush1.msra.mxu0 0.0
        %3987 = vmatprep.subr.mxu0 0.0
        %3988 = vmatpush1.msra.mxu0 0.0
        %3989 = vmatprep.subr.mxu0 0.0
        %3990 = vmatpush1.msra.mxu0 0.0
        %3991 = vmatprep.subr.mxu0 0.0
        %3992 = vmatpush1.msra.mxu0 0.0
        %3993 = vmatprep.subr.mxu0 0.0
        %3994 = vmatpush1.msra.mxu0 0.0
        %3995 = vmatprep.subr.mxu0 0.0
        %3996 = vmatpush1.msra.mxu0 0.0
        %3997 = vmatprep.subr.mxu0 0.0
        %3998 = vmatpush1.msra.mxu0 0.0
        %3999 = vmatprep.subr.mxu0 0.0
        %4000 = vmatpush1.msra.mxu0 0.0
        %4001 = vmatprep.subr.mxu0 0.0
        %4002 = vmatpush1.msra.mxu0 0.0
        %4003 = vmatprep.subr.mxu0 0.0
        %4004 = vmatpush1.msra.mxu0 0.0
        %4005 = vmatprep.subr.mxu0 0.0
        %4006 = vmatpush1.msra.mxu0 0.0
        %4007 = vmatprep.subr.mxu0 0.0
        %4008 = vmatpush1.msra.mxu0 0.0
        %4009 = vmatprep.subr.mxu0 0.0
        %4010 = vmatpush1.msra.mxu0 0.0
        %4011 = vmatprep.mubr.f32.mxu0 0.0
        %4012 = vmatmul.mubr.f32.gmra.mrb[0].mxu0 %v3874
        %v4013 = vpop.f32.mrb[0].mxu0
        %v4014 = vadd.f32 0.0, %v4013
        %v4015 = vpop.f32.mrb[0].mxu0
        %v4016 = vadd.f32 0.0, %v4015
        %4017 = vdwg.mxu0
        %v4018 = vmul.f32 %v3943, 0.015625
        %v4019 = vmul.f32 %v3945, 0.015625
        %v4020 = vmul.f32 %v4014, 0.015625
        %v4021 = vmul.f32 %v4016, 0.015625
        %s4022 = scalar_lea.vmem %s280, 160
        %v4023 = vld [vmem:[%s4022] sm:$0xff]
        %v4024 = vld [vmem:[%s4022 + $0x8] sm:$0xff]
        %v4025 = vld [vmem:[%s4022 + $0x10] sm:$0xff]
        %v4026 = vld [vmem:[%s4022 + $0x18] sm:$0xff]
        %4027 = vxpose.xlu0.b32.start [1/16] %v4023, 128
        %4028 = vxpose.xlu0.b32.cont [2/16] %v4024, 128
        %4029 = vxpose.xlu0.b32.cont [3/16] %v4025, 128
        %4030 = vxpose.xlu0.b32.cont [4/16] %v4026, 128
        %4031 = vxpose.xlu0.b32.cont [5/16] 0.0, 128
        %4032 = vxpose.xlu0.b32.cont [6/16] 0.0, 128
        %4033 = vxpose.xlu0.b32.cont [7/16] 0.0, 128
        %4034 = vxpose.xlu0.b32.cont [8/16] 0.0, 128
        %4035 = vxpose.xlu0.b32.cont [9/16] 0.0, 128
        %4036 = vxpose.xlu0.b32.cont [10/16] 0.0, 128
        %4037 = vxpose.xlu0.b32.cont [11/16] 0.0, 128
        %4038 = vxpose.xlu0.b32.cont [12/16] 0.0, 128
        %4039 = vxpose.xlu0.b32.cont [13/16] 0.0, 128
        %4040 = vxpose.xlu0.b32.cont [14/16] 0.0, 128
        %4041 = vxpose.xlu0.b32.cont [15/16] 0.0, 128
        %4042 = vxpose.xlu0.b32.end [16/16] 0.0, 128
        %v4043 = vpop.trf.xlu0
        %v4044 = vpop.trf.xlu0
        %v4045 = vpop.trf.xlu0
        %v4046 = vpop.trf.xlu0
        %v4047 = vpop.trf.xlu0
        %v4048 = vpop.trf.xlu0
        %v4049 = vpop.trf.xlu0
        %v4050 = vpop.trf.xlu0
        %v4051 = vpop.trf.xlu0
        %v4052 = vpop.trf.xlu0
        %v4053 = vpop.trf.xlu0
        %v4054 = vpop.trf.xlu0
        %v4055 = vpop.trf.xlu0
        %v4056 = vpop.trf.xlu0
        %v4057 = vpop.trf.xlu0
        %v4058 = vpop.trf.xlu0
        %v4060 = vsel %vm421, %v4043, 0
        %v4063 = vsel %vm421, %v4044, 0
        %v4066 = vsel %vm421, %v4045, 0
        %v4069 = vsel %vm421, %v4046, 0
        %v4072 = vsel %vm421, %v4047, 0
        %v4075 = vsel %vm421, %v4048, 0
        %v4078 = vsel %vm421, %v4049, 0
        %v4081 = vsel %vm421, %v4050, 0
        %4083 = vmatprep.subr.mxu0 %v283
        %4084 = vmatpush1.msra.mxu0 %v282
        %4085 = vmatprep.subr.mxu0 %v287
        %4086 = vmatpush1.msra.mxu0 %v286
        %4087 = vmatprep.subr.mxu0 %v291
        %4088 = vmatpush1.msra.mxu0 %v290
        %4089 = vmatprep.subr.mxu0 %v295
        %4090 = vmatpush1.msra.mxu0 %v294
        %4091 = vmatprep.subr.mxu0 0.0
        %4092 = vmatpush1.msra.mxu0 0.0
        %4093 = vmatprep.subr.mxu0 0.0
        %4094 = vmatpush1.msra.mxu0 0.0
        %4095 = vmatprep.subr.mxu0 0.0
        %4096 = vmatpush1.msra.mxu0 0.0
        %4097 = vmatprep.subr.mxu0 0.0
        %4098 = vmatpush1.msra.mxu0 0.0
        %4099 = vmatprep.subr.mxu0 0.0
        %4100 = vmatpush1.msra.mxu0 0.0
        %4101 = vmatprep.subr.mxu0 0.0
        %4102 = vmatpush1.msra.mxu0 0.0
        %4103 = vmatprep.subr.mxu0 0.0
        %4104 = vmatpush1.msra.mxu0 0.0
        %4105 = vmatprep.subr.mxu0 0.0
        %4106 = vmatpush1.msra.mxu0 0.0
        %4107 = vmatprep.subr.mxu0 0.0
        %4108 = vmatpush1.msra.mxu0 0.0
        %4109 = vmatprep.subr.mxu0 0.0
        %4110 = vmatpush1.msra.mxu0 0.0
        %4111 = vmatprep.subr.mxu0 0.0
        %4112 = vmatpush1.msra.mxu0 0.0
        %4113 = vmatprep.subr.mxu0 0.0
        %4114 = vmatpush1.msra.mxu0 0.0
        %4115 = vmatprep.subr.mxu0 0.0
        %4116 = vmatpush1.msra.mxu0 0.0
        %4117 = vmatprep.subr.mxu0 0.0
        %4118 = vmatpush1.msra.mxu0 0.0
        %4119 = vmatprep.subr.mxu0 0.0
        %4120 = vmatpush1.msra.mxu0 0.0
        %4121 = vmatprep.subr.mxu0 0.0
        %4122 = vmatpush1.msra.mxu0 0.0
        %4123 = vmatprep.subr.mxu0 0.0
        %4124 = vmatpush1.msra.mxu0 0.0
        %4125 = vmatprep.subr.mxu0 0.0
        %4126 = vmatpush1.msra.mxu0 0.0
        %4127 = vmatprep.subr.mxu0 0.0
        %4128 = vmatpush1.msra.mxu0 0.0
        %4129 = vmatprep.subr.mxu0 0.0
        %4130 = vmatpush1.msra.mxu0 0.0
        %4131 = vmatprep.subr.mxu0 0.0
        %4132 = vmatpush1.msra.mxu0 0.0
        %4133 = vmatprep.subr.mxu0 0.0
        %4134 = vmatpush1.msra.mxu0 0.0
        %4135 = vmatprep.subr.mxu0 0.0
        %4136 = vmatpush1.msra.mxu0 0.0
        %4137 = vmatprep.subr.mxu0 0.0
        %4138 = vmatpush1.msra.mxu0 0.0
        %4139 = vmatprep.subr.mxu0 0.0
        %4140 = vmatpush1.msra.mxu0 0.0
        %4141 = vmatprep.subr.mxu0 0.0
        %4142 = vmatpush1.msra.mxu0 0.0
        %4143 = vmatprep.subr.mxu0 0.0
        %4144 = vmatpush1.msra.mxu0 0.0
        %4145 = vmatprep.subr.mxu0 0.0
        %4146 = vmatpush1.msra.mxu0 0.0
        %4147 = vmatprep.mubr.f32.mxu0 0.0
        %4148 = vmatmul.mubr.f32.gmra.mrb[0].mxu0 %v4060
        %v4149 = vpop.f32.mrb[0].mxu0
        %v4150 = vadd.f32 %v372, %v4149
        %v4151 = vpop.f32.mrb[0].mxu0
        %v4152 = vadd.f32 %v376, %v4151
        %4153 = vmatprep.mubr.f32.mxu0 0.0
        %4154 = vmatmul.mubr.f32.gmra.mrb[0].mxu0 %v4063
        %v4155 = vpop.f32.mrb[0].mxu0
        %v4156 = vadd.f32 %v372, %v4155
        %v4157 = vpop.f32.mrb[0].mxu0
        %v4158 = vadd.f32 %v376, %v4157
        %4159 = vmatprep.mubr.f32.mxu0 0.0
        %4160 = vmatmul.mubr.f32.gmra.mrb[0].mxu0 %v4066
        %v4161 = vpop.f32.mrb[0].mxu0
        %v4162 = vadd.f32 %v372, %v4161
        %v4163 = vpop.f32.mrb[0].mxu0
        %v4164 = vadd.f32 %v376, %v4163
        %4165 = vmatprep.mubr.f32.mxu0 0.0
        %4166 = vmatmul.mubr.f32.gmra.mrb[0].mxu0 %v4069
        %v4167 = vpop.f32.mrb[0].mxu0
        %v4168 = vadd.f32 %v372, %v4167
        %v4169 = vpop.f32.mrb[0].mxu0
        %v4170 = vadd.f32 %v376, %v4169
        %4171 = vmatprep.mubr.f32.mxu0 0.0
        %4172 = vmatmul.mubr.f32.gmra.mrb[0].mxu0 %v4072
        %v4173 = vpop.f32.mrb[0].mxu0
        %v4174 = vadd.f32 %v372, %v4173
        %v4175 = vpop.f32.mrb[0].mxu0
        %v4176 = vadd.f32 %v376, %v4175
        %4177 = vmatprep.mubr.f32.mxu0 0.0
        %4178 = vmatmul.mubr.f32.gmra.mrb[0].mxu0 %v4075
        %v4179 = vpop.f32.mrb[0].mxu0
        %v4180 = vadd.f32 %v372, %v4179
        %v4181 = vpop.f32.mrb[0].mxu0
        %v4182 = vadd.f32 %v376, %v4181
        %4183 = vmatprep.mubr.f32.mxu0 0.0
        %4184 = vmatmul.mubr.f32.gmra.mrb[0].mxu0 %v4078
        %v4185 = vpop.f32.mrb[0].mxu0
        %v4186 = vadd.f32 %v372, %v4185
        %v4187 = vpop.f32.mrb[0].mxu0
        %v4188 = vadd.f32 %v376, %v4187
        %4189 = vmatprep.mubr.f32.mxu0 0.0
        %4190 = vmatmul.mubr.f32.gmra.mrb[0].mxu0 %v4081
        %v4191 = vpop.f32.mrb[0].mxu0
        %v4192 = vadd.f32 %v372, %v4191
        %v4193 = vpop.f32.mrb[0].mxu0
        %v4194 = vadd.f32 %v376, %v4193
        %4195 = vdwg.mxu0
        %4196 = vmatprep.subr.mxu0 %v285
        %4197 = vmatpush1.msra.mxu0 %v284
        %4198 = vmatprep.subr.mxu0 %v289
        %4199 = vmatpush1.msra.mxu0 %v288
        %4200 = vmatprep.subr.mxu0 %v293
        %4201 = vmatpush1.msra.mxu0 %v292
        %4202 = vmatprep.subr.mxu0 %v297
        %4203 = vmatpush1.msra.mxu0 %v296
        %4204 = vmatprep.subr.mxu0 0.0
        %4205 = vmatpush1.msra.mxu0 0.0
        %4206 = vmatprep.subr.mxu0 0.0
        %4207 = vmatpush1.msra.mxu0 0.0
        %4208 = vmatprep.subr.mxu0 0.0
        %4209 = vmatpush1.msra.mxu0 0.0
        %4210 = vmatprep.subr.mxu0 0.0
        %4211 = vmatpush1.msra.mxu0 0.0
        %4212 = vmatprep.subr.mxu0 0.0
        %4213 = vmatpush1.msra.mxu0 0.0
        %4214 = vmatprep.subr.mxu0 0.0
        %4215 = vmatpush1.msra.mxu0 0.0
        %4216 = vmatprep.subr.mxu0 0.0
        %4217 = vmatpush1.msra.mxu0 0.0
        %4218 = vmatprep.subr.mxu0 0.0
        %4219 = vmatpush1.msra.mxu0 0.0
        %4220 = vmatprep.subr.mxu0 0.0
        %4221 = vmatpush1.msra.mxu0 0.0
        %4222 = vmatprep.subr.mxu0 0.0
        %4223 = vmatpush1.msra.mxu0 0.0
        %4224 = vmatprep.subr.mxu0 0.0
        %4225 = vmatpush1.msra.mxu0 0.0
        %4226 = vmatprep.subr.mxu0 0.0
        %4227 = vmatpush1.msra.mxu0 0.0
        %4228 = vmatprep.subr.mxu0 0.0
        %4229 = vmatpush1.msra.mxu0 0.0
        %4230 = vmatprep.subr.mxu0 0.0
        %4231 = vmatpush1.msra.mxu0 0.0
        %4232 = vmatprep.subr.mxu0 0.0
        %4233 = vmatpush1.msra.mxu0 0.0
        %4234 = vmatprep.subr.mxu0 0.0
        %4235 = vmatpush1.msra.mxu0 0.0
        %4236 = vmatprep.subr.mxu0 0.0
        %4237 = vmatpush1.msra.mxu0 0.0
        %4238 = vmatprep.subr.mxu0 0.0
        %4239 = vmatpush1.msra.mxu0 0.0
        %4240 = vmatprep.subr.mxu0 0.0
        %4241 = vmatpush1.msra.mxu0 0.0
        %4242 = vmatprep.subr.mxu0 0.0
        %4243 = vmatpush1.msra.mxu0 0.0
        %4244 = vmatprep.subr.mxu0 0.0
        %4245 = vmatpush1.msra.mxu0 0.0
        %4246 = vmatprep.subr.mxu0 0.0
        %4247 = vmatpush1.msra.mxu0 0.0
        %4248 = vmatprep.subr.mxu0 0.0
        %4249 = vmatpush1.msra.mxu0 0.0
        %4250 = vmatprep.subr.mxu0 0.0
        %4251 = vmatpush1.msra.mxu0 0.0
        %4252 = vmatprep.subr.mxu0 0.0
        %4253 = vmatpush1.msra.mxu0 0.0
        %4254 = vmatprep.subr.mxu0 0.0
        %4255 = vmatpush1.msra.mxu0 0.0
        %4256 = vmatprep.subr.mxu0 0.0
        %4257 = vmatpush1.msra.mxu0 0.0
        %4258 = vmatprep.subr.mxu0 0.0
        %4259 = vmatpush1.msra.mxu0 0.0
        %4260 = vmatprep.mubr.f32.mxu0 0.0
        %4261 = vmatmul.mubr.f32.gmra.mrb[0].mxu0 %v4060
        %v4262 = vpop.f32.mrb[0].mxu0
        %v4263 = vadd.f32 %v380, %v4262
        %v4264 = vpop.f32.mrb[0].mxu0
        %v4265 = vadd.f32 %v384, %v4264
        %4266 = vmatprep.mubr.f32.mxu0 0.0
        %4267 = vmatmul.mubr.f32.gmra.mrb[0].mxu0 %v4063
        %v4268 = vpop.f32.mrb[0].mxu0
        %v4269 = vadd.f32 %v380, %v4268
        %v4270 = vpop.f32.mrb[0].mxu0
        %v4271 = vadd.f32 %v384, %v4270
        %4272 = vmatprep.mubr.f32.mxu0 0.0
        %4273 = vmatmul.mubr.f32.gmra.mrb[0].mxu0 %v4066
        %v4274 = vpop.f32.mrb[0].mxu0
        %v4275 = vadd.f32 %v380, %v4274
        %v4276 = vpop.f32.mrb[0].mxu0
        %v4277 = vadd.f32 %v384, %v4276
        %4278 = vmatprep.mubr.f32.mxu0 0.0
        %4279 = vmatmul.mubr.f32.gmra.mrb[0].mxu0 %v4069
        %v4280 = vpop.f32.mrb[0].mxu0
        %v4281 = vadd.f32 %v380, %v4280
        %v4282 = vpop.f32.mrb[0].mxu0
        %v4283 = vadd.f32 %v384, %v4282
        %4284 = vmatprep.mubr.f32.mxu0 0.0
        %4285 = vmatmul.mubr.f32.gmra.mrb[0].mxu0 %v4072
        %v4286 = vpop.f32.mrb[0].mxu0
        %v4287 = vadd.f32 %v380, %v4286
        %v4288 = vpop.f32.mrb[0].mxu0
        %v4289 = vadd.f32 %v384, %v4288
        %4290 = vmatprep.mubr.f32.mxu0 0.0
        %4291 = vmatmul.mubr.f32.gmra.mrb[0].mxu0 %v4075
        %v4292 = vpop.f32.mrb[0].mxu0
        %v4293 = vadd.f32 %v380, %v4292
        %v4294 = vpop.f32.mrb[0].mxu0
        %v4295 = vadd.f32 %v384, %v4294
        %4296 = vmatprep.mubr.f32.mxu0 0.0
        %4297 = vmatmul.mubr.f32.gmra.mrb[0].mxu0 %v4078
        %v4298 = vpop.f32.mrb[0].mxu0
        %v4299 = vadd.f32 %v380, %v4298
        %v4300 = vpop.f32.mrb[0].mxu0
        %v4301 = vadd.f32 %v384, %v4300
        %4302 = vmatprep.mubr.f32.mxu0 0.0
        %4303 = vmatmul.mubr.f32.gmra.mrb[0].mxu0 %v4081
        %v4304 = vpop.f32.mrb[0].mxu0
        %v4305 = vadd.f32 %v380, %v4304
        %v4306 = vpop.f32.mrb[0].mxu0
        %v4307 = vadd.f32 %v384, %v4306
        %4308 = vdwg.mxu0
        %4309 = vmatprep.subr.mxu0 0.0
        %4310 = vmatpush1.msra.mxu0 %v299
        %4311 = vmatprep.subr.mxu0 0.0
        %4312 = vmatpush1.msra.mxu0 %v300
        %4313 = vmatprep.subr.mxu0 0.0
        %4314 = vmatpush1.msra.mxu0 %v301
        %4315 = vmatprep.subr.mxu0 0.0
        %4316 = vmatpush1.msra.mxu0 %v302
        %4317 = vmatprep.subr.mxu0 0.0
        %4318 = vmatpush1.msra.mxu0 %v303
        %4319 = vmatprep.subr.mxu0 0.0
        %4320 = vmatpush1.msra.mxu0 %v304
        %4321 = vmatprep.subr.mxu0 0.0
        %4322 = vmatpush1.msra.mxu0 %v305
        %4323 = vmatprep.subr.mxu0 0.0
        %4324 = vmatpush1.msra.mxu0 %v306
        %4325 = vmatprep.subr.mxu0 0.0
        %4326 = vmatpush1.msra.mxu0 %v307
        %4327 = vmatprep.subr.mxu0 0.0
        %4328 = vmatpush1.msra.mxu0 %v308
        %4329 = vmatprep.subr.mxu0 0.0
        %4330 = vmatpush1.msra.mxu0 %v309
        %4331 = vmatprep.subr.mxu0 0.0
        %4332 = vmatpush1.msra.mxu0 %v310
        %4333 = vmatprep.subr.mxu0 0.0
        %4334 = vmatpush1.msra.mxu0 %v311
        %4335 = vmatprep.subr.mxu0 0.0
        %4336 = vmatpush1.msra.mxu0 %v312
        %4337 = vmatprep.subr.mxu0 0.0
        %4338 = vmatpush1.msra.mxu0 %v313
        %4339 = vmatprep.subr.mxu0 0.0
        %4340 = vmatpush1.msra.mxu0 %v314
        %4341 = vmatprep.subr.mxu0 0.0
        %4342 = vmatpush1.msra.mxu0 %v315
        %4343 = vmatprep.subr.mxu0 0.0
        %4344 = vmatpush1.msra.mxu0 %v316
        %4345 = vmatprep.subr.mxu0 0.0
        %4346 = vmatpush1.msra.mxu0 %v317
        %4347 = vmatprep.subr.mxu0 0.0
        %4348 = vmatpush1.msra.mxu0 %v318
        %4349 = vmatprep.subr.mxu0 0.0
        %4350 = vmatpush1.msra.mxu0 %v319
        %4351 = vmatprep.subr.mxu0 0.0
        %4352 = vmatpush1.msra.mxu0 %v320
        %4353 = vmatprep.subr.mxu0 0.0
        %4354 = vmatpush1.msra.mxu0 %v321
        %4355 = vmatprep.subr.mxu0 0.0
        %4356 = vmatpush1.msra.mxu0 %v322
        %4357 = vmatprep.subr.mxu0 0.0
        %4358 = vmatpush1.msra.mxu0 %v323
        %4359 = vmatprep.subr.mxu0 0.0
        %4360 = vmatpush1.msra.mxu0 %v324
        %4361 = vmatprep.subr.mxu0 0.0
        %4362 = vmatpush1.msra.mxu0 %v325
        %4363 = vmatprep.subr.mxu0 0.0
        %4364 = vmatpush1.msra.mxu0 %v326
        %4365 = vmatprep.subr.mxu0 0.0
        %4366 = vmatpush1.msra.mxu0 %v327
        %4367 = vmatprep.subr.mxu0 0.0
        %4368 = vmatpush1.msra.mxu0 %v328
        %4369 = vmatprep.subr.mxu0 0.0
        %4370 = vmatpush1.msra.mxu0 %v329
        %4371 = vmatprep.subr.mxu0 0.0
        %4372 = vmatpush1.msra.mxu0 %v330
        %4373 = vmatprep.mubr.f32.mxu0 %v4152
        %4374 = vmatmul.mubr.f32.gmra.mrb[0].mxu0 %v4150
        %v4375 = vpop.f32.mrb[0].mxu0
        %v4376 = vadd.f32 %v676, %v4375
        %v4377 = vpop.f32.mrb[0].mxu0
        %4378 = vmatprep.mubr.f32.mxu0 %v4158
        %4379 = vmatmul.mubr.f32.gmra.mrb[0].mxu0 %v4156
        %v4380 = vpop.f32.mrb[0].mxu0
        %v4381 = vadd.f32 %v676, %v4380
        %v4382 = vpop.f32.mrb[0].mxu0
        %4383 = vmatprep.mubr.f32.mxu0 %v4164
        %4384 = vmatmul.mubr.f32.gmra.mrb[0].mxu0 %v4162
        %v4385 = vpop.f32.mrb[0].mxu0
        %v4386 = vadd.f32 %v676, %v4385
        %v4387 = vpop.f32.mrb[0].mxu0
        %4388 = vmatprep.mubr.f32.mxu0 %v4170
        %4389 = vmatmul.mubr.f32.gmra.mrb[0].mxu0 %v4168
        %v4390 = vpop.f32.mrb[0].mxu0
        %v4391 = vadd.f32 %v676, %v4390
        %v4392 = vpop.f32.mrb[0].mxu0
        %4393 = vmatprep.mubr.f32.mxu0 %v4176
        %4394 = vmatmul.mubr.f32.gmra.mrb[0].mxu0 %v4174
        %v4395 = vpop.f32.mrb[0].mxu0
        %v4396 = vadd.f32 %v676, %v4395
        %v4397 = vpop.f32.mrb[0].mxu0
        %4398 = vmatprep.mubr.f32.mxu0 %v4182
        %4399 = vmatmul.mubr.f32.gmra.mrb[0].mxu0 %v4180
        %v4400 = vpop.f32.mrb[0].mxu0
        %v4401 = vadd.f32 %v676, %v4400
        %v4402 = vpop.f32.mrb[0].mxu0
        %4403 = vmatprep.mubr.f32.mxu0 %v4188
        %4404 = vmatmul.mubr.f32.gmra.mrb[0].mxu0 %v4186
        %v4405 = vpop.f32.mrb[0].mxu0
        %v4406 = vadd.f32 %v676, %v4405
        %v4407 = vpop.f32.mrb[0].mxu0
        %4408 = vmatprep.mubr.f32.mxu0 %v4194
        %4409 = vmatmul.mubr.f32.gmra.mrb[0].mxu0 %v4192
        %v4410 = vpop.f32.mrb[0].mxu0
        %v4411 = vadd.f32 %v676, %v4410
        %v4412 = vpop.f32.mrb[0].mxu0
        %4413 = vdwg.mxu0
        %4414 = vmatprep.subr.mxu0 0.0
        %4415 = vmatpush1.msra.mxu0 %v331
        %4416 = vmatprep.subr.mxu0 0.0
        %4417 = vmatpush1.msra.mxu0 %v332
        %4418 = vmatprep.subr.mxu0 0.0
        %4419 = vmatpush1.msra.mxu0 %v333
        %4420 = vmatprep.subr.mxu0 0.0
        %4421 = vmatpush1.msra.mxu0 %v334
        %4422 = vmatprep.subr.mxu0 0.0
        %4423 = vmatpush1.msra.mxu0 %v335
        %4424 = vmatprep.subr.mxu0 0.0
        %4425 = vmatpush1.msra.mxu0 %v336
        %4426 = vmatprep.subr.mxu0 0.0
        %4427 = vmatpush1.msra.mxu0 %v337
        %4428 = vmatprep.subr.mxu0 0.0
        %4429 = vmatpush1.msra.mxu0 %v338
        %4430 = vmatprep.subr.mxu0 0.0
        %4431 = vmatpush1.msra.mxu0 %v339
        %4432 = vmatprep.subr.mxu0 0.0
        %4433 = vmatpush1.msra.mxu0 %v340
        %4434 = vmatprep.subr.mxu0 0.0
        %4435 = vmatpush1.msra.mxu0 %v341
        %4436 = vmatprep.subr.mxu0 0.0
        %4437 = vmatpush1.msra.mxu0 %v342
        %4438 = vmatprep.subr.mxu0 0.0
        %4439 = vmatpush1.msra.mxu0 %v343
        %4440 = vmatprep.subr.mxu0 0.0
        %4441 = vmatpush1.msra.mxu0 %v344
        %4442 = vmatprep.subr.mxu0 0.0
        %4443 = vmatpush1.msra.mxu0 %v345
        %4444 = vmatprep.subr.mxu0 0.0
        %4445 = vmatpush1.msra.mxu0 %v346
        %4446 = vmatprep.subr.mxu0 0.0
        %4447 = vmatpush1.msra.mxu0 %v347
        %4448 = vmatprep.subr.mxu0 0.0
        %4449 = vmatpush1.msra.mxu0 %v348
        %4450 = vmatprep.subr.mxu0 0.0
        %4451 = vmatpush1.msra.mxu0 %v349
        %4452 = vmatprep.subr.mxu0 0.0
        %4453 = vmatpush1.msra.mxu0 %v350
        %4454 = vmatprep.subr.mxu0 0.0
        %4455 = vmatpush1.msra.mxu0 %v351
        %4456 = vmatprep.subr.mxu0 0.0
        %4457 = vmatpush1.msra.mxu0 %v352
        %4458 = vmatprep.subr.mxu0 0.0
        %4459 = vmatpush1.msra.mxu0 %v353
        %4460 = vmatprep.subr.mxu0 0.0
        %4461 = vmatpush1.msra.mxu0 %v354
        %4462 = vmatprep.subr.mxu0 0.0
        %4463 = vmatpush1.msra.mxu0 %v355
        %4464 = vmatprep.subr.mxu0 0.0
        %4465 = vmatpush1.msra.mxu0 %v356
        %4466 = vmatprep.subr.mxu0 0.0
        %4467 = vmatpush1.msra.mxu0 %v357
        %4468 = vmatprep.subr.mxu0 0.0
        %4469 = vmatpush1.msra.mxu0 %v358
        %4470 = vmatprep.subr.mxu0 0.0
        %4471 = vmatpush1.msra.mxu0 %v359
        %4472 = vmatprep.subr.mxu0 0.0
        %4473 = vmatpush1.msra.mxu0 %v360
        %4474 = vmatprep.subr.mxu0 0.0
        %4475 = vmatpush1.msra.mxu0 %v361
        %4476 = vmatprep.subr.mxu0 0.0
        %4477 = vmatpush1.msra.mxu0 %v362
        %4478 = vmatprep.mubr.f32.mxu0 %v4265
        %4479 = vmatmul.mubr.f32.gmra.mrb[0].mxu0 %v4263
        %v4480 = vpop.f32.mrb[0].mxu0
        %v4481 = vadd.f32 %v4376, %v4480
        %v4482 = vpop.f32.mrb[0].mxu0
        %4483 = vmatprep.mubr.f32.mxu0 %v4271
        %4484 = vmatmul.mubr.f32.gmra.mrb[0].mxu0 %v4269
        %v4485 = vpop.f32.mrb[0].mxu0
        %v4486 = vadd.f32 %v4381, %v4485
        %v4487 = vpop.f32.mrb[0].mxu0
        %4488 = vmatprep.mubr.f32.mxu0 %v4277
        %4489 = vmatmul.mubr.f32.gmra.mrb[0].mxu0 %v4275
        %v4490 = vpop.f32.mrb[0].mxu0
        %v4491 = vadd.f32 %v4386, %v4490
        %v4492 = vpop.f32.mrb[0].mxu0
        %4493 = vmatprep.mubr.f32.mxu0 %v4283
        %4494 = vmatmul.mubr.f32.gmra.mrb[0].mxu0 %v4281
        %v4495 = vpop.f32.mrb[0].mxu0
        %v4496 = vadd.f32 %v4391, %v4495
        %v4497 = vpop.f32.mrb[0].mxu0
        %4498 = vmatprep.mubr.f32.mxu0 %v4289
        %4499 = vmatmul.mubr.f32.gmra.mrb[0].mxu0 %v4287
        %v4500 = vpop.f32.mrb[0].mxu0
        %v4501 = vadd.f32 %v4396, %v4500
        %v4502 = vpop.f32.mrb[0].mxu0
        %4503 = vmatprep.mubr.f32.mxu0 %v4295
        %4504 = vmatmul.mubr.f32.gmra.mrb[0].mxu0 %v4293
        %v4505 = vpop.f32.mrb[0].mxu0
        %v4506 = vadd.f32 %v4401, %v4505
        %v4507 = vpop.f32.mrb[0].mxu0
        %4508 = vmatprep.mubr.f32.mxu0 %v4301
        %4509 = vmatmul.mubr.f32.gmra.mrb[0].mxu0 %v4299
        %v4510 = vpop.f32.mrb[0].mxu0
        %v4511 = vadd.f32 %v4406, %v4510
        %v4512 = vpop.f32.mrb[0].mxu0
        %4513 = vmatprep.mubr.f32.mxu0 %v4307
        %4514 = vmatmul.mubr.f32.gmra.mrb[0].mxu0 %v4305
        %v4515 = vpop.f32.mrb[0].mxu0
        %v4516 = vadd.f32 %v4411, %v4515
        %v4517 = vpop.f32.mrb[0].mxu0
        %4518 = vdwg.mxu0
        %v4519 = vxor.u32 %v4481, 2147483648
        %v4520 = vxor.u32 %v4486, 2147483648
        %v4521 = vxor.u32 %v4491, 2147483648
        %v4522 = vxor.u32 %v4496, 2147483648
        %v4523 = vxor.u32 %v4501, 2147483648
        %v4524 = vxor.u32 %v4506, 2147483648
        %v4525 = vxor.u32 %v4511, 2147483648
        %v4526 = vxor.u32 %v4516, 2147483648
        %v4527 = vmul.f32 %v4519, 1.442695
        %v4528 = vpow.pop %v4527
        %v4529 = vmul.f32 %v4520, 1.442695
        %v4530 = vpow.pop %v4529
        %v4531 = vmul.f32 %v4521, 1.442695
        %v4532 = vpow.pop %v4531
        %v4533 = vmul.f32 %v4522, 1.442695
        %v4534 = vpow.pop %v4533
        %v4535 = vmul.f32 %v4523, 1.442695
        %v4536 = vpow.pop %v4535
        %v4537 = vmul.f32 %v4524, 1.442695
        %v4538 = vpow.pop %v4537
        %v4539 = vmul.f32 %v4525, 1.442695
        %v4540 = vpow.pop %v4539
        %v4541 = vmul.f32 %v4526, 1.442695
        %v4542 = vpow.pop %v4541
        %v4543 = vadd.f32 %v4528, 1.0
        %v4544 = vadd.f32 %v4530, 1.0
        %v4545 = vadd.f32 %v4532, 1.0
        %v4546 = vadd.f32 %v4534, 1.0
        %v4547 = vadd.f32 %v4536, 1.0
        %v4548 = vadd.f32 %v4538, 1.0
        %v4549 = vadd.f32 %v4540, 1.0
        %v4550 = vadd.f32 %v4542, 1.0
        %v4551 = vrcp.pop %v4543
        %v4552 = vmul.f32 1.0, %v4551
        %v4553 = vrcp.pop %v4544
        %v4554 = vmul.f32 1.0, %v4553
        %v4555 = vrcp.pop %v4545
        %v4556 = vmul.f32 1.0, %v4555
        %v4557 = vrcp.pop %v4546
        %v4558 = vmul.f32 1.0, %v4557
        %v4559 = vrcp.pop %v4547
        %v4560 = vmul.f32 1.0, %v4559
        %v4561 = vrcp.pop %v4548
        %v4562 = vmul.f32 1.0, %v4561
        %v4563 = vrcp.pop %v4549
        %v4564 = vmul.f32 1.0, %v4563
        %v4565 = vrcp.pop %v4550
        %v4566 = vmul.f32 1.0, %v4565
        %4567 = vxpose.xlu0.b32.start [1/16] %v4552, 128
        %4568 = vxpose.xlu0.b32.cont [2/16] %v4554, 128
        %4569 = vxpose.xlu0.b32.cont [3/16] %v4556, 128
        %4570 = vxpose.xlu0.b32.cont [4/16] %v4558, 128
        %4571 = vxpose.xlu0.b32.cont [5/16] %v4560, 128
        %4572 = vxpose.xlu0.b32.cont [6/16] %v4562, 128
        %4573 = vxpose.xlu0.b32.cont [7/16] %v4564, 128
        %4574 = vxpose.xlu0.b32.cont [8/16] %v4566, 128
        %4575 = vxpose.xlu0.b32.cont [9/16] 0.0, 128
        %4576 = vxpose.xlu0.b32.cont [10/16] 0.0, 128
        %4577 = vxpose.xlu0.b32.cont [11/16] 0.0, 128
        %4578 = vxpose.xlu0.b32.cont [12/16] 0.0, 128
        %4579 = vxpose.xlu0.b32.cont [13/16] 0.0, 128
        %4580 = vxpose.xlu0.b32.cont [14/16] 0.0, 128
        %4581 = vxpose.xlu0.b32.cont [15/16] 0.0, 128
        %4582 = vxpose.xlu0.b32.end [16/16] 0.0, 128
        %v4583 = vpop.trf.xlu0
        %v4584 = vpop.trf.xlu0
        %v4585 = vpop.trf.xlu0
        %v4586 = vpop.trf.xlu0
        %v4587 = vpop.trf.xlu0
        %v4588 = vpop.trf.xlu0
        %v4589 = vpop.trf.xlu0
        %v4590 = vpop.trf.xlu0
        %v4591 = vpop.trf.xlu0
        %v4592 = vpop.trf.xlu0
        %v4593 = vpop.trf.xlu0
        %v4594 = vpop.trf.xlu0
        %v4595 = vpop.trf.xlu0
        %v4596 = vpop.trf.xlu0
        %v4597 = vpop.trf.xlu0
        %v4598 = vpop.trf.xlu0
        %v4600 = vsel %vm968, %v4583, 0
        %4602 = vmatprep.subr.mxu0 %v4152
        %4603 = vmatpush1.msra.mxu0 %v4150
        %4604 = vmatprep.subr.mxu0 %v4158
        %4605 = vmatpush1.msra.mxu0 %v4156
        %4606 = vmatprep.subr.mxu0 %v4164
        %4607 = vmatpush1.msra.mxu0 %v4162
        %4608 = vmatprep.subr.mxu0 %v4170
        %4609 = vmatpush1.msra.mxu0 %v4168
        %4610 = vmatprep.subr.mxu0 %v4176
        %4611 = vmatpush1.msra.mxu0 %v4174
        %4612 = vmatprep.subr.mxu0 %v4182
        %4613 = vmatpush1.msra.mxu0 %v4180
        %4614 = vmatprep.subr.mxu0 %v4188
        %4615 = vmatpush1.msra.mxu0 %v4186
        %4616 = vmatprep.subr.mxu0 %v4194
        %4617 = vmatpush1.msra.mxu0 %v4192
        %4618 = vmatprep.subr.mxu0 0.0
        %4619 = vmatpush1.msra.mxu0 0.0
        %4620 = vmatprep.subr.mxu0 0.0
        %4621 = vmatpush1.msra.mxu0 0.0
        %4622 = vmatprep.subr.mxu0 0.0
        %4623 = vmatpush1.msra.mxu0 0.0
        %4624 = vmatprep.subr.mxu0 0.0
        %4625 = vmatpush1.msra.mxu0 0.0
        %4626 = vmatprep.subr.mxu0 0.0
        %4627 = vmatpush1.msra.mxu0 0.0
        %4628 = vmatprep.subr.mxu0 0.0
        %4629 = vmatpush1.msra.mxu0 0.0
        %4630 = vmatprep.subr.mxu0 0.0
        %4631 = vmatpush1.msra.mxu0 0.0
        %4632 = vmatprep.subr.mxu0 0.0
        %4633 = vmatpush1.msra.mxu0 0.0
        %4634 = vmatprep.subr.mxu0 0.0
        %4635 = vmatpush1.msra.mxu0 0.0
        %4636 = vmatprep.subr.mxu0 0.0
        %4637 = vmatpush1.msra.mxu0 0.0
        %4638 = vmatprep.subr.mxu0 0.0
        %4639 = vmatpush1.msra.mxu0 0.0
        %4640 = vmatprep.subr.mxu0 0.0
        %4641 = vmatpush1.msra.mxu0 0.0
        %4642 = vmatprep.subr.mxu0 0.0
        %4643 = vmatpush1.msra.mxu0 0.0
        %4644 = vmatprep.subr.mxu0 0.0
        %4645 = vmatpush1.msra.mxu0 0.0
        %4646 = vmatprep.subr.mxu0 0.0
        %4647 = vmatpush1.msra.mxu0 0.0
        %4648 = vmatprep.subr.mxu0 0.0
        %4649 = vmatpush1.msra.mxu0 0.0
        %4650 = vmatprep.subr.mxu0 0.0
        %4651 = vmatpush1.msra.mxu0 0.0
        %4652 = vmatprep.subr.mxu0 0.0
        %4653 = vmatpush1.msra.mxu0 0.0
        %4654 = vmatprep.subr.mxu0 0.0
        %4655 = vmatpush1.msra.mxu0 0.0
        %4656 = vmatprep.subr.mxu0 0.0
        %4657 = vmatpush1.msra.mxu0 0.0
        %4658 = vmatprep.subr.mxu0 0.0
        %4659 = vmatpush1.msra.mxu0 0.0
        %4660 = vmatprep.subr.mxu0 0.0
        %4661 = vmatpush1.msra.mxu0 0.0
        %4662 = vmatprep.subr.mxu0 0.0
        %4663 = vmatpush1.msra.mxu0 0.0
        %4664 = vmatprep.subr.mxu0 0.0
        %4665 = vmatpush1.msra.mxu0 0.0
        %4666 = vmatprep.mubr.f32.mxu0 0.0
        %4667 = vmatmul.mubr.f32.gmra.mrb[0].mxu0 %v4600
        %v4668 = vpop.f32.mrb[0].mxu0
        %v4669 = vadd.f32 0.0, %v4668
        %v4670 = vpop.f32.mrb[0].mxu0
        %v4671 = vadd.f32 0.0, %v4670
        %4672 = vdwg.mxu0
        %4673 = vmatprep.subr.mxu0 %v4265
        %4674 = vmatpush1.msra.mxu0 %v4263
        %4675 = vmatprep.subr.mxu0 %v4271
        %4676 = vmatpush1.msra.mxu0 %v4269
        %4677 = vmatprep.subr.mxu0 %v4277
        %4678 = vmatpush1.msra.mxu0 %v4275
        %4679 = vmatprep.subr.mxu0 %v4283
        %4680 = vmatpush1.msra.mxu0 %v4281
        %4681 = vmatprep.subr.mxu0 %v4289
        %4682 = vmatpush1.msra.mxu0 %v4287
        %4683 = vmatprep.subr.mxu0 %v4295
        %4684 = vmatpush1.msra.mxu0 %v4293
        %4685 = vmatprep.subr.mxu0 %v4301
        %4686 = vmatpush1.msra.mxu0 %v4299
        %4687 = vmatprep.subr.mxu0 %v4307
        %4688 = vmatpush1.msra.mxu0 %v4305
        %4689 = vmatprep.subr.mxu0 0.0
        %4690 = vmatpush1.msra.mxu0 0.0
        %4691 = vmatprep.subr.mxu0 0.0
        %4692 = vmatpush1.msra.mxu0 0.0
        %4693 = vmatprep.subr.mxu0 0.0
        %4694 = vmatpush1.msra.mxu0 0.0
        %4695 = vmatprep.subr.mxu0 0.0
        %4696 = vmatpush1.msra.mxu0 0.0
        %4697 = vmatprep.subr.mxu0 0.0
        %4698 = vmatpush1.msra.mxu0 0.0
        %4699 = vmatprep.subr.mxu0 0.0
        %4700 = vmatpush1.msra.mxu0 0.0
        %4701 = vmatprep.subr.mxu0 0.0
        %4702 = vmatpush1.msra.mxu0 0.0
        %4703 = vmatprep.subr.mxu0 0.0
        %4704 = vmatpush1.msra.mxu0 0.0
        %4705 = vmatprep.subr.mxu0 0.0
        %4706 = vmatpush1.msra.mxu0 0.0
        %4707 = vmatprep.subr.mxu0 0.0
        %4708 = vmatpush1.msra.mxu0 0.0
        %4709 = vmatprep.subr.mxu0 0.0
        %4710 = vmatpush1.msra.mxu0 0.0
        %4711 = vmatprep.subr.mxu0 0.0
        %4712 = vmatpush1.msra.mxu0 0.0
        %4713 = vmatprep.subr.mxu0 0.0
        %4714 = vmatpush1.msra.mxu0 0.0
        %4715 = vmatprep.subr.mxu0 0.0
        %4716 = vmatpush1.msra.mxu0 0.0
        %4717 = vmatprep.subr.mxu0 0.0
        %4718 = vmatpush1.msra.mxu0 0.0
        %4719 = vmatprep.subr.mxu0 0.0
        %4720 = vmatpush1.msra.mxu0 0.0
        %4721 = vmatprep.subr.mxu0 0.0
        %4722 = vmatpush1.msra.mxu0 0.0
        %4723 = vmatprep.subr.mxu0 0.0
        %4724 = vmatpush1.msra.mxu0 0.0
        %4725 = vmatprep.subr.mxu0 0.0
        %4726 = vmatpush1.msra.mxu0 0.0
        %4727 = vmatprep.subr.mxu0 0.0
        %4728 = vmatpush1.msra.mxu0 0.0
        %4729 = vmatprep.subr.mxu0 0.0
        %4730 = vmatpush1.msra.mxu0 0.0
        %4731 = vmatprep.subr.mxu0 0.0
        %4732 = vmatpush1.msra.mxu0 0.0
        %4733 = vmatprep.subr.mxu0 0.0
        %4734 = vmatpush1.msra.mxu0 0.0
        %4735 = vmatprep.subr.mxu0 0.0
        %4736 = vmatpush1.msra.mxu0 0.0
        %4737 = vmatprep.mubr.f32.mxu0 0.0
        %4738 = vmatmul.mubr.f32.gmra.mrb[0].mxu0 %v4600
        %v4739 = vpop.f32.mrb[0].mxu0
        %v4740 = vadd.f32 0.0, %v4739
        %v4741 = vpop.f32.mrb[0].mxu0
        %v4742 = vadd.f32 0.0, %v4741
        %4743 = vdwg.mxu0
        %v4744 = vmul.f32 %v4669, 0.015625
        %v4745 = vmul.f32 %v4671, 0.015625
        %v4746 = vmul.f32 %v4740, 0.015625
        %v4747 = vmul.f32 %v4742, 0.015625
        %s4748 = scalar_lea.vmem %s280, 192
        %v4749 = vld [vmem:[%s4748] sm:$0xff]
        %v4750 = vld [vmem:[%s4748 + $0x8] sm:$0xff]
        %v4751 = vld [vmem:[%s4748 + $0x10] sm:$0xff]
        %v4752 = vld [vmem:[%s4748 + $0x18] sm:$0xff]
        %4753 = vxpose.xlu0.b32.start [1/16] %v4749, 128
        %4754 = vxpose.xlu0.b32.cont [2/16] %v4750, 128
        %4755 = vxpose.xlu0.b32.cont [3/16] %v4751, 128
        %4756 = vxpose.xlu0.b32.cont [4/16] %v4752, 128
        %4757 = vxpose.xlu0.b32.cont [5/16] 0.0, 128
        %4758 = vxpose.xlu0.b32.cont [6/16] 0.0, 128
        %4759 = vxpose.xlu0.b32.cont [7/16] 0.0, 128
        %4760 = vxpose.xlu0.b32.cont [8/16] 0.0, 128
        %4761 = vxpose.xlu0.b32.cont [9/16] 0.0, 128
        %4762 = vxpose.xlu0.b32.cont [10/16] 0.0, 128
        %4763 = vxpose.xlu0.b32.cont [11/16] 0.0, 128
        %4764 = vxpose.xlu0.b32.cont [12/16] 0.0, 128
        %4765 = vxpose.xlu0.b32.cont [13/16] 0.0, 128
        %4766 = vxpose.xlu0.b32.cont [14/16] 0.0, 128
        %4767 = vxpose.xlu0.b32.cont [15/16] 0.0, 128
        %4768 = vxpose.xlu0.b32.end [16/16] 0.0, 128
        %v4769 = vpop.trf.xlu0
        %v4770 = vpop.trf.xlu0
        %v4771 = vpop.trf.xlu0
        %v4772 = vpop.trf.xlu0
        %v4773 = vpop.trf.xlu0
        %v4774 = vpop.trf.xlu0
        %v4775 = vpop.trf.xlu0
        %v4776 = vpop.trf.xlu0
        %v4777 = vpop.trf.xlu0
        %v4778 = vpop.trf.xlu0
        %v4779 = vpop.trf.xlu0
        %v4780 = vpop.trf.xlu0
        %v4781 = vpop.trf.xlu0
        %v4782 = vpop.trf.xlu0
        %v4783 = vpop.trf.xlu0
        %v4784 = vpop.trf.xlu0
        %v4786 = vsel %vm421, %v4769, 0
        %v4789 = vsel %vm421, %v4770, 0
        %v4792 = vsel %vm421, %v4771, 0
        %v4795 = vsel %vm421, %v4772, 0
        %v4798 = vsel %vm421, %v4773, 0
        %v4801 = vsel %vm421, %v4774, 0
        %v4804 = vsel %vm421, %v4775, 0
        %v4807 = vsel %vm421, %v4776, 0
        %4809 = vmatprep.subr.mxu0 %v283
        %4810 = vmatpush1.msra.mxu0 %v282
        %4811 = vmatprep.subr.mxu0 %v287
        %4812 = vmatpush1.msra.mxu0 %v286
        %4813 = vmatprep.subr.mxu0 %v291
        %4814 = vmatpush1.msra.mxu0 %v290
        %4815 = vmatprep.subr.mxu0 %v295
        %4816 = vmatpush1.msra.mxu0 %v294
        %4817 = vmatprep.subr.mxu0 0.0
        %4818 = vmatpush1.msra.mxu0 0.0
        %4819 = vmatprep.subr.mxu0 0.0
        %4820 = vmatpush1.msra.mxu0 0.0
        %4821 = vmatprep.subr.mxu0 0.0
        %4822 = vmatpush1.msra.mxu0 0.0
        %4823 = vmatprep.subr.mxu0 0.0
        %4824 = vmatpush1.msra.mxu0 0.0
        %4825 = vmatprep.subr.mxu0 0.0
        %4826 = vmatpush1.msra.mxu0 0.0
        %4827 = vmatprep.subr.mxu0 0.0
        %4828 = vmatpush1.msra.mxu0 0.0
        %4829 = vmatprep.subr.mxu0 0.0
        %4830 = vmatpush1.msra.mxu0 0.0
        %4831 = vmatprep.subr.mxu0 0.0
        %4832 = vmatpush1.msra.mxu0 0.0
        %4833 = vmatprep.subr.mxu0 0.0
        %4834 = vmatpush1.msra.mxu0 0.0
        %4835 = vmatprep.subr.mxu0 0.0
        %4836 = vmatpush1.msra.mxu0 0.0
        %4837 = vmatprep.subr.mxu0 0.0
        %4838 = vmatpush1.msra.mxu0 0.0
        %4839 = vmatprep.subr.mxu0 0.0
        %4840 = vmatpush1.msra.mxu0 0.0
        %4841 = vmatprep.subr.mxu0 0.0
        %4842 = vmatpush1.msra.mxu0 0.0
        %4843 = vmatprep.subr.mxu0 0.0
        %4844 = vmatpush1.msra.mxu0 0.0
        %4845 = vmatprep.subr.mxu0 0.0
        %4846 = vmatpush1.msra.mxu0 0.0
        %4847 = vmatprep.subr.mxu0 0.0
        %4848 = vmatpush1.msra.mxu0 0.0
        %4849 = vmatprep.subr.mxu0 0.0
        %4850 = vmatpush1.msra.mxu0 0.0
        %4851 = vmatprep.subr.mxu0 0.0
        %4852 = vmatpush1.msra.mxu0 0.0
        %4853 = vmatprep.subr.mxu0 0.0
        %4854 = vmatpush1.msra.mxu0 0.0
        %4855 = vmatprep.subr.mxu0 0.0
        %4856 = vmatpush1.msra.mxu0 0.0
        %4857 = vmatprep.subr.mxu0 0.0
        %4858 = vmatpush1.msra.mxu0 0.0
        %4859 = vmatprep.subr.mxu0 0.0
        %4860 = vmatpush1.msra.mxu0 0.0
        %4861 = vmatprep.subr.mxu0 0.0
        %4862 = vmatpush1.msra.mxu0 0.0
        %4863 = vmatprep.subr.mxu0 0.0
        %4864 = vmatpush1.msra.mxu0 0.0
        %4865 = vmatprep.subr.mxu0 0.0
        %4866 = vmatpush1.msra.mxu0 0.0
        %4867 = vmatprep.subr.mxu0 0.0
        %4868 = vmatpush1.msra.mxu0 0.0
        %4869 = vmatprep.subr.mxu0 0.0
        %4870 = vmatpush1.msra.mxu0 0.0
        %4871 = vmatprep.subr.mxu0 0.0
        %4872 = vmatpush1.msra.mxu0 0.0
        %4873 = vmatprep.mubr.f32.mxu0 0.0
        %4874 = vmatmul.mubr.f32.gmra.mrb[0].mxu0 %v4786
        %v4875 = vpop.f32.mrb[0].mxu0
        %v4876 = vadd.f32 %v372, %v4875
        %v4877 = vpop.f32.mrb[0].mxu0
        %v4878 = vadd.f32 %v376, %v4877
        %4879 = vmatprep.mubr.f32.mxu0 0.0
        %4880 = vmatmul.mubr.f32.gmra.mrb[0].mxu0 %v4789
        %v4881 = vpop.f32.mrb[0].mxu0
        %v4882 = vadd.f32 %v372, %v4881
        %v4883 = vpop.f32.mrb[0].mxu0
        %v4884 = vadd.f32 %v376, %v4883
        %4885 = vmatprep.mubr.f32.mxu0 0.0
        %4886 = vmatmul.mubr.f32.gmra.mrb[0].mxu0 %v4792
        %v4887 = vpop.f32.mrb[0].mxu0
        %v4888 = vadd.f32 %v372, %v4887
        %v4889 = vpop.f32.mrb[0].mxu0
        %v4890 = vadd.f32 %v376, %v4889
        %4891 = vmatprep.mubr.f32.mxu0 0.0
        %4892 = vmatmul.mubr.f32.gmra.mrb[0].mxu0 %v4795
        %v4893 = vpop.f32.mrb[0].mxu0
        %v4894 = vadd.f32 %v372, %v4893
        %v4895 = vpop.f32.mrb[0].mxu0
        %v4896 = vadd.f32 %v376, %v4895
        %4897 = vmatprep.mubr.f32.mxu0 0.0
        %4898 = vmatmul.mubr.f32.gmra.mrb[0].mxu0 %v4798
        %v4899 = vpop.f32.mrb[0].mxu0
        %v4900 = vadd.f32 %v372, %v4899
        %v4901 = vpop.f32.mrb[0].mxu0
        %v4902 = vadd.f32 %v376, %v4901
        %4903 = vmatprep.mubr.f32.mxu0 0.0
        %4904 = vmatmul.mubr.f32.gmra.mrb[0].mxu0 %v4801
        %v4905 = vpop.f32.mrb[0].mxu0
        %v4906 = vadd.f32 %v372, %v4905
        %v4907 = vpop.f32.mrb[0].mxu0
        %v4908 = vadd.f32 %v376, %v4907
        %4909 = vmatprep.mubr.f32.mxu0 0.0
        %4910 = vmatmul.mubr.f32.gmra.mrb[0].mxu0 %v4804
        %v4911 = vpop.f32.mrb[0].mxu0
        %v4912 = vadd.f32 %v372, %v4911
        %v4913 = vpop.f32.mrb[0].mxu0
        %v4914 = vadd.f32 %v376, %v4913
        %4915 = vmatprep.mubr.f32.mxu0 0.0
        %4916 = vmatmul.mubr.f32.gmra.mrb[0].mxu0 %v4807
        %v4917 = vpop.f32.mrb[0].mxu0
        %v4918 = vadd.f32 %v372, %v4917
        %v4919 = vpop.f32.mrb[0].mxu0
        %v4920 = vadd.f32 %v376, %v4919
        %4921 = vdwg.mxu0
        %4922 = vmatprep.subr.mxu0 %v285
        %4923 = vmatpush1.msra.mxu0 %v284
        %4924 = vmatprep.subr.mxu0 %v289
        %4925 = vmatpush1.msra.mxu0 %v288
        %4926 = vmatprep.subr.mxu0 %v293
        %4927 = vmatpush1.msra.mxu0 %v292
        %4928 = vmatprep.subr.mxu0 %v297
        %4929 = vmatpush1.msra.mxu0 %v296
        %4930 = vmatprep.subr.mxu0 0.0
        %4931 = vmatpush1.msra.mxu0 0.0
        %4932 = vmatprep.subr.mxu0 0.0
        %4933 = vmatpush1.msra.mxu0 0.0
        %4934 = vmatprep.subr.mxu0 0.0
        %4935 = vmatpush1.msra.mxu0 0.0
        %4936 = vmatprep.subr.mxu0 0.0
        %4937 = vmatpush1.msra.mxu0 0.0
        %4938 = vmatprep.subr.mxu0 0.0
        %4939 = vmatpush1.msra.mxu0 0.0
        %4940 = vmatprep.subr.mxu0 0.0
        %4941 = vmatpush1.msra.mxu0 0.0
        %4942 = vmatprep.subr.mxu0 0.0
        %4943 = vmatpush1.msra.mxu0 0.0
        %4944 = vmatprep.subr.mxu0 0.0
        %4945 = vmatpush1.msra.mxu0 0.0
        %4946 = vmatprep.subr.mxu0 0.0
        %4947 = vmatpush1.msra.mxu0 0.0
        %4948 = vmatprep.subr.mxu0 0.0
        %4949 = vmatpush1.msra.mxu0 0.0
        %4950 = vmatprep.subr.mxu0 0.0
        %4951 = vmatpush1.msra.mxu0 0.0
        %4952 = vmatprep.subr.mxu0 0.0
        %4953 = vmatpush1.msra.mxu0 0.0
        %4954 = vmatprep.subr.mxu0 0.0
        %4955 = vmatpush1.msra.mxu0 0.0
        %4956 = vmatprep.subr.mxu0 0.0
        %4957 = vmatpush1.msra.mxu0 0.0
        %4958 = vmatprep.subr.mxu0 0.0
        %4959 = vmatpush1.msra.mxu0 0.0
        %4960 = vmatprep.subr.mxu0 0.0
        %4961 = vmatpush1.msra.mxu0 0.0
        %4962 = vmatprep.subr.mxu0 0.0
        %4963 = vmatpush1.msra.mxu0 0.0
        %4964 = vmatprep.subr.mxu0 0.0
        %4965 = vmatpush1.msra.mxu0 0.0
        %4966 = vmatprep.subr.mxu0 0.0
        %4967 = vmatpush1.msra.mxu0 0.0
        %4968 = vmatprep.subr.mxu0 0.0
        %4969 = vmatpush1.msra.mxu0 0.0
        %4970 = vmatprep.subr.mxu0 0.0
        %4971 = vmatpush1.msra.mxu0 0.0
        %4972 = vmatprep.subr.mxu0 0.0
        %4973 = vmatpush1.msra.mxu0 0.0
        %4974 = vmatprep.subr.mxu0 0.0
        %4975 = vmatpush1.msra.mxu0 0.0
        %4976 = vmatprep.subr.mxu0 0.0
        %4977 = vmatpush1.msra.mxu0 0.0
        %4978 = vmatprep.subr.mxu0 0.0
        %4979 = vmatpush1.msra.mxu0 0.0
        %4980 = vmatprep.subr.mxu0 0.0
        %4981 = vmatpush1.msra.mxu0 0.0
        %4982 = vmatprep.subr.mxu0 0.0
        %4983 = vmatpush1.msra.mxu0 0.0
        %4984 = vmatprep.subr.mxu0 0.0
        %4985 = vmatpush1.msra.mxu0 0.0
        %4986 = vmatprep.mubr.f32.mxu0 0.0
        %4987 = vmatmul.mubr.f32.gmra.mrb[0].mxu0 %v4786
        %v4988 = vpop.f32.mrb[0].mxu0
        %v4989 = vadd.f32 %v380, %v4988
        %v4990 = vpop.f32.mrb[0].mxu0
        %v4991 = vadd.f32 %v384, %v4990
        %4992 = vmatprep.mubr.f32.mxu0 0.0
        %4993 = vmatmul.mubr.f32.gmra.mrb[0].mxu0 %v4789
        %v4994 = vpop.f32.mrb[0].mxu0
        %v4995 = vadd.f32 %v380, %v4994
        %v4996 = vpop.f32.mrb[0].mxu0
        %v4997 = vadd.f32 %v384, %v4996
        %4998 = vmatprep.mubr.f32.mxu0 0.0
        %4999 = vmatmul.mubr.f32.gmra.mrb[0].mxu0 %v4792
        %v5000 = vpop.f32.mrb[0].mxu0
        %v5001 = vadd.f32 %v380, %v5000
        %v5002 = vpop.f32.mrb[0].mxu0
        %v5003 = vadd.f32 %v384, %v5002
        %5004 = vmatprep.mubr.f32.mxu0 0.0
        %5005 = vmatmul.mubr.f32.gmra.mrb[0].mxu0 %v4795
        %v5006 = vpop.f32.mrb[0].mxu0
        %v5007 = vadd.f32 %v380, %v5006
        %v5008 = vpop.f32.mrb[0].mxu0
        %v5009 = vadd.f32 %v384, %v5008
        %5010 = vmatprep.mubr.f32.mxu0 0.0
        %5011 = vmatmul.mubr.f32.gmra.mrb[0].mxu0 %v4798
        %v5012 = vpop.f32.mrb[0].mxu0
        %v5013 = vadd.f32 %v380, %v5012
        %v5014 = vpop.f32.mrb[0].mxu0
        %v5015 = vadd.f32 %v384, %v5014
        %5016 = vmatprep.mubr.f32.mxu0 0.0
        %5017 = vmatmul.mubr.f32.gmra.mrb[0].mxu0 %v4801
        %v5018 = vpop.f32.mrb[0].mxu0
        %v5019 = vadd.f32 %v380, %v5018
        %v5020 = vpop.f32.mrb[0].mxu0
        %v5021 = vadd.f32 %v384, %v5020
        %5022 = vmatprep.mubr.f32.mxu0 0.0
        %5023 = vmatmul.mubr.f32.gmra.mrb[0].mxu0 %v4804
        %v5024 = vpop.f32.mrb[0].mxu0
        %v5025 = vadd.f32 %v380, %v5024
        %v5026 = vpop.f32.mrb[0].mxu0
        %v5027 = vadd.f32 %v384, %v5026
        %5028 = vmatprep.mubr.f32.mxu0 0.0
        %5029 = vmatmul.mubr.f32.gmra.mrb[0].mxu0 %v4807
        %v5030 = vpop.f32.mrb[0].mxu0
        %v5031 = vadd.f32 %v380, %v5030
        %v5032 = vpop.f32.mrb[0].mxu0
        %v5033 = vadd.f32 %v384, %v5032
        %5034 = vdwg.mxu0
        %5035 = vmatprep.subr.mxu0 0.0
        %5036 = vmatpush1.msra.mxu0 %v299
        %5037 = vmatprep.subr.mxu0 0.0
        %5038 = vmatpush1.msra.mxu0 %v300
        %5039 = vmatprep.subr.mxu0 0.0
        %5040 = vmatpush1.msra.mxu0 %v301
        %5041 = vmatprep.subr.mxu0 0.0
        %5042 = vmatpush1.msra.mxu0 %v302
        %5043 = vmatprep.subr.mxu0 0.0
        %5044 = vmatpush1.msra.mxu0 %v303
        %5045 = vmatprep.subr.mxu0 0.0
        %5046 = vmatpush1.msra.mxu0 %v304
        %5047 = vmatprep.subr.mxu0 0.0
        %5048 = vmatpush1.msra.mxu0 %v305
        %5049 = vmatprep.subr.mxu0 0.0
        %5050 = vmatpush1.msra.mxu0 %v306
        %5051 = vmatprep.subr.mxu0 0.0
        %5052 = vmatpush1.msra.mxu0 %v307
        %5053 = vmatprep.subr.mxu0 0.0
        %5054 = vmatpush1.msra.mxu0 %v308
        %5055 = vmatprep.subr.mxu0 0.0
        %5056 = vmatpush1.msra.mxu0 %v309
        %5057 = vmatprep.subr.mxu0 0.0
        %5058 = vmatpush1.msra.mxu0 %v310
        %5059 = vmatprep.subr.mxu0 0.0
        %5060 = vmatpush1.msra.mxu0 %v311
        %5061 = vmatprep.subr.mxu0 0.0
        %5062 = vmatpush1.msra.mxu0 %v312
        %5063 = vmatprep.subr.mxu0 0.0
        %5064 = vmatpush1.msra.mxu0 %v313
        %5065 = vmatprep.subr.mxu0 0.0
        %5066 = vmatpush1.msra.mxu0 %v314
        %5067 = vmatprep.subr.mxu0 0.0
        %5068 = vmatpush1.msra.mxu0 %v315
        %5069 = vmatprep.subr.mxu0 0.0
        %5070 = vmatpush1.msra.mxu0 %v316
        %5071 = vmatprep.subr.mxu0 0.0
        %5072 = vmatpush1.msra.mxu0 %v317
        %5073 = vmatprep.subr.mxu0 0.0
        %5074 = vmatpush1.msra.mxu0 %v318
        %5075 = vmatprep.subr.mxu0 0.0
        %5076 = vmatpush1.msra.mxu0 %v319
        %5077 = vmatprep.subr.mxu0 0.0
        %5078 = vmatpush1.msra.mxu0 %v320
        %5079 = vmatprep.subr.mxu0 0.0
        %5080 = vmatpush1.msra.mxu0 %v321
        %5081 = vmatprep.subr.mxu0 0.0
        %5082 = vmatpush1.msra.mxu0 %v322
        %5083 = vmatprep.subr.mxu0 0.0
        %5084 = vmatpush1.msra.mxu0 %v323
        %5085 = vmatprep.subr.mxu0 0.0
        %5086 = vmatpush1.msra.mxu0 %v324
        %5087 = vmatprep.subr.mxu0 0.0
        %5088 = vmatpush1.msra.mxu0 %v325
        %5089 = vmatprep.subr.mxu0 0.0
        %5090 = vmatpush1.msra.mxu0 %v326
        %5091 = vmatprep.subr.mxu0 0.0
        %5092 = vmatpush1.msra.mxu0 %v327
        %5093 = vmatprep.subr.mxu0 0.0
        %5094 = vmatpush1.msra.mxu0 %v328
        %5095 = vmatprep.subr.mxu0 0.0
        %5096 = vmatpush1.msra.mxu0 %v329
        %5097 = vmatprep.subr.mxu0 0.0
        %5098 = vmatpush1.msra.mxu0 %v330
        %5099 = vmatprep.mubr.f32.mxu0 %v4878
        %5100 = vmatmul.mubr.f32.gmra.mrb[0].mxu0 %v4876
        %v5101 = vpop.f32.mrb[0].mxu0
        %v5102 = vadd.f32 %v676, %v5101
        %v5103 = vpop.f32.mrb[0].mxu0
        %5104 = vmatprep.mubr.f32.mxu0 %v4884
        %5105 = vmatmul.mubr.f32.gmra.mrb[0].mxu0 %v4882
        %v5106 = vpop.f32.mrb[0].mxu0
        %v5107 = vadd.f32 %v676, %v5106
        %v5108 = vpop.f32.mrb[0].mxu0
        %5109 = vmatprep.mubr.f32.mxu0 %v4890
        %5110 = vmatmul.mubr.f32.gmra.mrb[0].mxu0 %v4888
        %v5111 = vpop.f32.mrb[0].mxu0
        %v5112 = vadd.f32 %v676, %v5111
        %v5113 = vpop.f32.mrb[0].mxu0
        %5114 = vmatprep.mubr.f32.mxu0 %v4896
        %5115 = vmatmul.mubr.f32.gmra.mrb[0].mxu0 %v4894
        %v5116 = vpop.f32.mrb[0].mxu0
        %v5117 = vadd.f32 %v676, %v5116
        %v5118 = vpop.f32.mrb[0].mxu0
        %5119 = vmatprep.mubr.f32.mxu0 %v4902
        %5120 = vmatmul.mubr.f32.gmra.mrb[0].mxu0 %v4900
        %v5121 = vpop.f32.mrb[0].mxu0
        %v5122 = vadd.f32 %v676, %v5121
        %v5123 = vpop.f32.mrb[0].mxu0
        %5124 = vmatprep.mubr.f32.mxu0 %v4908
        %5125 = vmatmul.mubr.f32.gmra.mrb[0].mxu0 %v4906
        %v5126 = vpop.f32.mrb[0].mxu0
        %v5127 = vadd.f32 %v676, %v5126
        %v5128 = vpop.f32.mrb[0].mxu0
        %5129 = vmatprep.mubr.f32.mxu0 %v4914
        %5130 = vmatmul.mubr.f32.gmra.mrb[0].mxu0 %v4912
        %v5131 = vpop.f32.mrb[0].mxu0
        %v5132 = vadd.f32 %v676, %v5131
        %v5133 = vpop.f32.mrb[0].mxu0
        %5134 = vmatprep.mubr.f32.mxu0 %v4920
        %5135 = vmatmul.mubr.f32.gmra.mrb[0].mxu0 %v4918
        %v5136 = vpop.f32.mrb[0].mxu0
        %v5137 = vadd.f32 %v676, %v5136
        %v5138 = vpop.f32.mrb[0].mxu0
        %5139 = vdwg.mxu0
        %5140 = vmatprep.subr.mxu0 0.0
        %5141 = vmatpush1.msra.mxu0 %v331
        %5142 = vmatprep.subr.mxu0 0.0
        %5143 = vmatpush1.msra.mxu0 %v332
        %5144 = vmatprep.subr.mxu0 0.0
        %5145 = vmatpush1.msra.mxu0 %v333
        %5146 = vmatprep.subr.mxu0 0.0
        %5147 = vmatpush1.msra.mxu0 %v334
        %5148 = vmatprep.subr.mxu0 0.0
        %5149 = vmatpush1.msra.mxu0 %v335
        %5150 = vmatprep.subr.mxu0 0.0
        %5151 = vmatpush1.msra.mxu0 %v336
        %5152 = vmatprep.subr.mxu0 0.0
        %5153 = vmatpush1.msra.mxu0 %v337
        %5154 = vmatprep.subr.mxu0 0.0
        %5155 = vmatpush1.msra.mxu0 %v338
        %5156 = vmatprep.subr.mxu0 0.0
        %5157 = vmatpush1.msra.mxu0 %v339
        %5158 = vmatprep.subr.mxu0 0.0
        %5159 = vmatpush1.msra.mxu0 %v340
        %5160 = vmatprep.subr.mxu0 0.0
        %5161 = vmatpush1.msra.mxu0 %v341
        %5162 = vmatprep.subr.mxu0 0.0
        %5163 = vmatpush1.msra.mxu0 %v342
        %5164 = vmatprep.subr.mxu0 0.0
        %5165 = vmatpush1.msra.mxu0 %v343
        %5166 = vmatprep.subr.mxu0 0.0
        %5167 = vmatpush1.msra.mxu0 %v344
        %5168 = vmatprep.subr.mxu0 0.0
        %5169 = vmatpush1.msra.mxu0 %v345
        %5170 = vmatprep.subr.mxu0 0.0
        %5171 = vmatpush1.msra.mxu0 %v346
        %5172 = vmatprep.subr.mxu0 0.0
        %5173 = vmatpush1.msra.mxu0 %v347
        %5174 = vmatprep.subr.mxu0 0.0
        %5175 = vmatpush1.msra.mxu0 %v348
        %5176 = vmatprep.subr.mxu0 0.0
        %5177 = vmatpush1.msra.mxu0 %v349
        %5178 = vmatprep.subr.mxu0 0.0
        %5179 = vmatpush1.msra.mxu0 %v350
        %5180 = vmatprep.subr.mxu0 0.0
        %5181 = vmatpush1.msra.mxu0 %v351
        %5182 = vmatprep.subr.mxu0 0.0
        %5183 = vmatpush1.msra.mxu0 %v352
        %5184 = vmatprep.subr.mxu0 0.0
        %5185 = vmatpush1.msra.mxu0 %v353
        %5186 = vmatprep.subr.mxu0 0.0
        %5187 = vmatpush1.msra.mxu0 %v354
        %5188 = vmatprep.subr.mxu0 0.0
        %5189 = vmatpush1.msra.mxu0 %v355
        %5190 = vmatprep.subr.mxu0 0.0
        %5191 = vmatpush1.msra.mxu0 %v356
        %5192 = vmatprep.subr.mxu0 0.0
        %5193 = vmatpush1.msra.mxu0 %v357
        %5194 = vmatprep.subr.mxu0 0.0
        %5195 = vmatpush1.msra.mxu0 %v358
        %5196 = vmatprep.subr.mxu0 0.0
        %5197 = vmatpush1.msra.mxu0 %v359
        %5198 = vmatprep.subr.mxu0 0.0
        %5199 = vmatpush1.msra.mxu0 %v360
        %5200 = vmatprep.subr.mxu0 0.0
        %5201 = vmatpush1.msra.mxu0 %v361
        %5202 = vmatprep.subr.mxu0 0.0
        %5203 = vmatpush1.msra.mxu0 %v362
        %5204 = vmatprep.mubr.f32.mxu0 %v4991
        %5205 = vmatmul.mubr.f32.gmra.mrb[0].mxu0 %v4989
        %v5206 = vpop.f32.mrb[0].mxu0
        %v5207 = vadd.f32 %v5102, %v5206
        %v5208 = vpop.f32.mrb[0].mxu0
        %5209 = vmatprep.mubr.f32.mxu0 %v4997
        %5210 = vmatmul.mubr.f32.gmra.mrb[0].mxu0 %v4995
        %v5211 = vpop.f32.mrb[0].mxu0
        %v5212 = vadd.f32 %v5107, %v5211
        %v5213 = vpop.f32.mrb[0].mxu0
        %5214 = vmatprep.mubr.f32.mxu0 %v5003
        %5215 = vmatmul.mubr.f32.gmra.mrb[0].mxu0 %v5001
        %v5216 = vpop.f32.mrb[0].mxu0
        %v5217 = vadd.f32 %v5112, %v5216
        %v5218 = vpop.f32.mrb[0].mxu0
        %5219 = vmatprep.mubr.f32.mxu0 %v5009
        %5220 = vmatmul.mubr.f32.gmra.mrb[0].mxu0 %v5007
        %v5221 = vpop.f32.mrb[0].mxu0
        %v5222 = vadd.f32 %v5117, %v5221
        %v5223 = vpop.f32.mrb[0].mxu0
        %5224 = vmatprep.mubr.f32.mxu0 %v5015
        %5225 = vmatmul.mubr.f32.gmra.mrb[0].mxu0 %v5013
        %v5226 = vpop.f32.mrb[0].mxu0
        %v5227 = vadd.f32 %v5122, %v5226
        %v5228 = vpop.f32.mrb[0].mxu0
        %5229 = vmatprep.mubr.f32.mxu0 %v5021
        %5230 = vmatmul.mubr.f32.gmra.mrb[0].mxu0 %v5019
        %v5231 = vpop.f32.mrb[0].mxu0
        %v5232 = vadd.f32 %v5127, %v5231
        %v5233 = vpop.f32.mrb[0].mxu0
        %5234 = vmatprep.mubr.f32.mxu0 %v5027
        %5235 = vmatmul.mubr.f32.gmra.mrb[0].mxu0 %v5025
        %v5236 = vpop.f32.mrb[0].mxu0
        %v5237 = vadd.f32 %v5132, %v5236
        %v5238 = vpop.f32.mrb[0].mxu0
        %5239 = vmatprep.mubr.f32.mxu0 %v5033
        %5240 = vmatmul.mubr.f32.gmra.mrb[0].mxu0 %v5031
        %v5241 = vpop.f32.mrb[0].mxu0
        %v5242 = vadd.f32 %v5137, %v5241
        %v5243 = vpop.f32.mrb[0].mxu0
        %5244 = vdwg.mxu0
        %v5245 = vxor.u32 %v5207, 2147483648
        %v5246 = vxor.u32 %v5212, 2147483648
        %v5247 = vxor.u32 %v5217, 2147483648
        %v5248 = vxor.u32 %v5222, 2147483648
        %v5249 = vxor.u32 %v5227, 2147483648
        %v5250 = vxor.u32 %v5232, 2147483648
        %v5251 = vxor.u32 %v5237, 2147483648
        %v5252 = vxor.u32 %v5242, 2147483648
        %v5253 = vmul.f32 %v5245, 1.442695
        %v5254 = vpow.pop %v5253
        %v5255 = vmul.f32 %v5246, 1.442695
        %v5256 = vpow.pop %v5255
        %v5257 = vmul.f32 %v5247, 1.442695
        %v5258 = vpow.pop %v5257
        %v5259 = vmul.f32 %v5248, 1.442695
        %v5260 = vpow.pop %v5259
        %v5261 = vmul.f32 %v5249, 1.442695
        %v5262 = vpow.pop %v5261
        %v5263 = vmul.f32 %v5250, 1.442695
        %v5264 = vpow.pop %v5263
        %v5265 = vmul.f32 %v5251, 1.442695
        %v5266 = vpow.pop %v5265
        %v5267 = vmul.f32 %v5252, 1.442695
        %v5268 = vpow.pop %v5267
        %v5269 = vadd.f32 %v5254, 1.0
        %v5270 = vadd.f32 %v5256, 1.0
        %v5271 = vadd.f32 %v5258, 1.0
        %v5272 = vadd.f32 %v5260, 1.0
        %v5273 = vadd.f32 %v5262, 1.0
        %v5274 = vadd.f32 %v5264, 1.0
        %v5275 = vadd.f32 %v5266, 1.0
        %v5276 = vadd.f32 %v5268, 1.0
        %v5277 = vrcp.pop %v5269
        %v5278 = vmul.f32 1.0, %v5277
        %v5279 = vrcp.pop %v5270
        %v5280 = vmul.f32 1.0, %v5279
        %v5281 = vrcp.pop %v5271
        %v5282 = vmul.f32 1.0, %v5281
        %v5283 = vrcp.pop %v5272
        %v5284 = vmul.f32 1.0, %v5283
        %v5285 = vrcp.pop %v5273
        %v5286 = vmul.f32 1.0, %v5285
        %v5287 = vrcp.pop %v5274
        %v5288 = vmul.f32 1.0, %v5287
        %v5289 = vrcp.pop %v5275
        %v5290 = vmul.f32 1.0, %v5289
        %v5291 = vrcp.pop %v5276
        %v5292 = vmul.f32 1.0, %v5291
        %5293 = vxpose.xlu0.b32.start [1/16] %v5278, 128
        %5294 = vxpose.xlu0.b32.cont [2/16] %v5280, 128
        %5295 = vxpose.xlu0.b32.cont [3/16] %v5282, 128
        %5296 = vxpose.xlu0.b32.cont [4/16] %v5284, 128
        %5297 = vxpose.xlu0.b32.cont [5/16] %v5286, 128
        %5298 = vxpose.xlu0.b32.cont [6/16] %v5288, 128
        %5299 = vxpose.xlu0.b32.cont [7/16] %v5290, 128
        %5300 = vxpose.xlu0.b32.cont [8/16] %v5292, 128
        %5301 = vxpose.xlu0.b32.cont [9/16] 0.0, 128
        %5302 = vxpose.xlu0.b32.cont [10/16] 0.0, 128
        %5303 = vxpose.xlu0.b32.cont [11/16] 0.0, 128
        %5304 = vxpose.xlu0.b32.cont [12/16] 0.0, 128
        %5305 = vxpose.xlu0.b32.cont [13/16] 0.0, 128
        %5306 = vxpose.xlu0.b32.cont [14/16] 0.0, 128
        %5307 = vxpose.xlu0.b32.cont [15/16] 0.0, 128
        %5308 = vxpose.xlu0.b32.end [16/16] 0.0, 128
        %v5309 = vpop.trf.xlu0
        %v5310 = vpop.trf.xlu0
        %v5311 = vpop.trf.xlu0
        %v5312 = vpop.trf.xlu0
        %v5313 = vpop.trf.xlu0
        %v5314 = vpop.trf.xlu0
        %v5315 = vpop.trf.xlu0
        %v5316 = vpop.trf.xlu0
        %v5317 = vpop.trf.xlu0
        %v5318 = vpop.trf.xlu0
        %v5319 = vpop.trf.xlu0
        %v5320 = vpop.trf.xlu0
        %v5321 = vpop.trf.xlu0
        %v5322 = vpop.trf.xlu0
        %v5323 = vpop.trf.xlu0
        %v5324 = vpop.trf.xlu0
        %v5326 = vsel %vm968, %v5309, 0
        %5328 = vmatprep.subr.mxu0 %v4878
        %5329 = vmatpush1.msra.mxu0 %v4876
        %5330 = vmatprep.subr.mxu0 %v4884
        %5331 = vmatpush1.msra.mxu0 %v4882
        %5332 = vmatprep.subr.mxu0 %v4890
        %5333 = vmatpush1.msra.mxu0 %v4888
        %5334 = vmatprep.subr.mxu0 %v4896
        %5335 = vmatpush1.msra.mxu0 %v4894
        %5336 = vmatprep.subr.mxu0 %v4902
        %5337 = vmatpush1.msra.mxu0 %v4900
        %5338 = vmatprep.subr.mxu0 %v4908
        %5339 = vmatpush1.msra.mxu0 %v4906
        %5340 = vmatprep.subr.mxu0 %v4914
        %5341 = vmatpush1.msra.mxu0 %v4912
        %5342 = vmatprep.subr.mxu0 %v4920
        %5343 = vmatpush1.msra.mxu0 %v4918
        %5344 = vmatprep.subr.mxu0 0.0
        %5345 = vmatpush1.msra.mxu0 0.0
        %5346 = vmatprep.subr.mxu0 0.0
        %5347 = vmatpush1.msra.mxu0 0.0
        %5348 = vmatprep.subr.mxu0 0.0
        %5349 = vmatpush1.msra.mxu0 0.0
        %5350 = vmatprep.subr.mxu0 0.0
        %5351 = vmatpush1.msra.mxu0 0.0
        %5352 = vmatprep.subr.mxu0 0.0
        %5353 = vmatpush1.msra.mxu0 0.0
        %5354 = vmatprep.subr.mxu0 0.0
        %5355 = vmatpush1.msra.mxu0 0.0
        %5356 = vmatprep.subr.mxu0 0.0
        %5357 = vmatpush1.msra.mxu0 0.0
        %5358 = vmatprep.subr.mxu0 0.0
        %5359 = vmatpush1.msra.mxu0 0.0
        %5360 = vmatprep.subr.mxu0 0.0
        %5361 = vmatpush1.msra.mxu0 0.0
        %5362 = vmatprep.subr.mxu0 0.0
        %5363 = vmatpush1.msra.mxu0 0.0
        %5364 = vmatprep.subr.mxu0 0.0
        %5365 = vmatpush1.msra.mxu0 0.0
        %5366 = vmatprep.subr.mxu0 0.0
        %5367 = vmatpush1.msra.mxu0 0.0
        %5368 = vmatprep.subr.mxu0 0.0
        %5369 = vmatpush1.msra.mxu0 0.0
        %5370 = vmatprep.subr.mxu0 0.0
        %5371 = vmatpush1.msra.mxu0 0.0
        %5372 = vmatprep.subr.mxu0 0.0
        %5373 = vmatpush1.msra.mxu0 0.0
        %5374 = vmatprep.subr.mxu0 0.0
        %5375 = vmatpush1.msra.mxu0 0.0
        %5376 = vmatprep.subr.mxu0 0.0
        %5377 = vmatpush1.msra.mxu0 0.0
        %5378 = vmatprep.subr.mxu0 0.0
        %5379 = vmatpush1.msra.mxu0 0.0
        %5380 = vmatprep.subr.mxu0 0.0
        %5381 = vmatpush1.msra.mxu0 0.0
        %5382 = vmatprep.subr.mxu0 0.0
        %5383 = vmatpush1.msra.mxu0 0.0
        %5384 = vmatprep.subr.mxu0 0.0
        %5385 = vmatpush1.msra.mxu0 0.0
        %5386 = vmatprep.subr.mxu0 0.0
        %5387 = vmatpush1.msra.mxu0 0.0
        %5388 = vmatprep.subr.mxu0 0.0
        %5389 = vmatpush1.msra.mxu0 0.0
        %5390 = vmatprep.subr.mxu0 0.0
        %5391 = vmatpush1.msra.mxu0 0.0
        %5392 = vmatprep.mubr.f32.mxu0 0.0
        %5393 = vmatmul.mubr.f32.gmra.mrb[0].mxu0 %v5326
        %v5394 = vpop.f32.mrb[0].mxu0
        %v5395 = vadd.f32 0.0, %v5394
        %v5396 = vpop.f32.mrb[0].mxu0
        %v5397 = vadd.f32 0.0, %v5396
        %5398 = vdwg.mxu0
        %5399 = vmatprep.subr.mxu0 %v4991
        %5400 = vmatpush1.msra.mxu0 %v4989
        %5401 = vmatprep.subr.mxu0 %v4997
        %5402 = vmatpush1.msra.mxu0 %v4995
        %5403 = vmatprep.subr.mxu0 %v5003
        %5404 = vmatpush1.msra.mxu0 %v5001
        %5405 = vmatprep.subr.mxu0 %v5009
        %5406 = vmatpush1.msra.mxu0 %v5007
        %5407 = vmatprep.subr.mxu0 %v5015
        %5408 = vmatpush1.msra.mxu0 %v5013
        %5409 = vmatprep.subr.mxu0 %v5021
        %5410 = vmatpush1.msra.mxu0 %v5019
        %5411 = vmatprep.subr.mxu0 %v5027
        %5412 = vmatpush1.msra.mxu0 %v5025
        %5413 = vmatprep.subr.mxu0 %v5033
        %5414 = vmatpush1.msra.mxu0 %v5031
        %5415 = vmatprep.subr.mxu0 0.0
        %5416 = vmatpush1.msra.mxu0 0.0
        %5417 = vmatprep.subr.mxu0 0.0
        %5418 = vmatpush1.msra.mxu0 0.0
        %5419 = vmatprep.subr.mxu0 0.0
        %5420 = vmatpush1.msra.mxu0 0.0
        %5421 = vmatprep.subr.mxu0 0.0
        %5422 = vmatpush1.msra.mxu0 0.0
        %5423 = vmatprep.subr.mxu0 0.0
        %5424 = vmatpush1.msra.mxu0 0.0
        %5425 = vmatprep.subr.mxu0 0.0
        %5426 = vmatpush1.msra.mxu0 0.0
        %5427 = vmatprep.subr.mxu0 0.0
        %5428 = vmatpush1.msra.mxu0 0.0
        %5429 = vmatprep.subr.mxu0 0.0
        %5430 = vmatpush1.msra.mxu0 0.0
        %5431 = vmatprep.subr.mxu0 0.0
        %5432 = vmatpush1.msra.mxu0 0.0
        %5433 = vmatprep.subr.mxu0 0.0
        %5434 = vmatpush1.msra.mxu0 0.0
        %5435 = vmatprep.subr.mxu0 0.0
        %5436 = vmatpush1.msra.mxu0 0.0
        %5437 = vmatprep.subr.mxu0 0.0
        %5438 = vmatpush1.msra.mxu0 0.0
        %5439 = vmatprep.subr.mxu0 0.0
        %5440 = vmatpush1.msra.mxu0 0.0
        %5441 = vmatprep.subr.mxu0 0.0
        %5442 = vmatpush1.msra.mxu0 0.0
        %5443 = vmatprep.subr.mxu0 0.0
        %5444 = vmatpush1.msra.mxu0 0.0
        %5445 = vmatprep.subr.mxu0 0.0
        %5446 = vmatpush1.msra.mxu0 0.0
        %5447 = vmatprep.subr.mxu0 0.0
        %5448 = vmatpush1.msra.mxu0 0.0
        %5449 = vmatprep.subr.mxu0 0.0
        %5450 = vmatpush1.msra.mxu0 0.0
        %5451 = vmatprep.subr.mxu0 0.0
        %5452 = vmatpush1.msra.mxu0 0.0
        %5453 = vmatprep.subr.mxu0 0.0
        %5454 = vmatpush1.msra.mxu0 0.0
        %5455 = vmatprep.subr.mxu0 0.0
        %5456 = vmatpush1.msra.mxu0 0.0
        %5457 = vmatprep.subr.mxu0 0.0
        %5458 = vmatpush1.msra.mxu0 0.0
        %5459 = vmatprep.subr.mxu0 0.0
        %5460 = vmatpush1.msra.mxu0 0.0
        %5461 = vmatprep.subr.mxu0 0.0
        %5462 = vmatpush1.msra.mxu0 0.0
        %5463 = vmatprep.mubr.f32.mxu0 0.0
        %5464 = vmatmul.mubr.f32.gmra.mrb[0].mxu0 %v5326
        %v5465 = vpop.f32.mrb[0].mxu0
        %v5466 = vadd.f32 0.0, %v5465
        %v5467 = vpop.f32.mrb[0].mxu0
        %v5468 = vadd.f32 0.0, %v5467
        %5469 = vdwg.mxu0
        %v5470 = vmul.f32 %v5395, 0.015625
        %v5471 = vmul.f32 %v5397, 0.015625
        %v5472 = vmul.f32 %v5466, 0.015625
        %v5473 = vmul.f32 %v5468, 0.015625
        %s5474 = scalar_lea.vmem %s280, 224
        %v5475 = vld [vmem:[%s5474] sm:$0xff]
        %v5476 = vld [vmem:[%s5474 + $0x8] sm:$0xff]
        %v5477 = vld [vmem:[%s5474 + $0x10] sm:$0xff]
        %v5478 = vld [vmem:[%s5474 + $0x18] sm:$0xff]
        %5479 = vxpose.xlu0.b32.start [1/16] %v5475, 128
        %5480 = vxpose.xlu0.b32.cont [2/16] %v5476, 128
        %5481 = vxpose.xlu0.b32.cont [3/16] %v5477, 128
        %5482 = vxpose.xlu0.b32.cont [4/16] %v5478, 128
        %5483 = vxpose.xlu0.b32.cont [5/16] 0.0, 128
        %5484 = vxpose.xlu0.b32.cont [6/16] 0.0, 128
        %5485 = vxpose.xlu0.b32.cont [7/16] 0.0, 128
        %5486 = vxpose.xlu0.b32.cont [8/16] 0.0, 128
        %5487 = vxpose.xlu0.b32.cont [9/16] 0.0, 128
        %5488 = vxpose.xlu0.b32.cont [10/16] 0.0, 128
        %5489 = vxpose.xlu0.b32.cont [11/16] 0.0, 128
        %5490 = vxpose.xlu0.b32.cont [12/16] 0.0, 128
        %5491 = vxpose.xlu0.b32.cont [13/16] 0.0, 128
        %5492 = vxpose.xlu0.b32.cont [14/16] 0.0, 128
        %5493 = vxpose.xlu0.b32.cont [15/16] 0.0, 128
        %5494 = vxpose.xlu0.b32.end [16/16] 0.0, 128
        %v5495 = vpop.trf.xlu0
        %v5496 = vpop.trf.xlu0
        %v5497 = vpop.trf.xlu0
        %v5498 = vpop.trf.xlu0
        %v5499 = vpop.trf.xlu0
        %v5500 = vpop.trf.xlu0
        %v5501 = vpop.trf.xlu0
        %v5502 = vpop.trf.xlu0
        %v5503 = vpop.trf.xlu0
        %v5504 = vpop.trf.xlu0
        %v5505 = vpop.trf.xlu0
        %v5506 = vpop.trf.xlu0
        %v5507 = vpop.trf.xlu0
        %v5508 = vpop.trf.xlu0
        %v5509 = vpop.trf.xlu0
        %v5510 = vpop.trf.xlu0
        %v5512 = vsel %vm421, %v5495, 0
        %v5515 = vsel %vm421, %v5496, 0
        %v5518 = vsel %vm421, %v5497, 0
        %v5521 = vsel %vm421, %v5498, 0
        %v5524 = vsel %vm421, %v5499, 0
        %v5527 = vsel %vm421, %v5500, 0
        %v5530 = vsel %vm421, %v5501, 0
        %v5533 = vsel %vm421, %v5502, 0
        %5535 = vmatprep.subr.mxu0 %v283
        %5536 = vmatpush1.msra.mxu0 %v282
        %5537 = vmatprep.subr.mxu0 %v287
        %5538 = vmatpush1.msra.mxu0 %v286
        %5539 = vmatprep.subr.mxu0 %v291
        %5540 = vmatpush1.msra.mxu0 %v290
        %5541 = vmatprep.subr.mxu0 %v295
        %5542 = vmatpush1.msra.mxu0 %v294
        %5543 = vmatprep.subr.mxu0 0.0
        %5544 = vmatpush1.msra.mxu0 0.0
        %5545 = vmatprep.subr.mxu0 0.0
        %5546 = vmatpush1.msra.mxu0 0.0
        %5547 = vmatprep.subr.mxu0 0.0
        %5548 = vmatpush1.msra.mxu0 0.0
        %5549 = vmatprep.subr.mxu0 0.0
        %5550 = vmatpush1.msra.mxu0 0.0
        %5551 = vmatprep.subr.mxu0 0.0
        %5552 = vmatpush1.msra.mxu0 0.0
        %5553 = vmatprep.subr.mxu0 0.0
        %5554 = vmatpush1.msra.mxu0 0.0
        %5555 = vmatprep.subr.mxu0 0.0
        %5556 = vmatpush1.msra.mxu0 0.0
        %5557 = vmatprep.subr.mxu0 0.0
        %5558 = vmatpush1.msra.mxu0 0.0
        %5559 = vmatprep.subr.mxu0 0.0
        %5560 = vmatpush1.msra.mxu0 0.0
        %5561 = vmatprep.subr.mxu0 0.0
        %5562 = vmatpush1.msra.mxu0 0.0
        %5563 = vmatprep.subr.mxu0 0.0
        %5564 = vmatpush1.msra.mxu0 0.0
        %5565 = vmatprep.subr.mxu0 0.0
        %5566 = vmatpush1.msra.mxu0 0.0
        %5567 = vmatprep.subr.mxu0 0.0
        %5568 = vmatpush1.msra.mxu0 0.0
        %5569 = vmatprep.subr.mxu0 0.0
        %5570 = vmatpush1.msra.mxu0 0.0
        %5571 = vmatprep.subr.mxu0 0.0
        %5572 = vmatpush1.msra.mxu0 0.0
        %5573 = vmatprep.subr.mxu0 0.0
        %5574 = vmatpush1.msra.mxu0 0.0
        %5575 = vmatprep.subr.mxu0 0.0
        %5576 = vmatpush1.msra.mxu0 0.0
        %5577 = vmatprep.subr.mxu0 0.0
        %5578 = vmatpush1.msra.mxu0 0.0
        %5579 = vmatprep.subr.mxu0 0.0
        %5580 = vmatpush1.msra.mxu0 0.0
        %5581 = vmatprep.subr.mxu0 0.0
        %5582 = vmatpush1.msra.mxu0 0.0
        %5583 = vmatprep.subr.mxu0 0.0
        %5584 = vmatpush1.msra.mxu0 0.0
        %5585 = vmatprep.subr.mxu0 0.0
        %5586 = vmatpush1.msra.mxu0 0.0
        %5587 = vmatprep.subr.mxu0 0.0
        %5588 = vmatpush1.msra.mxu0 0.0
        %5589 = vmatprep.subr.mxu0 0.0
        %5590 = vmatpush1.msra.mxu0 0.0
        %5591 = vmatprep.subr.mxu0 0.0
        %5592 = vmatpush1.msra.mxu0 0.0
        %5593 = vmatprep.subr.mxu0 0.0
        %5594 = vmatpush1.msra.mxu0 0.0
        %5595 = vmatprep.subr.mxu0 0.0
        %5596 = vmatpush1.msra.mxu0 0.0
        %5597 = vmatprep.subr.mxu0 0.0
        %5598 = vmatpush1.msra.mxu0 0.0
        %5599 = vmatprep.mubr.f32.mxu0 0.0
        %5600 = vmatmul.mubr.f32.gmra.mrb[0].mxu0 %v5512
        %v5601 = vpop.f32.mrb[0].mxu0
        %v5602 = vadd.f32 %v372, %v5601
        %v5603 = vpop.f32.mrb[0].mxu0
        %v5604 = vadd.f32 %v376, %v5603
        %5605 = vmatprep.mubr.f32.mxu0 0.0
        %5606 = vmatmul.mubr.f32.gmra.mrb[0].mxu0 %v5515
        %v5607 = vpop.f32.mrb[0].mxu0
        %v5608 = vadd.f32 %v372, %v5607
        %v5609 = vpop.f32.mrb[0].mxu0
        %v5610 = vadd.f32 %v376, %v5609
        %5611 = vmatprep.mubr.f32.mxu0 0.0
        %5612 = vmatmul.mubr.f32.gmra.mrb[0].mxu0 %v5518
        %v5613 = vpop.f32.mrb[0].mxu0
        %v5614 = vadd.f32 %v372, %v5613
        %v5615 = vpop.f32.mrb[0].mxu0
        %v5616 = vadd.f32 %v376, %v5615
        %5617 = vmatprep.mubr.f32.mxu0 0.0
        %5618 = vmatmul.mubr.f32.gmra.mrb[0].mxu0 %v5521
        %v5619 = vpop.f32.mrb[0].mxu0
        %v5620 = vadd.f32 %v372, %v5619
        %v5621 = vpop.f32.mrb[0].mxu0
        %v5622 = vadd.f32 %v376, %v5621
        %5623 = vmatprep.mubr.f32.mxu0 0.0
        %5624 = vmatmul.mubr.f32.gmra.mrb[0].mxu0 %v5524
        %v5625 = vpop.f32.mrb[0].mxu0
        %v5626 = vadd.f32 %v372, %v5625
        %v5627 = vpop.f32.mrb[0].mxu0
        %v5628 = vadd.f32 %v376, %v5627
        %5629 = vmatprep.mubr.f32.mxu0 0.0
        %5630 = vmatmul.mubr.f32.gmra.mrb[0].mxu0 %v5527
        %v5631 = vpop.f32.mrb[0].mxu0
        %v5632 = vadd.f32 %v372, %v5631
        %v5633 = vpop.f32.mrb[0].mxu0
        %v5634 = vadd.f32 %v376, %v5633
        %5635 = vmatprep.mubr.f32.mxu0 0.0
        %5636 = vmatmul.mubr.f32.gmra.mrb[0].mxu0 %v5530
        %v5637 = vpop.f32.mrb[0].mxu0
        %v5638 = vadd.f32 %v372, %v5637
        %v5639 = vpop.f32.mrb[0].mxu0
        %v5640 = vadd.f32 %v376, %v5639
        %5641 = vmatprep.mubr.f32.mxu0 0.0
        %5642 = vmatmul.mubr.f32.gmra.mrb[0].mxu0 %v5533
        %v5643 = vpop.f32.mrb[0].mxu0
        %v5644 = vadd.f32 %v372, %v5643
        %v5645 = vpop.f32.mrb[0].mxu0
        %v5646 = vadd.f32 %v376, %v5645
        %5647 = vdwg.mxu0
        %5648 = vmatprep.subr.mxu0 %v285
        %5649 = vmatpush1.msra.mxu0 %v284
        %5650 = vmatprep.subr.mxu0 %v289
        %5651 = vmatpush1.msra.mxu0 %v288
        %5652 = vmatprep.subr.mxu0 %v293
        %5653 = vmatpush1.msra.mxu0 %v292
        %5654 = vmatprep.subr.mxu0 %v297
        %5655 = vmatpush1.msra.mxu0 %v296
        %5656 = vmatprep.subr.mxu0 0.0
        %5657 = vmatpush1.msra.mxu0 0.0
        %5658 = vmatprep.subr.mxu0 0.0
        %5659 = vmatpush1.msra.mxu0 0.0
        %5660 = vmatprep.subr.mxu0 0.0
        %5661 = vmatpush1.msra.mxu0 0.0
        %5662 = vmatprep.subr.mxu0 0.0
        %5663 = vmatpush1.msra.mxu0 0.0
        %5664 = vmatprep.subr.mxu0 0.0
        %5665 = vmatpush1.msra.mxu0 0.0
        %5666 = vmatprep.subr.mxu0 0.0
        %5667 = vmatpush1.msra.mxu0 0.0
        %5668 = vmatprep.subr.mxu0 0.0
        %5669 = vmatpush1.msra.mxu0 0.0
        %5670 = vmatprep.subr.mxu0 0.0
        %5671 = vmatpush1.msra.mxu0 0.0
        %5672 = vmatprep.subr.mxu0 0.0
        %5673 = vmatpush1.msra.mxu0 0.0
        %5674 = vmatprep.subr.mxu0 0.0
        %5675 = vmatpush1.msra.mxu0 0.0
        %5676 = vmatprep.subr.mxu0 0.0
        %5677 = vmatpush1.msra.mxu0 0.0
        %5678 = vmatprep.subr.mxu0 0.0
        %5679 = vmatpush1.msra.mxu0 0.0
        %5680 = vmatprep.subr.mxu0 0.0
        %5681 = vmatpush1.msra.mxu0 0.0
        %5682 = vmatprep.subr.mxu0 0.0
        %5683 = vmatpush1.msra.mxu0 0.0
        %5684 = vmatprep.subr.mxu0 0.0
        %5685 = vmatpush1.msra.mxu0 0.0
        %5686 = vmatprep.subr.mxu0 0.0
        %5687 = vmatpush1.msra.mxu0 0.0
        %5688 = vmatprep.subr.mxu0 0.0
        %5689 = vmatpush1.msra.mxu0 0.0
        %5690 = vmatprep.subr.mxu0 0.0
        %5691 = vmatpush1.msra.mxu0 0.0
        %5692 = vmatprep.subr.mxu0 0.0
        %5693 = vmatpush1.msra.mxu0 0.0
        %5694 = vmatprep.subr.mxu0 0.0
        %5695 = vmatpush1.msra.mxu0 0.0
        %5696 = vmatprep.subr.mxu0 0.0
        %5697 = vmatpush1.msra.mxu0 0.0
        %5698 = vmatprep.subr.mxu0 0.0
        %5699 = vmatpush1.msra.mxu0 0.0
        %5700 = vmatprep.subr.mxu0 0.0
        %5701 = vmatpush1.msra.mxu0 0.0
        %5702 = vmatprep.subr.mxu0 0.0
        %5703 = vmatpush1.msra.mxu0 0.0
        %5704 = vmatprep.subr.mxu0 0.0
        %5705 = vmatpush1.msra.mxu0 0.0
        %5706 = vmatprep.subr.mxu0 0.0
        %5707 = vmatpush1.msra.mxu0 0.0
        %5708 = vmatprep.subr.mxu0 0.0
        %5709 = vmatpush1.msra.mxu0 0.0
        %5710 = vmatprep.subr.mxu0 0.0
        %5711 = vmatpush1.msra.mxu0 0.0
        %5712 = vmatprep.mubr.f32.mxu0 0.0
        %5713 = vmatmul.mubr.f32.gmra.mrb[0].mxu0 %v5512
        %v5714 = vpop.f32.mrb[0].mxu0
        %v5715 = vadd.f32 %v380, %v5714
        %v5716 = vpop.f32.mrb[0].mxu0
        %v5717 = vadd.f32 %v384, %v5716
        %5718 = vmatprep.mubr.f32.mxu0 0.0
        %5719 = vmatmul.mubr.f32.gmra.mrb[0].mxu0 %v5515
        %v5720 = vpop.f32.mrb[0].mxu0
        %v5721 = vadd.f32 %v380, %v5720
        %v5722 = vpop.f32.mrb[0].mxu0
        %v5723 = vadd.f32 %v384, %v5722
        %5724 = vmatprep.mubr.f32.mxu0 0.0
        %5725 = vmatmul.mubr.f32.gmra.mrb[0].mxu0 %v5518
        %v5726 = vpop.f32.mrb[0].mxu0
        %v5727 = vadd.f32 %v380, %v5726
        %v5728 = vpop.f32.mrb[0].mxu0
        %v5729 = vadd.f32 %v384, %v5728
        %5730 = vmatprep.mubr.f32.mxu0 0.0
        %5731 = vmatmul.mubr.f32.gmra.mrb[0].mxu0 %v5521
        %v5732 = vpop.f32.mrb[0].mxu0
        %v5733 = vadd.f32 %v380, %v5732
        %v5734 = vpop.f32.mrb[0].mxu0
        %v5735 = vadd.f32 %v384, %v5734
        %5736 = vmatprep.mubr.f32.mxu0 0.0
        %5737 = vmatmul.mubr.f32.gmra.mrb[0].mxu0 %v5524
        %v5738 = vpop.f32.mrb[0].mxu0
        %v5739 = vadd.f32 %v380, %v5738
        %v5740 = vpop.f32.mrb[0].mxu0
        %v5741 = vadd.f32 %v384, %v5740
        %5742 = vmatprep.mubr.f32.mxu0 0.0
        %5743 = vmatmul.mubr.f32.gmra.mrb[0].mxu0 %v5527
        %v5744 = vpop.f32.mrb[0].mxu0
        %v5745 = vadd.f32 %v380, %v5744
        %v5746 = vpop.f32.mrb[0].mxu0
        %v5747 = vadd.f32 %v384, %v5746
        %5748 = vmatprep.mubr.f32.mxu0 0.0
        %5749 = vmatmul.mubr.f32.gmra.mrb[0].mxu0 %v5530
        %v5750 = vpop.f32.mrb[0].mxu0
        %v5751 = vadd.f32 %v380, %v5750
        %v5752 = vpop.f32.mrb[0].mxu0
        %v5753 = vadd.f32 %v384, %v5752
        %5754 = vmatprep.mubr.f32.mxu0 0.0
        %5755 = vmatmul.mubr.f32.gmra.mrb[0].mxu0 %v5533
        %v5756 = vpop.f32.mrb[0].mxu0
        %v5757 = vadd.f32 %v380, %v5756
        %v5758 = vpop.f32.mrb[0].mxu0
        %v5759 = vadd.f32 %v384, %v5758
        %5760 = vdwg.mxu0
        %5761 = vmatprep.subr.mxu0 0.0
        %5762 = vmatpush1.msra.mxu0 %v299
        %5763 = vmatprep.subr.mxu0 0.0
        %5764 = vmatpush1.msra.mxu0 %v300
        %5765 = vmatprep.subr.mxu0 0.0
        %5766 = vmatpush1.msra.mxu0 %v301
        %5767 = vmatprep.subr.mxu0 0.0
        %5768 = vmatpush1.msra.mxu0 %v302
        %5769 = vmatprep.subr.mxu0 0.0
        %5770 = vmatpush1.msra.mxu0 %v303
        %5771 = vmatprep.subr.mxu0 0.0
        %5772 = vmatpush1.msra.mxu0 %v304
        %5773 = vmatprep.subr.mxu0 0.0
        %5774 = vmatpush1.msra.mxu0 %v305
        %5775 = vmatprep.subr.mxu0 0.0
        %5776 = vmatpush1.msra.mxu0 %v306
        %5777 = vmatprep.subr.mxu0 0.0
        %5778 = vmatpush1.msra.mxu0 %v307
        %5779 = vmatprep.subr.mxu0 0.0
        %5780 = vmatpush1.msra.mxu0 %v308
        %5781 = vmatprep.subr.mxu0 0.0
        %5782 = vmatpush1.msra.mxu0 %v309
        %5783 = vmatprep.subr.mxu0 0.0
        %5784 = vmatpush1.msra.mxu0 %v310
        %5785 = vmatprep.subr.mxu0 0.0
        %5786 = vmatpush1.msra.mxu0 %v311
        %5787 = vmatprep.subr.mxu0 0.0
        %5788 = vmatpush1.msra.mxu0 %v312
        %5789 = vmatprep.subr.mxu0 0.0
        %5790 = vmatpush1.msra.mxu0 %v313
        %5791 = vmatprep.subr.mxu0 0.0
        %5792 = vmatpush1.msra.mxu0 %v314
        %5793 = vmatprep.subr.mxu0 0.0
        %5794 = vmatpush1.msra.mxu0 %v315
        %5795 = vmatprep.subr.mxu0 0.0
        %5796 = vmatpush1.msra.mxu0 %v316
        %5797 = vmatprep.subr.mxu0 0.0
        %5798 = vmatpush1.msra.mxu0 %v317
        %5799 = vmatprep.subr.mxu0 0.0
        %5800 = vmatpush1.msra.mxu0 %v318
        %5801 = vmatprep.subr.mxu0 0.0
        %5802 = vmatpush1.msra.mxu0 %v319
        %5803 = vmatprep.subr.mxu0 0.0
        %5804 = vmatpush1.msra.mxu0 %v320
        %5805 = vmatprep.subr.mxu0 0.0
        %5806 = vmatpush1.msra.mxu0 %v321
        %5807 = vmatprep.subr.mxu0 0.0
        %5808 = vmatpush1.msra.mxu0 %v322
        %5809 = vmatprep.subr.mxu0 0.0
        %5810 = vmatpush1.msra.mxu0 %v323
        %5811 = vmatprep.subr.mxu0 0.0
        %5812 = vmatpush1.msra.mxu0 %v324
        %5813 = vmatprep.subr.mxu0 0.0
        %5814 = vmatpush1.msra.mxu0 %v325
        %5815 = vmatprep.subr.mxu0 0.0
        %5816 = vmatpush1.msra.mxu0 %v326
        %5817 = vmatprep.subr.mxu0 0.0
        %5818 = vmatpush1.msra.mxu0 %v327
        %5819 = vmatprep.subr.mxu0 0.0
        %5820 = vmatpush1.msra.mxu0 %v328
        %5821 = vmatprep.subr.mxu0 0.0
        %5822 = vmatpush1.msra.mxu0 %v329
        %5823 = vmatprep.subr.mxu0 0.0
        %5824 = vmatpush1.msra.mxu0 %v330
        %5825 = vmatprep.mubr.f32.mxu0 %v5604
        %5826 = vmatmul.mubr.f32.gmra.mrb[0].mxu0 %v5602
        %v5827 = vpop.f32.mrb[0].mxu0
        %v5828 = vadd.f32 %v676, %v5827
        %v5829 = vpop.f32.mrb[0].mxu0
        %5830 = vmatprep.mubr.f32.mxu0 %v5610
        %5831 = vmatmul.mubr.f32.gmra.mrb[0].mxu0 %v5608
        %v5832 = vpop.f32.mrb[0].mxu0
        %v5833 = vadd.f32 %v676, %v5832
        %v5834 = vpop.f32.mrb[0].mxu0
        %5835 = vmatprep.mubr.f32.mxu0 %v5616
        %5836 = vmatmul.mubr.f32.gmra.mrb[0].mxu0 %v5614
        %v5837 = vpop.f32.mrb[0].mxu0
        %v5838 = vadd.f32 %v676, %v5837
        %v5839 = vpop.f32.mrb[0].mxu0
        %5840 = vmatprep.mubr.f32.mxu0 %v5622
        %5841 = vmatmul.mubr.f32.gmra.mrb[0].mxu0 %v5620
        %v5842 = vpop.f32.mrb[0].mxu0
        %v5843 = vadd.f32 %v676, %v5842
        %v5844 = vpop.f32.mrb[0].mxu0
        %5845 = vmatprep.mubr.f32.mxu0 %v5628
        %5846 = vmatmul.mubr.f32.gmra.mrb[0].mxu0 %v5626
        %v5847 = vpop.f32.mrb[0].mxu0
        %v5848 = vadd.f32 %v676, %v5847
        %v5849 = vpop.f32.mrb[0].mxu0
        %5850 = vmatprep.mubr.f32.mxu0 %v5634
        %5851 = vmatmul.mubr.f32.gmra.mrb[0].mxu0 %v5632
        %v5852 = vpop.f32.mrb[0].mxu0
        %v5853 = vadd.f32 %v676, %v5852
        %v5854 = vpop.f32.mrb[0].mxu0
        %5855 = vmatprep.mubr.f32.mxu0 %v5640
        %5856 = vmatmul.mubr.f32.gmra.mrb[0].mxu0 %v5638
        %v5857 = vpop.f32.mrb[0].mxu0
        %v5858 = vadd.f32 %v676, %v5857
        %v5859 = vpop.f32.mrb[0].mxu0
        %5860 = vmatprep.mubr.f32.mxu0 %v5646
        %5861 = vmatmul.mubr.f32.gmra.mrb[0].mxu0 %v5644
        %v5862 = vpop.f32.mrb[0].mxu0
        %v5863 = vadd.f32 %v676, %v5862
        %v5864 = vpop.f32.mrb[0].mxu0
        %5865 = vdwg.mxu0
        %5866 = vmatprep.subr.mxu0 0.0
        %5867 = vmatpush1.msra.mxu0 %v331
        %5868 = vmatprep.subr.mxu0 0.0
        %5869 = vmatpush1.msra.mxu0 %v332
        %5870 = vmatprep.subr.mxu0 0.0
        %5871 = vmatpush1.msra.mxu0 %v333
        %5872 = vmatprep.subr.mxu0 0.0
        %5873 = vmatpush1.msra.mxu0 %v334
        %5874 = vmatprep.subr.mxu0 0.0
        %5875 = vmatpush1.msra.mxu0 %v335
        %5876 = vmatprep.subr.mxu0 0.0
        %5877 = vmatpush1.msra.mxu0 %v336
        %5878 = vmatprep.subr.mxu0 0.0
        %5879 = vmatpush1.msra.mxu0 %v337
        %5880 = vmatprep.subr.mxu0 0.0
        %5881 = vmatpush1.msra.mxu0 %v338
        %5882 = vmatprep.subr.mxu0 0.0
        %5883 = vmatpush1.msra.mxu0 %v339
        %5884 = vmatprep.subr.mxu0 0.0
        %5885 = vmatpush1.msra.mxu0 %v340
        %5886 = vmatprep.subr.mxu0 0.0
        %5887 = vmatpush1.msra.mxu0 %v341
        %5888 = vmatprep.subr.mxu0 0.0
        %5889 = vmatpush1.msra.mxu0 %v342
        %5890 = vmatprep.subr.mxu0 0.0
        %5891 = vmatpush1.msra.mxu0 %v343
        %5892 = vmatprep.subr.mxu0 0.0
        %5893 = vmatpush1.msra.mxu0 %v344
        %5894 = vmatprep.subr.mxu0 0.0
        %5895 = vmatpush1.msra.mxu0 %v345
        %5896 = vmatprep.subr.mxu0 0.0
        %5897 = vmatpush1.msra.mxu0 %v346
        %5898 = vmatprep.subr.mxu0 0.0
        %5899 = vmatpush1.msra.mxu0 %v347
        %5900 = vmatprep.subr.mxu0 0.0
        %5901 = vmatpush1.msra.mxu0 %v348
        %5902 = vmatprep.subr.mxu0 0.0
        %5903 = vmatpush1.msra.mxu0 %v349
        %5904 = vmatprep.subr.mxu0 0.0
        %5905 = vmatpush1.msra.mxu0 %v350
        %5906 = vmatprep.subr.mxu0 0.0
        %5907 = vmatpush1.msra.mxu0 %v351
        %5908 = vmatprep.subr.mxu0 0.0
        %5909 = vmatpush1.msra.mxu0 %v352
        %5910 = vmatprep.subr.mxu0 0.0
        %5911 = vmatpush1.msra.mxu0 %v353
        %5912 = vmatprep.subr.mxu0 0.0
        %5913 = vmatpush1.msra.mxu0 %v354
        %5914 = vmatprep.subr.mxu0 0.0
        %5915 = vmatpush1.msra.mxu0 %v355
        %5916 = vmatprep.subr.mxu0 0.0
        %5917 = vmatpush1.msra.mxu0 %v356
        %5918 = vmatprep.subr.mxu0 0.0
        %5919 = vmatpush1.msra.mxu0 %v357
        %5920 = vmatprep.subr.mxu0 0.0
        %5921 = vmatpush1.msra.mxu0 %v358
        %5922 = vmatprep.subr.mxu0 0.0
        %5923 = vmatpush1.msra.mxu0 %v359
        %5924 = vmatprep.subr.mxu0 0.0
        %5925 = vmatpush1.msra.mxu0 %v360
        %5926 = vmatprep.subr.mxu0 0.0
        %5927 = vmatpush1.msra.mxu0 %v361
        %5928 = vmatprep.subr.mxu0 0.0
        %5929 = vmatpush1.msra.mxu0 %v362
        %5930 = vmatprep.mubr.f32.mxu0 %v5717
        %5931 = vmatmul.mubr.f32.gmra.mrb[0].mxu0 %v5715
        %v5932 = vpop.f32.mrb[0].mxu0
        %v5933 = vadd.f32 %v5828, %v5932
        %v5934 = vpop.f32.mrb[0].mxu0
        %5935 = vmatprep.mubr.f32.mxu0 %v5723
        %5936 = vmatmul.mubr.f32.gmra.mrb[0].mxu0 %v5721
        %v5937 = vpop.f32.mrb[0].mxu0
        %v5938 = vadd.f32 %v5833, %v5937
        %v5939 = vpop.f32.mrb[0].mxu0
        %5940 = vmatprep.mubr.f32.mxu0 %v5729
        %5941 = vmatmul.mubr.f32.gmra.mrb[0].mxu0 %v5727
        %v5942 = vpop.f32.mrb[0].mxu0
        %v5943 = vadd.f32 %v5838, %v5942
        %v5944 = vpop.f32.mrb[0].mxu0
        %5945 = vmatprep.mubr.f32.mxu0 %v5735
        %5946 = vmatmul.mubr.f32.gmra.mrb[0].mxu0 %v5733
        %v5947 = vpop.f32.mrb[0].mxu0
        %v5948 = vadd.f32 %v5843, %v5947
        %v5949 = vpop.f32.mrb[0].mxu0
        %5950 = vmatprep.mubr.f32.mxu0 %v5741
        %5951 = vmatmul.mubr.f32.gmra.mrb[0].mxu0 %v5739
        %v5952 = vpop.f32.mrb[0].mxu0
        %v5953 = vadd.f32 %v5848, %v5952
        %v5954 = vpop.f32.mrb[0].mxu0
        %5955 = vmatprep.mubr.f32.mxu0 %v5747
        %5956 = vmatmul.mubr.f32.gmra.mrb[0].mxu0 %v5745
        %v5957 = vpop.f32.mrb[0].mxu0
        %v5958 = vadd.f32 %v5853, %v5957
        %v5959 = vpop.f32.mrb[0].mxu0
        %5960 = vmatprep.mubr.f32.mxu0 %v5753
        %5961 = vmatmul.mubr.f32.gmra.mrb[0].mxu0 %v5751
        %v5962 = vpop.f32.mrb[0].mxu0
        %v5963 = vadd.f32 %v5858, %v5962
        %v5964 = vpop.f32.mrb[0].mxu0
        %5965 = vmatprep.mubr.f32.mxu0 %v5759
        %5966 = vmatmul.mubr.f32.gmra.mrb[0].mxu0 %v5757
        %v5967 = vpop.f32.mrb[0].mxu0
        %v5968 = vadd.f32 %v5863, %v5967
        %v5969 = vpop.f32.mrb[0].mxu0
        %5970 = vdwg.mxu0
        %v5971 = vxor.u32 %v5933, 2147483648
        %v5972 = vxor.u32 %v5938, 2147483648
        %v5973 = vxor.u32 %v5943, 2147483648
        %v5974 = vxor.u32 %v5948, 2147483648
        %v5975 = vxor.u32 %v5953, 2147483648
        %v5976 = vxor.u32 %v5958, 2147483648
        %v5977 = vxor.u32 %v5963, 2147483648
        %v5978 = vxor.u32 %v5968, 2147483648
        %v5979 = vmul.f32 %v5971, 1.442695
        %v5980 = vpow.pop %v5979
        %v5981 = vmul.f32 %v5972, 1.442695
        %v5982 = vpow.pop %v5981
        %v5983 = vmul.f32 %v5973, 1.442695
        %v5984 = vpow.pop %v5983
        %v5985 = vmul.f32 %v5974, 1.442695
        %v5986 = vpow.pop %v5985
        %v5987 = vmul.f32 %v5975, 1.442695
        %v5988 = vpow.pop %v5987
        %v5989 = vmul.f32 %v5976, 1.442695
        %v5990 = vpow.pop %v5989
        %v5991 = vmul.f32 %v5977, 1.442695
        %v5992 = vpow.pop %v5991
        %v5993 = vmul.f32 %v5978, 1.442695
        %v5994 = vpow.pop %v5993
        %v5995 = vadd.f32 %v5980, 1.0
        %v5996 = vadd.f32 %v5982, 1.0
        %v5997 = vadd.f32 %v5984, 1.0
        %v5998 = vadd.f32 %v5986, 1.0
        %v5999 = vadd.f32 %v5988, 1.0
        %v6000 = vadd.f32 %v5990, 1.0
        %v6001 = vadd.f32 %v5992, 1.0
        %v6002 = vadd.f32 %v5994, 1.0
        %v6003 = vrcp.pop %v5995
        %v6004 = vmul.f32 1.0, %v6003
        %v6005 = vrcp.pop %v5996
        %v6006 = vmul.f32 1.0, %v6005
        %v6007 = vrcp.pop %v5997
        %v6008 = vmul.f32 1.0, %v6007
        %v6009 = vrcp.pop %v5998
        %v6010 = vmul.f32 1.0, %v6009
        %v6011 = vrcp.pop %v5999
        %v6012 = vmul.f32 1.0, %v6011
        %v6013 = vrcp.pop %v6000
        %v6014 = vmul.f32 1.0, %v6013
        %v6015 = vrcp.pop %v6001
        %v6016 = vmul.f32 1.0, %v6015
        %v6017 = vrcp.pop %v6002
        %v6018 = vmul.f32 1.0, %v6017
        %6019 = vxpose.xlu0.b32.start [1/16] %v6004, 128
        %6020 = vxpose.xlu0.b32.cont [2/16] %v6006, 128
        %6021 = vxpose.xlu0.b32.cont [3/16] %v6008, 128
        %6022 = vxpose.xlu0.b32.cont [4/16] %v6010, 128
        %6023 = vxpose.xlu0.b32.cont [5/16] %v6012, 128
        %6024 = vxpose.xlu0.b32.cont [6/16] %v6014, 128
        %6025 = vxpose.xlu0.b32.cont [7/16] %v6016, 128
        %6026 = vxpose.xlu0.b32.cont [8/16] %v6018, 128
        %6027 = vxpose.xlu0.b32.cont [9/16] 0.0, 128
        %6028 = vxpose.xlu0.b32.cont [10/16] 0.0, 128
        %6029 = vxpose.xlu0.b32.cont [11/16] 0.0, 128
        %6030 = vxpose.xlu0.b32.cont [12/16] 0.0, 128
        %6031 = vxpose.xlu0.b32.cont [13/16] 0.0, 128
        %6032 = vxpose.xlu0.b32.cont [14/16] 0.0, 128
        %6033 = vxpose.xlu0.b32.cont [15/16] 0.0, 128
        %6034 = vxpose.xlu0.b32.end [16/16] 0.0, 128
        %v6035 = vpop.trf.xlu0
        %v6036 = vpop.trf.xlu0
        %v6037 = vpop.trf.xlu0
        %v6038 = vpop.trf.xlu0
        %v6039 = vpop.trf.xlu0
        %v6040 = vpop.trf.xlu0
        %v6041 = vpop.trf.xlu0
        %v6042 = vpop.trf.xlu0
        %v6043 = vpop.trf.xlu0
        %v6044 = vpop.trf.xlu0
        %v6045 = vpop.trf.xlu0
        %v6046 = vpop.trf.xlu0
        %v6047 = vpop.trf.xlu0
        %v6048 = vpop.trf.xlu0
        %v6049 = vpop.trf.xlu0
        %v6050 = vpop.trf.xlu0
        %v6052 = vsel %vm968, %v6035, 0
        %6054 = vmatprep.subr.mxu0 %v5604
        %6055 = vmatpush1.msra.mxu0 %v5602
        %6056 = vmatprep.subr.mxu0 %v5610
        %6057 = vmatpush1.msra.mxu0 %v5608
        %6058 = vmatprep.subr.mxu0 %v5616
        %6059 = vmatpush1.msra.mxu0 %v5614
        %6060 = vmatprep.subr.mxu0 %v5622
        %6061 = vmatpush1.msra.mxu0 %v5620
        %6062 = vmatprep.subr.mxu0 %v5628
        %6063 = vmatpush1.msra.mxu0 %v5626
        %6064 = vmatprep.subr.mxu0 %v5634
        %6065 = vmatpush1.msra.mxu0 %v5632
        %6066 = vmatprep.subr.mxu0 %v5640
        %6067 = vmatpush1.msra.mxu0 %v5638
        %6068 = vmatprep.subr.mxu0 %v5646
        %6069 = vmatpush1.msra.mxu0 %v5644
        %6070 = vmatprep.subr.mxu0 0.0
        %6071 = vmatpush1.msra.mxu0 0.0
        %6072 = vmatprep.subr.mxu0 0.0
        %6073 = vmatpush1.msra.mxu0 0.0
        %6074 = vmatprep.subr.mxu0 0.0
        %6075 = vmatpush1.msra.mxu0 0.0
        %6076 = vmatprep.subr.mxu0 0.0
        %6077 = vmatpush1.msra.mxu0 0.0
        %6078 = vmatprep.subr.mxu0 0.0
        %6079 = vmatpush1.msra.mxu0 0.0
        %6080 = vmatprep.subr.mxu0 0.0
        %6081 = vmatpush1.msra.mxu0 0.0
        %6082 = vmatprep.subr.mxu0 0.0
        %6083 = vmatpush1.msra.mxu0 0.0
        %6084 = vmatprep.subr.mxu0 0.0
        %6085 = vmatpush1.msra.mxu0 0.0
        %6086 = vmatprep.subr.mxu0 0.0
        %6087 = vmatpush1.msra.mxu0 0.0
        %6088 = vmatprep.subr.mxu0 0.0
        %6089 = vmatpush1.msra.mxu0 0.0
        %6090 = vmatprep.subr.mxu0 0.0
        %6091 = vmatpush1.msra.mxu0 0.0
        %6092 = vmatprep.subr.mxu0 0.0
        %6093 = vmatpush1.msra.mxu0 0.0
        %6094 = vmatprep.subr.mxu0 0.0
        %6095 = vmatpush1.msra.mxu0 0.0
        %6096 = vmatprep.subr.mxu0 0.0
        %6097 = vmatpush1.msra.mxu0 0.0
        %6098 = vmatprep.subr.mxu0 0.0
        %6099 = vmatpush1.msra.mxu0 0.0
        %6100 = vmatprep.subr.mxu0 0.0
        %6101 = vmatpush1.msra.mxu0 0.0
        %6102 = vmatprep.subr.mxu0 0.0
        %6103 = vmatpush1.msra.mxu0 0.0
        %6104 = vmatprep.subr.mxu0 0.0
        %6105 = vmatpush1.msra.mxu0 0.0
        %6106 = vmatprep.subr.mxu0 0.0
        %6107 = vmatpush1.msra.mxu0 0.0
        %6108 = vmatprep.subr.mxu0 0.0
        %6109 = vmatpush1.msra.mxu0 0.0
        %6110 = vmatprep.subr.mxu0 0.0
        %6111 = vmatpush1.msra.mxu0 0.0
        %6112 = vmatprep.subr.mxu0 0.0
        %6113 = vmatpush1.msra.mxu0 0.0
        %6114 = vmatprep.subr.mxu0 0.0
        %6115 = vmatpush1.msra.mxu0 0.0
        %6116 = vmatprep.subr.mxu0 0.0
        %6117 = vmatpush1.msra.mxu0 0.0
        %6118 = vmatprep.mubr.f32.mxu0 0.0
        %6119 = vmatmul.mubr.f32.gmra.mrb[0].mxu0 %v6052
        %v6120 = vpop.f32.mrb[0].mxu0
        %v6121 = vadd.f32 0.0, %v6120
        %v6122 = vpop.f32.mrb[0].mxu0
        %v6123 = vadd.f32 0.0, %v6122
        %6124 = vdwg.mxu0
        %6125 = vmatprep.subr.mxu0 %v5717
        %6126 = vmatpush1.msra.mxu0 %v5715
        %6127 = vmatprep.subr.mxu0 %v5723
        %6128 = vmatpush1.msra.mxu0 %v5721
        %6129 = vmatprep.subr.mxu0 %v5729
        %6130 = vmatpush1.msra.mxu0 %v5727
        %6131 = vmatprep.subr.mxu0 %v5735
        %6132 = vmatpush1.msra.mxu0 %v5733
        %6133 = vmatprep.subr.mxu0 %v5741
        %6134 = vmatpush1.msra.mxu0 %v5739
        %6135 = vmatprep.subr.mxu0 %v5747
        %6136 = vmatpush1.msra.mxu0 %v5745
        %6137 = vmatprep.subr.mxu0 %v5753
        %6138 = vmatpush1.msra.mxu0 %v5751
        %6139 = vmatprep.subr.mxu0 %v5759
        %6140 = vmatpush1.msra.mxu0 %v5757
        %6141 = vmatprep.subr.mxu0 0.0
        %6142 = vmatpush1.msra.mxu0 0.0
        %6143 = vmatprep.subr.mxu0 0.0
        %6144 = vmatpush1.msra.mxu0 0.0
        %6145 = vmatprep.subr.mxu0 0.0
        %6146 = vmatpush1.msra.mxu0 0.0
        %6147 = vmatprep.subr.mxu0 0.0
        %6148 = vmatpush1.msra.mxu0 0.0
        %6149 = vmatprep.subr.mxu0 0.0
        %6150 = vmatpush1.msra.mxu0 0.0
        %6151 = vmatprep.subr.mxu0 0.0
        %6152 = vmatpush1.msra.mxu0 0.0
        %6153 = vmatprep.subr.mxu0 0.0
        %6154 = vmatpush1.msra.mxu0 0.0
        %6155 = vmatprep.subr.mxu0 0.0
        %6156 = vmatpush1.msra.mxu0 0.0
        %6157 = vmatprep.subr.mxu0 0.0
        %6158 = vmatpush1.msra.mxu0 0.0
        %6159 = vmatprep.subr.mxu0 0.0
        %6160 = vmatpush1.msra.mxu0 0.0
        %6161 = vmatprep.subr.mxu0 0.0
        %6162 = vmatpush1.msra.mxu0 0.0
        %6163 = vmatprep.subr.mxu0 0.0
        %6164 = vmatpush1.msra.mxu0 0.0
        %6165 = vmatprep.subr.mxu0 0.0
        %6166 = vmatpush1.msra.mxu0 0.0
        %6167 = vmatprep.subr.mxu0 0.0
        %6168 = vmatpush1.msra.mxu0 0.0
        %6169 = vmatprep.subr.mxu0 0.0
        %6170 = vmatpush1.msra.mxu0 0.0
        %6171 = vmatprep.subr.mxu0 0.0
        %6172 = vmatpush1.msra.mxu0 0.0
        %6173 = vmatprep.subr.mxu0 0.0
        %6174 = vmatpush1.msra.mxu0 0.0
        %6175 = vmatprep.subr.mxu0 0.0
        %6176 = vmatpush1.msra.mxu0 0.0
        %6177 = vmatprep.subr.mxu0 0.0
        %6178 = vmatpush1.msra.mxu0 0.0
        %6179 = vmatprep.subr.mxu0 0.0
        %6180 = vmatpush1.msra.mxu0 0.0
        %6181 = vmatprep.subr.mxu0 0.0
        %6182 = vmatpush1.msra.mxu0 0.0
        %6183 = vmatprep.subr.mxu0 0.0
        %6184 = vmatpush1.msra.mxu0 0.0
        %6185 = vmatprep.subr.mxu0 0.0
        %6186 = vmatpush1.msra.mxu0 0.0
        %6187 = vmatprep.subr.mxu0 0.0
        %6188 = vmatpush1.msra.mxu0 0.0
        %6189 = vmatprep.mubr.f32.mxu0 0.0
        %6190 = vmatmul.mubr.f32.gmra.mrb[0].mxu0 %v6052
        %v6191 = vpop.f32.mrb[0].mxu0
        %v6192 = vadd.f32 0.0, %v6191
        %v6193 = vpop.f32.mrb[0].mxu0
        %v6194 = vadd.f32 0.0, %v6193
        %6195 = vdwg.mxu0
        %v6196 = vmul.f32 %v6121, 0.015625
        %v6197 = vmul.f32 %v6123, 0.015625
        %v6198 = vmul.f32 %v6192, 0.015625
        %v6199 = vmul.f32 %v6194, 0.015625
        %v6204 = vrot.slane %v1840, 7
        %v6205 = vrot.slane %v1841, 7
        %v6206 = vrot.slane %v1842, 7
        %v6207 = vrot.slane %v1843, 7
        %v6216 = vrot.slane %v2566, 6
        %v6217 = vrot.slane %v2567, 6
        %v6218 = vrot.slane %v2568, 6
        %v6219 = vrot.slane %v2569, 6
        %v6228 = vrot.slane %v3292, 5
        %v6229 = vrot.slane %v3293, 5
        %v6230 = vrot.slane %v3294, 5
        %v6231 = vrot.slane %v3295, 5
        %v6240 = vrot.slane %v4018, 4
        %v6241 = vrot.slane %v4019, 4
        %v6242 = vrot.slane %v4020, 4
        %v6243 = vrot.slane %v4021, 4
        %v6252 = vrot.slane %v4744, 3
        %v6253 = vrot.slane %v4745, 3
        %v6254 = vrot.slane %v4746, 3
        %v6255 = vrot.slane %v4747, 3
        %v6264 = vrot.slane %v5470, 2
        %v6265 = vrot.slane %v5471, 2
        %v6266 = vrot.slane %v5472, 2
        %v6267 = vrot.slane %v5473, 2
        %v6276 = vrot.slane %v6196, 1
        %v6277 = vrot.slane %v6197, 1
        %v6278 = vrot.slane %v6198, 1
        %v6279 = vrot.slane %v6199, 1
        %vm6284 = vcmask 1040384
        %v6285 = vsel %vm6284, %v1114, %v6204
        %v6286 = vsel %vm6284, %v1115, %v6205
        %v6287 = vsel %vm6284, %v1116, %v6206
        %v6288 = vsel %vm6284, %v1117, %v6207
        %vm6289 = vcmask 1041408
        %v6290 = vsel %vm6289, %v6285, %v6216
        %v6291 = vsel %vm6289, %v6286, %v6217
        %v6292 = vsel %vm6289, %v6287, %v6218
        %v6293 = vsel %vm6289, %v6288, %v6219
        %vm6294 = vcmask 1042432
        %v6295 = vsel %vm6294, %v6290, %v6228
        %v6296 = vsel %vm6294, %v6291, %v6229
        %v6297 = vsel %vm6294, %v6292, %v6230
        %v6298 = vsel %vm6294, %v6293, %v6231
        %vm6299 = vcmask 1043456
        %v6300 = vsel %vm6299, %v6295, %v6240
        %v6301 = vsel %vm6299, %v6296, %v6241
        %v6302 = vsel %vm6299, %v6297, %v6242
        %v6303 = vsel %vm6299, %v6298, %v6243
        %vm6304 = vcmask 1044480
        %v6305 = vsel %vm6304, %v6300, %v6252
        %v6306 = vsel %vm6304, %v6301, %v6253
        %v6307 = vsel %vm6304, %v6302, %v6254
        %v6308 = vsel %vm6304, %v6303, %v6255
        %vm6309 = vcmask 1045504
        %v6310 = vsel %vm6309, %v6305, %v6264
        %v6311 = vsel %vm6309, %v6306, %v6265
        %v6312 = vsel %vm6309, %v6307, %v6266
        %v6313 = vsel %vm6309, %v6308, %v6267
        %vm6314 = vcmask 1046528
        %v6315 = vsel %vm6314, %v6310, %v6276
        %v6316 = vsel %vm6314, %v6311, %v6277
        %v6317 = vsel %vm6314, %v6312, %v6278
        %v6318 = vsel %vm6314, %v6313, %v6279
        %v6319 = vld [vmem:[%s5] sm:$0xff]
        %v6320 = vld [vmem:[%s5 + $0x8] sm:$0xff]
        %v6321 = vld [vmem:[%s5 + $0x10] sm:$0xff]
        %v6322 = vld [vmem:[%s5 + $0x18] sm:$0xff]
        %v6323 = vld [vmem:[%s5 + $0x20] sm:$0xff]
        %v6324 = vld [vmem:[%s5 + $0x28] sm:$0xff]
        %v6325 = vld [vmem:[%s5 + $0x30] sm:$0xff]
        %v6326 = vld [vmem:[%s5 + $0x38] sm:$0xff]
        %v6327 = vld [vmem:[%s5 + $0x40] sm:$0xff]
        %v6328 = vld [vmem:[%s5 + $0x48] sm:$0xff]
        %v6329 = vld [vmem:[%s5 + $0x50] sm:$0xff]
        %v6330 = vld [vmem:[%s5 + $0x58] sm:$0xff]
        %v6331 = vld [vmem:[%s5 + $0x60] sm:$0xff]
        %v6332 = vld [vmem:[%s5 + $0x68] sm:$0xff]
        %v6333 = vld [vmem:[%s5 + $0x70] sm:$0xff]
        %v6334 = vld [vmem:[%s5 + $0x78] sm:$0xff]
        %v6335 = vld [vmem:[%s5 + $0x80] sm:$0xff]
        %v6336 = vld [vmem:[%s5 + $0x88] sm:$0xff]
        %v6337 = vld [vmem:[%s5 + $0x90] sm:$0xff]
        %v6338 = vld [vmem:[%s5 + $0x98] sm:$0xff]
        %v6339 = vld [vmem:[%s5 + $0xa0] sm:$0xff]
        %v6340 = vld [vmem:[%s5 + $0xa8] sm:$0xff]
        %v6341 = vld [vmem:[%s5 + $0xb0] sm:$0xff]
        %v6342 = vld [vmem:[%s5 + $0xb8] sm:$0xff]
        %v6343 = vld [vmem:[%s5 + $0xc0] sm:$0xff]
        %v6344 = vld [vmem:[%s5 + $0xc8] sm:$0xff]
        %v6345 = vld [vmem:[%s5 + $0xd0] sm:$0xff]
        %v6346 = vld [vmem:[%s5 + $0xd8] sm:$0xff]
        %v6347 = vld [vmem:[%s5 + $0xe0] sm:$0xff]
        %v6348 = vld [vmem:[%s5 + $0xe8] sm:$0xff]
        %v6349 = vld [vmem:[%s5 + $0xf0] sm:$0xff]
        %v6350 = vld [vmem:[%s5 + $0xf8] sm:$0xff]
        %v6351 = vld [vmem:[%s5 + $0x100] sm:$0xff]
        %v6352 = vld [vmem:[%s5 + $0x108] sm:$0xff]
        %v6353 = vld [vmem:[%s5 + $0x110] sm:$0xff]
        %v6354 = vld [vmem:[%s5 + $0x118] sm:$0xff]
        %v6355 = vld [vmem:[%s5 + $0x120] sm:$0xff]
        %v6356 = vld [vmem:[%s5 + $0x128] sm:$0xff]
        %v6357 = vld [vmem:[%s5 + $0x130] sm:$0xff]
        %v6358 = vld [vmem:[%s5 + $0x138] sm:$0xff]
        %v6359 = vld [vmem:[%s5 + $0x140] sm:$0xff]
        %v6360 = vld [vmem:[%s5 + $0x148] sm:$0xff]
        %v6361 = vld [vmem:[%s5 + $0x150] sm:$0xff]
        %v6362 = vld [vmem:[%s5 + $0x158] sm:$0xff]
        %v6363 = vld [vmem:[%s5 + $0x160] sm:$0xff]
        %v6364 = vld [vmem:[%s5 + $0x168] sm:$0xff]
        %v6365 = vld [vmem:[%s5 + $0x170] sm:$0xff]
        %v6366 = vld [vmem:[%s5 + $0x178] sm:$0xff]
        %v6367 = vld [vmem:[%s5 + $0x180] sm:$0xff]
        %v6368 = vld [vmem:[%s5 + $0x188] sm:$0xff]
        %v6369 = vld [vmem:[%s5 + $0x190] sm:$0xff]
        %v6370 = vld [vmem:[%s5 + $0x198] sm:$0xff]
        %v6371 = vld [vmem:[%s5 + $0x1a0] sm:$0xff]
        %v6372 = vld [vmem:[%s5 + $0x1a8] sm:$0xff]
        %v6373 = vld [vmem:[%s5 + $0x1b0] sm:$0xff]
        %v6374 = vld [vmem:[%s5 + $0x1b8] sm:$0xff]
        %v6375 = vld [vmem:[%s5 + $0x1c0] sm:$0xff]
        %v6376 = vld [vmem:[%s5 + $0x1c8] sm:$0xff]
        %v6377 = vld [vmem:[%s5 + $0x1d0] sm:$0xff]
        %v6378 = vld [vmem:[%s5 + $0x1d8] sm:$0xff]
        %v6379 = vld [vmem:[%s5 + $0x1e0] sm:$0xff]
        %v6380 = vld [vmem:[%s5 + $0x1e8] sm:$0xff]
        %v6381 = vld [vmem:[%s5 + $0x1f0] sm:$0xff]
        %v6382 = vld [vmem:[%s5 + $0x1f8] sm:$0xff]
        %v6383 = vld [vmem:[%s6] sm:$0x1]
        %v6384 = vlaneseq
        %v6385 = vshrl.u32 %v6384, 7
        %v6386 = vsub.s32 0, %v6385
        %v6387 = vrot.slane %v6383, %v6386
        %6388 = vmatprep.subr.mxu0 0.0
        %6389 = vmatpush1.msra.mxu0 %v6319
        %6390 = vmatprep.subr.mxu0 0.0
        %6391 = vmatpush1.msra.mxu0 %v6320
        %6392 = vmatprep.subr.mxu0 0.0
        %6393 = vmatpush1.msra.mxu0 %v6321
        %6394 = vmatprep.subr.mxu0 0.0
        %6395 = vmatpush1.msra.mxu0 %v6322
        %6396 = vmatprep.subr.mxu0 0.0
        %6397 = vmatpush1.msra.mxu0 %v6323
        %6398 = vmatprep.subr.mxu0 0.0
        %6399 = vmatpush1.msra.mxu0 %v6324
        %6400 = vmatprep.subr.mxu0 0.0
        %6401 = vmatpush1.msra.mxu0 %v6325
        %6402 = vmatprep.subr.mxu0 0.0
        %6403 = vmatpush1.msra.mxu0 %v6326
        %6404 = vmatprep.subr.mxu0 0.0
        %6405 = vmatpush1.msra.mxu0 %v6327
        %6406 = vmatprep.subr.mxu0 0.0
        %6407 = vmatpush1.msra.mxu0 %v6328
        %6408 = vmatprep.subr.mxu0 0.0
        %6409 = vmatpush1.msra.mxu0 %v6329
        %6410 = vmatprep.subr.mxu0 0.0
        %6411 = vmatpush1.msra.mxu0 %v6330
        %6412 = vmatprep.subr.mxu0 0.0
        %6413 = vmatpush1.msra.mxu0 %v6331
        %6414 = vmatprep.subr.mxu0 0.0
        %6415 = vmatpush1.msra.mxu0 %v6332
        %6416 = vmatprep.subr.mxu0 0.0
        %6417 = vmatpush1.msra.mxu0 %v6333
        %6418 = vmatprep.subr.mxu0 0.0
        %6419 = vmatpush1.msra.mxu0 %v6334
        %6420 = vmatprep.subr.mxu0 0.0
        %6421 = vmatpush1.msra.mxu0 %v6335
        %6422 = vmatprep.subr.mxu0 0.0
        %6423 = vmatpush1.msra.mxu0 %v6336
        %6424 = vmatprep.subr.mxu0 0.0
        %6425 = vmatpush1.msra.mxu0 %v6337
        %6426 = vmatprep.subr.mxu0 0.0
        %6427 = vmatpush1.msra.mxu0 %v6338
        %6428 = vmatprep.subr.mxu0 0.0
        %6429 = vmatpush1.msra.mxu0 %v6339
        %6430 = vmatprep.subr.mxu0 0.0
        %6431 = vmatpush1.msra.mxu0 %v6340
        %6432 = vmatprep.subr.mxu0 0.0
        %6433 = vmatpush1.msra.mxu0 %v6341
        %6434 = vmatprep.subr.mxu0 0.0
        %6435 = vmatpush1.msra.mxu0 %v6342
        %6436 = vmatprep.subr.mxu0 0.0
        %6437 = vmatpush1.msra.mxu0 %v6343
        %6438 = vmatprep.subr.mxu0 0.0
        %6439 = vmatpush1.msra.mxu0 %v6344
        %6440 = vmatprep.subr.mxu0 0.0
        %6441 = vmatpush1.msra.mxu0 %v6345
        %6442 = vmatprep.subr.mxu0 0.0
        %6443 = vmatpush1.msra.mxu0 %v6346
        %6444 = vmatprep.subr.mxu0 0.0
        %6445 = vmatpush1.msra.mxu0 %v6347
        %6446 = vmatprep.subr.mxu0 0.0
        %6447 = vmatpush1.msra.mxu0 %v6348
        %6448 = vmatprep.subr.mxu0 0.0
        %6449 = vmatpush1.msra.mxu0 %v6349
        %6450 = vmatprep.subr.mxu0 0.0
        %6451 = vmatpush1.msra.mxu0 %v6350
        %6452 = vmatprep.mubr.f32.mxu0 %v6316
        %6453 = vmatmul.mubr.f32.gmra.mrb[0].mxu0 %v6315
        %v6454 = vpop.f32.mrb[0].mxu0
        %v6455 = vadd.f32 %v6387, %v6454
        %v6456 = vpop.f32.mrb[0].mxu0
        %6457 = vdwg.mxu0
        %6458 = vmatprep.subr.mxu0 0.0
        %6459 = vmatpush1.msra.mxu0 %v6351
        %6460 = vmatprep.subr.mxu0 0.0
        %6461 = vmatpush1.msra.mxu0 %v6352
        %6462 = vmatprep.subr.mxu0 0.0
        %6463 = vmatpush1.msra.mxu0 %v6353
        %6464 = vmatprep.subr.mxu0 0.0
        %6465 = vmatpush1.msra.mxu0 %v6354
        %6466 = vmatprep.subr.mxu0 0.0
        %6467 = vmatpush1.msra.mxu0 %v6355
        %6468 = vmatprep.subr.mxu0 0.0
        %6469 = vmatpush1.msra.mxu0 %v6356
        %6470 = vmatprep.subr.mxu0 0.0
        %6471 = vmatpush1.msra.mxu0 %v6357
        %6472 = vmatprep.subr.mxu0 0.0
        %6473 = vmatpush1.msra.mxu0 %v6358
        %6474 = vmatprep.subr.mxu0 0.0
        %6475 = vmatpush1.msra.mxu0 %v6359
        %6476 = vmatprep.subr.mxu0 0.0
        %6477 = vmatpush1.msra.mxu0 %v6360
        %6478 = vmatprep.subr.mxu0 0.0
        %6479 = vmatpush1.msra.mxu0 %v6361
        %6480 = vmatprep.subr.mxu0 0.0
        %6481 = vmatpush1.msra.mxu0 %v6362
        %6482 = vmatprep.subr.mxu0 0.0
        %6483 = vmatpush1.msra.mxu0 %v6363
        %6484 = vmatprep.subr.mxu0 0.0
        %6485 = vmatpush1.msra.mxu0 %v6364
        %6486 = vmatprep.subr.mxu0 0.0
        %6487 = vmatpush1.msra.mxu0 %v6365
        %6488 = vmatprep.subr.mxu0 0.0
        %6489 = vmatpush1.msra.mxu0 %v6366
        %6490 = vmatprep.subr.mxu0 0.0
        %6491 = vmatpush1.msra.mxu0 %v6367
        %6492 = vmatprep.subr.mxu0 0.0
        %6493 = vmatpush1.msra.mxu0 %v6368
        %6494 = vmatprep.subr.mxu0 0.0
        %6495 = vmatpush1.msra.mxu0 %v6369
        %6496 = vmatprep.subr.mxu0 0.0
        %6497 = vmatpush1.msra.mxu0 %v6370
        %6498 = vmatprep.subr.mxu0 0.0
        %6499 = vmatpush1.msra.mxu0 %v6371
        %6500 = vmatprep.subr.mxu0 0.0
        %6501 = vmatpush1.msra.mxu0 %v6372
        %6502 = vmatprep.subr.mxu0 0.0
        %6503 = vmatpush1.msra.mxu0 %v6373
        %6504 = vmatprep.subr.mxu0 0.0
        %6505 = vmatpush1.msra.mxu0 %v6374
        %6506 = vmatprep.subr.mxu0 0.0
        %6507 = vmatpush1.msra.mxu0 %v6375
        %6508 = vmatprep.subr.mxu0 0.0
        %6509 = vmatpush1.msra.mxu0 %v6376
        %6510 = vmatprep.subr.mxu0 0.0
        %6511 = vmatpush1.msra.mxu0 %v6377
        %6512 = vmatprep.subr.mxu0 0.0
        %6513 = vmatpush1.msra.mxu0 %v6378
        %6514 = vmatprep.subr.mxu0 0.0
        %6515 = vmatpush1.msra.mxu0 %v6379
        %6516 = vmatprep.subr.mxu0 0.0
        %6517 = vmatpush1.msra.mxu0 %v6380
        %6518 = vmatprep.subr.mxu0 0.0
        %6519 = vmatpush1.msra.mxu0 %v6381
        %6520 = vmatprep.subr.mxu0 0.0
        %6521 = vmatpush1.msra.mxu0 %v6382
        %6522 = vmatprep.mubr.f32.mxu0 %v6318
        %6523 = vmatmul.mubr.f32.gmra.mrb[0].mxu0 %v6317
        %v6524 = vpop.f32.mrb[0].mxu0
        %v6525 = vadd.f32 %v6455, %v6524
        %v6526 = vpop.f32.mrb[0].mxu0
        %6527 = vdwg.mxu0
        %v6532 = vrot.slane %v1114, 1
        %v6533 = vrot.slane %v1115, 1
        %v6534 = vrot.slane %v1116, 1
        %v6535 = vrot.slane %v1117, 1
        %v6540 = vrot.slane %v2566, 7
        %v6541 = vrot.slane %v2567, 7
        %v6542 = vrot.slane %v2568, 7
        %v6543 = vrot.slane %v2569, 7
        %v6548 = vrot.slane %v3292, 6
        %v6549 = vrot.slane %v3293, 6
        %v6550 = vrot.slane %v3294, 6
        %v6551 = vrot.slane %v3295, 6
        %v6556 = vrot.slane %v4018, 5
        %v6557 = vrot.slane %v4019, 5
        %v6558 = vrot.slane %v4020, 5
        %v6559 = vrot.slane %v4021, 5
        %v6564 = vrot.slane %v4744, 4
        %v6565 = vrot.slane %v4745, 4
        %v6566 = vrot.slane %v4746, 4
        %v6567 = vrot.slane %v4747, 4
        %v6572 = vrot.slane %v5470, 3
        %v6573 = vrot.slane %v5471, 3
        %v6574 = vrot.slane %v5472, 3
        %v6575 = vrot.slane %v5473, 3
        %v6580 = vrot.slane %v6196, 2
        %v6581 = vrot.slane %v6197, 2
        %v6582 = vrot.slane %v6198, 2
        %v6583 = vrot.slane %v6199, 2
        %v6588 = vsel %vm6284, %v6532, %v1840
        %v6589 = vsel %vm6284, %v6533, %v1841
        %v6590 = vsel %vm6284, %v6534, %v1842
        %v6591 = vsel %vm6284, %v6535, %v1843
        %v6592 = vsel %vm6289, %v6588, %v6540
        %v6593 = vsel %vm6289, %v6589, %v6541
        %v6594 = vsel %vm6289, %v6590, %v6542
        %v6595 = vsel %vm6289, %v6591, %v6543
        %v6596 = vsel %vm6294, %v6592, %v6548
        %v6597 = vsel %vm6294, %v6593, %v6549
        %v6598 = vsel %vm6294, %v6594, %v6550
        %v6599 = vsel %vm6294, %v6595, %v6551
        %v6600 = vsel %vm6299, %v6596, %v6556
        %v6601 = vsel %vm6299, %v6597, %v6557
        %v6602 = vsel %vm6299, %v6598, %v6558
        %v6603 = vsel %vm6299, %v6599, %v6559
        %v6604 = vsel %vm6304, %v6600, %v6564
        %v6605 = vsel %vm6304, %v6601, %v6565
        %v6606 = vsel %vm6304, %v6602, %v6566
        %v6607 = vsel %vm6304, %v6603, %v6567
        %v6608 = vsel %vm6309, %v6604, %v6572
        %v6609 = vsel %vm6309, %v6605, %v6573
        %v6610 = vsel %vm6309, %v6606, %v6574
        %v6611 = vsel %vm6309, %v6607, %v6575
        %v6612 = vsel %vm6314, %v6608, %v6580
        %v6613 = vsel %vm6314, %v6609, %v6581
        %v6614 = vsel %vm6314, %v6610, %v6582
        %v6615 = vsel %vm6314, %v6611, %v6583
        %s6616 = scalar_lea.vmem %s5, 512
        %v6617 = vld [vmem:[%s6616] sm:$0xff]
        %v6618 = vld [vmem:[%s6616 + $0x8] sm:$0xff]
        %v6619 = vld [vmem:[%s6616 + $0x10] sm:$0xff]
        %v6620 = vld [vmem:[%s6616 + $0x18] sm:$0xff]
        %v6621 = vld [vmem:[%s6616 + $0x20] sm:$0xff]
        %v6622 = vld [vmem:[%s6616 + $0x28] sm:$0xff]
        %v6623 = vld [vmem:[%s6616 + $0x30] sm:$0xff]
        %v6624 = vld [vmem:[%s6616 + $0x38] sm:$0xff]
        %v6625 = vld [vmem:[%s6616 + $0x40] sm:$0xff]
        %v6626 = vld [vmem:[%s6616 + $0x48] sm:$0xff]
        %v6627 = vld [vmem:[%s6616 + $0x50] sm:$0xff]
        %v6628 = vld [vmem:[%s6616 + $0x58] sm:$0xff]
        %v6629 = vld [vmem:[%s6616 + $0x60] sm:$0xff]
        %v6630 = vld [vmem:[%s6616 + $0x68] sm:$0xff]
        %v6631 = vld [vmem:[%s6616 + $0x70] sm:$0xff]
        %v6632 = vld [vmem:[%s6616 + $0x78] sm:$0xff]
        %v6633 = vld [vmem:[%s6616 + $0x80] sm:$0xff]
        %v6634 = vld [vmem:[%s6616 + $0x88] sm:$0xff]
        %v6635 = vld [vmem:[%s6616 + $0x90] sm:$0xff]
        %v6636 = vld [vmem:[%s6616 + $0x98] sm:$0xff]
        %v6637 = vld [vmem:[%s6616 + $0xa0] sm:$0xff]
        %v6638 = vld [vmem:[%s6616 + $0xa8] sm:$0xff]
        %v6639 = vld [vmem:[%s6616 + $0xb0] sm:$0xff]
        %v6640 = vld [vmem:[%s6616 + $0xb8] sm:$0xff]
        %v6641 = vld [vmem:[%s6616 + $0xc0] sm:$0xff]
        %v6642 = vld [vmem:[%s6616 + $0xc8] sm:$0xff]
        %v6643 = vld [vmem:[%s6616 + $0xd0] sm:$0xff]
        %v6644 = vld [vmem:[%s6616 + $0xd8] sm:$0xff]
        %v6645 = vld [vmem:[%s6616 + $0xe0] sm:$0xff]
        %v6646 = vld [vmem:[%s6616 + $0xe8] sm:$0xff]
        %v6647 = vld [vmem:[%s6616 + $0xf0] sm:$0xff]
        %v6648 = vld [vmem:[%s6616 + $0xf8] sm:$0xff]
        %v6649 = vld [vmem:[%s6616 + $0x100] sm:$0xff]
        %v6650 = vld [vmem:[%s6616 + $0x108] sm:$0xff]
        %v6651 = vld [vmem:[%s6616 + $0x110] sm:$0xff]
        %v6652 = vld [vmem:[%s6616 + $0x118] sm:$0xff]
        %v6653 = vld [vmem:[%s6616 + $0x120] sm:$0xff]
        %v6654 = vld [vmem:[%s6616 + $0x128] sm:$0xff]
        %v6655 = vld [vmem:[%s6616 + $0x130] sm:$0xff]
        %v6656 = vld [vmem:[%s6616 + $0x138] sm:$0xff]
        %v6657 = vld [vmem:[%s6616 + $0x140] sm:$0xff]
        %v6658 = vld [vmem:[%s6616 + $0x148] sm:$0xff]
        %v6659 = vld [vmem:[%s6616 + $0x150] sm:$0xff]
        %v6660 = vld [vmem:[%s6616 + $0x158] sm:$0xff]
        %v6661 = vld [vmem:[%s6616 + $0x160] sm:$0xff]
        %v6662 = vld [vmem:[%s6616 + $0x168] sm:$0xff]
        %v6663 = vld [vmem:[%s6616 + $0x170] sm:$0xff]
        %v6664 = vld [vmem:[%s6616 + $0x178] sm:$0xff]
        %v6665 = vld [vmem:[%s6616 + $0x180] sm:$0xff]
        %v6666 = vld [vmem:[%s6616 + $0x188] sm:$0xff]
        %v6667 = vld [vmem:[%s6616 + $0x190] sm:$0xff]
        %v6668 = vld [vmem:[%s6616 + $0x198] sm:$0xff]
        %v6669 = vld [vmem:[%s6616 + $0x1a0] sm:$0xff]
        %v6670 = vld [vmem:[%s6616 + $0x1a8] sm:$0xff]
        %v6671 = vld [vmem:[%s6616 + $0x1b0] sm:$0xff]
        %v6672 = vld [vmem:[%s6616 + $0x1b8] sm:$0xff]
        %v6673 = vld [vmem:[%s6616 + $0x1c0] sm:$0xff]
        %v6674 = vld [vmem:[%s6616 + $0x1c8] sm:$0xff]
        %v6675 = vld [vmem:[%s6616 + $0x1d0] sm:$0xff]
        %v6676 = vld [vmem:[%s6616 + $0x1d8] sm:$0xff]
        %v6677 = vld [vmem:[%s6616 + $0x1e0] sm:$0xff]
        %v6678 = vld [vmem:[%s6616 + $0x1e8] sm:$0xff]
        %v6679 = vld [vmem:[%s6616 + $0x1f0] sm:$0xff]
        %v6680 = vld [vmem:[%s6616 + $0x1f8] sm:$0xff]
        %v6681 = vld [vmem:[%s6 + $0x1] sm:$0x1]
        %v6682 = vlaneseq
        %v6683 = vshrl.u32 %v6682, 7
        %v6684 = vsub.s32 0, %v6683
        %v6685 = vrot.slane %v6681, %v6684
        %6686 = vmatprep.subr.mxu0 0.0
        %6687 = vmatpush1.msra.mxu0 %v6617
        %6688 = vmatprep.subr.mxu0 0.0
        %6689 = vmatpush1.msra.mxu0 %v6618
        %6690 = vmatprep.subr.mxu0 0.0
        %6691 = vmatpush1.msra.mxu0 %v6619
        %6692 = vmatprep.subr.mxu0 0.0
        %6693 = vmatpush1.msra.mxu0 %v6620
        %6694 = vmatprep.subr.mxu0 0.0
        %6695 = vmatpush1.msra.mxu0 %v6621
        %6696 = vmatprep.subr.mxu0 0.0
        %6697 = vmatpush1.msra.mxu0 %v6622
        %6698 = vmatprep.subr.mxu0 0.0
        %6699 = vmatpush1.msra.mxu0 %v6623
        %6700 = vmatprep.subr.mxu0 0.0
        %6701 = vmatpush1.msra.mxu0 %v6624
        %6702 = vmatprep.subr.mxu0 0.0
        %6703 = vmatpush1.msra.mxu0 %v6625
        %6704 = vmatprep.subr.mxu0 0.0
        %6705 = vmatpush1.msra.mxu0 %v6626
        %6706 = vmatprep.subr.mxu0 0.0
        %6707 = vmatpush1.msra.mxu0 %v6627
        %6708 = vmatprep.subr.mxu0 0.0
        %6709 = vmatpush1.msra.mxu0 %v6628
        %6710 = vmatprep.subr.mxu0 0.0
        %6711 = vmatpush1.msra.mxu0 %v6629
        %6712 = vmatprep.subr.mxu0 0.0
        %6713 = vmatpush1.msra.mxu0 %v6630
        %6714 = vmatprep.subr.mxu0 0.0
        %6715 = vmatpush1.msra.mxu0 %v6631
        %6716 = vmatprep.subr.mxu0 0.0
        %6717 = vmatpush1.msra.mxu0 %v6632
        %6718 = vmatprep.subr.mxu0 0.0
        %6719 = vmatpush1.msra.mxu0 %v6633
        %6720 = vmatprep.subr.mxu0 0.0
        %6721 = vmatpush1.msra.mxu0 %v6634
        %6722 = vmatprep.subr.mxu0 0.0
        %6723 = vmatpush1.msra.mxu0 %v6635
        %6724 = vmatprep.subr.mxu0 0.0
        %6725 = vmatpush1.msra.mxu0 %v6636
        %6726 = vmatprep.subr.mxu0 0.0
        %6727 = vmatpush1.msra.mxu0 %v6637
        %6728 = vmatprep.subr.mxu0 0.0
        %6729 = vmatpush1.msra.mxu0 %v6638
        %6730 = vmatprep.subr.mxu0 0.0
        %6731 = vmatpush1.msra.mxu0 %v6639
        %6732 = vmatprep.subr.mxu0 0.0
        %6733 = vmatpush1.msra.mxu0 %v6640
        %6734 = vmatprep.subr.mxu0 0.0
        %6735 = vmatpush1.msra.mxu0 %v6641
        %6736 = vmatprep.subr.mxu0 0.0
        %6737 = vmatpush1.msra.mxu0 %v6642
        %6738 = vmatprep.subr.mxu0 0.0
        %6739 = vmatpush1.msra.mxu0 %v6643
        %6740 = vmatprep.subr.mxu0 0.0
        %6741 = vmatpush1.msra.mxu0 %v6644
        %6742 = vmatprep.subr.mxu0 0.0
        %6743 = vmatpush1.msra.mxu0 %v6645
        %6744 = vmatprep.subr.mxu0 0.0
        %6745 = vmatpush1.msra.mxu0 %v6646
        %6746 = vmatprep.subr.mxu0 0.0
        %6747 = vmatpush1.msra.mxu0 %v6647
        %6748 = vmatprep.subr.mxu0 0.0
        %6749 = vmatpush1.msra.mxu0 %v6648
        %6750 = vmatprep.mubr.f32.mxu0 %v6613
        %6751 = vmatmul.mubr.f32.gmra.mrb[0].mxu0 %v6612
        %v6752 = vpop.f32.mrb[0].mxu0
        %v6753 = vadd.f32 %v6685, %v6752
        %v6754 = vpop.f32.mrb[0].mxu0
        %6755 = vdwg.mxu0
        %6756 = vmatprep.subr.mxu0 0.0
        %6757 = vmatpush1.msra.mxu0 %v6649
        %6758 = vmatprep.subr.mxu0 0.0
        %6759 = vmatpush1.msra.mxu0 %v6650
        %6760 = vmatprep.subr.mxu0 0.0
        %6761 = vmatpush1.msra.mxu0 %v6651
        %6762 = vmatprep.subr.mxu0 0.0
        %6763 = vmatpush1.msra.mxu0 %v6652
        %6764 = vmatprep.subr.mxu0 0.0
        %6765 = vmatpush1.msra.mxu0 %v6653
        %6766 = vmatprep.subr.mxu0 0.0
        %6767 = vmatpush1.msra.mxu0 %v6654
        %6768 = vmatprep.subr.mxu0 0.0
        %6769 = vmatpush1.msra.mxu0 %v6655
        %6770 = vmatprep.subr.mxu0 0.0
        %6771 = vmatpush1.msra.mxu0 %v6656
        %6772 = vmatprep.subr.mxu0 0.0
        %6773 = vmatpush1.msra.mxu0 %v6657
        %6774 = vmatprep.subr.mxu0 0.0
        %6775 = vmatpush1.msra.mxu0 %v6658
        %6776 = vmatprep.subr.mxu0 0.0
        %6777 = vmatpush1.msra.mxu0 %v6659
        %6778 = vmatprep.subr.mxu0 0.0
        %6779 = vmatpush1.msra.mxu0 %v6660
        %6780 = vmatprep.subr.mxu0 0.0
        %6781 = vmatpush1.msra.mxu0 %v6661
        %6782 = vmatprep.subr.mxu0 0.0
        %6783 = vmatpush1.msra.mxu0 %v6662
        %6784 = vmatprep.subr.mxu0 0.0
        %6785 = vmatpush1.msra.mxu0 %v6663
        %6786 = vmatprep.subr.mxu0 0.0
        %6787 = vmatpush1.msra.mxu0 %v6664
        %6788 = vmatprep.subr.mxu0 0.0
        %6789 = vmatpush1.msra.mxu0 %v6665
        %6790 = vmatprep.subr.mxu0 0.0
        %6791 = vmatpush1.msra.mxu0 %v6666
        %6792 = vmatprep.subr.mxu0 0.0
        %6793 = vmatpush1.msra.mxu0 %v6667
        %6794 = vmatprep.subr.mxu0 0.0
        %6795 = vmatpush1.msra.mxu0 %v6668
        %6796 = vmatprep.subr.mxu0 0.0
        %6797 = vmatpush1.msra.mxu0 %v6669
        %6798 = vmatprep.subr.mxu0 0.0
        %6799 = vmatpush1.msra.mxu0 %v6670
        %6800 = vmatprep.subr.mxu0 0.0
        %6801 = vmatpush1.msra.mxu0 %v6671
        %6802 = vmatprep.subr.mxu0 0.0
        %6803 = vmatpush1.msra.mxu0 %v6672
        %6804 = vmatprep.subr.mxu0 0.0
        %6805 = vmatpush1.msra.mxu0 %v6673
        %6806 = vmatprep.subr.mxu0 0.0
        %6807 = vmatpush1.msra.mxu0 %v6674
        %6808 = vmatprep.subr.mxu0 0.0
        %6809 = vmatpush1.msra.mxu0 %v6675
        %6810 = vmatprep.subr.mxu0 0.0
        %6811 = vmatpush1.msra.mxu0 %v6676
        %6812 = vmatprep.subr.mxu0 0.0
        %6813 = vmatpush1.msra.mxu0 %v6677
        %6814 = vmatprep.subr.mxu0 0.0
        %6815 = vmatpush1.msra.mxu0 %v6678
        %6816 = vmatprep.subr.mxu0 0.0
        %6817 = vmatpush1.msra.mxu0 %v6679
        %6818 = vmatprep.subr.mxu0 0.0
        %6819 = vmatpush1.msra.mxu0 %v6680
        %6820 = vmatprep.mubr.f32.mxu0 %v6615
        %6821 = vmatmul.mubr.f32.gmra.mrb[0].mxu0 %v6614
        %v6822 = vpop.f32.mrb[0].mxu0
        %v6823 = vadd.f32 %v6753, %v6822
        %v6824 = vpop.f32.mrb[0].mxu0
        %6825 = vdwg.mxu0
        %v6826 = vrot.slane %v1114, 2
        %v6827 = vrot.slane %v1115, 2
        %v6828 = vrot.slane %v1116, 2
        %v6829 = vrot.slane %v1117, 2
        %v6834 = vrot.slane %v1840, 1
        %v6835 = vrot.slane %v1841, 1
        %v6836 = vrot.slane %v1842, 1
        %v6837 = vrot.slane %v1843, 1
        %v6842 = vrot.slane %v3292, 7
        %v6843 = vrot.slane %v3293, 7
        %v6844 = vrot.slane %v3294, 7
        %v6845 = vrot.slane %v3295, 7
        %v6850 = vrot.slane %v4018, 6
        %v6851 = vrot.slane %v4019, 6
        %v6852 = vrot.slane %v4020, 6
        %v6853 = vrot.slane %v4021, 6
        %v6858 = vrot.slane %v4744, 5
        %v6859 = vrot.slane %v4745, 5
        %v6860 = vrot.slane %v4746, 5
        %v6861 = vrot.slane %v4747, 5
        %v6866 = vrot.slane %v5470, 4
        %v6867 = vrot.slane %v5471, 4
        %v6868 = vrot.slane %v5472, 4
        %v6869 = vrot.slane %v5473, 4
        %v6874 = vrot.slane %v6196, 3
        %v6875 = vrot.slane %v6197, 3
        %v6876 = vrot.slane %v6198, 3
        %v6877 = vrot.slane %v6199, 3
        %v6882 = vsel %vm6284, %v6826, %v6834
        %v6883 = vsel %vm6284, %v6827, %v6835
        %v6884 = vsel %vm6284, %v6828, %v6836
        %v6885 = vsel %vm6284, %v6829, %v6837
        %v6886 = vsel %vm6289, %v6882, %v2566
        %v6887 = vsel %vm6289, %v6883, %v2567
        %v6888 = vsel %vm6289, %v6884, %v2568
        %v6889 = vsel %vm6289, %v6885, %v2569
        %v6890 = vsel %vm6294, %v6886, %v6842
        %v6891 = vsel %vm6294, %v6887, %v6843
        %v6892 = vsel %vm6294, %v6888, %v6844
        %v6893 = vsel %vm6294, %v6889, %v6845
        %v6894 = vsel %vm6299, %v6890, %v6850
        %v6895 = vsel %vm6299, %v6891, %v6851
        %v6896 = vsel %vm6299, %v6892, %v6852
        %v6897 = vsel %vm6299, %v6893, %v6853
        %v6898 = vsel %vm6304, %v6894, %v6858
        %v6899 = vsel %vm6304, %v6895, %v6859
        %v6900 = vsel %vm6304, %v6896, %v6860
        %v6901 = vsel %vm6304, %v6897, %v6861
        %v6902 = vsel %vm6309, %v6898, %v6866
        %v6903 = vsel %vm6309, %v6899, %v6867
        %v6904 = vsel %vm6309, %v6900, %v6868
        %v6905 = vsel %vm6309, %v6901, %v6869
        %v6906 = vsel %vm6314, %v6902, %v6874
        %v6907 = vsel %vm6314, %v6903, %v6875
        %v6908 = vsel %vm6314, %v6904, %v6876
        %v6909 = vsel %vm6314, %v6905, %v6877
        %s6910 = scalar_lea.vmem %s5, 1024
        %v6911 = vld [vmem:[%s6910] sm:$0xff]
        %v6912 = vld [vmem:[%s6910 + $0x8] sm:$0xff]
        %v6913 = vld [vmem:[%s6910 + $0x10] sm:$0xff]
        %v6914 = vld [vmem:[%s6910 + $0x18] sm:$0xff]
        %v6915 = vld [vmem:[%s6910 + $0x20] sm:$0xff]
        %v6916 = vld [vmem:[%s6910 + $0x28] sm:$0xff]
        %v6917 = vld [vmem:[%s6910 + $0x30] sm:$0xff]
        %v6918 = vld [vmem:[%s6910 + $0x38] sm:$0xff]
        %v6919 = vld [vmem:[%s6910 + $0x40] sm:$0xff]
        %v6920 = vld [vmem:[%s6910 + $0x48] sm:$0xff]
        %v6921 = vld [vmem:[%s6910 + $0x50] sm:$0xff]
        %v6922 = vld [vmem:[%s6910 + $0x58] sm:$0xff]
        %v6923 = vld [vmem:[%s6910 + $0x60] sm:$0xff]
        %v6924 = vld [vmem:[%s6910 + $0x68] sm:$0xff]
        %v6925 = vld [vmem:[%s6910 + $0x70] sm:$0xff]
        %v6926 = vld [vmem:[%s6910 + $0x78] sm:$0xff]
        %v6927 = vld [vmem:[%s6910 + $0x80] sm:$0xff]
        %v6928 = vld [vmem:[%s6910 + $0x88] sm:$0xff]
        %v6929 = vld [vmem:[%s6910 + $0x90] sm:$0xff]
        %v6930 = vld [vmem:[%s6910 + $0x98] sm:$0xff]
        %v6931 = vld [vmem:[%s6910 + $0xa0] sm:$0xff]
        %v6932 = vld [vmem:[%s6910 + $0xa8] sm:$0xff]
        %v6933 = vld [vmem:[%s6910 + $0xb0] sm:$0xff]
        %v6934 = vld [vmem:[%s6910 + $0xb8] sm:$0xff]
        %v6935 = vld [vmem:[%s6910 + $0xc0] sm:$0xff]
        %v6936 = vld [vmem:[%s6910 + $0xc8] sm:$0xff]
        %v6937 = vld [vmem:[%s6910 + $0xd0] sm:$0xff]
        %v6938 = vld [vmem:[%s6910 + $0xd8] sm:$0xff]
        %v6939 = vld [vmem:[%s6910 + $0xe0] sm:$0xff]
        %v6940 = vld [vmem:[%s6910 + $0xe8] sm:$0xff]
        %v6941 = vld [vmem:[%s6910 + $0xf0] sm:$0xff]
        %v6942 = vld [vmem:[%s6910 + $0xf8] sm:$0xff]
        %v6943 = vld [vmem:[%s6910 + $0x100] sm:$0xff]
        %v6944 = vld [vmem:[%s6910 + $0x108] sm:$0xff]
        %v6945 = vld [vmem:[%s6910 + $0x110] sm:$0xff]
        %v6946 = vld [vmem:[%s6910 + $0x118] sm:$0xff]
        %v6947 = vld [vmem:[%s6910 + $0x120] sm:$0xff]
        %v6948 = vld [vmem:[%s6910 + $0x128] sm:$0xff]
        %v6949 = vld [vmem:[%s6910 + $0x130] sm:$0xff]
        %v6950 = vld [vmem:[%s6910 + $0x138] sm:$0xff]
        %v6951 = vld [vmem:[%s6910 + $0x140] sm:$0xff]
        %v6952 = vld [vmem:[%s6910 + $0x148] sm:$0xff]
        %v6953 = vld [vmem:[%s6910 + $0x150] sm:$0xff]
        %v6954 = vld [vmem:[%s6910 + $0x158] sm:$0xff]
        %v6955 = vld [vmem:[%s6910 + $0x160] sm:$0xff]
        %v6956 = vld [vmem:[%s6910 + $0x168] sm:$0xff]
        %v6957 = vld [vmem:[%s6910 + $0x170] sm:$0xff]
        %v6958 = vld [vmem:[%s6910 + $0x178] sm:$0xff]
        %v6959 = vld [vmem:[%s6910 + $0x180] sm:$0xff]
        %v6960 = vld [vmem:[%s6910 + $0x188] sm:$0xff]
        %v6961 = vld [vmem:[%s6910 + $0x190] sm:$0xff]
        %v6962 = vld [vmem:[%s6910 + $0x198] sm:$0xff]
        %v6963 = vld [vmem:[%s6910 + $0x1a0] sm:$0xff]
        %v6964 = vld [vmem:[%s6910 + $0x1a8] sm:$0xff]
        %v6965 = vld [vmem:[%s6910 + $0x1b0] sm:$0xff]
        %v6966 = vld [vmem:[%s6910 + $0x1b8] sm:$0xff]
        %v6967 = vld [vmem:[%s6910 + $0x1c0] sm:$0xff]
        %v6968 = vld [vmem:[%s6910 + $0x1c8] sm:$0xff]
        %v6969 = vld [vmem:[%s6910 + $0x1d0] sm:$0xff]
        %v6970 = vld [vmem:[%s6910 + $0x1d8] sm:$0xff]
        %v6971 = vld [vmem:[%s6910 + $0x1e0] sm:$0xff]
        %v6972 = vld [vmem:[%s6910 + $0x1e8] sm:$0xff]
        %v6973 = vld [vmem:[%s6910 + $0x1f0] sm:$0xff]
        %v6974 = vld [vmem:[%s6910 + $0x1f8] sm:$0xff]
        %v6975 = vld [vmem:[%s6 + $0x2] sm:$0x1]
        %v6976 = vlaneseq
        %v6977 = vshrl.u32 %v6976, 7
        %v6978 = vsub.s32 0, %v6977
        %v6979 = vrot.slane %v6975, %v6978
        %6980 = vmatprep.subr.mxu0 0.0
        %6981 = vmatpush1.msra.mxu0 %v6911
        %6982 = vmatprep.subr.mxu0 0.0
        %6983 = vmatpush1.msra.mxu0 %v6912
        %6984 = vmatprep.subr.mxu0 0.0
        %6985 = vmatpush1.msra.mxu0 %v6913
        %6986 = vmatprep.subr.mxu0 0.0
        %6987 = vmatpush1.msra.mxu0 %v6914
        %6988 = vmatprep.subr.mxu0 0.0
        %6989 = vmatpush1.msra.mxu0 %v6915
        %6990 = vmatprep.subr.mxu0 0.0
        %6991 = vmatpush1.msra.mxu0 %v6916
        %6992 = vmatprep.subr.mxu0 0.0
        %6993 = vmatpush1.msra.mxu0 %v6917
        %6994 = vmatprep.subr.mxu0 0.0
        %6995 = vmatpush1.msra.mxu0 %v6918
        %6996 = vmatprep.subr.mxu0 0.0
        %6997 = vmatpush1.msra.mxu0 %v6919
        %6998 = vmatprep.subr.mxu0 0.0
        %6999 = vmatpush1.msra.mxu0 %v6920
        %7000 = vmatprep.subr.mxu0 0.0
        %7001 = vmatpush1.msra.mxu0 %v6921
        %7002 = vmatprep.subr.mxu0 0.0
        %7003 = vmatpush1.msra.mxu0 %v6922
        %7004 = vmatprep.subr.mxu0 0.0
        %7005 = vmatpush1.msra.mxu0 %v6923
        %7006 = vmatprep.subr.mxu0 0.0
        %7007 = vmatpush1.msra.mxu0 %v6924
        %7008 = vmatprep.subr.mxu0 0.0
        %7009 = vmatpush1.msra.mxu0 %v6925
        %7010 = vmatprep.subr.mxu0 0.0
        %7011 = vmatpush1.msra.mxu0 %v6926
        %7012 = vmatprep.subr.mxu0 0.0
        %7013 = vmatpush1.msra.mxu0 %v6927
        %7014 = vmatprep.subr.mxu0 0.0
        %7015 = vmatpush1.msra.mxu0 %v6928
        %7016 = vmatprep.subr.mxu0 0.0
        %7017 = vmatpush1.msra.mxu0 %v6929
        %7018 = vmatprep.subr.mxu0 0.0
        %7019 = vmatpush1.msra.mxu0 %v6930
        %7020 = vmatprep.subr.mxu0 0.0
        %7021 = vmatpush1.msra.mxu0 %v6931
        %7022 = vmatprep.subr.mxu0 0.0
        %7023 = vmatpush1.msra.mxu0 %v6932
        %7024 = vmatprep.subr.mxu0 0.0
        %7025 = vmatpush1.msra.mxu0 %v6933
        %7026 = vmatprep.subr.mxu0 0.0
        %7027 = vmatpush1.msra.mxu0 %v6934
        %7028 = vmatprep.subr.mxu0 0.0
        %7029 = vmatpush1.msra.mxu0 %v6935
        %7030 = vmatprep.subr.mxu0 0.0
        %7031 = vmatpush1.msra.mxu0 %v6936
        %7032 = vmatprep.subr.mxu0 0.0
        %7033 = vmatpush1.msra.mxu0 %v6937
        %7034 = vmatprep.subr.mxu0 0.0
        %7035 = vmatpush1.msra.mxu0 %v6938
        %7036 = vmatprep.subr.mxu0 0.0
        %7037 = vmatpush1.msra.mxu0 %v6939
        %7038 = vmatprep.subr.mxu0 0.0
        %7039 = vmatpush1.msra.mxu0 %v6940
        %7040 = vmatprep.subr.mxu0 0.0
        %7041 = vmatpush1.msra.mxu0 %v6941
        %7042 = vmatprep.subr.mxu0 0.0
        %7043 = vmatpush1.msra.mxu0 %v6942
        %7044 = vmatprep.mubr.f32.mxu0 %v6907
        %7045 = vmatmul.mubr.f32.gmra.mrb[0].mxu0 %v6906
        %v7046 = vpop.f32.mrb[0].mxu0
        %v7047 = vadd.f32 %v6979, %v7046
        %v7048 = vpop.f32.mrb[0].mxu0
        %7049 = vdwg.mxu0
        %7050 = vmatprep.subr.mxu0 0.0
        %7051 = vmatpush1.msra.mxu0 %v6943
        %7052 = vmatprep.subr.mxu0 0.0
        %7053 = vmatpush1.msra.mxu0 %v6944
        %7054 = vmatprep.subr.mxu0 0.0
        %7055 = vmatpush1.msra.mxu0 %v6945
        %7056 = vmatprep.subr.mxu0 0.0
        %7057 = vmatpush1.msra.mxu0 %v6946
        %7058 = vmatprep.subr.mxu0 0.0
        %7059 = vmatpush1.msra.mxu0 %v6947
        %7060 = vmatprep.subr.mxu0 0.0
        %7061 = vmatpush1.msra.mxu0 %v6948
        %7062 = vmatprep.subr.mxu0 0.0
        %7063 = vmatpush1.msra.mxu0 %v6949
        %7064 = vmatprep.subr.mxu0 0.0
        %7065 = vmatpush1.msra.mxu0 %v6950
        %7066 = vmatprep.subr.mxu0 0.0
        %7067 = vmatpush1.msra.mxu0 %v6951
        %7068 = vmatprep.subr.mxu0 0.0
        %7069 = vmatpush1.msra.mxu0 %v6952
        %7070 = vmatprep.subr.mxu0 0.0
        %7071 = vmatpush1.msra.mxu0 %v6953
        %7072 = vmatprep.subr.mxu0 0.0
        %7073 = vmatpush1.msra.mxu0 %v6954
        %7074 = vmatprep.subr.mxu0 0.0
        %7075 = vmatpush1.msra.mxu0 %v6955
        %7076 = vmatprep.subr.mxu0 0.0
        %7077 = vmatpush1.msra.mxu0 %v6956
        %7078 = vmatprep.subr.mxu0 0.0
        %7079 = vmatpush1.msra.mxu0 %v6957
        %7080 = vmatprep.subr.mxu0 0.0
        %7081 = vmatpush1.msra.mxu0 %v6958
        %7082 = vmatprep.subr.mxu0 0.0
        %7083 = vmatpush1.msra.mxu0 %v6959
        %7084 = vmatprep.subr.mxu0 0.0
        %7085 = vmatpush1.msra.mxu0 %v6960
        %7086 = vmatprep.subr.mxu0 0.0
        %7087 = vmatpush1.msra.mxu0 %v6961
        %7088 = vmatprep.subr.mxu0 0.0
        %7089 = vmatpush1.msra.mxu0 %v6962
        %7090 = vmatprep.subr.mxu0 0.0
        %7091 = vmatpush1.msra.mxu0 %v6963
        %7092 = vmatprep.subr.mxu0 0.0
        %7093 = vmatpush1.msra.mxu0 %v6964
        %7094 = vmatprep.subr.mxu0 0.0
        %7095 = vmatpush1.msra.mxu0 %v6965
        %7096 = vmatprep.subr.mxu0 0.0
        %7097 = vmatpush1.msra.mxu0 %v6966
        %7098 = vmatprep.subr.mxu0 0.0
        %7099 = vmatpush1.msra.mxu0 %v6967
        %7100 = vmatprep.subr.mxu0 0.0
        %7101 = vmatpush1.msra.mxu0 %v6968
        %7102 = vmatprep.subr.mxu0 0.0
        %7103 = vmatpush1.msra.mxu0 %v6969
        %7104 = vmatprep.subr.mxu0 0.0
        %7105 = vmatpush1.msra.mxu0 %v6970
        %7106 = vmatprep.subr.mxu0 0.0
        %7107 = vmatpush1.msra.mxu0 %v6971
        %7108 = vmatprep.subr.mxu0 0.0
        %7109 = vmatpush1.msra.mxu0 %v6972
        %7110 = vmatprep.subr.mxu0 0.0
        %7111 = vmatpush1.msra.mxu0 %v6973
        %7112 = vmatprep.subr.mxu0 0.0
        %7113 = vmatpush1.msra.mxu0 %v6974
        %7114 = vmatprep.mubr.f32.mxu0 %v6909
        %7115 = vmatmul.mubr.f32.gmra.mrb[0].mxu0 %v6908
        %v7116 = vpop.f32.mrb[0].mxu0
        %v7117 = vadd.f32 %v7047, %v7116
        %v7118 = vpop.f32.mrb[0].mxu0
        %7119 = vdwg.mxu0
        %v7120 = vrot.slane %v1114, 3
        %v7121 = vrot.slane %v1115, 3
        %v7122 = vrot.slane %v1116, 3
        %v7123 = vrot.slane %v1117, 3
        %v7128 = vrot.slane %v1840, 2
        %v7129 = vrot.slane %v1841, 2
        %v7130 = vrot.slane %v1842, 2
        %v7131 = vrot.slane %v1843, 2
        %v7136 = vrot.slane %v2566, 1
        %v7137 = vrot.slane %v2567, 1
        %v7138 = vrot.slane %v2568, 1
        %v7139 = vrot.slane %v2569, 1
        %v7144 = vrot.slane %v4018, 7
        %v7145 = vrot.slane %v4019, 7
        %v7146 = vrot.slane %v4020, 7
        %v7147 = vrot.slane %v4021, 7
        %v7152 = vrot.slane %v4744, 6
        %v7153 = vrot.slane %v4745, 6
        %v7154 = vrot.slane %v4746, 6
        %v7155 = vrot.slane %v4747, 6
        %v7160 = vrot.slane %v5470, 5
        %v7161 = vrot.slane %v5471, 5
        %v7162 = vrot.slane %v5472, 5
        %v7163 = vrot.slane %v5473, 5
        %v7168 = vrot.slane %v6196, 4
        %v7169 = vrot.slane %v6197, 4
        %v7170 = vrot.slane %v6198, 4
        %v7171 = vrot.slane %v6199, 4
        %v7176 = vsel %vm6284, %v7120, %v7128
        %v7177 = vsel %vm6284, %v7121, %v7129
        %v7178 = vsel %vm6284, %v7122, %v7130
        %v7179 = vsel %vm6284, %v7123, %v7131
        %v7180 = vsel %vm6289, %v7176, %v7136
        %v7181 = vsel %vm6289, %v7177, %v7137
        %v7182 = vsel %vm6289, %v7178, %v7138
        %v7183 = vsel %vm6289, %v7179, %v7139
        %v7184 = vsel %vm6294, %v7180, %v3292
        %v7185 = vsel %vm6294, %v7181, %v3293
        %v7186 = vsel %vm6294, %v7182, %v3294
        %v7187 = vsel %vm6294, %v7183, %v3295
        %v7188 = vsel %vm6299, %v7184, %v7144
        %v7189 = vsel %vm6299, %v7185, %v7145
        %v7190 = vsel %vm6299, %v7186, %v7146
        %v7191 = vsel %vm6299, %v7187, %v7147
        %v7192 = vsel %vm6304, %v7188, %v7152
        %v7193 = vsel %vm6304, %v7189, %v7153
        %v7194 = vsel %vm6304, %v7190, %v7154
        %v7195 = vsel %vm6304, %v7191, %v7155
        %v7196 = vsel %vm6309, %v7192, %v7160
        %v7197 = vsel %vm6309, %v7193, %v7161
        %v7198 = vsel %vm6309, %v7194, %v7162
        %v7199 = vsel %vm6309, %v7195, %v7163
        %v7200 = vsel %vm6314, %v7196, %v7168
        %v7201 = vsel %vm6314, %v7197, %v7169
        %v7202 = vsel %vm6314, %v7198, %v7170
        %v7203 = vsel %vm6314, %v7199, %v7171
        %s7204 = scalar_lea.vmem %s5, 1536
        %v7205 = vld [vmem:[%s7204] sm:$0xff]
        %v7206 = vld [vmem:[%s7204 + $0x8] sm:$0xff]
        %v7207 = vld [vmem:[%s7204 + $0x10] sm:$0xff]
        %v7208 = vld [vmem:[%s7204 + $0x18] sm:$0xff]
        %v7209 = vld [vmem:[%s7204 + $0x20] sm:$0xff]
        %v7210 = vld [vmem:[%s7204 + $0x28] sm:$0xff]
        %v7211 = vld [vmem:[%s7204 + $0x30] sm:$0xff]
        %v7212 = vld [vmem:[%s7204 + $0x38] sm:$0xff]
        %v7213 = vld [vmem:[%s7204 + $0x40] sm:$0xff]
        %v7214 = vld [vmem:[%s7204 + $0x48] sm:$0xff]
        %v7215 = vld [vmem:[%s7204 + $0x50] sm:$0xff]
        %v7216 = vld [vmem:[%s7204 + $0x58] sm:$0xff]
        %v7217 = vld [vmem:[%s7204 + $0x60] sm:$0xff]
        %v7218 = vld [vmem:[%s7204 + $0x68] sm:$0xff]
        %v7219 = vld [vmem:[%s7204 + $0x70] sm:$0xff]
        %v7220 = vld [vmem:[%s7204 + $0x78] sm:$0xff]
        %v7221 = vld [vmem:[%s7204 + $0x80] sm:$0xff]
        %v7222 = vld [vmem:[%s7204 + $0x88] sm:$0xff]
        %v7223 = vld [vmem:[%s7204 + $0x90] sm:$0xff]
        %v7224 = vld [vmem:[%s7204 + $0x98] sm:$0xff]
        %v7225 = vld [vmem:[%s7204 + $0xa0] sm:$0xff]
        %v7226 = vld [vmem:[%s7204 + $0xa8] sm:$0xff]
        %v7227 = vld [vmem:[%s7204 + $0xb0] sm:$0xff]
        %v7228 = vld [vmem:[%s7204 + $0xb8] sm:$0xff]
        %v7229 = vld [vmem:[%s7204 + $0xc0] sm:$0xff]
        %v7230 = vld [vmem:[%s7204 + $0xc8] sm:$0xff]
        %v7231 = vld [vmem:[%s7204 + $0xd0] sm:$0xff]
        %v7232 = vld [vmem:[%s7204 + $0xd8] sm:$0xff]
        %v7233 = vld [vmem:[%s7204 + $0xe0] sm:$0xff]
        %v7234 = vld [vmem:[%s7204 + $0xe8] sm:$0xff]
        %v7235 = vld [vmem:[%s7204 + $0xf0] sm:$0xff]
        %v7236 = vld [vmem:[%s7204 + $0xf8] sm:$0xff]
        %v7237 = vld [vmem:[%s7204 + $0x100] sm:$0xff]
        %v7238 = vld [vmem:[%s7204 + $0x108] sm:$0xff]
        %v7239 = vld [vmem:[%s7204 + $0x110] sm:$0xff]
        %v7240 = vld [vmem:[%s7204 + $0x118] sm:$0xff]
        %v7241 = vld [vmem:[%s7204 + $0x120] sm:$0xff]
        %v7242 = vld [vmem:[%s7204 + $0x128] sm:$0xff]
        %v7243 = vld [vmem:[%s7204 + $0x130] sm:$0xff]
        %v7244 = vld [vmem:[%s7204 + $0x138] sm:$0xff]
        %v7245 = vld [vmem:[%s7204 + $0x140] sm:$0xff]
        %v7246 = vld [vmem:[%s7204 + $0x148] sm:$0xff]
        %v7247 = vld [vmem:[%s7204 + $0x150] sm:$0xff]
        %v7248 = vld [vmem:[%s7204 + $0x158] sm:$0xff]
        %v7249 = vld [vmem:[%s7204 + $0x160] sm:$0xff]
        %v7250 = vld [vmem:[%s7204 + $0x168] sm:$0xff]
        %v7251 = vld [vmem:[%s7204 + $0x170] sm:$0xff]
        %v7252 = vld [vmem:[%s7204 + $0x178] sm:$0xff]
        %v7253 = vld [vmem:[%s7204 + $0x180] sm:$0xff]
        %v7254 = vld [vmem:[%s7204 + $0x188] sm:$0xff]
        %v7255 = vld [vmem:[%s7204 + $0x190] sm:$0xff]
        %v7256 = vld [vmem:[%s7204 + $0x198] sm:$0xff]
        %v7257 = vld [vmem:[%s7204 + $0x1a0] sm:$0xff]
        %v7258 = vld [vmem:[%s7204 + $0x1a8] sm:$0xff]
        %v7259 = vld [vmem:[%s7204 + $0x1b0] sm:$0xff]
        %v7260 = vld [vmem:[%s7204 + $0x1b8] sm:$0xff]
        %v7261 = vld [vmem:[%s7204 + $0x1c0] sm:$0xff]
        %v7262 = vld [vmem:[%s7204 + $0x1c8] sm:$0xff]
        %v7263 = vld [vmem:[%s7204 + $0x1d0] sm:$0xff]
        %v7264 = vld [vmem:[%s7204 + $0x1d8] sm:$0xff]
        %v7265 = vld [vmem:[%s7204 + $0x1e0] sm:$0xff]
        %v7266 = vld [vmem:[%s7204 + $0x1e8] sm:$0xff]
        %v7267 = vld [vmem:[%s7204 + $0x1f0] sm:$0xff]
        %v7268 = vld [vmem:[%s7204 + $0x1f8] sm:$0xff]
        %v7269 = vld [vmem:[%s6 + $0x3] sm:$0x1]
        %v7270 = vlaneseq
        %v7271 = vshrl.u32 %v7270, 7
        %v7272 = vsub.s32 0, %v7271
        %v7273 = vrot.slane %v7269, %v7272
        %7274 = vmatprep.subr.mxu0 0.0
        %7275 = vmatpush1.msra.mxu0 %v7205
        %7276 = vmatprep.subr.mxu0 0.0
        %7277 = vmatpush1.msra.mxu0 %v7206
        %7278 = vmatprep.subr.mxu0 0.0
        %7279 = vmatpush1.msra.mxu0 %v7207
        %7280 = vmatprep.subr.mxu0 0.0
        %7281 = vmatpush1.msra.mxu0 %v7208
        %7282 = vmatprep.subr.mxu0 0.0
        %7283 = vmatpush1.msra.mxu0 %v7209
        %7284 = vmatprep.subr.mxu0 0.0
        %7285 = vmatpush1.msra.mxu0 %v7210
        %7286 = vmatprep.subr.mxu0 0.0
        %7287 = vmatpush1.msra.mxu0 %v7211
        %7288 = vmatprep.subr.mxu0 0.0
        %7289 = vmatpush1.msra.mxu0 %v7212
        %7290 = vmatprep.subr.mxu0 0.0
        %7291 = vmatpush1.msra.mxu0 %v7213
        %7292 = vmatprep.subr.mxu0 0.0
        %7293 = vmatpush1.msra.mxu0 %v7214
        %7294 = vmatprep.subr.mxu0 0.0
        %7295 = vmatpush1.msra.mxu0 %v7215
        %7296 = vmatprep.subr.mxu0 0.0
        %7297 = vmatpush1.msra.mxu0 %v7216
        %7298 = vmatprep.subr.mxu0 0.0
        %7299 = vmatpush1.msra.mxu0 %v7217
        %7300 = vmatprep.subr.mxu0 0.0
        %7301 = vmatpush1.msra.mxu0 %v7218
        %7302 = vmatprep.subr.mxu0 0.0
        %7303 = vmatpush1.msra.mxu0 %v7219
        %7304 = vmatprep.subr.mxu0 0.0
        %7305 = vmatpush1.msra.mxu0 %v7220
        %7306 = vmatprep.subr.mxu0 0.0
        %7307 = vmatpush1.msra.mxu0 %v7221
        %7308 = vmatprep.subr.mxu0 0.0
        %7309 = vmatpush1.msra.mxu0 %v7222
        %7310 = vmatprep.subr.mxu0 0.0
        %7311 = vmatpush1.msra.mxu0 %v7223
        %7312 = vmatprep.subr.mxu0 0.0
        %7313 = vmatpush1.msra.mxu0 %v7224
        %7314 = vmatprep.subr.mxu0 0.0
        %7315 = vmatpush1.msra.mxu0 %v7225
        %7316 = vmatprep.subr.mxu0 0.0
        %7317 = vmatpush1.msra.mxu0 %v7226
        %7318 = vmatprep.subr.mxu0 0.0
        %7319 = vmatpush1.msra.mxu0 %v7227
        %7320 = vmatprep.subr.mxu0 0.0
        %7321 = vmatpush1.msra.mxu0 %v7228
        %7322 = vmatprep.subr.mxu0 0.0
        %7323 = vmatpush1.msra.mxu0 %v7229
        %7324 = vmatprep.subr.mxu0 0.0
        %7325 = vmatpush1.msra.mxu0 %v7230
        %7326 = vmatprep.subr.mxu0 0.0
        %7327 = vmatpush1.msra.mxu0 %v7231
        %7328 = vmatprep.subr.mxu0 0.0
        %7329 = vmatpush1.msra.mxu0 %v7232
        %7330 = vmatprep.subr.mxu0 0.0
        %7331 = vmatpush1.msra.mxu0 %v7233
        %7332 = vmatprep.subr.mxu0 0.0
        %7333 = vmatpush1.msra.mxu0 %v7234
        %7334 = vmatprep.subr.mxu0 0.0
        %7335 = vmatpush1.msra.mxu0 %v7235
        %7336 = vmatprep.subr.mxu0 0.0
        %7337 = vmatpush1.msra.mxu0 %v7236
        %7338 = vmatprep.mubr.f32.mxu0 %v7201
        %7339 = vmatmul.mubr.f32.gmra.mrb[0].mxu0 %v7200
        %v7340 = vpop.f32.mrb[0].mxu0
        %v7341 = vadd.f32 %v7273, %v7340
        %v7342 = vpop.f32.mrb[0].mxu0
        %7343 = vdwg.mxu0
        %7344 = vmatprep.subr.mxu0 0.0
        %7345 = vmatpush1.msra.mxu0 %v7237
        %7346 = vmatprep.subr.mxu0 0.0
        %7347 = vmatpush1.msra.mxu0 %v7238
        %7348 = vmatprep.subr.mxu0 0.0
        %7349 = vmatpush1.msra.mxu0 %v7239
        %7350 = vmatprep.subr.mxu0 0.0
        %7351 = vmatpush1.msra.mxu0 %v7240
        %7352 = vmatprep.subr.mxu0 0.0
        %7353 = vmatpush1.msra.mxu0 %v7241
        %7354 = vmatprep.subr.mxu0 0.0
        %7355 = vmatpush1.msra.mxu0 %v7242
        %7356 = vmatprep.subr.mxu0 0.0
        %7357 = vmatpush1.msra.mxu0 %v7243
        %7358 = vmatprep.subr.mxu0 0.0
        %7359 = vmatpush1.msra.mxu0 %v7244
        %7360 = vmatprep.subr.mxu0 0.0
        %7361 = vmatpush1.msra.mxu0 %v7245
        %7362 = vmatprep.subr.mxu0 0.0
        %7363 = vmatpush1.msra.mxu0 %v7246
        %7364 = vmatprep.subr.mxu0 0.0
        %7365 = vmatpush1.msra.mxu0 %v7247
        %7366 = vmatprep.subr.mxu0 0.0
        %7367 = vmatpush1.msra.mxu0 %v7248
        %7368 = vmatprep.subr.mxu0 0.0
        %7369 = vmatpush1.msra.mxu0 %v7249
        %7370 = vmatprep.subr.mxu0 0.0
        %7371 = vmatpush1.msra.mxu0 %v7250
        %7372 = vmatprep.subr.mxu0 0.0
        %7373 = vmatpush1.msra.mxu0 %v7251
        %7374 = vmatprep.subr.mxu0 0.0
        %7375 = vmatpush1.msra.mxu0 %v7252
        %7376 = vmatprep.subr.mxu0 0.0
        %7377 = vmatpush1.msra.mxu0 %v7253
        %7378 = vmatprep.subr.mxu0 0.0
        %7379 = vmatpush1.msra.mxu0 %v7254
        %7380 = vmatprep.subr.mxu0 0.0
        %7381 = vmatpush1.msra.mxu0 %v7255
        %7382 = vmatprep.subr.mxu0 0.0
        %7383 = vmatpush1.msra.mxu0 %v7256
        %7384 = vmatprep.subr.mxu0 0.0
        %7385 = vmatpush1.msra.mxu0 %v7257
        %7386 = vmatprep.subr.mxu0 0.0
        %7387 = vmatpush1.msra.mxu0 %v7258
        %7388 = vmatprep.subr.mxu0 0.0
        %7389 = vmatpush1.msra.mxu0 %v7259
        %7390 = vmatprep.subr.mxu0 0.0
        %7391 = vmatpush1.msra.mxu0 %v7260
        %7392 = vmatprep.subr.mxu0 0.0
        %7393 = vmatpush1.msra.mxu0 %v7261
        %7394 = vmatprep.subr.mxu0 0.0
        %7395 = vmatpush1.msra.mxu0 %v7262
        %7396 = vmatprep.subr.mxu0 0.0
        %7397 = vmatpush1.msra.mxu0 %v7263
        %7398 = vmatprep.subr.mxu0 0.0
        %7399 = vmatpush1.msra.mxu0 %v7264
        %7400 = vmatprep.subr.mxu0 0.0
        %7401 = vmatpush1.msra.mxu0 %v7265
        %7402 = vmatprep.subr.mxu0 0.0
        %7403 = vmatpush1.msra.mxu0 %v7266
        %7404 = vmatprep.subr.mxu0 0.0
        %7405 = vmatpush1.msra.mxu0 %v7267
        %7406 = vmatprep.subr.mxu0 0.0
        %7407 = vmatpush1.msra.mxu0 %v7268
        %7408 = vmatprep.mubr.f32.mxu0 %v7203
        %7409 = vmatmul.mubr.f32.gmra.mrb[0].mxu0 %v7202
        %v7410 = vpop.f32.mrb[0].mxu0
        %v7411 = vadd.f32 %v7341, %v7410
        %v7412 = vpop.f32.mrb[0].mxu0
        %7413 = vdwg.mxu0
        %v7414 = vrot.slane %v1114, 4
        %v7415 = vrot.slane %v1115, 4
        %v7416 = vrot.slane %v1116, 4
        %v7417 = vrot.slane %v1117, 4
        %v7422 = vrot.slane %v1840, 3
        %v7423 = vrot.slane %v1841, 3
        %v7424 = vrot.slane %v1842, 3
        %v7425 = vrot.slane %v1843, 3
        %v7430 = vrot.slane %v2566, 2
        %v7431 = vrot.slane %v2567, 2
        %v7432 = vrot.slane %v2568, 2
        %v7433 = vrot.slane %v2569, 2
        %v7438 = vrot.slane %v3292, 1
        %v7439 = vrot.slane %v3293, 1
        %v7440 = vrot.slane %v3294, 1
        %v7441 = vrot.slane %v3295, 1
        %v7446 = vrot.slane %v4744, 7
        %v7447 = vrot.slane %v4745, 7
        %v7448 = vrot.slane %v4746, 7
        %v7449 = vrot.slane %v4747, 7
        %v7454 = vrot.slane %v5470, 6
        %v7455 = vrot.slane %v5471, 6
        %v7456 = vrot.slane %v5472, 6
        %v7457 = vrot.slane %v5473, 6
        %v7462 = vrot.slane %v6196, 5
        %v7463 = vrot.slane %v6197, 5
        %v7464 = vrot.slane %v6198, 5
        %v7465 = vrot.slane %v6199, 5
        %v7470 = vsel %vm6284, %v7414, %v7422
        %v7471 = vsel %vm6284, %v7415, %v7423
        %v7472 = vsel %vm6284, %v7416, %v7424
        %v7473 = vsel %vm6284, %v7417, %v7425
        %v7474 = vsel %vm6289, %v7470, %v7430
        %v7475 = vsel %vm6289, %v7471, %v7431
        %v7476 = vsel %vm6289, %v7472, %v7432
        %v7477 = vsel %vm6289, %v7473, %v7433
        %v7478 = vsel %vm6294, %v7474, %v7438
        %v7479 = vsel %vm6294, %v7475, %v7439
        %v7480 = vsel %vm6294, %v7476, %v7440
        %v7481 = vsel %vm6294, %v7477, %v7441
        %v7482 = vsel %vm6299, %v7478, %v4018
        %v7483 = vsel %vm6299, %v7479, %v4019
        %v7484 = vsel %vm6299, %v7480, %v4020
        %v7485 = vsel %vm6299, %v7481, %v4021
        %v7486 = vsel %vm6304, %v7482, %v7446
        %v7487 = vsel %vm6304, %v7483, %v7447
        %v7488 = vsel %vm6304, %v7484, %v7448
        %v7489 = vsel %vm6304, %v7485, %v7449
        %v7490 = vsel %vm6309, %v7486, %v7454
        %v7491 = vsel %vm6309, %v7487, %v7455
        %v7492 = vsel %vm6309, %v7488, %v7456
        %v7493 = vsel %vm6309, %v7489, %v7457
        %v7494 = vsel %vm6314, %v7490, %v7462
        %v7495 = vsel %vm6314, %v7491, %v7463
        %v7496 = vsel %vm6314, %v7492, %v7464
        %v7497 = vsel %vm6314, %v7493, %v7465
        %s7498 = scalar_lea.vmem %s5, 2048
        %v7499 = vld [vmem:[%s7498] sm:$0xff]
        %v7500 = vld [vmem:[%s7498 + $0x8] sm:$0xff]
        %v7501 = vld [vmem:[%s7498 + $0x10] sm:$0xff]
        %v7502 = vld [vmem:[%s7498 + $0x18] sm:$0xff]
        %v7503 = vld [vmem:[%s7498 + $0x20] sm:$0xff]
        %v7504 = vld [vmem:[%s7498 + $0x28] sm:$0xff]
        %v7505 = vld [vmem:[%s7498 + $0x30] sm:$0xff]
        %v7506 = vld [vmem:[%s7498 + $0x38] sm:$0xff]
        %v7507 = vld [vmem:[%s7498 + $0x40] sm:$0xff]
        %v7508 = vld [vmem:[%s7498 + $0x48] sm:$0xff]
        %v7509 = vld [vmem:[%s7498 + $0x50] sm:$0xff]
        %v7510 = vld [vmem:[%s7498 + $0x58] sm:$0xff]
        %v7511 = vld [vmem:[%s7498 + $0x60] sm:$0xff]
        %v7512 = vld [vmem:[%s7498 + $0x68] sm:$0xff]
        %v7513 = vld [vmem:[%s7498 + $0x70] sm:$0xff]
        %v7514 = vld [vmem:[%s7498 + $0x78] sm:$0xff]
        %v7515 = vld [vmem:[%s7498 + $0x80] sm:$0xff]
        %v7516 = vld [vmem:[%s7498 + $0x88] sm:$0xff]
        %v7517 = vld [vmem:[%s7498 + $0x90] sm:$0xff]
        %v7518 = vld [vmem:[%s7498 + $0x98] sm:$0xff]
        %v7519 = vld [vmem:[%s7498 + $0xa0] sm:$0xff]
        %v7520 = vld [vmem:[%s7498 + $0xa8] sm:$0xff]
        %v7521 = vld [vmem:[%s7498 + $0xb0] sm:$0xff]
        %v7522 = vld [vmem:[%s7498 + $0xb8] sm:$0xff]
        %v7523 = vld [vmem:[%s7498 + $0xc0] sm:$0xff]
        %v7524 = vld [vmem:[%s7498 + $0xc8] sm:$0xff]
        %v7525 = vld [vmem:[%s7498 + $0xd0] sm:$0xff]
        %v7526 = vld [vmem:[%s7498 + $0xd8] sm:$0xff]
        %v7527 = vld [vmem:[%s7498 + $0xe0] sm:$0xff]
        %v7528 = vld [vmem:[%s7498 + $0xe8] sm:$0xff]
        %v7529 = vld [vmem:[%s7498 + $0xf0] sm:$0xff]
        %v7530 = vld [vmem:[%s7498 + $0xf8] sm:$0xff]
        %v7531 = vld [vmem:[%s7498 + $0x100] sm:$0xff]
        %v7532 = vld [vmem:[%s7498 + $0x108] sm:$0xff]
        %v7533 = vld [vmem:[%s7498 + $0x110] sm:$0xff]
        %v7534 = vld [vmem:[%s7498 + $0x118] sm:$0xff]
        %v7535 = vld [vmem:[%s7498 + $0x120] sm:$0xff]
        %v7536 = vld [vmem:[%s7498 + $0x128] sm:$0xff]
        %v7537 = vld [vmem:[%s7498 + $0x130] sm:$0xff]
        %v7538 = vld [vmem:[%s7498 + $0x138] sm:$0xff]
        %v7539 = vld [vmem:[%s7498 + $0x140] sm:$0xff]
        %v7540 = vld [vmem:[%s7498 + $0x148] sm:$0xff]
        %v7541 = vld [vmem:[%s7498 + $0x150] sm:$0xff]
        %v7542 = vld [vmem:[%s7498 + $0x158] sm:$0xff]
        %v7543 = vld [vmem:[%s7498 + $0x160] sm:$0xff]
        %v7544 = vld [vmem:[%s7498 + $0x168] sm:$0xff]
        %v7545 = vld [vmem:[%s7498 + $0x170] sm:$0xff]
        %v7546 = vld [vmem:[%s7498 + $0x178] sm:$0xff]
        %v7547 = vld [vmem:[%s7498 + $0x180] sm:$0xff]
        %v7548 = vld [vmem:[%s7498 + $0x188] sm:$0xff]
        %v7549 = vld [vmem:[%s7498 + $0x190] sm:$0xff]
        %v7550 = vld [vmem:[%s7498 + $0x198] sm:$0xff]
        %v7551 = vld [vmem:[%s7498 + $0x1a0] sm:$0xff]
        %v7552 = vld [vmem:[%s7498 + $0x1a8] sm:$0xff]
        %v7553 = vld [vmem:[%s7498 + $0x1b0] sm:$0xff]
        %v7554 = vld [vmem:[%s7498 + $0x1b8] sm:$0xff]
        %v7555 = vld [vmem:[%s7498 + $0x1c0] sm:$0xff]
        %v7556 = vld [vmem:[%s7498 + $0x1c8] sm:$0xff]
        %v7557 = vld [vmem:[%s7498 + $0x1d0] sm:$0xff]
        %v7558 = vld [vmem:[%s7498 + $0x1d8] sm:$0xff]
        %v7559 = vld [vmem:[%s7498 + $0x1e0] sm:$0xff]
        %v7560 = vld [vmem:[%s7498 + $0x1e8] sm:$0xff]
        %v7561 = vld [vmem:[%s7498 + $0x1f0] sm:$0xff]
        %v7562 = vld [vmem:[%s7498 + $0x1f8] sm:$0xff]
        %v7563 = vld [vmem:[%s6 + $0x4] sm:$0x1]
        %v7564 = vlaneseq
        %v7565 = vshrl.u32 %v7564, 7
        %v7566 = vsub.s32 0, %v7565
        %v7567 = vrot.slane %v7563, %v7566
        %7568 = vmatprep.subr.mxu0 0.0
        %7569 = vmatpush1.msra.mxu0 %v7499
        %7570 = vmatprep.subr.mxu0 0.0
        %7571 = vmatpush1.msra.mxu0 %v7500
        %7572 = vmatprep.subr.mxu0 0.0
        %7573 = vmatpush1.msra.mxu0 %v7501
        %7574 = vmatprep.subr.mxu0 0.0
        %7575 = vmatpush1.msra.mxu0 %v7502
        %7576 = vmatprep.subr.mxu0 0.0
        %7577 = vmatpush1.msra.mxu0 %v7503
        %7578 = vmatprep.subr.mxu0 0.0
        %7579 = vmatpush1.msra.mxu0 %v7504
        %7580 = vmatprep.subr.mxu0 0.0
        %7581 = vmatpush1.msra.mxu0 %v7505
        %7582 = vmatprep.subr.mxu0 0.0
        %7583 = vmatpush1.msra.mxu0 %v7506
        %7584 = vmatprep.subr.mxu0 0.0
        %7585 = vmatpush1.msra.mxu0 %v7507
        %7586 = vmatprep.subr.mxu0 0.0
        %7587 = vmatpush1.msra.mxu0 %v7508
        %7588 = vmatprep.subr.mxu0 0.0
        %7589 = vmatpush1.msra.mxu0 %v7509
        %7590 = vmatprep.subr.mxu0 0.0
        %7591 = vmatpush1.msra.mxu0 %v7510
        %7592 = vmatprep.subr.mxu0 0.0
        %7593 = vmatpush1.msra.mxu0 %v7511
        %7594 = vmatprep.subr.mxu0 0.0
        %7595 = vmatpush1.msra.mxu0 %v7512
        %7596 = vmatprep.subr.mxu0 0.0
        %7597 = vmatpush1.msra.mxu0 %v7513
        %7598 = vmatprep.subr.mxu0 0.0
        %7599 = vmatpush1.msra.mxu0 %v7514
        %7600 = vmatprep.subr.mxu0 0.0
        %7601 = vmatpush1.msra.mxu0 %v7515
        %7602 = vmatprep.subr.mxu0 0.0
        %7603 = vmatpush1.msra.mxu0 %v7516
        %7604 = vmatprep.subr.mxu0 0.0
        %7605 = vmatpush1.msra.mxu0 %v7517
        %7606 = vmatprep.subr.mxu0 0.0
        %7607 = vmatpush1.msra.mxu0 %v7518
        %7608 = vmatprep.subr.mxu0 0.0
        %7609 = vmatpush1.msra.mxu0 %v7519
        %7610 = vmatprep.subr.mxu0 0.0
        %7611 = vmatpush1.msra.mxu0 %v7520
        %7612 = vmatprep.subr.mxu0 0.0
        %7613 = vmatpush1.msra.mxu0 %v7521
        %7614 = vmatprep.subr.mxu0 0.0
        %7615 = vmatpush1.msra.mxu0 %v7522
        %7616 = vmatprep.subr.mxu0 0.0
        %7617 = vmatpush1.msra.mxu0 %v7523
        %7618 = vmatprep.subr.mxu0 0.0
        %7619 = vmatpush1.msra.mxu0 %v7524
        %7620 = vmatprep.subr.mxu0 0.0
        %7621 = vmatpush1.msra.mxu0 %v7525
        %7622 = vmatprep.subr.mxu0 0.0
        %7623 = vmatpush1.msra.mxu0 %v7526
        %7624 = vmatprep.subr.mxu0 0.0
        %7625 = vmatpush1.msra.mxu0 %v7527
        %7626 = vmatprep.subr.mxu0 0.0
        %7627 = vmatpush1.msra.mxu0 %v7528
        %7628 = vmatprep.subr.mxu0 0.0
        %7629 = vmatpush1.msra.mxu0 %v7529
        %7630 = vmatprep.subr.mxu0 0.0
        %7631 = vmatpush1.msra.mxu0 %v7530
        %7632 = vmatprep.mubr.f32.mxu0 %v7495
        %7633 = vmatmul.mubr.f32.gmra.mrb[0].mxu0 %v7494
        %v7634 = vpop.f32.mrb[0].mxu0
        %v7635 = vadd.f32 %v7567, %v7634
        %v7636 = vpop.f32.mrb[0].mxu0
        %7637 = vdwg.mxu0
        %7638 = vmatprep.subr.mxu0 0.0
        %7639 = vmatpush1.msra.mxu0 %v7531
        %7640 = vmatprep.subr.mxu0 0.0
        %7641 = vmatpush1.msra.mxu0 %v7532
        %7642 = vmatprep.subr.mxu0 0.0
        %7643 = vmatpush1.msra.mxu0 %v7533
        %7644 = vmatprep.subr.mxu0 0.0
        %7645 = vmatpush1.msra.mxu0 %v7534
        %7646 = vmatprep.subr.mxu0 0.0
        %7647 = vmatpush1.msra.mxu0 %v7535
        %7648 = vmatprep.subr.mxu0 0.0
        %7649 = vmatpush1.msra.mxu0 %v7536
        %7650 = vmatprep.subr.mxu0 0.0
        %7651 = vmatpush1.msra.mxu0 %v7537
        %7652 = vmatprep.subr.mxu0 0.0
        %7653 = vmatpush1.msra.mxu0 %v7538
        %7654 = vmatprep.subr.mxu0 0.0
        %7655 = vmatpush1.msra.mxu0 %v7539
        %7656 = vmatprep.subr.mxu0 0.0
        %7657 = vmatpush1.msra.mxu0 %v7540
        %7658 = vmatprep.subr.mxu0 0.0
        %7659 = vmatpush1.msra.mxu0 %v7541
        %7660 = vmatprep.subr.mxu0 0.0
        %7661 = vmatpush1.msra.mxu0 %v7542
        %7662 = vmatprep.subr.mxu0 0.0
        %7663 = vmatpush1.msra.mxu0 %v7543
        %7664 = vmatprep.subr.mxu0 0.0
        %7665 = vmatpush1.msra.mxu0 %v7544
        %7666 = vmatprep.subr.mxu0 0.0
        %7667 = vmatpush1.msra.mxu0 %v7545
        %7668 = vmatprep.subr.mxu0 0.0
        %7669 = vmatpush1.msra.mxu0 %v7546
        %7670 = vmatprep.subr.mxu0 0.0
        %7671 = vmatpush1.msra.mxu0 %v7547
        %7672 = vmatprep.subr.mxu0 0.0
        %7673 = vmatpush1.msra.mxu0 %v7548
        %7674 = vmatprep.subr.mxu0 0.0
        %7675 = vmatpush1.msra.mxu0 %v7549
        %7676 = vmatprep.subr.mxu0 0.0
        %7677 = vmatpush1.msra.mxu0 %v7550
        %7678 = vmatprep.subr.mxu0 0.0
        %7679 = vmatpush1.msra.mxu0 %v7551
        %7680 = vmatprep.subr.mxu0 0.0
        %7681 = vmatpush1.msra.mxu0 %v7552
        %7682 = vmatprep.subr.mxu0 0.0
        %7683 = vmatpush1.msra.mxu0 %v7553
        %7684 = vmatprep.subr.mxu0 0.0
        %7685 = vmatpush1.msra.mxu0 %v7554
        %7686 = vmatprep.subr.mxu0 0.0
        %7687 = vmatpush1.msra.mxu0 %v7555
        %7688 = vmatprep.subr.mxu0 0.0
        %7689 = vmatpush1.msra.mxu0 %v7556
        %7690 = vmatprep.subr.mxu0 0.0
        %7691 = vmatpush1.msra.mxu0 %v7557
        %7692 = vmatprep.subr.mxu0 0.0
        %7693 = vmatpush1.msra.mxu0 %v7558
        %7694 = vmatprep.subr.mxu0 0.0
        %7695 = vmatpush1.msra.mxu0 %v7559
        %7696 = vmatprep.subr.mxu0 0.0
        %7697 = vmatpush1.msra.mxu0 %v7560
        %7698 = vmatprep.subr.mxu0 0.0
        %7699 = vmatpush1.msra.mxu0 %v7561
        %7700 = vmatprep.subr.mxu0 0.0
        %7701 = vmatpush1.msra.mxu0 %v7562
        %7702 = vmatprep.mubr.f32.mxu0 %v7497
        %7703 = vmatmul.mubr.f32.gmra.mrb[0].mxu0 %v7496
        %v7704 = vpop.f32.mrb[0].mxu0
        %v7705 = vadd.f32 %v7635, %v7704
        %v7706 = vpop.f32.mrb[0].mxu0
        %7707 = vdwg.mxu0
        %v7708 = vrot.slane %v1114, 5
        %v7709 = vrot.slane %v1115, 5
        %v7710 = vrot.slane %v1116, 5
        %v7711 = vrot.slane %v1117, 5
        %v7716 = vrot.slane %v1840, 4
        %v7717 = vrot.slane %v1841, 4
        %v7718 = vrot.slane %v1842, 4
        %v7719 = vrot.slane %v1843, 4
        %v7724 = vrot.slane %v2566, 3
        %v7725 = vrot.slane %v2567, 3
        %v7726 = vrot.slane %v2568, 3
        %v7727 = vrot.slane %v2569, 3
        %v7732 = vrot.slane %v3292, 2
        %v7733 = vrot.slane %v3293, 2
        %v7734 = vrot.slane %v3294, 2
        %v7735 = vrot.slane %v3295, 2
        %v7740 = vrot.slane %v4018, 1
        %v7741 = vrot.slane %v4019, 1
        %v7742 = vrot.slane %v4020, 1
        %v7743 = vrot.slane %v4021, 1
        %v7748 = vrot.slane %v5470, 7
        %v7749 = vrot.slane %v5471, 7
        %v7750 = vrot.slane %v5472, 7
        %v7751 = vrot.slane %v5473, 7
        %v7756 = vrot.slane %v6196, 6
        %v7757 = vrot.slane %v6197, 6
        %v7758 = vrot.slane %v6198, 6
        %v7759 = vrot.slane %v6199, 6
        %v7764 = vsel %vm6284, %v7708, %v7716
        %v7765 = vsel %vm6284, %v7709, %v7717
        %v7766 = vsel %vm6284, %v7710, %v7718
        %v7767 = vsel %vm6284, %v7711, %v7719
        %v7768 = vsel %vm6289, %v7764, %v7724
        %v7769 = vsel %vm6289, %v7765, %v7725
        %v7770 = vsel %vm6289, %v7766, %v7726
        %v7771 = vsel %vm6289, %v7767, %v7727
        %v7772 = vsel %vm6294, %v7768, %v7732
        %v7773 = vsel %vm6294, %v7769, %v7733
        %v7774 = vsel %vm6294, %v7770, %v7734
        %v7775 = vsel %vm6294, %v7771, %v7735
        %v7776 = vsel %vm6299, %v7772, %v7740
        %v7777 = vsel %vm6299, %v7773, %v7741
        %v7778 = vsel %vm6299, %v7774, %v7742
        %v7779 = vsel %vm6299, %v7775, %v7743
        %v7780 = vsel %vm6304, %v7776, %v4744
        %v7781 = vsel %vm6304, %v7777, %v4745
        %v7782 = vsel %vm6304, %v7778, %v4746
        %v7783 = vsel %vm6304, %v7779, %v4747
        %v7784 = vsel %vm6309, %v7780, %v7748
        %v7785 = vsel %vm6309, %v7781, %v7749
        %v7786 = vsel %vm6309, %v7782, %v7750
        %v7787 = vsel %vm6309, %v7783, %v7751
        %v7788 = vsel %vm6314, %v7784, %v7756
        %v7789 = vsel %vm6314, %v7785, %v7757
        %v7790 = vsel %vm6314, %v7786, %v7758
        %v7791 = vsel %vm6314, %v7787, %v7759
        %s7792 = scalar_lea.vmem %s5, 2560
        %v7793 = vld [vmem:[%s7792] sm:$0xff]
        %v7794 = vld [vmem:[%s7792 + $0x8] sm:$0xff]
        %v7795 = vld [vmem:[%s7792 + $0x10] sm:$0xff]
        %v7796 = vld [vmem:[%s7792 + $0x18] sm:$0xff]
        %v7797 = vld [vmem:[%s7792 + $0x20] sm:$0xff]
        %v7798 = vld [vmem:[%s7792 + $0x28] sm:$0xff]
        %v7799 = vld [vmem:[%s7792 + $0x30] sm:$0xff]
        %v7800 = vld [vmem:[%s7792 + $0x38] sm:$0xff]
        %v7801 = vld [vmem:[%s7792 + $0x40] sm:$0xff]
        %v7802 = vld [vmem:[%s7792 + $0x48] sm:$0xff]
        %v7803 = vld [vmem:[%s7792 + $0x50] sm:$0xff]
        %v7804 = vld [vmem:[%s7792 + $0x58] sm:$0xff]
        %v7805 = vld [vmem:[%s7792 + $0x60] sm:$0xff]
        %v7806 = vld [vmem:[%s7792 + $0x68] sm:$0xff]
        %v7807 = vld [vmem:[%s7792 + $0x70] sm:$0xff]
        %v7808 = vld [vmem:[%s7792 + $0x78] sm:$0xff]
        %v7809 = vld [vmem:[%s7792 + $0x80] sm:$0xff]
        %v7810 = vld [vmem:[%s7792 + $0x88] sm:$0xff]
        %v7811 = vld [vmem:[%s7792 + $0x90] sm:$0xff]
        %v7812 = vld [vmem:[%s7792 + $0x98] sm:$0xff]
        %v7813 = vld [vmem:[%s7792 + $0xa0] sm:$0xff]
        %v7814 = vld [vmem:[%s7792 + $0xa8] sm:$0xff]
        %v7815 = vld [vmem:[%s7792 + $0xb0] sm:$0xff]
        %v7816 = vld [vmem:[%s7792 + $0xb8] sm:$0xff]
        %v7817 = vld [vmem:[%s7792 + $0xc0] sm:$0xff]
        %v7818 = vld [vmem:[%s7792 + $0xc8] sm:$0xff]
        %v7819 = vld [vmem:[%s7792 + $0xd0] sm:$0xff]
        %v7820 = vld [vmem:[%s7792 + $0xd8] sm:$0xff]
        %v7821 = vld [vmem:[%s7792 + $0xe0] sm:$0xff]
        %v7822 = vld [vmem:[%s7792 + $0xe8] sm:$0xff]
        %v7823 = vld [vmem:[%s7792 + $0xf0] sm:$0xff]
        %v7824 = vld [vmem:[%s7792 + $0xf8] sm:$0xff]
        %v7825 = vld [vmem:[%s7792 + $0x100] sm:$0xff]
        %v7826 = vld [vmem:[%s7792 + $0x108] sm:$0xff]
        %v7827 = vld [vmem:[%s7792 + $0x110] sm:$0xff]
        %v7828 = vld [vmem:[%s7792 + $0x118] sm:$0xff]
        %v7829 = vld [vmem:[%s7792 + $0x120] sm:$0xff]
        %v7830 = vld [vmem:[%s7792 + $0x128] sm:$0xff]
        %v7831 = vld [vmem:[%s7792 + $0x130] sm:$0xff]
        %v7832 = vld [vmem:[%s7792 + $0x138] sm:$0xff]
        %v7833 = vld [vmem:[%s7792 + $0x140] sm:$0xff]
        %v7834 = vld [vmem:[%s7792 + $0x148] sm:$0xff]
        %v7835 = vld [vmem:[%s7792 + $0x150] sm:$0xff]
        %v7836 = vld [vmem:[%s7792 + $0x158] sm:$0xff]
        %v7837 = vld [vmem:[%s7792 + $0x160] sm:$0xff]
        %v7838 = vld [vmem:[%s7792 + $0x168] sm:$0xff]
        %v7839 = vld [vmem:[%s7792 + $0x170] sm:$0xff]
        %v7840 = vld [vmem:[%s7792 + $0x178] sm:$0xff]
        %v7841 = vld [vmem:[%s7792 + $0x180] sm:$0xff]
        %v7842 = vld [vmem:[%s7792 + $0x188] sm:$0xff]
        %v7843 = vld [vmem:[%s7792 + $0x190] sm:$0xff]
        %v7844 = vld [vmem:[%s7792 + $0x198] sm:$0xff]
        %v7845 = vld [vmem:[%s7792 + $0x1a0] sm:$0xff]
        %v7846 = vld [vmem:[%s7792 + $0x1a8] sm:$0xff]
        %v7847 = vld [vmem:[%s7792 + $0x1b0] sm:$0xff]
        %v7848 = vld [vmem:[%s7792 + $0x1b8] sm:$0xff]
        %v7849 = vld [vmem:[%s7792 + $0x1c0] sm:$0xff]
        %v7850 = vld [vmem:[%s7792 + $0x1c8] sm:$0xff]
        %v7851 = vld [vmem:[%s7792 + $0x1d0] sm:$0xff]
        %v7852 = vld [vmem:[%s7792 + $0x1d8] sm:$0xff]
        %v7853 = vld [vmem:[%s7792 + $0x1e0] sm:$0xff]
        %v7854 = vld [vmem:[%s7792 + $0x1e8] sm:$0xff]
        %v7855 = vld [vmem:[%s7792 + $0x1f0] sm:$0xff]
        %v7856 = vld [vmem:[%s7792 + $0x1f8] sm:$0xff]
        %v7857 = vld [vmem:[%s6 + $0x5] sm:$0x1]
        %v7858 = vlaneseq
        %v7859 = vshrl.u32 %v7858, 7
        %v7860 = vsub.s32 0, %v7859
        %v7861 = vrot.slane %v7857, %v7860
        %7862 = vmatprep.subr.mxu0 0.0
        %7863 = vmatpush1.msra.mxu0 %v7793
        %7864 = vmatprep.subr.mxu0 0.0
        %7865 = vmatpush1.msra.mxu0 %v7794
        %7866 = vmatprep.subr.mxu0 0.0
        %7867 = vmatpush1.msra.mxu0 %v7795
        %7868 = vmatprep.subr.mxu0 0.0
        %7869 = vmatpush1.msra.mxu0 %v7796
        %7870 = vmatprep.subr.mxu0 0.0
        %7871 = vmatpush1.msra.mxu0 %v7797
        %7872 = vmatprep.subr.mxu0 0.0
        %7873 = vmatpush1.msra.mxu0 %v7798
        %7874 = vmatprep.subr.mxu0 0.0
        %7875 = vmatpush1.msra.mxu0 %v7799
        %7876 = vmatprep.subr.mxu0 0.0
        %7877 = vmatpush1.msra.mxu0 %v7800
        %7878 = vmatprep.subr.mxu0 0.0
        %7879 = vmatpush1.msra.mxu0 %v7801
        %7880 = vmatprep.subr.mxu0 0.0
        %7881 = vmatpush1.msra.mxu0 %v7802
        %7882 = vmatprep.subr.mxu0 0.0
        %7883 = vmatpush1.msra.mxu0 %v7803
        %7884 = vmatprep.subr.mxu0 0.0
        %7885 = vmatpush1.msra.mxu0 %v7804
        %7886 = vmatprep.subr.mxu0 0.0
        %7887 = vmatpush1.msra.mxu0 %v7805
        %7888 = vmatprep.subr.mxu0 0.0
        %7889 = vmatpush1.msra.mxu0 %v7806
        %7890 = vmatprep.subr.mxu0 0.0
        %7891 = vmatpush1.msra.mxu0 %v7807
        %7892 = vmatprep.subr.mxu0 0.0
        %7893 = vmatpush1.msra.mxu0 %v7808
        %7894 = vmatprep.subr.mxu0 0.0
        %7895 = vmatpush1.msra.mxu0 %v7809
        %7896 = vmatprep.subr.mxu0 0.0
        %7897 = vmatpush1.msra.mxu0 %v7810
        %7898 = vmatprep.subr.mxu0 0.0
        %7899 = vmatpush1.msra.mxu0 %v7811
        %7900 = vmatprep.subr.mxu0 0.0
        %7901 = vmatpush1.msra.mxu0 %v7812
        %7902 = vmatprep.subr.mxu0 0.0
        %7903 = vmatpush1.msra.mxu0 %v7813
        %7904 = vmatprep.subr.mxu0 0.0
        %7905 = vmatpush1.msra.mxu0 %v7814
        %7906 = vmatprep.subr.mxu0 0.0
        %7907 = vmatpush1.msra.mxu0 %v7815
        %7908 = vmatprep.subr.mxu0 0.0
        %7909 = vmatpush1.msra.mxu0 %v7816
        %7910 = vmatprep.subr.mxu0 0.0
        %7911 = vmatpush1.msra.mxu0 %v7817
        %7912 = vmatprep.subr.mxu0 0.0
        %7913 = vmatpush1.msra.mxu0 %v7818
        %7914 = vmatprep.subr.mxu0 0.0
        %7915 = vmatpush1.msra.mxu0 %v7819
        %7916 = vmatprep.subr.mxu0 0.0
        %7917 = vmatpush1.msra.mxu0 %v7820
        %7918 = vmatprep.subr.mxu0 0.0
        %7919 = vmatpush1.msra.mxu0 %v7821
        %7920 = vmatprep.subr.mxu0 0.0
        %7921 = vmatpush1.msra.mxu0 %v7822
        %7922 = vmatprep.subr.mxu0 0.0
        %7923 = vmatpush1.msra.mxu0 %v7823
        %7924 = vmatprep.subr.mxu0 0.0
        %7925 = vmatpush1.msra.mxu0 %v7824
        %7926 = vmatprep.mubr.f32.mxu0 %v7789
        %7927 = vmatmul.mubr.f32.gmra.mrb[0].mxu0 %v7788
        %v7928 = vpop.f32.mrb[0].mxu0
        %v7929 = vadd.f32 %v7861, %v7928
        %v7930 = vpop.f32.mrb[0].mxu0
        %7931 = vdwg.mxu0
        %7932 = vmatprep.subr.mxu0 0.0
        %7933 = vmatpush1.msra.mxu0 %v7825
        %7934 = vmatprep.subr.mxu0 0.0
        %7935 = vmatpush1.msra.mxu0 %v7826
        %7936 = vmatprep.subr.mxu0 0.0
        %7937 = vmatpush1.msra.mxu0 %v7827
        %7938 = vmatprep.subr.mxu0 0.0
        %7939 = vmatpush1.msra.mxu0 %v7828
        %7940 = vmatprep.subr.mxu0 0.0
        %7941 = vmatpush1.msra.mxu0 %v7829
        %7942 = vmatprep.subr.mxu0 0.0
        %7943 = vmatpush1.msra.mxu0 %v7830
        %7944 = vmatprep.subr.mxu0 0.0
        %7945 = vmatpush1.msra.mxu0 %v7831
        %7946 = vmatprep.subr.mxu0 0.0
        %7947 = vmatpush1.msra.mxu0 %v7832
        %7948 = vmatprep.subr.mxu0 0.0
        %7949 = vmatpush1.msra.mxu0 %v7833
        %7950 = vmatprep.subr.mxu0 0.0
        %7951 = vmatpush1.msra.mxu0 %v7834
        %7952 = vmatprep.subr.mxu0 0.0
        %7953 = vmatpush1.msra.mxu0 %v7835
        %7954 = vmatprep.subr.mxu0 0.0
        %7955 = vmatpush1.msra.mxu0 %v7836
        %7956 = vmatprep.subr.mxu0 0.0
        %7957 = vmatpush1.msra.mxu0 %v7837
        %7958 = vmatprep.subr.mxu0 0.0
        %7959 = vmatpush1.msra.mxu0 %v7838
        %7960 = vmatprep.subr.mxu0 0.0
        %7961 = vmatpush1.msra.mxu0 %v7839
        %7962 = vmatprep.subr.mxu0 0.0
        %7963 = vmatpush1.msra.mxu0 %v7840
        %7964 = vmatprep.subr.mxu0 0.0
        %7965 = vmatpush1.msra.mxu0 %v7841
        %7966 = vmatprep.subr.mxu0 0.0
        %7967 = vmatpush1.msra.mxu0 %v7842
        %7968 = vmatprep.subr.mxu0 0.0
        %7969 = vmatpush1.msra.mxu0 %v7843
        %7970 = vmatprep.subr.mxu0 0.0
        %7971 = vmatpush1.msra.mxu0 %v7844
        %7972 = vmatprep.subr.mxu0 0.0
        %7973 = vmatpush1.msra.mxu0 %v7845
        %7974 = vmatprep.subr.mxu0 0.0
        %7975 = vmatpush1.msra.mxu0 %v7846
        %7976 = vmatprep.subr.mxu0 0.0
        %7977 = vmatpush1.msra.mxu0 %v7847
        %7978 = vmatprep.subr.mxu0 0.0
        %7979 = vmatpush1.msra.mxu0 %v7848
        %7980 = vmatprep.subr.mxu0 0.0
        %7981 = vmatpush1.msra.mxu0 %v7849
        %7982 = vmatprep.subr.mxu0 0.0
        %7983 = vmatpush1.msra.mxu0 %v7850
        %7984 = vmatprep.subr.mxu0 0.0
        %7985 = vmatpush1.msra.mxu0 %v7851
        %7986 = vmatprep.subr.mxu0 0.0
        %7987 = vmatpush1.msra.mxu0 %v7852
        %7988 = vmatprep.subr.mxu0 0.0
        %7989 = vmatpush1.msra.mxu0 %v7853
        %7990 = vmatprep.subr.mxu0 0.0
        %7991 = vmatpush1.msra.mxu0 %v7854
        %7992 = vmatprep.subr.mxu0 0.0
        %7993 = vmatpush1.msra.mxu0 %v7855
        %7994 = vmatprep.subr.mxu0 0.0
        %7995 = vmatpush1.msra.mxu0 %v7856
        %7996 = vmatprep.mubr.f32.mxu0 %v7791
        %7997 = vmatmul.mubr.f32.gmra.mrb[0].mxu0 %v7790
        %v7998 = vpop.f32.mrb[0].mxu0
        %v7999 = vadd.f32 %v7929, %v7998
        %v8000 = vpop.f32.mrb[0].mxu0
        %8001 = vdwg.mxu0
        %v8002 = vrot.slane %v1114, 6
        %v8003 = vrot.slane %v1115, 6
        %v8004 = vrot.slane %v1116, 6
        %v8005 = vrot.slane %v1117, 6
        %v8010 = vrot.slane %v1840, 5
        %v8011 = vrot.slane %v1841, 5
        %v8012 = vrot.slane %v1842, 5
        %v8013 = vrot.slane %v1843, 5
        %v8018 = vrot.slane %v2566, 4
        %v8019 = vrot.slane %v2567, 4
        %v8020 = vrot.slane %v2568, 4
        %v8021 = vrot.slane %v2569, 4
        %v8026 = vrot.slane %v3292, 3
        %v8027 = vrot.slane %v3293, 3
        %v8028 = vrot.slane %v3294, 3
        %v8029 = vrot.slane %v3295, 3
        %v8034 = vrot.slane %v4018, 2
        %v8035 = vrot.slane %v4019, 2
        %v8036 = vrot.slane %v4020, 2
        %v8037 = vrot.slane %v4021, 2
        %v8042 = vrot.slane %v4744, 1
        %v8043 = vrot.slane %v4745, 1
        %v8044 = vrot.slane %v4746, 1
        %v8045 = vrot.slane %v4747, 1
        %v8050 = vrot.slane %v6196, 7
        %v8051 = vrot.slane %v6197, 7
        %v8052 = vrot.slane %v6198, 7
        %v8053 = vrot.slane %v6199, 7
        %v8058 = vsel %vm6284, %v8002, %v8010
        %v8059 = vsel %vm6284, %v8003, %v8011
        %v8060 = vsel %vm6284, %v8004, %v8012
        %v8061 = vsel %vm6284, %v8005, %v8013
        %v8062 = vsel %vm6289, %v8058, %v8018
        %v8063 = vsel %vm6289, %v8059, %v8019
        %v8064 = vsel %vm6289, %v8060, %v8020
        %v8065 = vsel %vm6289, %v8061, %v8021
        %v8066 = vsel %vm6294, %v8062, %v8026
        %v8067 = vsel %vm6294, %v8063, %v8027
        %v8068 = vsel %vm6294, %v8064, %v8028
        %v8069 = vsel %vm6294, %v8065, %v8029
        %v8070 = vsel %vm6299, %v8066, %v8034
        %v8071 = vsel %vm6299, %v8067, %v8035
        %v8072 = vsel %vm6299, %v8068, %v8036
        %v8073 = vsel %vm6299, %v8069, %v8037
        %v8074 = vsel %vm6304, %v8070, %v8042
        %v8075 = vsel %vm6304, %v8071, %v8043
        %v8076 = vsel %vm6304, %v8072, %v8044
        %v8077 = vsel %vm6304, %v8073, %v8045
        %v8078 = vsel %vm6309, %v8074, %v5470
        %v8079 = vsel %vm6309, %v8075, %v5471
        %v8080 = vsel %vm6309, %v8076, %v5472
        %v8081 = vsel %vm6309, %v8077, %v5473
        %v8082 = vsel %vm6314, %v8078, %v8050
        %v8083 = vsel %vm6314, %v8079, %v8051
        %v8084 = vsel %vm6314, %v8080, %v8052
        %v8085 = vsel %vm6314, %v8081, %v8053
        %s8086 = scalar_lea.vmem %s5, 3072
        %v8087 = vld [vmem:[%s8086] sm:$0xff]
        %v8088 = vld [vmem:[%s8086 + $0x8] sm:$0xff]
        %v8089 = vld [vmem:[%s8086 + $0x10] sm:$0xff]
        %v8090 = vld [vmem:[%s8086 + $0x18] sm:$0xff]
        %v8091 = vld [vmem:[%s8086 + $0x20] sm:$0xff]
        %v8092 = vld [vmem:[%s8086 + $0x28] sm:$0xff]
        %v8093 = vld [vmem:[%s8086 + $0x30] sm:$0xff]
        %v8094 = vld [vmem:[%s8086 + $0x38] sm:$0xff]
        %v8095 = vld [vmem:[%s8086 + $0x40] sm:$0xff]
        %v8096 = vld [vmem:[%s8086 + $0x48] sm:$0xff]
        %v8097 = vld [vmem:[%s8086 + $0x50] sm:$0xff]
        %v8098 = vld [vmem:[%s8086 + $0x58] sm:$0xff]
        %v8099 = vld [vmem:[%s8086 + $0x60] sm:$0xff]
        %v8100 = vld [vmem:[%s8086 + $0x68] sm:$0xff]
        %v8101 = vld [vmem:[%s8086 + $0x70] sm:$0xff]
        %v8102 = vld [vmem:[%s8086 + $0x78] sm:$0xff]
        %v8103 = vld [vmem:[%s8086 + $0x80] sm:$0xff]
        %v8104 = vld [vmem:[%s8086 + $0x88] sm:$0xff]
        %v8105 = vld [vmem:[%s8086 + $0x90] sm:$0xff]
        %v8106 = vld [vmem:[%s8086 + $0x98] sm:$0xff]
        %v8107 = vld [vmem:[%s8086 + $0xa0] sm:$0xff]
        %v8108 = vld [vmem:[%s8086 + $0xa8] sm:$0xff]
        %v8109 = vld [vmem:[%s8086 + $0xb0] sm:$0xff]
        %v8110 = vld [vmem:[%s8086 + $0xb8] sm:$0xff]
        %v8111 = vld [vmem:[%s8086 + $0xc0] sm:$0xff]
        %v8112 = vld [vmem:[%s8086 + $0xc8] sm:$0xff]
        %v8113 = vld [vmem:[%s8086 + $0xd0] sm:$0xff]
        %v8114 = vld [vmem:[%s8086 + $0xd8] sm:$0xff]
        %v8115 = vld [vmem:[%s8086 + $0xe0] sm:$0xff]
        %v8116 = vld [vmem:[%s8086 + $0xe8] sm:$0xff]
        %v8117 = vld [vmem:[%s8086 + $0xf0] sm:$0xff]
        %v8118 = vld [vmem:[%s8086 + $0xf8] sm:$0xff]
        %v8119 = vld [vmem:[%s8086 + $0x100] sm:$0xff]
        %v8120 = vld [vmem:[%s8086 + $0x108] sm:$0xff]
        %v8121 = vld [vmem:[%s8086 + $0x110] sm:$0xff]
        %v8122 = vld [vmem:[%s8086 + $0x118] sm:$0xff]
        %v8123 = vld [vmem:[%s8086 + $0x120] sm:$0xff]
        %v8124 = vld [vmem:[%s8086 + $0x128] sm:$0xff]
        %v8125 = vld [vmem:[%s8086 + $0x130] sm:$0xff]
        %v8126 = vld [vmem:[%s8086 + $0x138] sm:$0xff]
        %v8127 = vld [vmem:[%s8086 + $0x140] sm:$0xff]
        %v8128 = vld [vmem:[%s8086 + $0x148] sm:$0xff]
        %v8129 = vld [vmem:[%s8086 + $0x150] sm:$0xff]
        %v8130 = vld [vmem:[%s8086 + $0x158] sm:$0xff]
        %v8131 = vld [vmem:[%s8086 + $0x160] sm:$0xff]
        %v8132 = vld [vmem:[%s8086 + $0x168] sm:$0xff]
        %v8133 = vld [vmem:[%s8086 + $0x170] sm:$0xff]
        %v8134 = vld [vmem:[%s8086 + $0x178] sm:$0xff]
        %v8135 = vld [vmem:[%s8086 + $0x180] sm:$0xff]
        %v8136 = vld [vmem:[%s8086 + $0x188] sm:$0xff]
        %v8137 = vld [vmem:[%s8086 + $0x190] sm:$0xff]
        %v8138 = vld [vmem:[%s8086 + $0x198] sm:$0xff]
        %v8139 = vld [vmem:[%s8086 + $0x1a0] sm:$0xff]
        %v8140 = vld [vmem:[%s8086 + $0x1a8] sm:$0xff]
        %v8141 = vld [vmem:[%s8086 + $0x1b0] sm:$0xff]
        %v8142 = vld [vmem:[%s8086 + $0x1b8] sm:$0xff]
        %v8143 = vld [vmem:[%s8086 + $0x1c0] sm:$0xff]
        %v8144 = vld [vmem:[%s8086 + $0x1c8] sm:$0xff]
        %v8145 = vld [vmem:[%s8086 + $0x1d0] sm:$0xff]
        %v8146 = vld [vmem:[%s8086 + $0x1d8] sm:$0xff]
        %v8147 = vld [vmem:[%s8086 + $0x1e0] sm:$0xff]
        %v8148 = vld [vmem:[%s8086 + $0x1e8] sm:$0xff]
        %v8149 = vld [vmem:[%s8086 + $0x1f0] sm:$0xff]
        %v8150 = vld [vmem:[%s8086 + $0x1f8] sm:$0xff]
        %v8151 = vld [vmem:[%s6 + $0x6] sm:$0x1]
        %v8152 = vlaneseq
        %v8153 = vshrl.u32 %v8152, 7
        %v8154 = vsub.s32 0, %v8153
        %v8155 = vrot.slane %v8151, %v8154
        %8156 = vmatprep.subr.mxu0 0.0
        %8157 = vmatpush1.msra.mxu0 %v8087
        %8158 = vmatprep.subr.mxu0 0.0
        %8159 = vmatpush1.msra.mxu0 %v8088
        %8160 = vmatprep.subr.mxu0 0.0
        %8161 = vmatpush1.msra.mxu0 %v8089
        %8162 = vmatprep.subr.mxu0 0.0
        %8163 = vmatpush1.msra.mxu0 %v8090
        %8164 = vmatprep.subr.mxu0 0.0
        %8165 = vmatpush1.msra.mxu0 %v8091
        %8166 = vmatprep.subr.mxu0 0.0
        %8167 = vmatpush1.msra.mxu0 %v8092
        %8168 = vmatprep.subr.mxu0 0.0
        %8169 = vmatpush1.msra.mxu0 %v8093
        %8170 = vmatprep.subr.mxu0 0.0
        %8171 = vmatpush1.msra.mxu0 %v8094
        %8172 = vmatprep.subr.mxu0 0.0
        %8173 = vmatpush1.msra.mxu0 %v8095
        %8174 = vmatprep.subr.mxu0 0.0
        %8175 = vmatpush1.msra.mxu0 %v8096
        %8176 = vmatprep.subr.mxu0 0.0
        %8177 = vmatpush1.msra.mxu0 %v8097
        %8178 = vmatprep.subr.mxu0 0.0
        %8179 = vmatpush1.msra.mxu0 %v8098
        %8180 = vmatprep.subr.mxu0 0.0
        %8181 = vmatpush1.msra.mxu0 %v8099
        %8182 = vmatprep.subr.mxu0 0.0
        %8183 = vmatpush1.msra.mxu0 %v8100
        %8184 = vmatprep.subr.mxu0 0.0
        %8185 = vmatpush1.msra.mxu0 %v8101
        %8186 = vmatprep.subr.mxu0 0.0
        %8187 = vmatpush1.msra.mxu0 %v8102
        %8188 = vmatprep.subr.mxu0 0.0
        %8189 = vmatpush1.msra.mxu0 %v8103
        %8190 = vmatprep.subr.mxu0 0.0
        %8191 = vmatpush1.msra.mxu0 %v8104
        %8192 = vmatprep.subr.mxu0 0.0
        %8193 = vmatpush1.msra.mxu0 %v8105
        %8194 = vmatprep.subr.mxu0 0.0
        %8195 = vmatpush1.msra.mxu0 %v8106
        %8196 = vmatprep.subr.mxu0 0.0
        %8197 = vmatpush1.msra.mxu0 %v8107
        %8198 = vmatprep.subr.mxu0 0.0
        %8199 = vmatpush1.msra.mxu0 %v8108
        %8200 = vmatprep.subr.mxu0 0.0
        %8201 = vmatpush1.msra.mxu0 %v8109
        %8202 = vmatprep.subr.mxu0 0.0
        %8203 = vmatpush1.msra.mxu0 %v8110
        %8204 = vmatprep.subr.mxu0 0.0
        %8205 = vmatpush1.msra.mxu0 %v8111
        %8206 = vmatprep.subr.mxu0 0.0
        %8207 = vmatpush1.msra.mxu0 %v8112
        %8208 = vmatprep.subr.mxu0 0.0
        %8209 = vmatpush1.msra.mxu0 %v8113
        %8210 = vmatprep.subr.mxu0 0.0
        %8211 = vmatpush1.msra.mxu0 %v8114
        %8212 = vmatprep.subr.mxu0 0.0
        %8213 = vmatpush1.msra.mxu0 %v8115
        %8214 = vmatprep.subr.mxu0 0.0
        %8215 = vmatpush1.msra.mxu0 %v8116
        %8216 = vmatprep.subr.mxu0 0.0
        %8217 = vmatpush1.msra.mxu0 %v8117
        %8218 = vmatprep.subr.mxu0 0.0
        %8219 = vmatpush1.msra.mxu0 %v8118
        %8220 = vmatprep.mubr.f32.mxu0 %v8083
        %8221 = vmatmul.mubr.f32.gmra.mrb[0].mxu0 %v8082
        %v8222 = vpop.f32.mrb[0].mxu0
        %v8223 = vadd.f32 %v8155, %v8222
        %v8224 = vpop.f32.mrb[0].mxu0
        %8225 = vdwg.mxu0
        %8226 = vmatprep.subr.mxu0 0.0
        %8227 = vmatpush1.msra.mxu0 %v8119
        %8228 = vmatprep.subr.mxu0 0.0
        %8229 = vmatpush1.msra.mxu0 %v8120
        %8230 = vmatprep.subr.mxu0 0.0
        %8231 = vmatpush1.msra.mxu0 %v8121
        %8232 = vmatprep.subr.mxu0 0.0
        %8233 = vmatpush1.msra.mxu0 %v8122
        %8234 = vmatprep.subr.mxu0 0.0
        %8235 = vmatpush1.msra.mxu0 %v8123
        %8236 = vmatprep.subr.mxu0 0.0
        %8237 = vmatpush1.msra.mxu0 %v8124
        %8238 = vmatprep.subr.mxu0 0.0
        %8239 = vmatpush1.msra.mxu0 %v8125
        %8240 = vmatprep.subr.mxu0 0.0
        %8241 = vmatpush1.msra.mxu0 %v8126
        %8242 = vmatprep.subr.mxu0 0.0
        %8243 = vmatpush1.msra.mxu0 %v8127
        %8244 = vmatprep.subr.mxu0 0.0
        %8245 = vmatpush1.msra.mxu0 %v8128
        %8246 = vmatprep.subr.mxu0 0.0
        %8247 = vmatpush1.msra.mxu0 %v8129
        %8248 = vmatprep.subr.mxu0 0.0
        %8249 = vmatpush1.msra.mxu0 %v8130
        %8250 = vmatprep.subr.mxu0 0.0
        %8251 = vmatpush1.msra.mxu0 %v8131
        %8252 = vmatprep.subr.mxu0 0.0
        %8253 = vmatpush1.msra.mxu0 %v8132
        %8254 = vmatprep.subr.mxu0 0.0
        %8255 = vmatpush1.msra.mxu0 %v8133
        %8256 = vmatprep.subr.mxu0 0.0
        %8257 = vmatpush1.msra.mxu0 %v8134
        %8258 = vmatprep.subr.mxu0 0.0
        %8259 = vmatpush1.msra.mxu0 %v8135
        %8260 = vmatprep.subr.mxu0 0.0
        %8261 = vmatpush1.msra.mxu0 %v8136
        %8262 = vmatprep.subr.mxu0 0.0
        %8263 = vmatpush1.msra.mxu0 %v8137
        %8264 = vmatprep.subr.mxu0 0.0
        %8265 = vmatpush1.msra.mxu0 %v8138
        %8266 = vmatprep.subr.mxu0 0.0
        %8267 = vmatpush1.msra.mxu0 %v8139
        %8268 = vmatprep.subr.mxu0 0.0
        %8269 = vmatpush1.msra.mxu0 %v8140
        %8270 = vmatprep.subr.mxu0 0.0
        %8271 = vmatpush1.msra.mxu0 %v8141
        %8272 = vmatprep.subr.mxu0 0.0
        %8273 = vmatpush1.msra.mxu0 %v8142
        %8274 = vmatprep.subr.mxu0 0.0
        %8275 = vmatpush1.msra.mxu0 %v8143
        %8276 = vmatprep.subr.mxu0 0.0
        %8277 = vmatpush1.msra.mxu0 %v8144
        %8278 = vmatprep.subr.mxu0 0.0
        %8279 = vmatpush1.msra.mxu0 %v8145
        %8280 = vmatprep.subr.mxu0 0.0
        %8281 = vmatpush1.msra.mxu0 %v8146
        %8282 = vmatprep.subr.mxu0 0.0
        %8283 = vmatpush1.msra.mxu0 %v8147
        %8284 = vmatprep.subr.mxu0 0.0
        %8285 = vmatpush1.msra.mxu0 %v8148
        %8286 = vmatprep.subr.mxu0 0.0
        %8287 = vmatpush1.msra.mxu0 %v8149
        %8288 = vmatprep.subr.mxu0 0.0
        %8289 = vmatpush1.msra.mxu0 %v8150
        %8290 = vmatprep.mubr.f32.mxu0 %v8085
        %8291 = vmatmul.mubr.f32.gmra.mrb[0].mxu0 %v8084
        %v8292 = vpop.f32.mrb[0].mxu0
        %v8293 = vadd.f32 %v8223, %v8292
        %v8294 = vpop.f32.mrb[0].mxu0
        %8295 = vdwg.mxu0
        %v8296 = vrot.slane %v1114, 7
        %v8297 = vrot.slane %v1115, 7
        %v8298 = vrot.slane %v1116, 7
        %v8299 = vrot.slane %v1117, 7
        %v8304 = vrot.slane %v1840, 6
        %v8305 = vrot.slane %v1841, 6
        %v8306 = vrot.slane %v1842, 6
        %v8307 = vrot.slane %v1843, 6
        %v8312 = vrot.slane %v2566, 5
        %v8313 = vrot.slane %v2567, 5
        %v8314 = vrot.slane %v2568, 5
        %v8315 = vrot.slane %v2569, 5
        %v8320 = vrot.slane %v3292, 4
        %v8321 = vrot.slane %v3293, 4
        %v8322 = vrot.slane %v3294, 4
        %v8323 = vrot.slane %v3295, 4
        %v8328 = vrot.slane %v4018, 3
        %v8329 = vrot.slane %v4019, 3
        %v8330 = vrot.slane %v4020, 3
        %v8331 = vrot.slane %v4021, 3
        %v8336 = vrot.slane %v4744, 2
        %v8337 = vrot.slane %v4745, 2
        %v8338 = vrot.slane %v4746, 2
        %v8339 = vrot.slane %v4747, 2
        %v8344 = vrot.slane %v5470, 1
        %v8345 = vrot.slane %v5471, 1
        %v8346 = vrot.slane %v5472, 1
        %v8347 = vrot.slane %v5473, 1
        %v8352 = vsel %vm6284, %v8296, %v8304
        %v8353 = vsel %vm6284, %v8297, %v8305
        %v8354 = vsel %vm6284, %v8298, %v8306
        %v8355 = vsel %vm6284, %v8299, %v8307
        %v8356 = vsel %vm6289, %v8352, %v8312
        %v8357 = vsel %vm6289, %v8353, %v8313
        %v8358 = vsel %vm6289, %v8354, %v8314
        %v8359 = vsel %vm6289, %v8355, %v8315
        %v8360 = vsel %vm6294, %v8356, %v8320
        %v8361 = vsel %vm6294, %v8357, %v8321
        %v8362 = vsel %vm6294, %v8358, %v8322
        %v8363 = vsel %vm6294, %v8359, %v8323
        %v8364 = vsel %vm6299, %v8360, %v8328
        %v8365 = vsel %vm6299, %v8361, %v8329
        %v8366 = vsel %vm6299, %v8362, %v8330
        %v8367 = vsel %vm6299, %v8363, %v8331
        %v8368 = vsel %vm6304, %v8364, %v8336
        %v8369 = vsel %vm6304, %v8365, %v8337
        %v8370 = vsel %vm6304, %v8366, %v8338
        %v8371 = vsel %vm6304, %v8367, %v8339
        %v8372 = vsel %vm6309, %v8368, %v8344
        %v8373 = vsel %vm6309, %v8369, %v8345
        %v8374 = vsel %vm6309, %v8370, %v8346
        %v8375 = vsel %vm6309, %v8371, %v8347
        %v8376 = vsel %vm6314, %v8372, %v6196
        %v8377 = vsel %vm6314, %v8373, %v6197
        %v8378 = vsel %vm6314, %v8374, %v6198
        %v8379 = vsel %vm6314, %v8375, %v6199
        %s8380 = scalar_lea.vmem %s5, 3584
        %v8381 = vld [vmem:[%s8380] sm:$0xff]
        %v8382 = vld [vmem:[%s8380 + $0x8] sm:$0xff]
        %v8383 = vld [vmem:[%s8380 + $0x10] sm:$0xff]
        %v8384 = vld [vmem:[%s8380 + $0x18] sm:$0xff]
        %v8385 = vld [vmem:[%s8380 + $0x20] sm:$0xff]
        %v8386 = vld [vmem:[%s8380 + $0x28] sm:$0xff]
        %v8387 = vld [vmem:[%s8380 + $0x30] sm:$0xff]
        %v8388 = vld [vmem:[%s8380 + $0x38] sm:$0xff]
        %v8389 = vld [vmem:[%s8380 + $0x40] sm:$0xff]
        %v8390 = vld [vmem:[%s8380 + $0x48] sm:$0xff]
        %v8391 = vld [vmem:[%s8380 + $0x50] sm:$0xff]
        %v8392 = vld [vmem:[%s8380 + $0x58] sm:$0xff]
        %v8393 = vld [vmem:[%s8380 + $0x60] sm:$0xff]
        %v8394 = vld [vmem:[%s8380 + $0x68] sm:$0xff]
        %v8395 = vld [vmem:[%s8380 + $0x70] sm:$0xff]
        %v8396 = vld [vmem:[%s8380 + $0x78] sm:$0xff]
        %v8397 = vld [vmem:[%s8380 + $0x80] sm:$0xff]
        %v8398 = vld [vmem:[%s8380 + $0x88] sm:$0xff]
        %v8399 = vld [vmem:[%s8380 + $0x90] sm:$0xff]
        %v8400 = vld [vmem:[%s8380 + $0x98] sm:$0xff]
        %v8401 = vld [vmem:[%s8380 + $0xa0] sm:$0xff]
        %v8402 = vld [vmem:[%s8380 + $0xa8] sm:$0xff]
        %v8403 = vld [vmem:[%s8380 + $0xb0] sm:$0xff]
        %v8404 = vld [vmem:[%s8380 + $0xb8] sm:$0xff]
        %v8405 = vld [vmem:[%s8380 + $0xc0] sm:$0xff]
        %v8406 = vld [vmem:[%s8380 + $0xc8] sm:$0xff]
        %v8407 = vld [vmem:[%s8380 + $0xd0] sm:$0xff]
        %v8408 = vld [vmem:[%s8380 + $0xd8] sm:$0xff]
        %v8409 = vld [vmem:[%s8380 + $0xe0] sm:$0xff]
        %v8410 = vld [vmem:[%s8380 + $0xe8] sm:$0xff]
        %v8411 = vld [vmem:[%s8380 + $0xf0] sm:$0xff]
        %v8412 = vld [vmem:[%s8380 + $0xf8] sm:$0xff]
        %v8413 = vld [vmem:[%s8380 + $0x100] sm:$0xff]
        %v8414 = vld [vmem:[%s8380 + $0x108] sm:$0xff]
        %v8415 = vld [vmem:[%s8380 + $0x110] sm:$0xff]
        %v8416 = vld [vmem:[%s8380 + $0x118] sm:$0xff]
        %v8417 = vld [vmem:[%s8380 + $0x120] sm:$0xff]
        %v8418 = vld [vmem:[%s8380 + $0x128] sm:$0xff]
        %v8419 = vld [vmem:[%s8380 + $0x130] sm:$0xff]
        %v8420 = vld [vmem:[%s8380 + $0x138] sm:$0xff]
        %v8421 = vld [vmem:[%s8380 + $0x140] sm:$0xff]
        %v8422 = vld [vmem:[%s8380 + $0x148] sm:$0xff]
        %v8423 = vld [vmem:[%s8380 + $0x150] sm:$0xff]
        %v8424 = vld [vmem:[%s8380 + $0x158] sm:$0xff]
        %v8425 = vld [vmem:[%s8380 + $0x160] sm:$0xff]
        %v8426 = vld [vmem:[%s8380 + $0x168] sm:$0xff]
        %v8427 = vld [vmem:[%s8380 + $0x170] sm:$0xff]
        %v8428 = vld [vmem:[%s8380 + $0x178] sm:$0xff]
        %v8429 = vld [vmem:[%s8380 + $0x180] sm:$0xff]
        %v8430 = vld [vmem:[%s8380 + $0x188] sm:$0xff]
        %v8431 = vld [vmem:[%s8380 + $0x190] sm:$0xff]
        %v8432 = vld [vmem:[%s8380 + $0x198] sm:$0xff]
        %v8433 = vld [vmem:[%s8380 + $0x1a0] sm:$0xff]
        %v8434 = vld [vmem:[%s8380 + $0x1a8] sm:$0xff]
        %v8435 = vld [vmem:[%s8380 + $0x1b0] sm:$0xff]
        %v8436 = vld [vmem:[%s8380 + $0x1b8] sm:$0xff]
        %v8437 = vld [vmem:[%s8380 + $0x1c0] sm:$0xff]
        %v8438 = vld [vmem:[%s8380 + $0x1c8] sm:$0xff]
        %v8439 = vld [vmem:[%s8380 + $0x1d0] sm:$0xff]
        %v8440 = vld [vmem:[%s8380 + $0x1d8] sm:$0xff]
        %v8441 = vld [vmem:[%s8380 + $0x1e0] sm:$0xff]
        %v8442 = vld [vmem:[%s8380 + $0x1e8] sm:$0xff]
        %v8443 = vld [vmem:[%s8380 + $0x1f0] sm:$0xff]
        %v8444 = vld [vmem:[%s8380 + $0x1f8] sm:$0xff]
        %v8445 = vld [vmem:[%s6 + $0x7] sm:$0x1]
        %v8446 = vlaneseq
        %v8447 = vshrl.u32 %v8446, 7
        %v8448 = vsub.s32 0, %v8447
        %v8449 = vrot.slane %v8445, %v8448
        %8450 = vmatprep.subr.mxu0 0.0
        %8451 = vmatpush1.msra.mxu0 %v8381
        %8452 = vmatprep.subr.mxu0 0.0
        %8453 = vmatpush1.msra.mxu0 %v8382
        %8454 = vmatprep.subr.mxu0 0.0
        %8455 = vmatpush1.msra.mxu0 %v8383
        %8456 = vmatprep.subr.mxu0 0.0
        %8457 = vmatpush1.msra.mxu0 %v8384
        %8458 = vmatprep.subr.mxu0 0.0
        %8459 = vmatpush1.msra.mxu0 %v8385
        %8460 = vmatprep.subr.mxu0 0.0
        %8461 = vmatpush1.msra.mxu0 %v8386
        %8462 = vmatprep.subr.mxu0 0.0
        %8463 = vmatpush1.msra.mxu0 %v8387
        %8464 = vmatprep.subr.mxu0 0.0
        %8465 = vmatpush1.msra.mxu0 %v8388
        %8466 = vmatprep.subr.mxu0 0.0
        %8467 = vmatpush1.msra.mxu0 %v8389
        %8468 = vmatprep.subr.mxu0 0.0
        %8469 = vmatpush1.msra.mxu0 %v8390
        %8470 = vmatprep.subr.mxu0 0.0
        %8471 = vmatpush1.msra.mxu0 %v8391
        %8472 = vmatprep.subr.mxu0 0.0
        %8473 = vmatpush1.msra.mxu0 %v8392
        %8474 = vmatprep.subr.mxu0 0.0
        %8475 = vmatpush1.msra.mxu0 %v8393
        %8476 = vmatprep.subr.mxu0 0.0
        %8477 = vmatpush1.msra.mxu0 %v8394
        %8478 = vmatprep.subr.mxu0 0.0
        %8479 = vmatpush1.msra.mxu0 %v8395
        %8480 = vmatprep.subr.mxu0 0.0
        %8481 = vmatpush1.msra.mxu0 %v8396
        %8482 = vmatprep.subr.mxu0 0.0
        %8483 = vmatpush1.msra.mxu0 %v8397
        %8484 = vmatprep.subr.mxu0 0.0
        %8485 = vmatpush1.msra.mxu0 %v8398
        %8486 = vmatprep.subr.mxu0 0.0
        %8487 = vmatpush1.msra.mxu0 %v8399
        %8488 = vmatprep.subr.mxu0 0.0
        %8489 = vmatpush1.msra.mxu0 %v8400
        %8490 = vmatprep.subr.mxu0 0.0
        %8491 = vmatpush1.msra.mxu0 %v8401
        %8492 = vmatprep.subr.mxu0 0.0
        %8493 = vmatpush1.msra.mxu0 %v8402
        %8494 = vmatprep.subr.mxu0 0.0
        %8495 = vmatpush1.msra.mxu0 %v8403
        %8496 = vmatprep.subr.mxu0 0.0
        %8497 = vmatpush1.msra.mxu0 %v8404
        %8498 = vmatprep.subr.mxu0 0.0
        %8499 = vmatpush1.msra.mxu0 %v8405
        %8500 = vmatprep.subr.mxu0 0.0
        %8501 = vmatpush1.msra.mxu0 %v8406
        %8502 = vmatprep.subr.mxu0 0.0
        %8503 = vmatpush1.msra.mxu0 %v8407
        %8504 = vmatprep.subr.mxu0 0.0
        %8505 = vmatpush1.msra.mxu0 %v8408
        %8506 = vmatprep.subr.mxu0 0.0
        %8507 = vmatpush1.msra.mxu0 %v8409
        %8508 = vmatprep.subr.mxu0 0.0
        %8509 = vmatpush1.msra.mxu0 %v8410
        %8510 = vmatprep.subr.mxu0 0.0
        %8511 = vmatpush1.msra.mxu0 %v8411
        %8512 = vmatprep.subr.mxu0 0.0
        %8513 = vmatpush1.msra.mxu0 %v8412
        %8514 = vmatprep.mubr.f32.mxu0 %v8377
        %8515 = vmatmul.mubr.f32.gmra.mrb[0].mxu0 %v8376
        %v8516 = vpop.f32.mrb[0].mxu0
        %v8517 = vadd.f32 %v8449, %v8516
        %v8518 = vpop.f32.mrb[0].mxu0
        %8519 = vdwg.mxu0
        %8520 = vmatprep.subr.mxu0 0.0
        %8521 = vmatpush1.msra.mxu0 %v8413
        %8522 = vmatprep.subr.mxu0 0.0
        %8523 = vmatpush1.msra.mxu0 %v8414
        %8524 = vmatprep.subr.mxu0 0.0
        %8525 = vmatpush1.msra.mxu0 %v8415
        %8526 = vmatprep.subr.mxu0 0.0
        %8527 = vmatpush1.msra.mxu0 %v8416
        %8528 = vmatprep.subr.mxu0 0.0
        %8529 = vmatpush1.msra.mxu0 %v8417
        %8530 = vmatprep.subr.mxu0 0.0
        %8531 = vmatpush1.msra.mxu0 %v8418
        %8532 = vmatprep.subr.mxu0 0.0
        %8533 = vmatpush1.msra.mxu0 %v8419
        %8534 = vmatprep.subr.mxu0 0.0
        %8535 = vmatpush1.msra.mxu0 %v8420
        %8536 = vmatprep.subr.mxu0 0.0
        %8537 = vmatpush1.msra.mxu0 %v8421
        %8538 = vmatprep.subr.mxu0 0.0
        %8539 = vmatpush1.msra.mxu0 %v8422
        %8540 = vmatprep.subr.mxu0 0.0
        %8541 = vmatpush1.msra.mxu0 %v8423
        %8542 = vmatprep.subr.mxu0 0.0
        %8543 = vmatpush1.msra.mxu0 %v8424
        %8544 = vmatprep.subr.mxu0 0.0
        %8545 = vmatpush1.msra.mxu0 %v8425
        %8546 = vmatprep.subr.mxu0 0.0
        %8547 = vmatpush1.msra.mxu0 %v8426
        %8548 = vmatprep.subr.mxu0 0.0
        %8549 = vmatpush1.msra.mxu0 %v8427
        %8550 = vmatprep.subr.mxu0 0.0
        %8551 = vmatpush1.msra.mxu0 %v8428
        %8552 = vmatprep.subr.mxu0 0.0
        %8553 = vmatpush1.msra.mxu0 %v8429
        %8554 = vmatprep.subr.mxu0 0.0
        %8555 = vmatpush1.msra.mxu0 %v8430
        %8556 = vmatprep.subr.mxu0 0.0
        %8557 = vmatpush1.msra.mxu0 %v8431
        %8558 = vmatprep.subr.mxu0 0.0
        %8559 = vmatpush1.msra.mxu0 %v8432
        %8560 = vmatprep.subr.mxu0 0.0
        %8561 = vmatpush1.msra.mxu0 %v8433
        %8562 = vmatprep.subr.mxu0 0.0
        %8563 = vmatpush1.msra.mxu0 %v8434
        %8564 = vmatprep.subr.mxu0 0.0
        %8565 = vmatpush1.msra.mxu0 %v8435
        %8566 = vmatprep.subr.mxu0 0.0
        %8567 = vmatpush1.msra.mxu0 %v8436
        %8568 = vmatprep.subr.mxu0 0.0
        %8569 = vmatpush1.msra.mxu0 %v8437
        %8570 = vmatprep.subr.mxu0 0.0
        %8571 = vmatpush1.msra.mxu0 %v8438
        %8572 = vmatprep.subr.mxu0 0.0
        %8573 = vmatpush1.msra.mxu0 %v8439
        %8574 = vmatprep.subr.mxu0 0.0
        %8575 = vmatpush1.msra.mxu0 %v8440
        %8576 = vmatprep.subr.mxu0 0.0
        %8577 = vmatpush1.msra.mxu0 %v8441
        %8578 = vmatprep.subr.mxu0 0.0
        %8579 = vmatpush1.msra.mxu0 %v8442
        %8580 = vmatprep.subr.mxu0 0.0
        %8581 = vmatpush1.msra.mxu0 %v8443
        %8582 = vmatprep.subr.mxu0 0.0
        %8583 = vmatpush1.msra.mxu0 %v8444
        %8584 = vmatprep.mubr.f32.mxu0 %v8379
        %8585 = vmatmul.mubr.f32.gmra.mrb[0].mxu0 %v8378
        %v8586 = vpop.f32.mrb[0].mxu0
        %v8587 = vadd.f32 %v8517, %v8586
        %v8588 = vpop.f32.mrb[0].mxu0
        %8589 = vdwg.mxu0
        %8591 = vrot.lane.b32.xlu0 %v6823, 64
        %v8592 = vpop.permute.xlu0 %8591
        %8595 = vrot.lane.b32.xlu0 %v7411, 64
        %v8596 = vpop.permute.xlu0 %8595
        %8599 = vrot.lane.b32.xlu0 %v7999, 64
        %v8600 = vpop.permute.xlu0 %8599
        %8603 = vrot.lane.b32.xlu0 %v8587, 64
        %v8604 = vpop.permute.xlu0 %8603
        %v8606 = vsel %vm968, %v6525, %v8592
        %v8607 = vsel %vm968, %v7117, %v8596
        %v8608 = vsel %vm968, %v7705, %v8600
        %v8609 = vsel %vm968, %v8293, %v8604
        %v8610 = vmul.f32 %v8606, %v8606
        %v8611 = vmul.f32 %v8607, %v8607
        %v8612 = vmul.f32 %v8608, %v8608
        %v8613 = vmul.f32 %v8609, %v8609
        %v8614 = vadd.f32 %v8610, %v8611
        %v8615 = vadd.f32 %v8614, %v8612
        %v8616 = vadd.f32 %v8615, %v8613
        %8617 = vadd.xlane.f32.xlu0 %v8616
        %v8618 = vpop.xlane.xlu0 %8617
        %v8619 = vrsqrt.pop %v8618
        %v8620 = vmul.f32 %v8618, %v8619
        %vm8621 = vcmp.eq.f32.partialorder %v8618, inf
        %v8622 = vsel %vm8621, %v8618, %v8620
        %vm8623 = vcmp.eq.f32.partialorder %v8618, 0.0
        %v8624 = vand.u32 %v8618, 2147483648
        %v8625 = vsel %vm8623, %v8624, %v8622
        %v8626 = vmax.f32 %v8625, 1e-06
        %v8627 = vrcp.pop %v8626
        %v8628 = vmul.f32 %v8606, %v8627
        %v8629 = vmul.f32 %v8607, %v8627
        %v8630 = vmul.f32 %v8608, %v8627
        %v8631 = vmul.f32 %v8609, %v8627
        %8632 = vst [vmem:[%s274] sm:$0xff] %v8628
        %8633 = vst [vmem:[%s274 + $0x8] sm:$0xff] %v8629
        %8634 = vst [vmem:[%s274 + $0x10] sm:$0xff] %v8630
        %8635 = vst [vmem:[%s274 + $0x18] sm:$0xff] %v8631
        %s8636 = sand.u32 %s181, 1
        %s8637 = scalar_lea.sflag [#allocation3], %s8636
        %s8638 = sand.u32 %s181, 1
        %s8639 = smul.addr %s8638, 32
        %s8640 = scalar_lea.vmem [#allocation2], %s8639
        // Predicated region
        $region49: #{tpu_custom_call.1} parent=47 // pred_check
          %p8641 = pneg %p191
        $region50: #{tpu_custom_call.1} parent=47 // pred_check_branch
          %8643 = sbr.rel (%p8641) target = $region52
        $region51: #{tpu_custom_call.1} parent=47 // pred_region
          %s8645 = ssub.s32 512, 512
          %8646 = vsyncadd %s8637, %s8645
          %s8647 = smul.addr %s21, 4
          %s8648 = smul.addr %s8647, 128
          %s8649 = scalar_lea.hbm %s7, %s8648
          %s8651 = sshll.u32 %s8640, 4
          %s8652 = int_to_ptr.vmem [resolvable:$true] %s8651
          %8654 = dma.vmem_to_hbm [thread:$0]  %s8652, 512, %s8649, %s8637
        $region52: #{tpu_custom_call.1} parent=47 // pred_fallthru
          _
      $region48: #{tpu_custom_call.1} parent=5 // pred_fallthru
        _
      %p8655 = scmp.le.s32.totalorder 2, %s16
      // Predicated region
      $region53: #{tpu_custom_call.1} parent=5 // pred_check
        %p8656 = pneg %p8655
      $region54: #{tpu_custom_call.1} parent=5 // pred_check_branch
        %8658 = sbr.rel (%p8656) target = $region56
      $region55: #{tpu_custom_call.1} parent=5 // pred_region
        %s8659 = ssub.s32 %s16, 2
        // Predicated region
        $region57: #{tpu_custom_call.1} parent=55 // pred_check
          %p8660 = pneg %p197
        $region58: #{tpu_custom_call.1} parent=55 // pred_check_branch
          %8662 = sbr.rel (%p8660) target = $region60
        $region59: #{tpu_custom_call.1} parent=55 // pred_region
          %s8663 = sand.u32 %s182, 1
          %s8664 = scalar_lea.sflag [#allocation3], %s8663
          %s8665 = sand.u32 %s182, 1
          %s8666 = smul.addr %s8665, 32
          %s8667 = scalar_lea.vmem [#allocation2], %s8666
          %8668 = dma.done %s8664, 512
        $region60: #{tpu_custom_call.1} parent=55 // pred_fallthru
          _
      $region56: #{tpu_custom_call.1} parent=5 // pred_fallthru
        _
    $region6: #{tpu_custom_call.1} parent=1 // loop_footer
      %s20 = sadd.s32 1, %s16
    $region7: #{tpu_custom_call.1} parent=1 // loop_footer_branch
      %15 = sbr.rel target = $region3
    $region8: #{tpu_custom_call.1} parent=1 // loop_exit
      _
    %8669 = vsyncpa [#allocation3], 1
    %s8670 = scalar_lea.sflag [#allocation3], 1
    %8671 = vsyncpa %s8670, 1

</llo_original>
